<compile_context>
chip_gen: v5e
topology: v5e:2x2
jax: 0.10.0
libtpu: 0.0.40
codegen_flags: <defaults>
</compile_context>

<pallas_src>
import functools
import math

import jax
import jax.numpy as jnp
from jax import lax
from jax.experimental import pallas as pl
from jax.experimental.pallas import tpu as pltpu


_LANE = 128
_TARGET_BLOCK_BYTES = 2 << 20      # ~2 MiB useful data per pipeline buffer
_MIN_GRID_STEPS = 8                # aim for >= 8 steps (megacore balance)
_SCOPED_VMEM_LIMIT = 32 << 20      # safe on v7x (64 MiB physical VMEM)
_MAX_MIN_BLOCK_BYTES = 4 << 20     # largest minimal tile before falling back
_MAX_PACK_WIDTH = 1024             # cap on packed lane width (S is width^2 f32)
_SMALL_PROBLEM_ELEMS = 1 << 17     # below ~1.3e5 elems XLA fusion beats a launch
_APPROX_RECIP = False              # True -> EUP vrcp (small rel. error) on v7x


def _round_up(x, m):
    return (x + m - 1) // m * m


def _sublane(dtype):
    # Sublane quantum of the second-minor tile dim, per element width.
    return {4: 8, 2: 16, 1: 32}.get(jnp.dtype(dtype).itemsize, 8)


def _reference(x):
    # Pure-JAX reference mirroring the PyTorch forward exactly.
    xf = x.astype(jnp.float32)
    nu = xf + jnp.sqrt(1.0 + xf * xf)
    return (nu / jnp.sum(nu, axis=1, keepdims=True)).astype(x.dtype)


# -----------------------------------------------------------------------------
# Block sizing
# -----------------------------------------------------------------------------
def _pick_block_rows(n_rows, row_vmem_bytes, sublane):
    """Rows per block: ~_TARGET_BLOCK_BYTES per buffer, >= _MIN_GRID_STEPS steps
    when the problem is big enough, and an even step count when achievable so
    v7x's two TensorCores split the 'parallel' grid evenly."""
    if n_rows <= sublane:
        return max(int(n_rows), 1)
    cap = max(sublane, (_TARGET_BLOCK_BYTES // row_vmem_bytes) // sublane * sublane)
    by_steps = _round_up(pl.cdiv(n_rows, _MIN_GRID_STEPS), sublane)
    block = max(sublane, min(cap, by_steps))
    if block >= n_rows:
        return int(n_rows)
    steps = pl.cdiv(n_rows, block)
    if steps > 1 and steps % 2 == 1:
        cand = _round_up(pl.cdiv(n_rows, steps + 1), sublane)
        if sublane <= cand < n_rows and pl.cdiv(n_rows, cand) % 2 == 0:
            block = cand
    return int(block)


# -----------------------------------------------------------------------------
# Kernels
# -----------------------------------------------------------------------------
def _rows_kernel(x_ref, o_ref, *, approx):
    # Tile: (block_rows, C) — batch on sublanes, classes on lanes.
    x = x_ref[...]
    if x.dtype != jnp.float32:
        x = x.astype(jnp.float32)
    nu = x + jnp.sqrt(1.0 + x * x)                  # VPU + EUP sqrt
    denom = jnp.sum(nu, axis=-1, keepdims=True)     # XLU lane reduction
    inv = pl.reciprocal(denom, approx=approx)       # EUP
    o_ref[...] = (nu * inv).astype(o_ref.dtype)


def _packed_kernel(x_ref, s_ref, o_ref, *, approx):
    # Tile: (block_rows, L) — G original rows packed lane-dense per kernel row.
    # s_ref is the (L, L) block-diagonal 0/1 segment-sum matrix (fetched once:
    # its block index never changes, so Pallas does not re-DMA it per step).
    x = x_ref[...]
    if x.dtype != jnp.float32:
        x = x.astype(jnp.float32)
    nu = x + jnp.sqrt(1.0 + x * x)
    # Per-original-row denominator via the otherwise-idle MXU; HIGHEST keeps
    # full f32 accuracy (default precision would round operands to bf16).
    denom = jnp.dot(nu, s_ref[...], preferred_element_type=jnp.float32,
                    precision=lax.Precision.HIGHEST)
    inv = pl.reciprocal(denom, approx=approx)
    o_ref[...] = (nu * inv).astype(o_ref.dtype)


# -----------------------------------------------------------------------------
# Wrappers
# -----------------------------------------------------------------------------
def _run_rows(x):
    """Block over batch rows; class axis stays whole. No transpose, no padding:
    the last grid block is ragged (rows are independent, OOB rows unwritten)."""
    B, C = x.shape
    itemsize = jnp.dtype(x.dtype).itemsize
    sub = _sublane(x.dtype)
    row_vmem = _round_up(C, _LANE) * itemsize        # count lane padding in VMEM
    block_rows = _pick_block_rows(B, row_vmem, sub)
    grid = (pl.cdiv(B, block_rows),)
    return pl.pallas_call(
        functools.partial(_rows_kernel, approx=_APPROX_RECIP),
        out_shape=jax.ShapeDtypeStruct((B, C), x.dtype),
        grid=grid,
        in_specs=[pl.BlockSpec((block_rows, C), lambda i: (i, 0))],
        out_specs=pl.BlockSpec((block_rows, C), lambda i: (i, 0)),
        compiler_params=pltpu.CompilerParams(
            dimension_semantics=("parallel",),
            vmem_limit_bytes=_SCOPED_VMEM_LIMIT,
        ),
    )(x)


def _run_packed(x, pack_width):
    """C < 128: pack G = pack_width // C rows into one lane-dense row of width
    pack_width = lcm(C, 128) via a row-major reshape (bitcast, no transpose)."""
    B, C = x.shape
    dtype = x.dtype
    G = pack_width // C
    Bp = _round_up(B, G)
    if Bp != B:
        # At most G-1 (< 128) padded rows; zeros give nu = 1, denom = C (finite).
        x = jnp.pad(x, ((0, Bp - B), (0, 0)))
    R = Bp // G
    xr = x.reshape(R, pack_width)                    # contiguous reshape: free

    seg = jnp.arange(pack_width, dtype=jnp.int32) // C
    s = (seg[:, None] == seg[None, :]).astype(jnp.float32)   # block-diag ones

    sub = _sublane(dtype)
    row_vmem = pack_width * jnp.dtype(dtype).itemsize
    block_rows = _pick_block_rows(R, row_vmem, sub)
    grid = (pl.cdiv(R, block_rows),)

    out_r = pl.pallas_call(
        functools.partial(_packed_kernel, approx=_APPROX_RECIP),
        out_shape=jax.ShapeDtypeStruct((R, pack_width), dtype),
        grid=grid,
        in_specs=[
            pl.BlockSpec((block_rows, pack_width), lambda i: (i, 0)),
            pl.BlockSpec((pack_width, pack_width), lambda i: (0, 0)),
        ],
        out_specs=pl.BlockSpec((block_rows, pack_width), lambda i: (i, 0)),
        compiler_params=pltpu.CompilerParams(
            dimension_semantics=("parallel",),
            vmem_limit_bytes=_SCOPED_VMEM_LIMIT,
        ),
    )(xr, s)
    out = out_r.reshape(Bp, C)                       # bitcast back
    return out if Bp == B else out[:B]


@functools.partial(jax.jit, static_argnames=("force_kernel",))
def conservative_softmax_monotone(x, *, force_kernel=False):
    """x: [B, C] float array. Returns [B, C] row-normalized monotone map."""
    B, C = x.shape
    if not force_kernel and B * C < _SMALL_PROBLEM_ELEMS:
        # Launch + wrapper overhead dwarfs the work; let XLA fuse it.
        return _reference(x)

    itemsize = jnp.dtype(x.dtype).itemsize
    sub = _sublane(x.dtype)
    # Very wide logits: even a minimal (sub x C) tile blows the VMEM budget.
    # TODO(synk): block over the class axis (two-pass denominator with a
    # pl.when-finalized accumulator) instead of falling back for huge C.
    if sub * _round_up(C, _LANE) * itemsize > _MAX_MIN_BLOCK_BYTES:
        return _reference(x)

    if C < _LANE:
        pack_width = (C * _LANE) // math.gcd(C, _LANE)   # lcm(C, 128)
        if pack_width <= _MAX_PACK_WIDTH and B >= pack_width // C:
            return _run_packed(x, pack_width)
    # C >= 128, or C < 128 with an awkward lcm / tiny batch: full-width blocks
    # over rows (still minimal HBM traffic; lanes may be partially masked).
    return _run_rows(x)


if __name__ == "__main__":
    key = jax.random.PRNGKey(0)
    k1, k2, k3, k4, k5 = jax.random.split(key, 5)

    cases = [
        # name, input, tolerance
        ("packed / exact multiple", jax.random.normal(k1, (128, 10), jnp.float32), 1e-5),
        ("packed / ragged batch",   jax.random.normal(k2, (200, 10), jnp.float32), 1e-5),
        ("packed / 8-step grid",    jax.random.normal(k3, (4096, 10), jnp.float32), 1e-5),
        ("rows   / C >= 128",       jax.random.normal(k4, (96, 256), jnp.float32), 1e-5),
        ("packed / bf16",
         jax.random.normal(k5, (4096, 10), jnp.float32).astype(jnp.bfloat16), 2e-2),
    ]

    ok = True
    for name, x, tol in cases:
        out = jax.block_until_ready(
            conservative_softmax_monotone(x, force_kernel=True))
        assert out.shape == x.shape, name
        ref = _reference(x)
        good = bool(jnp.allclose(out.astype(jnp.float32), ref.astype(jnp.float32),
                                 atol=tol, rtol=tol))
        ok &= good

    assert ok, "mismatch vs reference"
    print("KERNEL_OK")
</pallas_src>

<mosaic_0001>
module attributes {stable_mosaic.version = 11 : i64} {
  func.func @_packed_kernel(%arg0: i32, %arg1: memref<2x640xf32, #tpu.memory_space<vmem>>, %arg2: memref<640x640xf32, #tpu.memory_space<vmem>>, %arg3: memref<2x640xf32, #tpu.memory_space<vmem>>) attributes {dimension_semantics = [#tpu.dimension_semantics<parallel>], iteration_bounds = array<i64: 1>, scalar_prefetch = 0 : i64, scratch_operands = 0 : i64, tpu.core_type = #tpu.core_type<tc>, window_params = [{transform_indices = @transform_0, window_bounds = array<i64: 2, 640>}, {pipeline_mode = #tpu.pipeline_mode<synchronous>, transform_indices = @transform_1, window_bounds = array<i64: 640, 640>}, {transform_indices = @transform_2, window_bounds = array<i64: 2, 640>}]} {
    %c0 = arith.constant 0 : index
    %c0_0 = arith.constant 0 : index
    %0 = vector.load %arg1[%c0, %c0_0] : memref<2x640xf32, #tpu.memory_space<vmem>>, vector<2x640xf32>
    %1 = arith.mulf %0, %0 : vector<2x640xf32>
    %cst = arith.constant 1.000000e+00 : f32
    %2 = vector.broadcast %cst : f32 to vector<2x640xf32>
    %3 = arith.addf %2, %1 : vector<2x640xf32>
    %4 = math.sqrt %3 : vector<2x640xf32>
    %5 = arith.addf %0, %4 : vector<2x640xf32>
    %c0_1 = arith.constant 0 : index
    %c0_2 = arith.constant 0 : index
    %6 = vector.load %arg2[%c0_1, %c0_2] : memref<640x640xf32, #tpu.memory_space<vmem>>, vector<640x640xf32>
    %cst_3 = arith.constant dense<0.000000e+00> : vector<2x640xf32>
    %7 = tpu.matmul %5, %6, %cst_3 {dimension_numbers = #tpu.dot_dimension_numbers<[1], [0], [0], [1], [0, 0, 1, 1], [], []>, precision = #tpu.contract_precision<fp32>} : vector<2x640xf32>, vector<640x640xf32>, vector<2x640xf32> -> vector<2x640xf32>
    %8 = tpu.reciprocal %7 : vector<2x640xf32> -> vector<2x640xf32>
    %9 = arith.mulf %5, %8 : vector<2x640xf32>
    %c0_4 = arith.constant 0 : index
    %c0_5 = arith.constant 0 : index
    %10 = vector.load %arg3[%c0_4, %c0_5] : memref<2x640xf32, #tpu.memory_space<vmem>>, vector<2x640xf32>
    tpu.vector_store %arg3[%c0_4, %c0_5], %9 {strides = array<i32>} : memref<2x640xf32, #tpu.memory_space<vmem>>, vector<2x640xf32>,
    return
  }
  func.func @transform_0(%arg0: i32) -> (i32, i32) {
    %c0_i32 = arith.constant 0 : i32
    %c0_i32_0 = arith.constant 0 : i32
    return %arg0, %c0_i32 : i32, i32
  }
  func.func @transform_1(%arg0: i32) -> (i32, i32) {
    %c0_i32 = arith.constant 0 : i32
    %c0_i32_0 = arith.constant 0 : i32
    %c0_i32_1 = arith.constant 0 : i32
    return %c0_i32, %c0_i32_0 : i32, i32
  }
  func.func @transform_2(%arg0: i32) -> (i32, i32) {
    %c0_i32 = arith.constant 0 : i32
    %c0_i32_0 = arith.constant 0 : i32
    return %arg0, %c0_i32 : i32, i32
  }
}

</mosaic_0001>

<llo_original>
// kernel: conservative_softmax_monotone.1
$region0: #{conservative_softmax_monotone.1}
  #allocation0 [shape = 'u32[]', space=smem, size = 0x4, offset = 0x4, fixed_abs, tag = 'smem constant byte address 0x4 - core index']
  #allocation1 [shape = 'u32[72,128]{1,0:T(1,128)}', space=vmem, size = 0x9000, scoped, tag = 'internal scratch']
  %s0 = inlined_call_operand.vmem [shape: f32[2,640], index: 0, kind: input, shape index: {}]
  %s1 = inlined_call_operand.vmem [shape: f32[640,640], index: 1, kind: input, shape index: {}]
  %s2 = inlined_call_operand.vmem [shape: f32[2,640], index: 2, kind: output, shape index: {}]
  %s3 = sld [smem:[#allocation0]]
  $region18: #{conservative_softmax_monotone.1} parent=0
    _
  %s5 = ssub.s32 1, %s3
  %s6 = scalar_select 0, %s5, %s3
  // Predicated region
  $region2: #{conservative_softmax_monotone.1} parent=0 // pred_check
    _
  $region3: #{conservative_softmax_monotone.1} parent=0 // pred_check_branch
    %8 = sbr.rel (0) target = $region5
  $region4: #{conservative_softmax_monotone.1} parent=0 // pred_region
    _
  $region5: #{conservative_softmax_monotone.1} parent=0 // pred_fallthru
    _
  // Predicated region
  $region6: #{conservative_softmax_monotone.1} parent=0 // pred_check
    _
  $region7: #{conservative_softmax_monotone.1} parent=0 // pred_check_branch
    %10 = sbr.rel (0) target = $region9
  $region8: #{conservative_softmax_monotone.1} parent=0 // pred_region
    _
  $region9: #{conservative_softmax_monotone.1} parent=0 // pred_fallthru
    _
  %v11 = vld [vmem:[%s0] sm:$0xff]
  %v12 = vld [vmem:[%s0 + $0x8] sm:$0x3]
  %v13 = vmul.f32 %v11, %v11
  %v14 = vmul.f32 %v12, %v12
  %v15 = vadd.f32 %v13, 1.0
  %v16 = vadd.f32 %v14, 1.0
  %v17 = vrsqrt.pop %v15
  %v18 = vmul.f32 %v17, %v15
  %v19 = vmul.f32 %v18, %v17
  %v20 = vmul.f32 0.5, %v19
  %v21 = vsub.f32 1.5, %v20
  %v22 = vmul.f32 %v17, %v21
  %v23 = vmul.f32 %v15, %v22
  %vm24 = vcmp.eq.f32.partialorder %v15, inf
  %v25 = vsel %vm24, %v15, %v23
  %vm26 = vcmp.eq.f32.partialorder %v15, 0.0
  %v27 = vand.u32 %v15, 2147483648
  %v28 = vsel %vm26, %v27, %v25
  %v29 = vrsqrt.pop %v16
  %v30 = vmul.f32 %v29, %v16
  %v31 = vmul.f32 %v30, %v29
  %v32 = vmul.f32 0.5, %v31
  %v33 = vsub.f32 1.5, %v32
  %v34 = vmul.f32 %v29, %v33
  %v35 = vmul.f32 %v16, %v34
  %vm36 = vcmp.eq.f32.partialorder %v16, inf
  %v37 = vsel %vm36, %v16, %v35
  %vm38 = vcmp.eq.f32.partialorder %v16, 0.0
  %v39 = vand.u32 %v16, 2147483648
  %v40 = vsel %vm38, %v39, %v37
  %v41 = vadd.f32 %v11, %v28
  %v42 = vadd.f32 %v12, %v40
  %v43 = vld [vmem:[%s1] sm:$0xff]
  %v44 = vld [vmem:[%s1 + $0x8] sm:$0xff]
  %v45 = vld [vmem:[%s1 + $0x10] sm:$0xff]
  %v46 = vld [vmem:[%s1 + $0x18] sm:$0xff]
  %v47 = vld [vmem:[%s1 + $0x20] sm:$0xff]
  %v48 = vld [vmem:[%s1 + $0x28] sm:$0xff]
  %v49 = vld [vmem:[%s1 + $0x30] sm:$0xff]
  %v50 = vld [vmem:[%s1 + $0x38] sm:$0xff]
  %v51 = vld [vmem:[%s1 + $0x40] sm:$0xff]
  %v52 = vld [vmem:[%s1 + $0x48] sm:$0xff]
  %v53 = vld [vmem:[%s1 + $0x50] sm:$0xff]
  %v54 = vld [vmem:[%s1 + $0x58] sm:$0xff]
  %v55 = vld [vmem:[%s1 + $0x60] sm:$0xff]
  %v56 = vld [vmem:[%s1 + $0x68] sm:$0xff]
  %v57 = vld [vmem:[%s1 + $0x70] sm:$0xff]
  %v58 = vld [vmem:[%s1 + $0x78] sm:$0xff]
  %v59 = vld [vmem:[%s1 + $0x80] sm:$0xff]
  %v60 = vld [vmem:[%s1 + $0x88] sm:$0xff]
  %v61 = vld [vmem:[%s1 + $0x90] sm:$0xff]
  %v62 = vld [vmem:[%s1 + $0x98] sm:$0xff]
  %v63 = vld [vmem:[%s1 + $0xa0] sm:$0xff]
  %v64 = vld [vmem:[%s1 + $0xa8] sm:$0xff]
  %v65 = vld [vmem:[%s1 + $0xb0] sm:$0xff]
  %v66 = vld [vmem:[%s1 + $0xb8] sm:$0xff]
  %v67 = vld [vmem:[%s1 + $0xc0] sm:$0xff]
  %v68 = vld [vmem:[%s1 + $0xc8] sm:$0xff]
  %v69 = vld [vmem:[%s1 + $0xd0] sm:$0xff]
  %v70 = vld [vmem:[%s1 + $0xd8] sm:$0xff]
  %v71 = vld [vmem:[%s1 + $0xe0] sm:$0xff]
  %v72 = vld [vmem:[%s1 + $0xe8] sm:$0xff]
  %v73 = vld [vmem:[%s1 + $0xf0] sm:$0xff]
  %v74 = vld [vmem:[%s1 + $0xf8] sm:$0xff]
  %v75 = vld [vmem:[%s1 + $0x100] sm:$0xff]
  %v76 = vld [vmem:[%s1 + $0x108] sm:$0xff]
  %v77 = vld [vmem:[%s1 + $0x110] sm:$0xff]
  %v78 = vld [vmem:[%s1 + $0x118] sm:$0xff]
  %v79 = vld [vmem:[%s1 + $0x120] sm:$0xff]
  %v80 = vld [vmem:[%s1 + $0x128] sm:$0xff]
  %v81 = vld [vmem:[%s1 + $0x130] sm:$0xff]
  %v82 = vld [vmem:[%s1 + $0x138] sm:$0xff]
  %v83 = vld [vmem:[%s1 + $0x140] sm:$0xff]
  %v84 = vld [vmem:[%s1 + $0x148] sm:$0xff]
  %v85 = vld [vmem:[%s1 + $0x150] sm:$0xff]
  %v86 = vld [vmem:[%s1 + $0x158] sm:$0xff]
  %v87 = vld [vmem:[%s1 + $0x160] sm:$0xff]
  %v88 = vld [vmem:[%s1 + $0x168] sm:$0xff]
  %v89 = vld [vmem:[%s1 + $0x170] sm:$0xff]
  %v90 = vld [vmem:[%s1 + $0x178] sm:$0xff]
  %v91 = vld [vmem:[%s1 + $0x180] sm:$0xff]
  %v92 = vld [vmem:[%s1 + $0x188] sm:$0xff]
  %v93 = vld [vmem:[%s1 + $0x190] sm:$0xff]
  %v94 = vld [vmem:[%s1 + $0x198] sm:$0xff]
  %v95 = vld [vmem:[%s1 + $0x1a0] sm:$0xff]
  %v96 = vld [vmem:[%s1 + $0x1a8] sm:$0xff]
  %v97 = vld [vmem:[%s1 + $0x1b0] sm:$0xff]
  %v98 = vld [vmem:[%s1 + $0x1b8] sm:$0xff]
  %v99 = vld [vmem:[%s1 + $0x1c0] sm:$0xff]
  %v100 = vld [vmem:[%s1 + $0x1c8] sm:$0xff]
  %v101 = vld [vmem:[%s1 + $0x1d0] sm:$0xff]
  %v102 = vld [vmem:[%s1 + $0x1d8] sm:$0xff]
  %v103 = vld [vmem:[%s1 + $0x1e0] sm:$0xff]
  %v104 = vld [vmem:[%s1 + $0x1e8] sm:$0xff]
  %v105 = vld [vmem:[%s1 + $0x1f0] sm:$0xff]
  %v106 = vld [vmem:[%s1 + $0x1f8] sm:$0xff]
  %v107 = vld [vmem:[%s1 + $0x200] sm:$0xff]
  %v108 = vld [vmem:[%s1 + $0x208] sm:$0xff]
  %v109 = vld [vmem:[%s1 + $0x210] sm:$0xff]
  %v110 = vld [vmem:[%s1 + $0x218] sm:$0xff]
  %v111 = vld [vmem:[%s1 + $0x220] sm:$0xff]
  %v112 = vld [vmem:[%s1 + $0x228] sm:$0xff]
  %v113 = vld [vmem:[%s1 + $0x230] sm:$0xff]
  %v114 = vld [vmem:[%s1 + $0x238] sm:$0xff]
  %v115 = vld [vmem:[%s1 + $0x240] sm:$0xff]
  %v116 = vld [vmem:[%s1 + $0x248] sm:$0xff]
  %v117 = vld [vmem:[%s1 + $0x250] sm:$0xff]
  %v118 = vld [vmem:[%s1 + $0x258] sm:$0xff]
  %v119 = vld [vmem:[%s1 + $0x260] sm:$0xff]
  %v120 = vld [vmem:[%s1 + $0x268] sm:$0xff]
  %v121 = vld [vmem:[%s1 + $0x270] sm:$0xff]
  %v122 = vld [vmem:[%s1 + $0x278] sm:$0xff]
  %v123 = vld [vmem:[%s1 + $0x280] sm:$0xff]
  %v124 = vld [vmem:[%s1 + $0x288] sm:$0xff]
  %v125 = vld [vmem:[%s1 + $0x290] sm:$0xff]
  %v126 = vld [vmem:[%s1 + $0x298] sm:$0xff]
  %v127 = vld [vmem:[%s1 + $0x2a0] sm:$0xff]
  %v128 = vld [vmem:[%s1 + $0x2a8] sm:$0xff]
  %v129 = vld [vmem:[%s1 + $0x2b0] sm:$0xff]
  %v130 = vld [vmem:[%s1 + $0x2b8] sm:$0xff]
  %v131 = vld [vmem:[%s1 + $0x2c0] sm:$0xff]
  %v132 = vld [vmem:[%s1 + $0x2c8] sm:$0xff]
  %v133 = vld [vmem:[%s1 + $0x2d0] sm:$0xff]
  %v134 = vld [vmem:[%s1 + $0x2d8] sm:$0xff]
  %v135 = vld [vmem:[%s1 + $0x2e0] sm:$0xff]
  %v136 = vld [vmem:[%s1 + $0x2e8] sm:$0xff]
  %v137 = vld [vmem:[%s1 + $0x2f0] sm:$0xff]
  %v138 = vld [vmem:[%s1 + $0x2f8] sm:$0xff]
  %v139 = vld [vmem:[%s1 + $0x300] sm:$0xff]
  %v140 = vld [vmem:[%s1 + $0x308] sm:$0xff]
  %v141 = vld [vmem:[%s1 + $0x310] sm:$0xff]
  %v142 = vld [vmem:[%s1 + $0x318] sm:$0xff]
  %v143 = vld [vmem:[%s1 + $0x320] sm:$0xff]
  %v144 = vld [vmem:[%s1 + $0x328] sm:$0xff]
  %v145 = vld [vmem:[%s1 + $0x330] sm:$0xff]
  %v146 = vld [vmem:[%s1 + $0x338] sm:$0xff]
  %v147 = vld [vmem:[%s1 + $0x340] sm:$0xff]
  %v148 = vld [vmem:[%s1 + $0x348] sm:$0xff]
  %v149 = vld [vmem:[%s1 + $0x350] sm:$0xff]
  %v150 = vld [vmem:[%s1 + $0x358] sm:$0xff]
  %v151 = vld [vmem:[%s1 + $0x360] sm:$0xff]
  %v152 = vld [vmem:[%s1 + $0x368] sm:$0xff]
  %v153 = vld [vmem:[%s1 + $0x370] sm:$0xff]
  %v154 = vld [vmem:[%s1 + $0x378] sm:$0xff]
  %v155 = vld [vmem:[%s1 + $0x380] sm:$0xff]
  %v156 = vld [vmem:[%s1 + $0x388] sm:$0xff]
  %v157 = vld [vmem:[%s1 + $0x390] sm:$0xff]
  %v158 = vld [vmem:[%s1 + $0x398] sm:$0xff]
  %v159 = vld [vmem:[%s1 + $0x3a0] sm:$0xff]
  %v160 = vld [vmem:[%s1 + $0x3a8] sm:$0xff]
  %v161 = vld [vmem:[%s1 + $0x3b0] sm:$0xff]
  %v162 = vld [vmem:[%s1 + $0x3b8] sm:$0xff]
  %v163 = vld [vmem:[%s1 + $0x3c0] sm:$0xff]
  %v164 = vld [vmem:[%s1 + $0x3c8] sm:$0xff]
  %v165 = vld [vmem:[%s1 + $0x3d0] sm:$0xff]
  %v166 = vld [vmem:[%s1 + $0x3d8] sm:$0xff]
  %v167 = vld [vmem:[%s1 + $0x3e0] sm:$0xff]
  %v168 = vld [vmem:[%s1 + $0x3e8] sm:$0xff]
  %v169 = vld [vmem:[%s1 + $0x3f0] sm:$0xff]
  %v170 = vld [vmem:[%s1 + $0x3f8] sm:$0xff]
  %v171 = vld [vmem:[%s1 + $0x400] sm:$0xff]
  %v172 = vld [vmem:[%s1 + $0x408] sm:$0xff]
  %v173 = vld [vmem:[%s1 + $0x410] sm:$0xff]
  %v174 = vld [vmem:[%s1 + $0x418] sm:$0xff]
  %v175 = vld [vmem:[%s1 + $0x420] sm:$0xff]
  %v176 = vld [vmem:[%s1 + $0x428] sm:$0xff]
  %v177 = vld [vmem:[%s1 + $0x430] sm:$0xff]
  %v178 = vld [vmem:[%s1 + $0x438] sm:$0xff]
  %v179 = vld [vmem:[%s1 + $0x440] sm:$0xff]
  %v180 = vld [vmem:[%s1 + $0x448] sm:$0xff]
  %v181 = vld [vmem:[%s1 + $0x450] sm:$0xff]
  %v182 = vld [vmem:[%s1 + $0x458] sm:$0xff]
  %v183 = vld [vmem:[%s1 + $0x460] sm:$0xff]
  %v184 = vld [vmem:[%s1 + $0x468] sm:$0xff]
  %v185 = vld [vmem:[%s1 + $0x470] sm:$0xff]
  %v186 = vld [vmem:[%s1 + $0x478] sm:$0xff]
  %v187 = vld [vmem:[%s1 + $0x480] sm:$0xff]
  %v188 = vld [vmem:[%s1 + $0x488] sm:$0xff]
  %v189 = vld [vmem:[%s1 + $0x490] sm:$0xff]
  %v190 = vld [vmem:[%s1 + $0x498] sm:$0xff]
  %v191 = vld [vmem:[%s1 + $0x4a0] sm:$0xff]
  %v192 = vld [vmem:[%s1 + $0x4a8] sm:$0xff]
  %v193 = vld [vmem:[%s1 + $0x4b0] sm:$0xff]
  %v194 = vld [vmem:[%s1 + $0x4b8] sm:$0xff]
  %v195 = vld [vmem:[%s1 + $0x4c0] sm:$0xff]
  %v196 = vld [vmem:[%s1 + $0x4c8] sm:$0xff]
  %v197 = vld [vmem:[%s1 + $0x4d0] sm:$0xff]
  %v198 = vld [vmem:[%s1 + $0x4d8] sm:$0xff]
  %v199 = vld [vmem:[%s1 + $0x4e0] sm:$0xff]
  %v200 = vld [vmem:[%s1 + $0x4e8] sm:$0xff]
  %v201 = vld [vmem:[%s1 + $0x4f0] sm:$0xff]
  %v202 = vld [vmem:[%s1 + $0x4f8] sm:$0xff]
  %v203 = vld [vmem:[%s1 + $0x500] sm:$0xff]
  %v204 = vld [vmem:[%s1 + $0x508] sm:$0xff]
  %v205 = vld [vmem:[%s1 + $0x510] sm:$0xff]
  %v206 = vld [vmem:[%s1 + $0x518] sm:$0xff]
  %v207 = vld [vmem:[%s1 + $0x520] sm:$0xff]
  %v208 = vld [vmem:[%s1 + $0x528] sm:$0xff]
  %v209 = vld [vmem:[%s1 + $0x530] sm:$0xff]
  %v210 = vld [vmem:[%s1 + $0x538] sm:$0xff]
  %v211 = vld [vmem:[%s1 + $0x540] sm:$0xff]
  %v212 = vld [vmem:[%s1 + $0x548] sm:$0xff]
  %v213 = vld [vmem:[%s1 + $0x550] sm:$0xff]
  %v214 = vld [vmem:[%s1 + $0x558] sm:$0xff]
  %v215 = vld [vmem:[%s1 + $0x560] sm:$0xff]
  %v216 = vld [vmem:[%s1 + $0x568] sm:$0xff]
  %v217 = vld [vmem:[%s1 + $0x570] sm:$0xff]
  %v218 = vld [vmem:[%s1 + $0x578] sm:$0xff]
  %v219 = vld [vmem:[%s1 + $0x580] sm:$0xff]
  %v220 = vld [vmem:[%s1 + $0x588] sm:$0xff]
  %v221 = vld [vmem:[%s1 + $0x590] sm:$0xff]
  %v222 = vld [vmem:[%s1 + $0x598] sm:$0xff]
  %v223 = vld [vmem:[%s1 + $0x5a0] sm:$0xff]
  %v224 = vld [vmem:[%s1 + $0x5a8] sm:$0xff]
  %v225 = vld [vmem:[%s1 + $0x5b0] sm:$0xff]
  %v226 = vld [vmem:[%s1 + $0x5b8] sm:$0xff]
  %v227 = vld [vmem:[%s1 + $0x5c0] sm:$0xff]
  %v228 = vld [vmem:[%s1 + $0x5c8] sm:$0xff]
  %v229 = vld [vmem:[%s1 + $0x5d0] sm:$0xff]
  %v230 = vld [vmem:[%s1 + $0x5d8] sm:$0xff]
  %v231 = vld [vmem:[%s1 + $0x5e0] sm:$0xff]
  %v232 = vld [vmem:[%s1 + $0x5e8] sm:$0xff]
  %v233 = vld [vmem:[%s1 + $0x5f0] sm:$0xff]
  %v234 = vld [vmem:[%s1 + $0x5f8] sm:$0xff]
  %v235 = vld [vmem:[%s1 + $0x600] sm:$0xff]
  %v236 = vld [vmem:[%s1 + $0x608] sm:$0xff]
  %v237 = vld [vmem:[%s1 + $0x610] sm:$0xff]
  %v238 = vld [vmem:[%s1 + $0x618] sm:$0xff]
  %v239 = vld [vmem:[%s1 + $0x620] sm:$0xff]
  %v240 = vld [vmem:[%s1 + $0x628] sm:$0xff]
  %v241 = vld [vmem:[%s1 + $0x630] sm:$0xff]
  %v242 = vld [vmem:[%s1 + $0x638] sm:$0xff]
  %v243 = vld [vmem:[%s1 + $0x640] sm:$0xff]
  %v244 = vld [vmem:[%s1 + $0x648] sm:$0xff]
  %v245 = vld [vmem:[%s1 + $0x650] sm:$0xff]
  %v246 = vld [vmem:[%s1 + $0x658] sm:$0xff]
  %v247 = vld [vmem:[%s1 + $0x660] sm:$0xff]
  %v248 = vld [vmem:[%s1 + $0x668] sm:$0xff]
  %v249 = vld [vmem:[%s1 + $0x670] sm:$0xff]
  %v250 = vld [vmem:[%s1 + $0x678] sm:$0xff]
  %v251 = vld [vmem:[%s1 + $0x680] sm:$0xff]
  %v252 = vld [vmem:[%s1 + $0x688] sm:$0xff]
  %v253 = vld [vmem:[%s1 + $0x690] sm:$0xff]
  %v254 = vld [vmem:[%s1 + $0x698] sm:$0xff]
  %v255 = vld [vmem:[%s1 + $0x6a0] sm:$0xff]
  %v256 = vld [vmem:[%s1 + $0x6a8] sm:$0xff]
  %v257 = vld [vmem:[%s1 + $0x6b0] sm:$0xff]
  %v258 = vld [vmem:[%s1 + $0x6b8] sm:$0xff]
  %v259 = vld [vmem:[%s1 + $0x6c0] sm:$0xff]
  %v260 = vld [vmem:[%s1 + $0x6c8] sm:$0xff]
  %v261 = vld [vmem:[%s1 + $0x6d0] sm:$0xff]
  %v262 = vld [vmem:[%s1 + $0x6d8] sm:$0xff]
  %v263 = vld [vmem:[%s1 + $0x6e0] sm:$0xff]
  %v264 = vld [vmem:[%s1 + $0x6e8] sm:$0xff]
  %v265 = vld [vmem:[%s1 + $0x6f0] sm:$0xff]
  %v266 = vld [vmem:[%s1 + $0x6f8] sm:$0xff]
  %v267 = vld [vmem:[%s1 + $0x700] sm:$0xff]
  %v268 = vld [vmem:[%s1 + $0x708] sm:$0xff]
  %v269 = vld [vmem:[%s1 + $0x710] sm:$0xff]
  %v270 = vld [vmem:[%s1 + $0x718] sm:$0xff]
  %v271 = vld [vmem:[%s1 + $0x720] sm:$0xff]
  %v272 = vld [vmem:[%s1 + $0x728] sm:$0xff]
  %v273 = vld [vmem:[%s1 + $0x730] sm:$0xff]
  %v274 = vld [vmem:[%s1 + $0x738] sm:$0xff]
  %v275 = vld [vmem:[%s1 + $0x740] sm:$0xff]
  %v276 = vld [vmem:[%s1 + $0x748] sm:$0xff]
  %v277 = vld [vmem:[%s1 + $0x750] sm:$0xff]
  %v278 = vld [vmem:[%s1 + $0x758] sm:$0xff]
  %v279 = vld [vmem:[%s1 + $0x760] sm:$0xff]
  %v280 = vld [vmem:[%s1 + $0x768] sm:$0xff]
  %v281 = vld [vmem:[%s1 + $0x770] sm:$0xff]
  %v282 = vld [vmem:[%s1 + $0x778] sm:$0xff]
  %v283 = vld [vmem:[%s1 + $0x780] sm:$0xff]
  %v284 = vld [vmem:[%s1 + $0x788] sm:$0xff]
  %v285 = vld [vmem:[%s1 + $0x790] sm:$0xff]
  %v286 = vld [vmem:[%s1 + $0x798] sm:$0xff]
  %v287 = vld [vmem:[%s1 + $0x7a0] sm:$0xff]
  %v288 = vld [vmem:[%s1 + $0x7a8] sm:$0xff]
  %v289 = vld [vmem:[%s1 + $0x7b0] sm:$0xff]
  %v290 = vld [vmem:[%s1 + $0x7b8] sm:$0xff]
  %v291 = vld [vmem:[%s1 + $0x7c0] sm:$0xff]
  %v292 = vld [vmem:[%s1 + $0x7c8] sm:$0xff]
  %v293 = vld [vmem:[%s1 + $0x7d0] sm:$0xff]
  %v294 = vld [vmem:[%s1 + $0x7d8] sm:$0xff]
  %v295 = vld [vmem:[%s1 + $0x7e0] sm:$0xff]
  %v296 = vld [vmem:[%s1 + $0x7e8] sm:$0xff]
  %v297 = vld [vmem:[%s1 + $0x7f0] sm:$0xff]
  %v298 = vld [vmem:[%s1 + $0x7f8] sm:$0xff]
  %v299 = vld [vmem:[%s1 + $0x800] sm:$0xff]
  %v300 = vld [vmem:[%s1 + $0x808] sm:$0xff]
  %v301 = vld [vmem:[%s1 + $0x810] sm:$0xff]
  %v302 = vld [vmem:[%s1 + $0x818] sm:$0xff]
  %v303 = vld [vmem:[%s1 + $0x820] sm:$0xff]
  %v304 = vld [vmem:[%s1 + $0x828] sm:$0xff]
  %v305 = vld [vmem:[%s1 + $0x830] sm:$0xff]
  %v306 = vld [vmem:[%s1 + $0x838] sm:$0xff]
  %v307 = vld [vmem:[%s1 + $0x840] sm:$0xff]
  %v308 = vld [vmem:[%s1 + $0x848] sm:$0xff]
  %v309 = vld [vmem:[%s1 + $0x850] sm:$0xff]
  %v310 = vld [vmem:[%s1 + $0x858] sm:$0xff]
  %v311 = vld [vmem:[%s1 + $0x860] sm:$0xff]
  %v312 = vld [vmem:[%s1 + $0x868] sm:$0xff]
  %v313 = vld [vmem:[%s1 + $0x870] sm:$0xff]
  %v314 = vld [vmem:[%s1 + $0x878] sm:$0xff]
  %v315 = vld [vmem:[%s1 + $0x880] sm:$0xff]
  %v316 = vld [vmem:[%s1 + $0x888] sm:$0xff]
  %v317 = vld [vmem:[%s1 + $0x890] sm:$0xff]
  %v318 = vld [vmem:[%s1 + $0x898] sm:$0xff]
  %v319 = vld [vmem:[%s1 + $0x8a0] sm:$0xff]
  %v320 = vld [vmem:[%s1 + $0x8a8] sm:$0xff]
  %v321 = vld [vmem:[%s1 + $0x8b0] sm:$0xff]
  %v322 = vld [vmem:[%s1 + $0x8b8] sm:$0xff]
  %v323 = vld [vmem:[%s1 + $0x8c0] sm:$0xff]
  %v324 = vld [vmem:[%s1 + $0x8c8] sm:$0xff]
  %v325 = vld [vmem:[%s1 + $0x8d0] sm:$0xff]
  %v326 = vld [vmem:[%s1 + $0x8d8] sm:$0xff]
  %v327 = vld [vmem:[%s1 + $0x8e0] sm:$0xff]
  %v328 = vld [vmem:[%s1 + $0x8e8] sm:$0xff]
  %v329 = vld [vmem:[%s1 + $0x8f0] sm:$0xff]
  %v330 = vld [vmem:[%s1 + $0x8f8] sm:$0xff]
  %v331 = vld [vmem:[%s1 + $0x900] sm:$0xff]
  %v332 = vld [vmem:[%s1 + $0x908] sm:$0xff]
  %v333 = vld [vmem:[%s1 + $0x910] sm:$0xff]
  %v334 = vld [vmem:[%s1 + $0x918] sm:$0xff]
  %v335 = vld [vmem:[%s1 + $0x920] sm:$0xff]
  %v336 = vld [vmem:[%s1 + $0x928] sm:$0xff]
  %v337 = vld [vmem:[%s1 + $0x930] sm:$0xff]
  %v338 = vld [vmem:[%s1 + $0x938] sm:$0xff]
  %v339 = vld [vmem:[%s1 + $0x940] sm:$0xff]
  %v340 = vld [vmem:[%s1 + $0x948] sm:$0xff]
  %v341 = vld [vmem:[%s1 + $0x950] sm:$0xff]
  %v342 = vld [vmem:[%s1 + $0x958] sm:$0xff]
  %v343 = vld [vmem:[%s1 + $0x960] sm:$0xff]
  %v344 = vld [vmem:[%s1 + $0x968] sm:$0xff]
  %v345 = vld [vmem:[%s1 + $0x970] sm:$0xff]
  %v346 = vld [vmem:[%s1 + $0x978] sm:$0xff]
  %v347 = vld [vmem:[%s1 + $0x980] sm:$0xff]
  %v348 = vld [vmem:[%s1 + $0x988] sm:$0xff]
  %v349 = vld [vmem:[%s1 + $0x990] sm:$0xff]
  %v350 = vld [vmem:[%s1 + $0x998] sm:$0xff]
  %v351 = vld [vmem:[%s1 + $0x9a0] sm:$0xff]
  %v352 = vld [vmem:[%s1 + $0x9a8] sm:$0xff]
  %v353 = vld [vmem:[%s1 + $0x9b0] sm:$0xff]
  %v354 = vld [vmem:[%s1 + $0x9b8] sm:$0xff]
  %v355 = vld [vmem:[%s1 + $0x9c0] sm:$0xff]
  %v356 = vld [vmem:[%s1 + $0x9c8] sm:$0xff]
  %v357 = vld [vmem:[%s1 + $0x9d0] sm:$0xff]
  %v358 = vld [vmem:[%s1 + $0x9d8] sm:$0xff]
  %v359 = vld [vmem:[%s1 + $0x9e0] sm:$0xff]
  %v360 = vld [vmem:[%s1 + $0x9e8] sm:$0xff]
  %v361 = vld [vmem:[%s1 + $0x9f0] sm:$0xff]
  %v362 = vld [vmem:[%s1 + $0x9f8] sm:$0xff]
  %v363 = vld [vmem:[%s1 + $0xa00] sm:$0xff]
  %v364 = vld [vmem:[%s1 + $0xa08] sm:$0xff]
  %v365 = vld [vmem:[%s1 + $0xa10] sm:$0xff]
  %v366 = vld [vmem:[%s1 + $0xa18] sm:$0xff]
  %v367 = vld [vmem:[%s1 + $0xa20] sm:$0xff]
  %v368 = vld [vmem:[%s1 + $0xa28] sm:$0xff]
  %v369 = vld [vmem:[%s1 + $0xa30] sm:$0xff]
  %v370 = vld [vmem:[%s1 + $0xa38] sm:$0xff]
  %v371 = vld [vmem:[%s1 + $0xa40] sm:$0xff]
  %v372 = vld [vmem:[%s1 + $0xa48] sm:$0xff]
  %v373 = vld [vmem:[%s1 + $0xa50] sm:$0xff]
  %v374 = vld [vmem:[%s1 + $0xa58] sm:$0xff]
  %v375 = vld [vmem:[%s1 + $0xa60] sm:$0xff]
  %v376 = vld [vmem:[%s1 + $0xa68] sm:$0xff]
  %v377 = vld [vmem:[%s1 + $0xa70] sm:$0xff]
  %v378 = vld [vmem:[%s1 + $0xa78] sm:$0xff]
  %v379 = vld [vmem:[%s1 + $0xa80] sm:$0xff]
  %v380 = vld [vmem:[%s1 + $0xa88] sm:$0xff]
  %v381 = vld [vmem:[%s1 + $0xa90] sm:$0xff]
  %v382 = vld [vmem:[%s1 + $0xa98] sm:$0xff]
  %v383 = vld [vmem:[%s1 + $0xaa0] sm:$0xff]
  %v384 = vld [vmem:[%s1 + $0xaa8] sm:$0xff]
  %v385 = vld [vmem:[%s1 + $0xab0] sm:$0xff]
  %v386 = vld [vmem:[%s1 + $0xab8] sm:$0xff]
  %v387 = vld [vmem:[%s1 + $0xac0] sm:$0xff]
  %v388 = vld [vmem:[%s1 + $0xac8] sm:$0xff]
  %v389 = vld [vmem:[%s1 + $0xad0] sm:$0xff]
  %v390 = vld [vmem:[%s1 + $0xad8] sm:$0xff]
  %v391 = vld [vmem:[%s1 + $0xae0] sm:$0xff]
  %v392 = vld [vmem:[%s1 + $0xae8] sm:$0xff]
  %v393 = vld [vmem:[%s1 + $0xaf0] sm:$0xff]
  %v394 = vld [vmem:[%s1 + $0xaf8] sm:$0xff]
  %v395 = vld [vmem:[%s1 + $0xb00] sm:$0xff]
  %v396 = vld [vmem:[%s1 + $0xb08] sm:$0xff]
  %v397 = vld [vmem:[%s1 + $0xb10] sm:$0xff]
  %v398 = vld [vmem:[%s1 + $0xb18] sm:$0xff]
  %v399 = vld [vmem:[%s1 + $0xb20] sm:$0xff]
  %v400 = vld [vmem:[%s1 + $0xb28] sm:$0xff]
  %v401 = vld [vmem:[%s1 + $0xb30] sm:$0xff]
  %v402 = vld [vmem:[%s1 + $0xb38] sm:$0xff]
  %v403 = vld [vmem:[%s1 + $0xb40] sm:$0xff]
  %v404 = vld [vmem:[%s1 + $0xb48] sm:$0xff]
  %v405 = vld [vmem:[%s1 + $0xb50] sm:$0xff]
  %v406 = vld [vmem:[%s1 + $0xb58] sm:$0xff]
  %v407 = vld [vmem:[%s1 + $0xb60] sm:$0xff]
  %v408 = vld [vmem:[%s1 + $0xb68] sm:$0xff]
  %v409 = vld [vmem:[%s1 + $0xb70] sm:$0xff]
  %v410 = vld [vmem:[%s1 + $0xb78] sm:$0xff]
  %v411 = vld [vmem:[%s1 + $0xb80] sm:$0xff]
  %v412 = vld [vmem:[%s1 + $0xb88] sm:$0xff]
  %v413 = vld [vmem:[%s1 + $0xb90] sm:$0xff]
  %v414 = vld [vmem:[%s1 + $0xb98] sm:$0xff]
  %v415 = vld [vmem:[%s1 + $0xba0] sm:$0xff]
  %v416 = vld [vmem:[%s1 + $0xba8] sm:$0xff]
  %v417 = vld [vmem:[%s1 + $0xbb0] sm:$0xff]
  %v418 = vld [vmem:[%s1 + $0xbb8] sm:$0xff]
  %v419 = vld [vmem:[%s1 + $0xbc0] sm:$0xff]
  %v420 = vld [vmem:[%s1 + $0xbc8] sm:$0xff]
  %v421 = vld [vmem:[%s1 + $0xbd0] sm:$0xff]
  %v422 = vld [vmem:[%s1 + $0xbd8] sm:$0xff]
  %v423 = vld [vmem:[%s1 + $0xbe0] sm:$0xff]
  %v424 = vld [vmem:[%s1 + $0xbe8] sm:$0xff]
  %v425 = vld [vmem:[%s1 + $0xbf0] sm:$0xff]
  %v426 = vld [vmem:[%s1 + $0xbf8] sm:$0xff]
  %v427 = vld [vmem:[%s1 + $0xc00] sm:$0xff]
  %v428 = vld [vmem:[%s1 + $0xc08] sm:$0xff]
  %v429 = vld [vmem:[%s1 + $0xc10] sm:$0xff]
  %v430 = vld [vmem:[%s1 + $0xc18] sm:$0xff]
  %v431 = vld [vmem:[%s1 + $0xc20] sm:$0xff]
  %v432 = vld [vmem:[%s1 + $0xc28] sm:$0xff]
  %v433 = vld [vmem:[%s1 + $0xc30] sm:$0xff]
  %v434 = vld [vmem:[%s1 + $0xc38] sm:$0xff]
  %v435 = vld [vmem:[%s1 + $0xc40] sm:$0xff]
  %v436 = vld [vmem:[%s1 + $0xc48] sm:$0xff]
  %v437 = vld [vmem:[%s1 + $0xc50] sm:$0xff]
  %v438 = vld [vmem:[%s1 + $0xc58] sm:$0xff]
  %v439 = vld [vmem:[%s1 + $0xc60] sm:$0xff]
  %v440 = vld [vmem:[%s1 + $0xc68] sm:$0xff]
  %v441 = vld [vmem:[%s1 + $0xc70] sm:$0xff]
  %v442 = vld [vmem:[%s1 + $0xc78] sm:$0xff]
  %445 = vst [vmem:[#allocation1] ss:$4 sm:$0xff] %v41
  %s446 = scalar_lea.vmem [#allocation1], 32
  %447 = vst [vmem:[%s446] ss:$4 sm:$0xff] %v42
  %v448 = vld.sshfl [vmem:[#allocation1] sm:$0xff pattern:$0x73625140]
  %v449 = vld.sshfl [vmem:[#allocation1 + $0x8] sm:$0xff pattern:$0x73625140]
  %v450 = vld.sshfl [vmem:[#allocation1 + $0x10] sm:$0xff pattern:$0x73625140]
  %v451 = vld.sshfl [vmem:[#allocation1 + $0x18] sm:$0xff pattern:$0x73625140]
  %v452 = vld.sshfl [vmem:[#allocation1 + $0x20] sm:$0xff pattern:$0x73625140]
  %v458 = vand.u32 %v118, 4294901760
  %459 = vmatpush.msra.mxu0 %v458
  %v460 = vand.u32 %v113, 4294901760
  %461 = vmatpush.msra.mxu0 %v460
  %v462 = vand.u32 %v108, 4294901760
  %463 = vmatpush.msra.mxu0 %v462
  %v464 = vand.u32 %v103, 4294901760
  %465 = vmatpush.msra.mxu0 %v464
  %v466 = vand.u32 %v98, 4294901760
  %467 = vmatpush.msra.mxu0 %v466
  %v468 = vand.u32 %v93, 4294901760
  %469 = vmatpush.msra.mxu0 %v468
  %v470 = vand.u32 %v88, 4294901760
  %471 = vmatpush.msra.mxu0 %v470
  %v472 = vand.u32 %v83, 4294901760
  %473 = vmatpush.msra.mxu0 %v472
  %v474 = vand.u32 %v78, 4294901760
  %475 = vmatpush.msra.mxu0 %v474
  %v476 = vand.u32 %v73, 4294901760
  %477 = vmatpush.msra.mxu0 %v476
  %v478 = vand.u32 %v68, 4294901760
  %479 = vmatpush.msra.mxu0 %v478
  %v480 = vand.u32 %v63, 4294901760
  %481 = vmatpush.msra.mxu0 %v480
  %v482 = vand.u32 %v58, 4294901760
  %483 = vmatpush.msra.mxu0 %v482
  %v484 = vand.u32 %v53, 4294901760
  %485 = vmatpush.msra.mxu0 %v484
  %v486 = vand.u32 %v48, 4294901760
  %487 = vmatpush.msra.mxu0 %v486
  %v488 = vand.u32 %v43, 4294901760
  %489 = vmatpush.msra.mxu0 %v488
  %v490 = vand.u32 %v448, 4294901760
  %v491 = vsub.f32 %v448, %v490
  %v492 = vand.u32 %v491, 4294901760
  %v493 = vsub.f32 %v491, %v492
  %v494 = vand.u32 %v493, 4294901760
  %495 = vmatmul.f32.gmra.mxu0 %v494
  %v496 = vpop.f32.mrf.mxu0
  %v497 = vadd.f32 0.0, %v496
  %498 = vdwg.mxu0
  %v499 = vand.u32 %v118, 4294901760
  %v500 = vsub.f32 %v118, %v499
  %v501 = vand.u32 %v500, 4294901760
  %v502 = vsub.f32 %v500, %v501
  %v503 = vand.u32 %v502, 4294901760
  %504 = vmatpush.msra.mxu0 %v503
  %v505 = vand.u32 %v113, 4294901760
  %v506 = vsub.f32 %v113, %v505
  %v507 = vand.u32 %v506, 4294901760
  %v508 = vsub.f32 %v506, %v507
  %v509 = vand.u32 %v508, 4294901760
  %510 = vmatpush.msra.mxu0 %v509
  %v511 = vand.u32 %v108, 4294901760
  %v512 = vsub.f32 %v108, %v511
  %v513 = vand.u32 %v512, 4294901760
  %v514 = vsub.f32 %v512, %v513
  %v515 = vand.u32 %v514, 4294901760
  %516 = vmatpush.msra.mxu0 %v515
  %v517 = vand.u32 %v103, 4294901760
  %v518 = vsub.f32 %v103, %v517
  %v519 = vand.u32 %v518, 4294901760
  %v520 = vsub.f32 %v518, %v519
  %v521 = vand.u32 %v520, 4294901760
  %522 = vmatpush.msra.mxu0 %v521
  %v523 = vand.u32 %v98, 4294901760
  %v524 = vsub.f32 %v98, %v523
  %v525 = vand.u32 %v524, 4294901760
  %v526 = vsub.f32 %v524, %v525
  %v527 = vand.u32 %v526, 4294901760
  %528 = vmatpush.msra.mxu0 %v527
  %v529 = vand.u32 %v93, 4294901760
  %v530 = vsub.f32 %v93, %v529
  %v531 = vand.u32 %v530, 4294901760
  %v532 = vsub.f32 %v530, %v531
  %v533 = vand.u32 %v532, 4294901760
  %534 = vmatpush.msra.mxu0 %v533
  %v535 = vand.u32 %v88, 4294901760
  %v536 = vsub.f32 %v88, %v535
  %v537 = vand.u32 %v536, 4294901760
  %v538 = vsub.f32 %v536, %v537
  %v539 = vand.u32 %v538, 4294901760
  %540 = vmatpush.msra.mxu0 %v539
  %v541 = vand.u32 %v83, 4294901760
  %v542 = vsub.f32 %v83, %v541
  %v543 = vand.u32 %v542, 4294901760
  %v544 = vsub.f32 %v542, %v543
  %v545 = vand.u32 %v544, 4294901760
  %546 = vmatpush.msra.mxu0 %v545
  %v547 = vand.u32 %v78, 4294901760
  %v548 = vsub.f32 %v78, %v547
  %v549 = vand.u32 %v548, 4294901760
  %v550 = vsub.f32 %v548, %v549
  %v551 = vand.u32 %v550, 4294901760
  %552 = vmatpush.msra.mxu0 %v551
  %v553 = vand.u32 %v73, 4294901760
  %v554 = vsub.f32 %v73, %v553
  %v555 = vand.u32 %v554, 4294901760
  %v556 = vsub.f32 %v554, %v555
  %v557 = vand.u32 %v556, 4294901760
  %558 = vmatpush.msra.mxu0 %v557
  %v559 = vand.u32 %v68, 4294901760
  %v560 = vsub.f32 %v68, %v559
  %v561 = vand.u32 %v560, 4294901760
  %v562 = vsub.f32 %v560, %v561
  %v563 = vand.u32 %v562, 4294901760
  %564 = vmatpush.msra.mxu0 %v563
  %v565 = vand.u32 %v63, 4294901760
  %v566 = vsub.f32 %v63, %v565
  %v567 = vand.u32 %v566, 4294901760
  %v568 = vsub.f32 %v566, %v567
  %v569 = vand.u32 %v568, 4294901760
  %570 = vmatpush.msra.mxu0 %v569
  %v571 = vand.u32 %v58, 4294901760
  %v572 = vsub.f32 %v58, %v571
  %v573 = vand.u32 %v572, 4294901760
  %v574 = vsub.f32 %v572, %v573
  %v575 = vand.u32 %v574, 4294901760
  %576 = vmatpush.msra.mxu0 %v575
  %v577 = vand.u32 %v53, 4294901760
  %v578 = vsub.f32 %v53, %v577
  %v579 = vand.u32 %v578, 4294901760
  %v580 = vsub.f32 %v578, %v579
  %v581 = vand.u32 %v580, 4294901760
  %582 = vmatpush.msra.mxu0 %v581
  %v583 = vand.u32 %v48, 4294901760
  %v584 = vsub.f32 %v48, %v583
  %v585 = vand.u32 %v584, 4294901760
  %v586 = vsub.f32 %v584, %v585
  %v587 = vand.u32 %v586, 4294901760
  %588 = vmatpush.msra.mxu0 %v587
  %v589 = vand.u32 %v43, 4294901760
  %v590 = vsub.f32 %v43, %v589
  %v591 = vand.u32 %v590, 4294901760
  %v592 = vsub.f32 %v590, %v591
  %v593 = vand.u32 %v592, 4294901760
  %594 = vmatpush.msra.mxu0 %v593
  %v595 = vand.u32 %v448, 4294901760
  %596 = vmatmul.f32.gmra.mxu0 %v595
  %v597 = vpop.f32.mrf.mxu0
  %v598 = vadd.f32 %v497, %v597
  %599 = vdwg.mxu0
  %v600 = vand.u32 %v118, 4294901760
  %v601 = vsub.f32 %v118, %v600
  %602 = vmatpush.msra.mxu0 %v601
  %v603 = vand.u32 %v113, 4294901760
  %v604 = vsub.f32 %v113, %v603
  %605 = vmatpush.msra.mxu0 %v604
  %v606 = vand.u32 %v108, 4294901760
  %v607 = vsub.f32 %v108, %v606
  %608 = vmatpush.msra.mxu0 %v607
  %v609 = vand.u32 %v103, 4294901760
  %v610 = vsub.f32 %v103, %v609
  %611 = vmatpush.msra.mxu0 %v610
  %v612 = vand.u32 %v98, 4294901760
  %v613 = vsub.f32 %v98, %v612
  %614 = vmatpush.msra.mxu0 %v613
  %v615 = vand.u32 %v93, 4294901760
  %v616 = vsub.f32 %v93, %v615
  %617 = vmatpush.msra.mxu0 %v616
  %v618 = vand.u32 %v88, 4294901760
  %v619 = vsub.f32 %v88, %v618
  %620 = vmatpush.msra.mxu0 %v619
  %v621 = vand.u32 %v83, 4294901760
  %v622 = vsub.f32 %v83, %v621
  %623 = vmatpush.msra.mxu0 %v622
  %v624 = vand.u32 %v78, 4294901760
  %v625 = vsub.f32 %v78, %v624
  %626 = vmatpush.msra.mxu0 %v625
  %v627 = vand.u32 %v73, 4294901760
  %v628 = vsub.f32 %v73, %v627
  %629 = vmatpush.msra.mxu0 %v628
  %v630 = vand.u32 %v68, 4294901760
  %v631 = vsub.f32 %v68, %v630
  %632 = vmatpush.msra.mxu0 %v631
  %v633 = vand.u32 %v63, 4294901760
  %v634 = vsub.f32 %v63, %v633
  %635 = vmatpush.msra.mxu0 %v634
  %v636 = vand.u32 %v58, 4294901760
  %v637 = vsub.f32 %v58, %v636
  %638 = vmatpush.msra.mxu0 %v637
  %v639 = vand.u32 %v53, 4294901760
  %v640 = vsub.f32 %v53, %v639
  %641 = vmatpush.msra.mxu0 %v640
  %v642 = vand.u32 %v48, 4294901760
  %v643 = vsub.f32 %v48, %v642
  %644 = vmatpush.msra.mxu0 %v643
  %v645 = vand.u32 %v43, 4294901760
  %v646 = vsub.f32 %v43, %v645
  %647 = vmatpush.msra.mxu0 %v646
  %v648 = vand.u32 %v448, 4294901760
  %v649 = vsub.f32 %v448, %v648
  %650 = vmatmul.f32.gmra.mxu0 %v649
  %v651 = vpop.f32.mrf.mxu0
  %v652 = vadd.f32 %v598, %v651
  %653 = vdwg.mxu0
  %v654 = vand.u32 %v118, 4294901760
  %655 = vmatpush.msra.mxu0 %v654
  %v656 = vand.u32 %v113, 4294901760
  %657 = vmatpush.msra.mxu0 %v656
  %v658 = vand.u32 %v108, 4294901760
  %659 = vmatpush.msra.mxu0 %v658
  %v660 = vand.u32 %v103, 4294901760
  %661 = vmatpush.msra.mxu0 %v660
  %v662 = vand.u32 %v98, 4294901760
  %663 = vmatpush.msra.mxu0 %v662
  %v664 = vand.u32 %v93, 4294901760
  %665 = vmatpush.msra.mxu0 %v664
  %v666 = vand.u32 %v88, 4294901760
  %667 = vmatpush.msra.mxu0 %v666
  %v668 = vand.u32 %v83, 4294901760
  %669 = vmatpush.msra.mxu0 %v668
  %v670 = vand.u32 %v78, 4294901760
  %671 = vmatpush.msra.mxu0 %v670
  %v672 = vand.u32 %v73, 4294901760
  %673 = vmatpush.msra.mxu0 %v672
  %v674 = vand.u32 %v68, 4294901760
  %675 = vmatpush.msra.mxu0 %v674
  %v676 = vand.u32 %v63, 4294901760
  %677 = vmatpush.msra.mxu0 %v676
  %v678 = vand.u32 %v58, 4294901760
  %679 = vmatpush.msra.mxu0 %v678
  %v680 = vand.u32 %v53, 4294901760
  %681 = vmatpush.msra.mxu0 %v680
  %v682 = vand.u32 %v48, 4294901760
  %683 = vmatpush.msra.mxu0 %v682
  %v684 = vand.u32 %v43, 4294901760
  %685 = vmatpush.msra.mxu0 %v684
  %v686 = vand.u32 %v448, 4294901760
  %v687 = vsub.f32 %v448, %v686
  %v688 = vand.u32 %v687, 4294901760
  %689 = vmatmul.f32.gmra.mxu0 %v688
  %v690 = vpop.f32.mrf.mxu0
  %v691 = vadd.f32 %v652, %v690
  %692 = vdwg.mxu0
  %v693 = vand.u32 %v118, 4294901760
  %v694 = vsub.f32 %v118, %v693
  %v695 = vand.u32 %v694, 4294901760
  %696 = vmatpush.msra.mxu0 %v695
  %v697 = vand.u32 %v113, 4294901760
  %v698 = vsub.f32 %v113, %v697
  %v699 = vand.u32 %v698, 4294901760
  %700 = vmatpush.msra.mxu0 %v699
  %v701 = vand.u32 %v108, 4294901760
  %v702 = vsub.f32 %v108, %v701
  %v703 = vand.u32 %v702, 4294901760
  %704 = vmatpush.msra.mxu0 %v703
  %v705 = vand.u32 %v103, 4294901760
  %v706 = vsub.f32 %v103, %v705
  %v707 = vand.u32 %v706, 4294901760
  %708 = vmatpush.msra.mxu0 %v707
  %v709 = vand.u32 %v98, 4294901760
  %v710 = vsub.f32 %v98, %v709
  %v711 = vand.u32 %v710, 4294901760
  %712 = vmatpush.msra.mxu0 %v711
  %v713 = vand.u32 %v93, 4294901760
  %v714 = vsub.f32 %v93, %v713
  %v715 = vand.u32 %v714, 4294901760
  %716 = vmatpush.msra.mxu0 %v715
  %v717 = vand.u32 %v88, 4294901760
  %v718 = vsub.f32 %v88, %v717
  %v719 = vand.u32 %v718, 4294901760
  %720 = vmatpush.msra.mxu0 %v719
  %v721 = vand.u32 %v83, 4294901760
  %v722 = vsub.f32 %v83, %v721
  %v723 = vand.u32 %v722, 4294901760
  %724 = vmatpush.msra.mxu0 %v723
  %v725 = vand.u32 %v78, 4294901760
  %v726 = vsub.f32 %v78, %v725
  %v727 = vand.u32 %v726, 4294901760
  %728 = vmatpush.msra.mxu0 %v727
  %v729 = vand.u32 %v73, 4294901760
  %v730 = vsub.f32 %v73, %v729
  %v731 = vand.u32 %v730, 4294901760
  %732 = vmatpush.msra.mxu0 %v731
  %v733 = vand.u32 %v68, 4294901760
  %v734 = vsub.f32 %v68, %v733
  %v735 = vand.u32 %v734, 4294901760
  %736 = vmatpush.msra.mxu0 %v735
  %v737 = vand.u32 %v63, 4294901760
  %v738 = vsub.f32 %v63, %v737
  %v739 = vand.u32 %v738, 4294901760
  %740 = vmatpush.msra.mxu0 %v739
  %v741 = vand.u32 %v58, 4294901760
  %v742 = vsub.f32 %v58, %v741
  %v743 = vand.u32 %v742, 4294901760
  %744 = vmatpush.msra.mxu0 %v743
  %v745 = vand.u32 %v53, 4294901760
  %v746 = vsub.f32 %v53, %v745
  %v747 = vand.u32 %v746, 4294901760
  %748 = vmatpush.msra.mxu0 %v747
  %v749 = vand.u32 %v48, 4294901760
  %v750 = vsub.f32 %v48, %v749
  %v751 = vand.u32 %v750, 4294901760
  %752 = vmatpush.msra.mxu0 %v751
  %v753 = vand.u32 %v43, 4294901760
  %v754 = vsub.f32 %v43, %v753
  %v755 = vand.u32 %v754, 4294901760
  %756 = vmatpush.msra.mxu0 %v755
  %v757 = vand.u32 %v448, 4294901760
  %758 = vmatmul.f32.gmra.mxu0 %v757
  %v759 = vpop.f32.mrf.mxu0
  %v760 = vadd.f32 %v691, %v759
  %761 = vdwg.mxu0
  %v762 = vand.u32 %v118, 4294901760
  %763 = vmatpush.msra.mxu0 %v762
  %v764 = vand.u32 %v113, 4294901760
  %765 = vmatpush.msra.mxu0 %v764
  %v766 = vand.u32 %v108, 4294901760
  %767 = vmatpush.msra.mxu0 %v766
  %v768 = vand.u32 %v103, 4294901760
  %769 = vmatpush.msra.mxu0 %v768
  %v770 = vand.u32 %v98, 4294901760
  %771 = vmatpush.msra.mxu0 %v770
  %v772 = vand.u32 %v93, 4294901760
  %773 = vmatpush.msra.mxu0 %v772
  %v774 = vand.u32 %v88, 4294901760
  %775 = vmatpush.msra.mxu0 %v774
  %v776 = vand.u32 %v83, 4294901760
  %777 = vmatpush.msra.mxu0 %v776
  %v778 = vand.u32 %v78, 4294901760
  %779 = vmatpush.msra.mxu0 %v778
  %v780 = vand.u32 %v73, 4294901760
  %781 = vmatpush.msra.mxu0 %v780
  %v782 = vand.u32 %v68, 4294901760
  %783 = vmatpush.msra.mxu0 %v782
  %v784 = vand.u32 %v63, 4294901760
  %785 = vmatpush.msra.mxu0 %v784
  %v786 = vand.u32 %v58, 4294901760
  %787 = vmatpush.msra.mxu0 %v786
  %v788 = vand.u32 %v53, 4294901760
  %789 = vmatpush.msra.mxu0 %v788
  %v790 = vand.u32 %v48, 4294901760
  %791 = vmatpush.msra.mxu0 %v790
  %v792 = vand.u32 %v43, 4294901760
  %793 = vmatpush.msra.mxu0 %v792
  %v794 = vand.u32 %v448, 4294901760
  %795 = vmatmul.f32.gmra.mxu0 %v794
  %v796 = vpop.f32.mrf.mxu0
  %v797 = vadd.f32 %v760, %v796
  %798 = vdwg.mxu0
  %v799 = vand.u32 %v198, 4294901760
  %800 = vmatpush.msra.mxu0 %v799
  %v801 = vand.u32 %v193, 4294901760
  %802 = vmatpush.msra.mxu0 %v801
  %v803 = vand.u32 %v188, 4294901760
  %804 = vmatpush.msra.mxu0 %v803
  %v805 = vand.u32 %v183, 4294901760
  %806 = vmatpush.msra.mxu0 %v805
  %v807 = vand.u32 %v178, 4294901760
  %808 = vmatpush.msra.mxu0 %v807
  %v809 = vand.u32 %v173, 4294901760
  %810 = vmatpush.msra.mxu0 %v809
  %v811 = vand.u32 %v168, 4294901760
  %812 = vmatpush.msra.mxu0 %v811
  %v813 = vand.u32 %v163, 4294901760
  %814 = vmatpush.msra.mxu0 %v813
  %v815 = vand.u32 %v158, 4294901760
  %816 = vmatpush.msra.mxu0 %v815
  %v817 = vand.u32 %v153, 4294901760
  %818 = vmatpush.msra.mxu0 %v817
  %v819 = vand.u32 %v148, 4294901760
  %820 = vmatpush.msra.mxu0 %v819
  %v821 = vand.u32 %v143, 4294901760
  %822 = vmatpush.msra.mxu0 %v821
  %v823 = vand.u32 %v138, 4294901760
  %824 = vmatpush.msra.mxu0 %v823
  %v825 = vand.u32 %v133, 4294901760
  %826 = vmatpush.msra.mxu0 %v825
  %v827 = vand.u32 %v128, 4294901760
  %828 = vmatpush.msra.mxu0 %v827
  %v829 = vand.u32 %v123, 4294901760
  %830 = vmatpush.msra.mxu0 %v829
  %v831 = vand.u32 %v449, 4294901760
  %v832 = vsub.f32 %v449, %v831
  %v833 = vand.u32 %v832, 4294901760
  %v834 = vsub.f32 %v832, %v833
  %v835 = vand.u32 %v834, 4294901760
  %836 = vmatmul.f32.gmra.mxu0 %v835
  %v837 = vpop.f32.mrf.mxu0
  %v838 = vadd.f32 %v797, %v837
  %839 = vdwg.mxu0
  %v840 = vand.u32 %v198, 4294901760
  %v841 = vsub.f32 %v198, %v840
  %v842 = vand.u32 %v841, 4294901760
  %v843 = vsub.f32 %v841, %v842
  %v844 = vand.u32 %v843, 4294901760
  %845 = vmatpush.msra.mxu0 %v844
  %v846 = vand.u32 %v193, 4294901760
  %v847 = vsub.f32 %v193, %v846
  %v848 = vand.u32 %v847, 4294901760
  %v849 = vsub.f32 %v847, %v848
  %v850 = vand.u32 %v849, 4294901760
  %851 = vmatpush.msra.mxu0 %v850
  %v852 = vand.u32 %v188, 4294901760
  %v853 = vsub.f32 %v188, %v852
  %v854 = vand.u32 %v853, 4294901760
  %v855 = vsub.f32 %v853, %v854
  %v856 = vand.u32 %v855, 4294901760
  %857 = vmatpush.msra.mxu0 %v856
  %v858 = vand.u32 %v183, 4294901760
  %v859 = vsub.f32 %v183, %v858
  %v860 = vand.u32 %v859, 4294901760
  %v861 = vsub.f32 %v859, %v860
  %v862 = vand.u32 %v861, 4294901760
  %863 = vmatpush.msra.mxu0 %v862
  %v864 = vand.u32 %v178, 4294901760
  %v865 = vsub.f32 %v178, %v864
  %v866 = vand.u32 %v865, 4294901760
  %v867 = vsub.f32 %v865, %v866
  %v868 = vand.u32 %v867, 4294901760
  %869 = vmatpush.msra.mxu0 %v868
  %v870 = vand.u32 %v173, 4294901760
  %v871 = vsub.f32 %v173, %v870
  %v872 = vand.u32 %v871, 4294901760
  %v873 = vsub.f32 %v871, %v872
  %v874 = vand.u32 %v873, 4294901760
  %875 = vmatpush.msra.mxu0 %v874
  %v876 = vand.u32 %v168, 4294901760
  %v877 = vsub.f32 %v168, %v876
  %v878 = vand.u32 %v877, 4294901760
  %v879 = vsub.f32 %v877, %v878
  %v880 = vand.u32 %v879, 4294901760
  %881 = vmatpush.msra.mxu0 %v880
  %v882 = vand.u32 %v163, 4294901760
  %v883 = vsub.f32 %v163, %v882
  %v884 = vand.u32 %v883, 4294901760
  %v885 = vsub.f32 %v883, %v884
  %v886 = vand.u32 %v885, 4294901760
  %887 = vmatpush.msra.mxu0 %v886
  %v888 = vand.u32 %v158, 4294901760
  %v889 = vsub.f32 %v158, %v888
  %v890 = vand.u32 %v889, 4294901760
  %v891 = vsub.f32 %v889, %v890
  %v892 = vand.u32 %v891, 4294901760
  %893 = vmatpush.msra.mxu0 %v892
  %v894 = vand.u32 %v153, 4294901760
  %v895 = vsub.f32 %v153, %v894
  %v896 = vand.u32 %v895, 4294901760
  %v897 = vsub.f32 %v895, %v896
  %v898 = vand.u32 %v897, 4294901760
  %899 = vmatpush.msra.mxu0 %v898
  %v900 = vand.u32 %v148, 4294901760
  %v901 = vsub.f32 %v148, %v900
  %v902 = vand.u32 %v901, 4294901760
  %v903 = vsub.f32 %v901, %v902
  %v904 = vand.u32 %v903, 4294901760
  %905 = vmatpush.msra.mxu0 %v904
  %v906 = vand.u32 %v143, 4294901760
  %v907 = vsub.f32 %v143, %v906
  %v908 = vand.u32 %v907, 4294901760
  %v909 = vsub.f32 %v907, %v908
  %v910 = vand.u32 %v909, 4294901760
  %911 = vmatpush.msra.mxu0 %v910
  %v912 = vand.u32 %v138, 4294901760
  %v913 = vsub.f32 %v138, %v912
  %v914 = vand.u32 %v913, 4294901760
  %v915 = vsub.f32 %v913, %v914
  %v916 = vand.u32 %v915, 4294901760
  %917 = vmatpush.msra.mxu0 %v916
  %v918 = vand.u32 %v133, 4294901760
  %v919 = vsub.f32 %v133, %v918
  %v920 = vand.u32 %v919, 4294901760
  %v921 = vsub.f32 %v919, %v920
  %v922 = vand.u32 %v921, 4294901760
  %923 = vmatpush.msra.mxu0 %v922
  %v924 = vand.u32 %v128, 4294901760
  %v925 = vsub.f32 %v128, %v924
  %v926 = vand.u32 %v925, 4294901760
  %v927 = vsub.f32 %v925, %v926
  %v928 = vand.u32 %v927, 4294901760
  %929 = vmatpush.msra.mxu0 %v928
  %v930 = vand.u32 %v123, 4294901760
  %v931 = vsub.f32 %v123, %v930
  %v932 = vand.u32 %v931, 4294901760
  %v933 = vsub.f32 %v931, %v932
  %v934 = vand.u32 %v933, 4294901760
  %935 = vmatpush.msra.mxu0 %v934
  %v936 = vand.u32 %v449, 4294901760
  %937 = vmatmul.f32.gmra.mxu0 %v936
  %v938 = vpop.f32.mrf.mxu0
  %v939 = vadd.f32 %v838, %v938
  %940 = vdwg.mxu0
  %v941 = vand.u32 %v198, 4294901760
  %v942 = vsub.f32 %v198, %v941
  %943 = vmatpush.msra.mxu0 %v942
  %v944 = vand.u32 %v193, 4294901760
  %v945 = vsub.f32 %v193, %v944
  %946 = vmatpush.msra.mxu0 %v945
  %v947 = vand.u32 %v188, 4294901760
  %v948 = vsub.f32 %v188, %v947
  %949 = vmatpush.msra.mxu0 %v948
  %v950 = vand.u32 %v183, 4294901760
  %v951 = vsub.f32 %v183, %v950
  %952 = vmatpush.msra.mxu0 %v951
  %v953 = vand.u32 %v178, 4294901760
  %v954 = vsub.f32 %v178, %v953
  %955 = vmatpush.msra.mxu0 %v954
  %v956 = vand.u32 %v173, 4294901760
  %v957 = vsub.f32 %v173, %v956
  %958 = vmatpush.msra.mxu0 %v957
  %v959 = vand.u32 %v168, 4294901760
  %v960 = vsub.f32 %v168, %v959
  %961 = vmatpush.msra.mxu0 %v960
  %v962 = vand.u32 %v163, 4294901760
  %v963 = vsub.f32 %v163, %v962
  %964 = vmatpush.msra.mxu0 %v963
  %v965 = vand.u32 %v158, 4294901760
  %v966 = vsub.f32 %v158, %v965
  %967 = vmatpush.msra.mxu0 %v966
  %v968 = vand.u32 %v153, 4294901760
  %v969 = vsub.f32 %v153, %v968
  %970 = vmatpush.msra.mxu0 %v969
  %v971 = vand.u32 %v148, 4294901760
  %v972 = vsub.f32 %v148, %v971
  %973 = vmatpush.msra.mxu0 %v972
  %v974 = vand.u32 %v143, 4294901760
  %v975 = vsub.f32 %v143, %v974
  %976 = vmatpush.msra.mxu0 %v975
  %v977 = vand.u32 %v138, 4294901760
  %v978 = vsub.f32 %v138, %v977
  %979 = vmatpush.msra.mxu0 %v978
  %v980 = vand.u32 %v133, 4294901760
  %v981 = vsub.f32 %v133, %v980
  %982 = vmatpush.msra.mxu0 %v981
  %v983 = vand.u32 %v128, 4294901760
  %v984 = vsub.f32 %v128, %v983
  %985 = vmatpush.msra.mxu0 %v984
  %v986 = vand.u32 %v123, 4294901760
  %v987 = vsub.f32 %v123, %v986
  %988 = vmatpush.msra.mxu0 %v987
  %v989 = vand.u32 %v449, 4294901760
  %v990 = vsub.f32 %v449, %v989
  %991 = vmatmul.f32.gmra.mxu0 %v990
  %v992 = vpop.f32.mrf.mxu0
  %v993 = vadd.f32 %v939, %v992
  %994 = vdwg.mxu0
  %v995 = vand.u32 %v198, 4294901760
  %996 = vmatpush.msra.mxu0 %v995
  %v997 = vand.u32 %v193, 4294901760
  %998 = vmatpush.msra.mxu0 %v997
  %v999 = vand.u32 %v188, 4294901760
  %1000 = vmatpush.msra.mxu0 %v999
  %v1001 = vand.u32 %v183, 4294901760
  %1002 = vmatpush.msra.mxu0 %v1001
  %v1003 = vand.u32 %v178, 4294901760
  %1004 = vmatpush.msra.mxu0 %v1003
  %v1005 = vand.u32 %v173, 4294901760
  %1006 = vmatpush.msra.mxu0 %v1005
  %v1007 = vand.u32 %v168, 4294901760
  %1008 = vmatpush.msra.mxu0 %v1007
  %v1009 = vand.u32 %v163, 4294901760
  %1010 = vmatpush.msra.mxu0 %v1009
  %v1011 = vand.u32 %v158, 4294901760
  %1012 = vmatpush.msra.mxu0 %v1011
  %v1013 = vand.u32 %v153, 4294901760
  %1014 = vmatpush.msra.mxu0 %v1013
  %v1015 = vand.u32 %v148, 4294901760
  %1016 = vmatpush.msra.mxu0 %v1015
  %v1017 = vand.u32 %v143, 4294901760
  %1018 = vmatpush.msra.mxu0 %v1017
  %v1019 = vand.u32 %v138, 4294901760
  %1020 = vmatpush.msra.mxu0 %v1019
  %v1021 = vand.u32 %v133, 4294901760
  %1022 = vmatpush.msra.mxu0 %v1021
  %v1023 = vand.u32 %v128, 4294901760
  %1024 = vmatpush.msra.mxu0 %v1023
  %v1025 = vand.u32 %v123, 4294901760
  %1026 = vmatpush.msra.mxu0 %v1025
  %v1027 = vand.u32 %v449, 4294901760
  %v1028 = vsub.f32 %v449, %v1027
  %v1029 = vand.u32 %v1028, 4294901760
  %1030 = vmatmul.f32.gmra.mxu0 %v1029
  %v1031 = vpop.f32.mrf.mxu0
  %v1032 = vadd.f32 %v993, %v1031
  %1033 = vdwg.mxu0
  %v1034 = vand.u32 %v198, 4294901760
  %v1035 = vsub.f32 %v198, %v1034
  %v1036 = vand.u32 %v1035, 4294901760
  %1037 = vmatpush.msra.mxu0 %v1036
  %v1038 = vand.u32 %v193, 4294901760
  %v1039 = vsub.f32 %v193, %v1038
  %v1040 = vand.u32 %v1039, 4294901760
  %1041 = vmatpush.msra.mxu0 %v1040
  %v1042 = vand.u32 %v188, 4294901760
  %v1043 = vsub.f32 %v188, %v1042
  %v1044 = vand.u32 %v1043, 4294901760
  %1045 = vmatpush.msra.mxu0 %v1044
  %v1046 = vand.u32 %v183, 4294901760
  %v1047 = vsub.f32 %v183, %v1046
  %v1048 = vand.u32 %v1047, 4294901760
  %1049 = vmatpush.msra.mxu0 %v1048
  %v1050 = vand.u32 %v178, 4294901760
  %v1051 = vsub.f32 %v178, %v1050
  %v1052 = vand.u32 %v1051, 4294901760
  %1053 = vmatpush.msra.mxu0 %v1052
  %v1054 = vand.u32 %v173, 4294901760
  %v1055 = vsub.f32 %v173, %v1054
  %v1056 = vand.u32 %v1055, 4294901760
  %1057 = vmatpush.msra.mxu0 %v1056
  %v1058 = vand.u32 %v168, 4294901760
  %v1059 = vsub.f32 %v168, %v1058
  %v1060 = vand.u32 %v1059, 4294901760
  %1061 = vmatpush.msra.mxu0 %v1060
  %v1062 = vand.u32 %v163, 4294901760
  %v1063 = vsub.f32 %v163, %v1062
  %v1064 = vand.u32 %v1063, 4294901760
  %1065 = vmatpush.msra.mxu0 %v1064
  %v1066 = vand.u32 %v158, 4294901760
  %v1067 = vsub.f32 %v158, %v1066
  %v1068 = vand.u32 %v1067, 4294901760
  %1069 = vmatpush.msra.mxu0 %v1068
  %v1070 = vand.u32 %v153, 4294901760
  %v1071 = vsub.f32 %v153, %v1070
  %v1072 = vand.u32 %v1071, 4294901760
  %1073 = vmatpush.msra.mxu0 %v1072
  %v1074 = vand.u32 %v148, 4294901760
  %v1075 = vsub.f32 %v148, %v1074
  %v1076 = vand.u32 %v1075, 4294901760
  %1077 = vmatpush.msra.mxu0 %v1076
  %v1078 = vand.u32 %v143, 4294901760
  %v1079 = vsub.f32 %v143, %v1078
  %v1080 = vand.u32 %v1079, 4294901760
  %1081 = vmatpush.msra.mxu0 %v1080
  %v1082 = vand.u32 %v138, 4294901760
  %v1083 = vsub.f32 %v138, %v1082
  %v1084 = vand.u32 %v1083, 4294901760
  %1085 = vmatpush.msra.mxu0 %v1084
  %v1086 = vand.u32 %v133, 4294901760
  %v1087 = vsub.f32 %v133, %v1086
  %v1088 = vand.u32 %v1087, 4294901760
  %1089 = vmatpush.msra.mxu0 %v1088
  %v1090 = vand.u32 %v128, 4294901760
  %v1091 = vsub.f32 %v128, %v1090
  %v1092 = vand.u32 %v1091, 4294901760
  %1093 = vmatpush.msra.mxu0 %v1092
  %v1094 = vand.u32 %v123, 4294901760
  %v1095 = vsub.f32 %v123, %v1094
  %v1096 = vand.u32 %v1095, 4294901760
  %1097 = vmatpush.msra.mxu0 %v1096
  %v1098 = vand.u32 %v449, 4294901760
  %1099 = vmatmul.f32.gmra.mxu0 %v1098
  %v1100 = vpop.f32.mrf.mxu0
  %v1101 = vadd.f32 %v1032, %v1100
  %1102 = vdwg.mxu0
  %v1103 = vand.u32 %v198, 4294901760
  %1104 = vmatpush.msra.mxu0 %v1103
  %v1105 = vand.u32 %v193, 4294901760
  %1106 = vmatpush.msra.mxu0 %v1105
  %v1107 = vand.u32 %v188, 4294901760
  %1108 = vmatpush.msra.mxu0 %v1107
  %v1109 = vand.u32 %v183, 4294901760
  %1110 = vmatpush.msra.mxu0 %v1109
  %v1111 = vand.u32 %v178, 4294901760
  %1112 = vmatpush.msra.mxu0 %v1111
  %v1113 = vand.u32 %v173, 4294901760
  %1114 = vmatpush.msra.mxu0 %v1113
  %v1115 = vand.u32 %v168, 4294901760
  %1116 = vmatpush.msra.mxu0 %v1115
  %v1117 = vand.u32 %v163, 4294901760
  %1118 = vmatpush.msra.mxu0 %v1117
  %v1119 = vand.u32 %v158, 4294901760
  %1120 = vmatpush.msra.mxu0 %v1119
  %v1121 = vand.u32 %v153, 4294901760
  %1122 = vmatpush.msra.mxu0 %v1121
  %v1123 = vand.u32 %v148, 4294901760
  %1124 = vmatpush.msra.mxu0 %v1123
  %v1125 = vand.u32 %v143, 4294901760
  %1126 = vmatpush.msra.mxu0 %v1125
  %v1127 = vand.u32 %v138, 4294901760
  %1128 = vmatpush.msra.mxu0 %v1127
  %v1129 = vand.u32 %v133, 4294901760
  %1130 = vmatpush.msra.mxu0 %v1129
  %v1131 = vand.u32 %v128, 4294901760
  %1132 = vmatpush.msra.mxu0 %v1131
  %v1133 = vand.u32 %v123, 4294901760
  %1134 = vmatpush.msra.mxu0 %v1133
  %v1135 = vand.u32 %v449, 4294901760
  %1136 = vmatmul.f32.gmra.mxu0 %v1135
  %v1137 = vpop.f32.mrf.mxu0
  %v1138 = vadd.f32 %v1101, %v1137
  %1139 = vdwg.mxu0
  %v1140 = vand.u32 %v278, 4294901760
  %1141 = vmatpush.msra.mxu0 %v1140
  %v1142 = vand.u32 %v273, 4294901760
  %1143 = vmatpush.msra.mxu0 %v1142
  %v1144 = vand.u32 %v268, 4294901760
  %1145 = vmatpush.msra.mxu0 %v1144
  %v1146 = vand.u32 %v263, 4294901760
  %1147 = vmatpush.msra.mxu0 %v1146
  %v1148 = vand.u32 %v258, 4294901760
  %1149 = vmatpush.msra.mxu0 %v1148
  %v1150 = vand.u32 %v253, 4294901760
  %1151 = vmatpush.msra.mxu0 %v1150
  %v1152 = vand.u32 %v248, 4294901760
  %1153 = vmatpush.msra.mxu0 %v1152
  %v1154 = vand.u32 %v243, 4294901760
  %1155 = vmatpush.msra.mxu0 %v1154
  %v1156 = vand.u32 %v238, 4294901760
  %1157 = vmatpush.msra.mxu0 %v1156
  %v1158 = vand.u32 %v233, 4294901760
  %1159 = vmatpush.msra.mxu0 %v1158
  %v1160 = vand.u32 %v228, 4294901760
  %1161 = vmatpush.msra.mxu0 %v1160
  %v1162 = vand.u32 %v223, 4294901760
  %1163 = vmatpush.msra.mxu0 %v1162
  %v1164 = vand.u32 %v218, 4294901760
  %1165 = vmatpush.msra.mxu0 %v1164
  %v1166 = vand.u32 %v213, 4294901760
  %1167 = vmatpush.msra.mxu0 %v1166
  %v1168 = vand.u32 %v208, 4294901760
  %1169 = vmatpush.msra.mxu0 %v1168
  %v1170 = vand.u32 %v203, 4294901760
  %1171 = vmatpush.msra.mxu0 %v1170
  %v1172 = vand.u32 %v450, 4294901760
  %v1173 = vsub.f32 %v450, %v1172
  %v1174 = vand.u32 %v1173, 4294901760
  %v1175 = vsub.f32 %v1173, %v1174
  %v1176 = vand.u32 %v1175, 4294901760
  %1177 = vmatmul.f32.gmra.mxu0 %v1176
  %v1178 = vpop.f32.mrf.mxu0
  %v1179 = vadd.f32 %v1138, %v1178
  %1180 = vdwg.mxu0
  %v1181 = vand.u32 %v278, 4294901760
  %v1182 = vsub.f32 %v278, %v1181
  %v1183 = vand.u32 %v1182, 4294901760
  %v1184 = vsub.f32 %v1182, %v1183
  %v1185 = vand.u32 %v1184, 4294901760
  %1186 = vmatpush.msra.mxu0 %v1185
  %v1187 = vand.u32 %v273, 4294901760
  %v1188 = vsub.f32 %v273, %v1187
  %v1189 = vand.u32 %v1188, 4294901760
  %v1190 = vsub.f32 %v1188, %v1189
  %v1191 = vand.u32 %v1190, 4294901760
  %1192 = vmatpush.msra.mxu0 %v1191
  %v1193 = vand.u32 %v268, 4294901760
  %v1194 = vsub.f32 %v268, %v1193
  %v1195 = vand.u32 %v1194, 4294901760
  %v1196 = vsub.f32 %v1194, %v1195
  %v1197 = vand.u32 %v1196, 4294901760
  %1198 = vmatpush.msra.mxu0 %v1197
  %v1199 = vand.u32 %v263, 4294901760
  %v1200 = vsub.f32 %v263, %v1199
  %v1201 = vand.u32 %v1200, 4294901760
  %v1202 = vsub.f32 %v1200, %v1201
  %v1203 = vand.u32 %v1202, 4294901760
  %1204 = vmatpush.msra.mxu0 %v1203
  %v1205 = vand.u32 %v258, 4294901760
  %v1206 = vsub.f32 %v258, %v1205
  %v1207 = vand.u32 %v1206, 4294901760
  %v1208 = vsub.f32 %v1206, %v1207
  %v1209 = vand.u32 %v1208, 4294901760
  %1210 = vmatpush.msra.mxu0 %v1209
  %v1211 = vand.u32 %v253, 4294901760
  %v1212 = vsub.f32 %v253, %v1211
  %v1213 = vand.u32 %v1212, 4294901760
  %v1214 = vsub.f32 %v1212, %v1213
  %v1215 = vand.u32 %v1214, 4294901760
  %1216 = vmatpush.msra.mxu0 %v1215
  %v1217 = vand.u32 %v248, 4294901760
  %v1218 = vsub.f32 %v248, %v1217
  %v1219 = vand.u32 %v1218, 4294901760
  %v1220 = vsub.f32 %v1218, %v1219
  %v1221 = vand.u32 %v1220, 4294901760
  %1222 = vmatpush.msra.mxu0 %v1221
  %v1223 = vand.u32 %v243, 4294901760
  %v1224 = vsub.f32 %v243, %v1223
  %v1225 = vand.u32 %v1224, 4294901760
  %v1226 = vsub.f32 %v1224, %v1225
  %v1227 = vand.u32 %v1226, 4294901760
  %1228 = vmatpush.msra.mxu0 %v1227
  %v1229 = vand.u32 %v238, 4294901760
  %v1230 = vsub.f32 %v238, %v1229
  %v1231 = vand.u32 %v1230, 4294901760
  %v1232 = vsub.f32 %v1230, %v1231
  %v1233 = vand.u32 %v1232, 4294901760
  %1234 = vmatpush.msra.mxu0 %v1233
  %v1235 = vand.u32 %v233, 4294901760
  %v1236 = vsub.f32 %v233, %v1235
  %v1237 = vand.u32 %v1236, 4294901760
  %v1238 = vsub.f32 %v1236, %v1237
  %v1239 = vand.u32 %v1238, 4294901760
  %1240 = vmatpush.msra.mxu0 %v1239
  %v1241 = vand.u32 %v228, 4294901760
  %v1242 = vsub.f32 %v228, %v1241
  %v1243 = vand.u32 %v1242, 4294901760
  %v1244 = vsub.f32 %v1242, %v1243
  %v1245 = vand.u32 %v1244, 4294901760
  %1246 = vmatpush.msra.mxu0 %v1245
  %v1247 = vand.u32 %v223, 4294901760
  %v1248 = vsub.f32 %v223, %v1247
  %v1249 = vand.u32 %v1248, 4294901760
  %v1250 = vsub.f32 %v1248, %v1249
  %v1251 = vand.u32 %v1250, 4294901760
  %1252 = vmatpush.msra.mxu0 %v1251
  %v1253 = vand.u32 %v218, 4294901760
  %v1254 = vsub.f32 %v218, %v1253
  %v1255 = vand.u32 %v1254, 4294901760
  %v1256 = vsub.f32 %v1254, %v1255
  %v1257 = vand.u32 %v1256, 4294901760
  %1258 = vmatpush.msra.mxu0 %v1257
  %v1259 = vand.u32 %v213, 4294901760
  %v1260 = vsub.f32 %v213, %v1259
  %v1261 = vand.u32 %v1260, 4294901760
  %v1262 = vsub.f32 %v1260, %v1261
  %v1263 = vand.u32 %v1262, 4294901760
  %1264 = vmatpush.msra.mxu0 %v1263
  %v1265 = vand.u32 %v208, 4294901760
  %v1266 = vsub.f32 %v208, %v1265
  %v1267 = vand.u32 %v1266, 4294901760
  %v1268 = vsub.f32 %v1266, %v1267
  %v1269 = vand.u32 %v1268, 4294901760
  %1270 = vmatpush.msra.mxu0 %v1269
  %v1271 = vand.u32 %v203, 4294901760
  %v1272 = vsub.f32 %v203, %v1271
  %v1273 = vand.u32 %v1272, 4294901760
  %v1274 = vsub.f32 %v1272, %v1273
  %v1275 = vand.u32 %v1274, 4294901760
  %1276 = vmatpush.msra.mxu0 %v1275
  %v1277 = vand.u32 %v450, 4294901760
  %1278 = vmatmul.f32.gmra.mxu0 %v1277
  %v1279 = vpop.f32.mrf.mxu0
  %v1280 = vadd.f32 %v1179, %v1279
  %1281 = vdwg.mxu0
  %v1282 = vand.u32 %v278, 4294901760
  %v1283 = vsub.f32 %v278, %v1282
  %1284 = vmatpush.msra.mxu0 %v1283
  %v1285 = vand.u32 %v273, 4294901760
  %v1286 = vsub.f32 %v273, %v1285
  %1287 = vmatpush.msra.mxu0 %v1286
  %v1288 = vand.u32 %v268, 4294901760
  %v1289 = vsub.f32 %v268, %v1288
  %1290 = vmatpush.msra.mxu0 %v1289
  %v1291 = vand.u32 %v263, 4294901760
  %v1292 = vsub.f32 %v263, %v1291
  %1293 = vmatpush.msra.mxu0 %v1292
  %v1294 = vand.u32 %v258, 4294901760
  %v1295 = vsub.f32 %v258, %v1294
  %1296 = vmatpush.msra.mxu0 %v1295
  %v1297 = vand.u32 %v253, 4294901760
  %v1298 = vsub.f32 %v253, %v1297
  %1299 = vmatpush.msra.mxu0 %v1298
  %v1300 = vand.u32 %v248, 4294901760
  %v1301 = vsub.f32 %v248, %v1300
  %1302 = vmatpush.msra.mxu0 %v1301
  %v1303 = vand.u32 %v243, 4294901760
  %v1304 = vsub.f32 %v243, %v1303
  %1305 = vmatpush.msra.mxu0 %v1304
  %v1306 = vand.u32 %v238, 4294901760
  %v1307 = vsub.f32 %v238, %v1306
  %1308 = vmatpush.msra.mxu0 %v1307
  %v1309 = vand.u32 %v233, 4294901760
  %v1310 = vsub.f32 %v233, %v1309
  %1311 = vmatpush.msra.mxu0 %v1310
  %v1312 = vand.u32 %v228, 4294901760
  %v1313 = vsub.f32 %v228, %v1312
  %1314 = vmatpush.msra.mxu0 %v1313
  %v1315 = vand.u32 %v223, 4294901760
  %v1316 = vsub.f32 %v223, %v1315
  %1317 = vmatpush.msra.mxu0 %v1316
  %v1318 = vand.u32 %v218, 4294901760
  %v1319 = vsub.f32 %v218, %v1318
  %1320 = vmatpush.msra.mxu0 %v1319
  %v1321 = vand.u32 %v213, 4294901760
  %v1322 = vsub.f32 %v213, %v1321
  %1323 = vmatpush.msra.mxu0 %v1322
  %v1324 = vand.u32 %v208, 4294901760
  %v1325 = vsub.f32 %v208, %v1324
  %1326 = vmatpush.msra.mxu0 %v1325
  %v1327 = vand.u32 %v203, 4294901760
  %v1328 = vsub.f32 %v203, %v1327
  %1329 = vmatpush.msra.mxu0 %v1328
  %v1330 = vand.u32 %v450, 4294901760
  %v1331 = vsub.f32 %v450, %v1330
  %1332 = vmatmul.f32.gmra.mxu0 %v1331
  %v1333 = vpop.f32.mrf.mxu0
  %v1334 = vadd.f32 %v1280, %v1333
  %1335 = vdwg.mxu0
  %v1336 = vand.u32 %v278, 4294901760
  %1337 = vmatpush.msra.mxu0 %v1336
  %v1338 = vand.u32 %v273, 4294901760
  %1339 = vmatpush.msra.mxu0 %v1338
  %v1340 = vand.u32 %v268, 4294901760
  %1341 = vmatpush.msra.mxu0 %v1340
  %v1342 = vand.u32 %v263, 4294901760
  %1343 = vmatpush.msra.mxu0 %v1342
  %v1344 = vand.u32 %v258, 4294901760
  %1345 = vmatpush.msra.mxu0 %v1344
  %v1346 = vand.u32 %v253, 4294901760
  %1347 = vmatpush.msra.mxu0 %v1346
  %v1348 = vand.u32 %v248, 4294901760
  %1349 = vmatpush.msra.mxu0 %v1348
  %v1350 = vand.u32 %v243, 4294901760
  %1351 = vmatpush.msra.mxu0 %v1350
  %v1352 = vand.u32 %v238, 4294901760
  %1353 = vmatpush.msra.mxu0 %v1352
  %v1354 = vand.u32 %v233, 4294901760
  %1355 = vmatpush.msra.mxu0 %v1354
  %v1356 = vand.u32 %v228, 4294901760
  %1357 = vmatpush.msra.mxu0 %v1356
  %v1358 = vand.u32 %v223, 4294901760
  %1359 = vmatpush.msra.mxu0 %v1358
  %v1360 = vand.u32 %v218, 4294901760
  %1361 = vmatpush.msra.mxu0 %v1360
  %v1362 = vand.u32 %v213, 4294901760
  %1363 = vmatpush.msra.mxu0 %v1362
  %v1364 = vand.u32 %v208, 4294901760
  %1365 = vmatpush.msra.mxu0 %v1364
  %v1366 = vand.u32 %v203, 4294901760
  %1367 = vmatpush.msra.mxu0 %v1366
  %v1368 = vand.u32 %v450, 4294901760
  %v1369 = vsub.f32 %v450, %v1368
  %v1370 = vand.u32 %v1369, 4294901760
  %1371 = vmatmul.f32.gmra.mxu0 %v1370
  %v1372 = vpop.f32.mrf.mxu0
  %v1373 = vadd.f32 %v1334, %v1372
  %1374 = vdwg.mxu0
  %v1375 = vand.u32 %v278, 4294901760
  %v1376 = vsub.f32 %v278, %v1375
  %v1377 = vand.u32 %v1376, 4294901760
  %1378 = vmatpush.msra.mxu0 %v1377
  %v1379 = vand.u32 %v273, 4294901760
  %v1380 = vsub.f32 %v273, %v1379
  %v1381 = vand.u32 %v1380, 4294901760
  %1382 = vmatpush.msra.mxu0 %v1381
  %v1383 = vand.u32 %v268, 4294901760
  %v1384 = vsub.f32 %v268, %v1383
  %v1385 = vand.u32 %v1384, 4294901760
  %1386 = vmatpush.msra.mxu0 %v1385
  %v1387 = vand.u32 %v263, 4294901760
  %v1388 = vsub.f32 %v263, %v1387
  %v1389 = vand.u32 %v1388, 4294901760
  %1390 = vmatpush.msra.mxu0 %v1389
  %v1391 = vand.u32 %v258, 4294901760
  %v1392 = vsub.f32 %v258, %v1391
  %v1393 = vand.u32 %v1392, 4294901760
  %1394 = vmatpush.msra.mxu0 %v1393
  %v1395 = vand.u32 %v253, 4294901760
  %v1396 = vsub.f32 %v253, %v1395
  %v1397 = vand.u32 %v1396, 4294901760
  %1398 = vmatpush.msra.mxu0 %v1397
  %v1399 = vand.u32 %v248, 4294901760
  %v1400 = vsub.f32 %v248, %v1399
  %v1401 = vand.u32 %v1400, 4294901760
  %1402 = vmatpush.msra.mxu0 %v1401
  %v1403 = vand.u32 %v243, 4294901760
  %v1404 = vsub.f32 %v243, %v1403
  %v1405 = vand.u32 %v1404, 4294901760
  %1406 = vmatpush.msra.mxu0 %v1405
  %v1407 = vand.u32 %v238, 4294901760
  %v1408 = vsub.f32 %v238, %v1407
  %v1409 = vand.u32 %v1408, 4294901760
  %1410 = vmatpush.msra.mxu0 %v1409
  %v1411 = vand.u32 %v233, 4294901760
  %v1412 = vsub.f32 %v233, %v1411
  %v1413 = vand.u32 %v1412, 4294901760
  %1414 = vmatpush.msra.mxu0 %v1413
  %v1415 = vand.u32 %v228, 4294901760
  %v1416 = vsub.f32 %v228, %v1415
  %v1417 = vand.u32 %v1416, 4294901760
  %1418 = vmatpush.msra.mxu0 %v1417
  %v1419 = vand.u32 %v223, 4294901760
  %v1420 = vsub.f32 %v223, %v1419
  %v1421 = vand.u32 %v1420, 4294901760
  %1422 = vmatpush.msra.mxu0 %v1421
  %v1423 = vand.u32 %v218, 4294901760
  %v1424 = vsub.f32 %v218, %v1423
  %v1425 = vand.u32 %v1424, 4294901760
  %1426 = vmatpush.msra.mxu0 %v1425
  %v1427 = vand.u32 %v213, 4294901760
  %v1428 = vsub.f32 %v213, %v1427
  %v1429 = vand.u32 %v1428, 4294901760
  %1430 = vmatpush.msra.mxu0 %v1429
  %v1431 = vand.u32 %v208, 4294901760
  %v1432 = vsub.f32 %v208, %v1431
  %v1433 = vand.u32 %v1432, 4294901760
  %1434 = vmatpush.msra.mxu0 %v1433
  %v1435 = vand.u32 %v203, 4294901760
  %v1436 = vsub.f32 %v203, %v1435
  %v1437 = vand.u32 %v1436, 4294901760
  %1438 = vmatpush.msra.mxu0 %v1437
  %v1439 = vand.u32 %v450, 4294901760
  %1440 = vmatmul.f32.gmra.mxu0 %v1439
  %v1441 = vpop.f32.mrf.mxu0
  %v1442 = vadd.f32 %v1373, %v1441
  %1443 = vdwg.mxu0
  %v1444 = vand.u32 %v278, 4294901760
  %1445 = vmatpush.msra.mxu0 %v1444
  %v1446 = vand.u32 %v273, 4294901760
  %1447 = vmatpush.msra.mxu0 %v1446
  %v1448 = vand.u32 %v268, 4294901760
  %1449 = vmatpush.msra.mxu0 %v1448
  %v1450 = vand.u32 %v263, 4294901760
  %1451 = vmatpush.msra.mxu0 %v1450
  %v1452 = vand.u32 %v258, 4294901760
  %1453 = vmatpush.msra.mxu0 %v1452
  %v1454 = vand.u32 %v253, 4294901760
  %1455 = vmatpush.msra.mxu0 %v1454
  %v1456 = vand.u32 %v248, 4294901760
  %1457 = vmatpush.msra.mxu0 %v1456
  %v1458 = vand.u32 %v243, 4294901760
  %1459 = vmatpush.msra.mxu0 %v1458
  %v1460 = vand.u32 %v238, 4294901760
  %1461 = vmatpush.msra.mxu0 %v1460
  %v1462 = vand.u32 %v233, 4294901760
  %1463 = vmatpush.msra.mxu0 %v1462
  %v1464 = vand.u32 %v228, 4294901760
  %1465 = vmatpush.msra.mxu0 %v1464
  %v1466 = vand.u32 %v223, 4294901760
  %1467 = vmatpush.msra.mxu0 %v1466
  %v1468 = vand.u32 %v218, 4294901760
  %1469 = vmatpush.msra.mxu0 %v1468
  %v1470 = vand.u32 %v213, 4294901760
  %1471 = vmatpush.msra.mxu0 %v1470
  %v1472 = vand.u32 %v208, 4294901760
  %1473 = vmatpush.msra.mxu0 %v1472
  %v1474 = vand.u32 %v203, 4294901760
  %1475 = vmatpush.msra.mxu0 %v1474
  %v1476 = vand.u32 %v450, 4294901760
  %1477 = vmatmul.f32.gmra.mxu0 %v1476
  %v1478 = vpop.f32.mrf.mxu0
  %v1479 = vadd.f32 %v1442, %v1478
  %1480 = vdwg.mxu0
  %v1481 = vand.u32 %v358, 4294901760
  %1482 = vmatpush.msra.mxu0 %v1481
  %v1483 = vand.u32 %v353, 4294901760
  %1484 = vmatpush.msra.mxu0 %v1483
  %v1485 = vand.u32 %v348, 4294901760
  %1486 = vmatpush.msra.mxu0 %v1485
  %v1487 = vand.u32 %v343, 4294901760
  %1488 = vmatpush.msra.mxu0 %v1487
  %v1489 = vand.u32 %v338, 4294901760
  %1490 = vmatpush.msra.mxu0 %v1489
  %v1491 = vand.u32 %v333, 4294901760
  %1492 = vmatpush.msra.mxu0 %v1491
  %v1493 = vand.u32 %v328, 4294901760
  %1494 = vmatpush.msra.mxu0 %v1493
  %v1495 = vand.u32 %v323, 4294901760
  %1496 = vmatpush.msra.mxu0 %v1495
  %v1497 = vand.u32 %v318, 4294901760
  %1498 = vmatpush.msra.mxu0 %v1497
  %v1499 = vand.u32 %v313, 4294901760
  %1500 = vmatpush.msra.mxu0 %v1499
  %v1501 = vand.u32 %v308, 4294901760
  %1502 = vmatpush.msra.mxu0 %v1501
  %v1503 = vand.u32 %v303, 4294901760
  %1504 = vmatpush.msra.mxu0 %v1503
  %v1505 = vand.u32 %v298, 4294901760
  %1506 = vmatpush.msra.mxu0 %v1505
  %v1507 = vand.u32 %v293, 4294901760
  %1508 = vmatpush.msra.mxu0 %v1507
  %v1509 = vand.u32 %v288, 4294901760
  %1510 = vmatpush.msra.mxu0 %v1509
  %v1511 = vand.u32 %v283, 4294901760
  %1512 = vmatpush.msra.mxu0 %v1511
  %v1513 = vand.u32 %v451, 4294901760
  %v1514 = vsub.f32 %v451, %v1513
  %v1515 = vand.u32 %v1514, 4294901760
  %v1516 = vsub.f32 %v1514, %v1515
  %v1517 = vand.u32 %v1516, 4294901760
  %1518 = vmatmul.f32.gmra.mxu0 %v1517
  %v1519 = vpop.f32.mrf.mxu0
  %v1520 = vadd.f32 %v1479, %v1519
  %1521 = vdwg.mxu0
  %v1522 = vand.u32 %v358, 4294901760
  %v1523 = vsub.f32 %v358, %v1522
  %v1524 = vand.u32 %v1523, 4294901760
  %v1525 = vsub.f32 %v1523, %v1524
  %v1526 = vand.u32 %v1525, 4294901760
  %1527 = vmatpush.msra.mxu0 %v1526
  %v1528 = vand.u32 %v353, 4294901760
  %v1529 = vsub.f32 %v353, %v1528
  %v1530 = vand.u32 %v1529, 4294901760
  %v1531 = vsub.f32 %v1529, %v1530
  %v1532 = vand.u32 %v1531, 4294901760
  %1533 = vmatpush.msra.mxu0 %v1532
  %v1534 = vand.u32 %v348, 4294901760
  %v1535 = vsub.f32 %v348, %v1534
  %v1536 = vand.u32 %v1535, 4294901760
  %v1537 = vsub.f32 %v1535, %v1536
  %v1538 = vand.u32 %v1537, 4294901760
  %1539 = vmatpush.msra.mxu0 %v1538
  %v1540 = vand.u32 %v343, 4294901760
  %v1541 = vsub.f32 %v343, %v1540
  %v1542 = vand.u32 %v1541, 4294901760
  %v1543 = vsub.f32 %v1541, %v1542
  %v1544 = vand.u32 %v1543, 4294901760
  %1545 = vmatpush.msra.mxu0 %v1544
  %v1546 = vand.u32 %v338, 4294901760
  %v1547 = vsub.f32 %v338, %v1546
  %v1548 = vand.u32 %v1547, 4294901760
  %v1549 = vsub.f32 %v1547, %v1548
  %v1550 = vand.u32 %v1549, 4294901760
  %1551 = vmatpush.msra.mxu0 %v1550
  %v1552 = vand.u32 %v333, 4294901760
  %v1553 = vsub.f32 %v333, %v1552
  %v1554 = vand.u32 %v1553, 4294901760
  %v1555 = vsub.f32 %v1553, %v1554
  %v1556 = vand.u32 %v1555, 4294901760
  %1557 = vmatpush.msra.mxu0 %v1556
  %v1558 = vand.u32 %v328, 4294901760
  %v1559 = vsub.f32 %v328, %v1558
  %v1560 = vand.u32 %v1559, 4294901760
  %v1561 = vsub.f32 %v1559, %v1560
  %v1562 = vand.u32 %v1561, 4294901760
  %1563 = vmatpush.msra.mxu0 %v1562
  %v1564 = vand.u32 %v323, 4294901760
  %v1565 = vsub.f32 %v323, %v1564
  %v1566 = vand.u32 %v1565, 4294901760
  %v1567 = vsub.f32 %v1565, %v1566
  %v1568 = vand.u32 %v1567, 4294901760
  %1569 = vmatpush.msra.mxu0 %v1568
  %v1570 = vand.u32 %v318, 4294901760
  %v1571 = vsub.f32 %v318, %v1570
  %v1572 = vand.u32 %v1571, 4294901760
  %v1573 = vsub.f32 %v1571, %v1572
  %v1574 = vand.u32 %v1573, 4294901760
  %1575 = vmatpush.msra.mxu0 %v1574
  %v1576 = vand.u32 %v313, 4294901760
  %v1577 = vsub.f32 %v313, %v1576
  %v1578 = vand.u32 %v1577, 4294901760
  %v1579 = vsub.f32 %v1577, %v1578
  %v1580 = vand.u32 %v1579, 4294901760
  %1581 = vmatpush.msra.mxu0 %v1580
  %v1582 = vand.u32 %v308, 4294901760
  %v1583 = vsub.f32 %v308, %v1582
  %v1584 = vand.u32 %v1583, 4294901760
  %v1585 = vsub.f32 %v1583, %v1584
  %v1586 = vand.u32 %v1585, 4294901760
  %1587 = vmatpush.msra.mxu0 %v1586
  %v1588 = vand.u32 %v303, 4294901760
  %v1589 = vsub.f32 %v303, %v1588
  %v1590 = vand.u32 %v1589, 4294901760
  %v1591 = vsub.f32 %v1589, %v1590
  %v1592 = vand.u32 %v1591, 4294901760
  %1593 = vmatpush.msra.mxu0 %v1592
  %v1594 = vand.u32 %v298, 4294901760
  %v1595 = vsub.f32 %v298, %v1594
  %v1596 = vand.u32 %v1595, 4294901760
  %v1597 = vsub.f32 %v1595, %v1596
  %v1598 = vand.u32 %v1597, 4294901760
  %1599 = vmatpush.msra.mxu0 %v1598
  %v1600 = vand.u32 %v293, 4294901760
  %v1601 = vsub.f32 %v293, %v1600
  %v1602 = vand.u32 %v1601, 4294901760
  %v1603 = vsub.f32 %v1601, %v1602
  %v1604 = vand.u32 %v1603, 4294901760
  %1605 = vmatpush.msra.mxu0 %v1604
  %v1606 = vand.u32 %v288, 4294901760
  %v1607 = vsub.f32 %v288, %v1606
  %v1608 = vand.u32 %v1607, 4294901760
  %v1609 = vsub.f32 %v1607, %v1608
  %v1610 = vand.u32 %v1609, 4294901760
  %1611 = vmatpush.msra.mxu0 %v1610
  %v1612 = vand.u32 %v283, 4294901760
  %v1613 = vsub.f32 %v283, %v1612
  %v1614 = vand.u32 %v1613, 4294901760
  %v1615 = vsub.f32 %v1613, %v1614
  %v1616 = vand.u32 %v1615, 4294901760
  %1617 = vmatpush.msra.mxu0 %v1616
  %v1618 = vand.u32 %v451, 4294901760
  %1619 = vmatmul.f32.gmra.mxu0 %v1618
  %v1620 = vpop.f32.mrf.mxu0
  %v1621 = vadd.f32 %v1520, %v1620
  %1622 = vdwg.mxu0
  %v1623 = vand.u32 %v358, 4294901760
  %v1624 = vsub.f32 %v358, %v1623
  %1625 = vmatpush.msra.mxu0 %v1624
  %v1626 = vand.u32 %v353, 4294901760
  %v1627 = vsub.f32 %v353, %v1626
  %1628 = vmatpush.msra.mxu0 %v1627
  %v1629 = vand.u32 %v348, 4294901760
  %v1630 = vsub.f32 %v348, %v1629
  %1631 = vmatpush.msra.mxu0 %v1630
  %v1632 = vand.u32 %v343, 4294901760
  %v1633 = vsub.f32 %v343, %v1632
  %1634 = vmatpush.msra.mxu0 %v1633
  %v1635 = vand.u32 %v338, 4294901760
  %v1636 = vsub.f32 %v338, %v1635
  %1637 = vmatpush.msra.mxu0 %v1636
  %v1638 = vand.u32 %v333, 4294901760
  %v1639 = vsub.f32 %v333, %v1638
  %1640 = vmatpush.msra.mxu0 %v1639
  %v1641 = vand.u32 %v328, 4294901760
  %v1642 = vsub.f32 %v328, %v1641
  %1643 = vmatpush.msra.mxu0 %v1642
  %v1644 = vand.u32 %v323, 4294901760
  %v1645 = vsub.f32 %v323, %v1644
  %1646 = vmatpush.msra.mxu0 %v1645
  %v1647 = vand.u32 %v318, 4294901760
  %v1648 = vsub.f32 %v318, %v1647
  %1649 = vmatpush.msra.mxu0 %v1648
  %v1650 = vand.u32 %v313, 4294901760
  %v1651 = vsub.f32 %v313, %v1650
  %1652 = vmatpush.msra.mxu0 %v1651
  %v1653 = vand.u32 %v308, 4294901760
  %v1654 = vsub.f32 %v308, %v1653
  %1655 = vmatpush.msra.mxu0 %v1654
  %v1656 = vand.u32 %v303, 4294901760
  %v1657 = vsub.f32 %v303, %v1656
  %1658 = vmatpush.msra.mxu0 %v1657
  %v1659 = vand.u32 %v298, 4294901760
  %v1660 = vsub.f32 %v298, %v1659
  %1661 = vmatpush.msra.mxu0 %v1660
  %v1662 = vand.u32 %v293, 4294901760
  %v1663 = vsub.f32 %v293, %v1662
  %1664 = vmatpush.msra.mxu0 %v1663
  %v1665 = vand.u32 %v288, 4294901760
  %v1666 = vsub.f32 %v288, %v1665
  %1667 = vmatpush.msra.mxu0 %v1666
  %v1668 = vand.u32 %v283, 4294901760
  %v1669 = vsub.f32 %v283, %v1668
  %1670 = vmatpush.msra.mxu0 %v1669
  %v1671 = vand.u32 %v451, 4294901760
  %v1672 = vsub.f32 %v451, %v1671
  %1673 = vmatmul.f32.gmra.mxu0 %v1672
  %v1674 = vpop.f32.mrf.mxu0
  %v1675 = vadd.f32 %v1621, %v1674
  %1676 = vdwg.mxu0
  %v1677 = vand.u32 %v358, 4294901760
  %1678 = vmatpush.msra.mxu0 %v1677
  %v1679 = vand.u32 %v353, 4294901760
  %1680 = vmatpush.msra.mxu0 %v1679
  %v1681 = vand.u32 %v348, 4294901760
  %1682 = vmatpush.msra.mxu0 %v1681
  %v1683 = vand.u32 %v343, 4294901760
  %1684 = vmatpush.msra.mxu0 %v1683
  %v1685 = vand.u32 %v338, 4294901760
  %1686 = vmatpush.msra.mxu0 %v1685
  %v1687 = vand.u32 %v333, 4294901760
  %1688 = vmatpush.msra.mxu0 %v1687
  %v1689 = vand.u32 %v328, 4294901760
  %1690 = vmatpush.msra.mxu0 %v1689
  %v1691 = vand.u32 %v323, 4294901760
  %1692 = vmatpush.msra.mxu0 %v1691
  %v1693 = vand.u32 %v318, 4294901760
  %1694 = vmatpush.msra.mxu0 %v1693
  %v1695 = vand.u32 %v313, 4294901760
  %1696 = vmatpush.msra.mxu0 %v1695
  %v1697 = vand.u32 %v308, 4294901760
  %1698 = vmatpush.msra.mxu0 %v1697
  %v1699 = vand.u32 %v303, 4294901760
  %1700 = vmatpush.msra.mxu0 %v1699
  %v1701 = vand.u32 %v298, 4294901760
  %1702 = vmatpush.msra.mxu0 %v1701
  %v1703 = vand.u32 %v293, 4294901760
  %1704 = vmatpush.msra.mxu0 %v1703
  %v1705 = vand.u32 %v288, 4294901760
  %1706 = vmatpush.msra.mxu0 %v1705
  %v1707 = vand.u32 %v283, 4294901760
  %1708 = vmatpush.msra.mxu0 %v1707
  %v1709 = vand.u32 %v451, 4294901760
  %v1710 = vsub.f32 %v451, %v1709
  %v1711 = vand.u32 %v1710, 4294901760
  %1712 = vmatmul.f32.gmra.mxu0 %v1711
  %v1713 = vpop.f32.mrf.mxu0
  %v1714 = vadd.f32 %v1675, %v1713
  %1715 = vdwg.mxu0
  %v1716 = vand.u32 %v358, 4294901760
  %v1717 = vsub.f32 %v358, %v1716
  %v1718 = vand.u32 %v1717, 4294901760
  %1719 = vmatpush.msra.mxu0 %v1718
  %v1720 = vand.u32 %v353, 4294901760
  %v1721 = vsub.f32 %v353, %v1720
  %v1722 = vand.u32 %v1721, 4294901760
  %1723 = vmatpush.msra.mxu0 %v1722
  %v1724 = vand.u32 %v348, 4294901760
  %v1725 = vsub.f32 %v348, %v1724
  %v1726 = vand.u32 %v1725, 4294901760
  %1727 = vmatpush.msra.mxu0 %v1726
  %v1728 = vand.u32 %v343, 4294901760
  %v1729 = vsub.f32 %v343, %v1728
  %v1730 = vand.u32 %v1729, 4294901760
  %1731 = vmatpush.msra.mxu0 %v1730
  %v1732 = vand.u32 %v338, 4294901760
  %v1733 = vsub.f32 %v338, %v1732
  %v1734 = vand.u32 %v1733, 4294901760
  %1735 = vmatpush.msra.mxu0 %v1734
  %v1736 = vand.u32 %v333, 4294901760
  %v1737 = vsub.f32 %v333, %v1736
  %v1738 = vand.u32 %v1737, 4294901760
  %1739 = vmatpush.msra.mxu0 %v1738
  %v1740 = vand.u32 %v328, 4294901760
  %v1741 = vsub.f32 %v328, %v1740
  %v1742 = vand.u32 %v1741, 4294901760
  %1743 = vmatpush.msra.mxu0 %v1742
  %v1744 = vand.u32 %v323, 4294901760
  %v1745 = vsub.f32 %v323, %v1744
  %v1746 = vand.u32 %v1745, 4294901760
  %1747 = vmatpush.msra.mxu0 %v1746
  %v1748 = vand.u32 %v318, 4294901760
  %v1749 = vsub.f32 %v318, %v1748
  %v1750 = vand.u32 %v1749, 4294901760
  %1751 = vmatpush.msra.mxu0 %v1750
  %v1752 = vand.u32 %v313, 4294901760
  %v1753 = vsub.f32 %v313, %v1752
  %v1754 = vand.u32 %v1753, 4294901760
  %1755 = vmatpush.msra.mxu0 %v1754
  %v1756 = vand.u32 %v308, 4294901760
  %v1757 = vsub.f32 %v308, %v1756
  %v1758 = vand.u32 %v1757, 4294901760
  %1759 = vmatpush.msra.mxu0 %v1758
  %v1760 = vand.u32 %v303, 4294901760
  %v1761 = vsub.f32 %v303, %v1760
  %v1762 = vand.u32 %v1761, 4294901760
  %1763 = vmatpush.msra.mxu0 %v1762
  %v1764 = vand.u32 %v298, 4294901760
  %v1765 = vsub.f32 %v298, %v1764
  %v1766 = vand.u32 %v1765, 4294901760
  %1767 = vmatpush.msra.mxu0 %v1766
  %v1768 = vand.u32 %v293, 4294901760
  %v1769 = vsub.f32 %v293, %v1768
  %v1770 = vand.u32 %v1769, 4294901760
  %1771 = vmatpush.msra.mxu0 %v1770
  %v1772 = vand.u32 %v288, 4294901760
  %v1773 = vsub.f32 %v288, %v1772
  %v1774 = vand.u32 %v1773, 4294901760
  %1775 = vmatpush.msra.mxu0 %v1774
  %v1776 = vand.u32 %v283, 4294901760
  %v1777 = vsub.f32 %v283, %v1776
  %v1778 = vand.u32 %v1777, 4294901760
  %1779 = vmatpush.msra.mxu0 %v1778
  %v1780 = vand.u32 %v451, 4294901760
  %1781 = vmatmul.f32.gmra.mxu0 %v1780
  %v1782 = vpop.f32.mrf.mxu0
  %v1783 = vadd.f32 %v1714, %v1782
  %1784 = vdwg.mxu0
  %v1785 = vand.u32 %v358, 4294901760
  %1786 = vmatpush.msra.mxu0 %v1785
  %v1787 = vand.u32 %v353, 4294901760
  %1788 = vmatpush.msra.mxu0 %v1787
  %v1789 = vand.u32 %v348, 4294901760
  %1790 = vmatpush.msra.mxu0 %v1789
  %v1791 = vand.u32 %v343, 4294901760
  %1792 = vmatpush.msra.mxu0 %v1791
  %v1793 = vand.u32 %v338, 4294901760
  %1794 = vmatpush.msra.mxu0 %v1793
  %v1795 = vand.u32 %v333, 4294901760
  %1796 = vmatpush.msra.mxu0 %v1795
  %v1797 = vand.u32 %v328, 4294901760
  %1798 = vmatpush.msra.mxu0 %v1797
  %v1799 = vand.u32 %v323, 4294901760
  %1800 = vmatpush.msra.mxu0 %v1799
  %v1801 = vand.u32 %v318, 4294901760
  %1802 = vmatpush.msra.mxu0 %v1801
  %v1803 = vand.u32 %v313, 4294901760
  %1804 = vmatpush.msra.mxu0 %v1803
  %v1805 = vand.u32 %v308, 4294901760
  %1806 = vmatpush.msra.mxu0 %v1805
  %v1807 = vand.u32 %v303, 4294901760
  %1808 = vmatpush.msra.mxu0 %v1807
  %v1809 = vand.u32 %v298, 4294901760
  %1810 = vmatpush.msra.mxu0 %v1809
  %v1811 = vand.u32 %v293, 4294901760
  %1812 = vmatpush.msra.mxu0 %v1811
  %v1813 = vand.u32 %v288, 4294901760
  %1814 = vmatpush.msra.mxu0 %v1813
  %v1815 = vand.u32 %v283, 4294901760
  %1816 = vmatpush.msra.mxu0 %v1815
  %v1817 = vand.u32 %v451, 4294901760
  %1818 = vmatmul.f32.gmra.mxu0 %v1817
  %v1819 = vpop.f32.mrf.mxu0
  %v1820 = vadd.f32 %v1783, %v1819
  %1821 = vdwg.mxu0
  %v1822 = vand.u32 %v438, 4294901760
  %1823 = vmatpush.msra.mxu0 %v1822
  %v1824 = vand.u32 %v433, 4294901760
  %1825 = vmatpush.msra.mxu0 %v1824
  %v1826 = vand.u32 %v428, 4294901760
  %1827 = vmatpush.msra.mxu0 %v1826
  %v1828 = vand.u32 %v423, 4294901760
  %1829 = vmatpush.msra.mxu0 %v1828
  %v1830 = vand.u32 %v418, 4294901760
  %1831 = vmatpush.msra.mxu0 %v1830
  %v1832 = vand.u32 %v413, 4294901760
  %1833 = vmatpush.msra.mxu0 %v1832
  %v1834 = vand.u32 %v408, 4294901760
  %1835 = vmatpush.msra.mxu0 %v1834
  %v1836 = vand.u32 %v403, 4294901760
  %1837 = vmatpush.msra.mxu0 %v1836
  %v1838 = vand.u32 %v398, 4294901760
  %1839 = vmatpush.msra.mxu0 %v1838
  %v1840 = vand.u32 %v393, 4294901760
  %1841 = vmatpush.msra.mxu0 %v1840
  %v1842 = vand.u32 %v388, 4294901760
  %1843 = vmatpush.msra.mxu0 %v1842
  %v1844 = vand.u32 %v383, 4294901760
  %1845 = vmatpush.msra.mxu0 %v1844
  %v1846 = vand.u32 %v378, 4294901760
  %1847 = vmatpush.msra.mxu0 %v1846
  %v1848 = vand.u32 %v373, 4294901760
  %1849 = vmatpush.msra.mxu0 %v1848
  %v1850 = vand.u32 %v368, 4294901760
  %1851 = vmatpush.msra.mxu0 %v1850
  %v1852 = vand.u32 %v363, 4294901760
  %1853 = vmatpush.msra.mxu0 %v1852
  %v1854 = vand.u32 %v452, 4294901760
  %v1855 = vsub.f32 %v452, %v1854
  %v1856 = vand.u32 %v1855, 4294901760
  %v1857 = vsub.f32 %v1855, %v1856
  %v1858 = vand.u32 %v1857, 4294901760
  %1859 = vmatmul.f32.gmra.mxu0 %v1858
  %v1860 = vpop.f32.mrf.mxu0
  %v1861 = vadd.f32 %v1820, %v1860
  %1862 = vdwg.mxu0
  %v1863 = vand.u32 %v438, 4294901760
  %v1864 = vsub.f32 %v438, %v1863
  %v1865 = vand.u32 %v1864, 4294901760
  %v1866 = vsub.f32 %v1864, %v1865
  %v1867 = vand.u32 %v1866, 4294901760
  %1868 = vmatpush.msra.mxu0 %v1867
  %v1869 = vand.u32 %v433, 4294901760
  %v1870 = vsub.f32 %v433, %v1869
  %v1871 = vand.u32 %v1870, 4294901760
  %v1872 = vsub.f32 %v1870, %v1871
  %v1873 = vand.u32 %v1872, 4294901760
  %1874 = vmatpush.msra.mxu0 %v1873
  %v1875 = vand.u32 %v428, 4294901760
  %v1876 = vsub.f32 %v428, %v1875
  %v1877 = vand.u32 %v1876, 4294901760
  %v1878 = vsub.f32 %v1876, %v1877
  %v1879 = vand.u32 %v1878, 4294901760
  %1880 = vmatpush.msra.mxu0 %v1879
  %v1881 = vand.u32 %v423, 4294901760
  %v1882 = vsub.f32 %v423, %v1881
  %v1883 = vand.u32 %v1882, 4294901760
  %v1884 = vsub.f32 %v1882, %v1883
  %v1885 = vand.u32 %v1884, 4294901760
  %1886 = vmatpush.msra.mxu0 %v1885
  %v1887 = vand.u32 %v418, 4294901760
  %v1888 = vsub.f32 %v418, %v1887
  %v1889 = vand.u32 %v1888, 4294901760
  %v1890 = vsub.f32 %v1888, %v1889
  %v1891 = vand.u32 %v1890, 4294901760
  %1892 = vmatpush.msra.mxu0 %v1891
  %v1893 = vand.u32 %v413, 4294901760
  %v1894 = vsub.f32 %v413, %v1893
  %v1895 = vand.u32 %v1894, 4294901760
  %v1896 = vsub.f32 %v1894, %v1895
  %v1897 = vand.u32 %v1896, 4294901760
  %1898 = vmatpush.msra.mxu0 %v1897
  %v1899 = vand.u32 %v408, 4294901760
  %v1900 = vsub.f32 %v408, %v1899
  %v1901 = vand.u32 %v1900, 4294901760
  %v1902 = vsub.f32 %v1900, %v1901
  %v1903 = vand.u32 %v1902, 4294901760
  %1904 = vmatpush.msra.mxu0 %v1903
  %v1905 = vand.u32 %v403, 4294901760
  %v1906 = vsub.f32 %v403, %v1905
  %v1907 = vand.u32 %v1906, 4294901760
  %v1908 = vsub.f32 %v1906, %v1907
  %v1909 = vand.u32 %v1908, 4294901760
  %1910 = vmatpush.msra.mxu0 %v1909
  %v1911 = vand.u32 %v398, 4294901760
  %v1912 = vsub.f32 %v398, %v1911
  %v1913 = vand.u32 %v1912, 4294901760
  %v1914 = vsub.f32 %v1912, %v1913
  %v1915 = vand.u32 %v1914, 4294901760
  %1916 = vmatpush.msra.mxu0 %v1915
  %v1917 = vand.u32 %v393, 4294901760
  %v1918 = vsub.f32 %v393, %v1917
  %v1919 = vand.u32 %v1918, 4294901760
  %v1920 = vsub.f32 %v1918, %v1919
  %v1921 = vand.u32 %v1920, 4294901760
  %1922 = vmatpush.msra.mxu0 %v1921
  %v1923 = vand.u32 %v388, 4294901760
  %v1924 = vsub.f32 %v388, %v1923
  %v1925 = vand.u32 %v1924, 4294901760
  %v1926 = vsub.f32 %v1924, %v1925
  %v1927 = vand.u32 %v1926, 4294901760
  %1928 = vmatpush.msra.mxu0 %v1927
  %v1929 = vand.u32 %v383, 4294901760
  %v1930 = vsub.f32 %v383, %v1929
  %v1931 = vand.u32 %v1930, 4294901760
  %v1932 = vsub.f32 %v1930, %v1931
  %v1933 = vand.u32 %v1932, 4294901760
  %1934 = vmatpush.msra.mxu0 %v1933
  %v1935 = vand.u32 %v378, 4294901760
  %v1936 = vsub.f32 %v378, %v1935
  %v1937 = vand.u32 %v1936, 4294901760
  %v1938 = vsub.f32 %v1936, %v1937
  %v1939 = vand.u32 %v1938, 4294901760
  %1940 = vmatpush.msra.mxu0 %v1939
  %v1941 = vand.u32 %v373, 4294901760
  %v1942 = vsub.f32 %v373, %v1941
  %v1943 = vand.u32 %v1942, 4294901760
  %v1944 = vsub.f32 %v1942, %v1943
  %v1945 = vand.u32 %v1944, 4294901760
  %1946 = vmatpush.msra.mxu0 %v1945
  %v1947 = vand.u32 %v368, 4294901760
  %v1948 = vsub.f32 %v368, %v1947
  %v1949 = vand.u32 %v1948, 4294901760
  %v1950 = vsub.f32 %v1948, %v1949
  %v1951 = vand.u32 %v1950, 4294901760
  %1952 = vmatpush.msra.mxu0 %v1951
  %v1953 = vand.u32 %v363, 4294901760
  %v1954 = vsub.f32 %v363, %v1953
  %v1955 = vand.u32 %v1954, 4294901760
  %v1956 = vsub.f32 %v1954, %v1955
  %v1957 = vand.u32 %v1956, 4294901760
  %1958 = vmatpush.msra.mxu0 %v1957
  %v1959 = vand.u32 %v452, 4294901760
  %1960 = vmatmul.f32.gmra.mxu0 %v1959
  %v1961 = vpop.f32.mrf.mxu0
  %v1962 = vadd.f32 %v1861, %v1961
  %1963 = vdwg.mxu0
  %v1964 = vand.u32 %v438, 4294901760
  %v1965 = vsub.f32 %v438, %v1964
  %1966 = vmatpush.msra.mxu0 %v1965
  %v1967 = vand.u32 %v433, 4294901760
  %v1968 = vsub.f32 %v433, %v1967
  %1969 = vmatpush.msra.mxu0 %v1968
  %v1970 = vand.u32 %v428, 4294901760
  %v1971 = vsub.f32 %v428, %v1970
  %1972 = vmatpush.msra.mxu0 %v1971
  %v1973 = vand.u32 %v423, 4294901760
  %v1974 = vsub.f32 %v423, %v1973
  %1975 = vmatpush.msra.mxu0 %v1974
  %v1976 = vand.u32 %v418, 4294901760
  %v1977 = vsub.f32 %v418, %v1976
  %1978 = vmatpush.msra.mxu0 %v1977
  %v1979 = vand.u32 %v413, 4294901760
  %v1980 = vsub.f32 %v413, %v1979
  %1981 = vmatpush.msra.mxu0 %v1980
  %v1982 = vand.u32 %v408, 4294901760
  %v1983 = vsub.f32 %v408, %v1982
  %1984 = vmatpush.msra.mxu0 %v1983
  %v1985 = vand.u32 %v403, 4294901760
  %v1986 = vsub.f32 %v403, %v1985
  %1987 = vmatpush.msra.mxu0 %v1986
  %v1988 = vand.u32 %v398, 4294901760
  %v1989 = vsub.f32 %v398, %v1988
  %1990 = vmatpush.msra.mxu0 %v1989
  %v1991 = vand.u32 %v393, 4294901760
  %v1992 = vsub.f32 %v393, %v1991
  %1993 = vmatpush.msra.mxu0 %v1992
  %v1994 = vand.u32 %v388, 4294901760
  %v1995 = vsub.f32 %v388, %v1994
  %1996 = vmatpush.msra.mxu0 %v1995
  %v1997 = vand.u32 %v383, 4294901760
  %v1998 = vsub.f32 %v383, %v1997
  %1999 = vmatpush.msra.mxu0 %v1998
  %v2000 = vand.u32 %v378, 4294901760
  %v2001 = vsub.f32 %v378, %v2000
  %2002 = vmatpush.msra.mxu0 %v2001
  %v2003 = vand.u32 %v373, 4294901760
  %v2004 = vsub.f32 %v373, %v2003
  %2005 = vmatpush.msra.mxu0 %v2004
  %v2006 = vand.u32 %v368, 4294901760
  %v2007 = vsub.f32 %v368, %v2006
  %2008 = vmatpush.msra.mxu0 %v2007
  %v2009 = vand.u32 %v363, 4294901760
  %v2010 = vsub.f32 %v363, %v2009
  %2011 = vmatpush.msra.mxu0 %v2010
  %v2012 = vand.u32 %v452, 4294901760
  %v2013 = vsub.f32 %v452, %v2012
  %2014 = vmatmul.f32.gmra.mxu0 %v2013
  %v2015 = vpop.f32.mrf.mxu0
  %v2016 = vadd.f32 %v1962, %v2015
  %2017 = vdwg.mxu0
  %v2018 = vand.u32 %v438, 4294901760
  %2019 = vmatpush.msra.mxu0 %v2018
  %v2020 = vand.u32 %v433, 4294901760
  %2021 = vmatpush.msra.mxu0 %v2020
  %v2022 = vand.u32 %v428, 4294901760
  %2023 = vmatpush.msra.mxu0 %v2022
  %v2024 = vand.u32 %v423, 4294901760
  %2025 = vmatpush.msra.mxu0 %v2024
  %v2026 = vand.u32 %v418, 4294901760
  %2027 = vmatpush.msra.mxu0 %v2026
  %v2028 = vand.u32 %v413, 4294901760
  %2029 = vmatpush.msra.mxu0 %v2028
  %v2030 = vand.u32 %v408, 4294901760
  %2031 = vmatpush.msra.mxu0 %v2030
  %v2032 = vand.u32 %v403, 4294901760
  %2033 = vmatpush.msra.mxu0 %v2032
  %v2034 = vand.u32 %v398, 4294901760
  %2035 = vmatpush.msra.mxu0 %v2034
  %v2036 = vand.u32 %v393, 4294901760
  %2037 = vmatpush.msra.mxu0 %v2036
  %v2038 = vand.u32 %v388, 4294901760
  %2039 = vmatpush.msra.mxu0 %v2038
  %v2040 = vand.u32 %v383, 4294901760
  %2041 = vmatpush.msra.mxu0 %v2040
  %v2042 = vand.u32 %v378, 4294901760
  %2043 = vmatpush.msra.mxu0 %v2042
  %v2044 = vand.u32 %v373, 4294901760
  %2045 = vmatpush.msra.mxu0 %v2044
  %v2046 = vand.u32 %v368, 4294901760
  %2047 = vmatpush.msra.mxu0 %v2046
  %v2048 = vand.u32 %v363, 4294901760
  %2049 = vmatpush.msra.mxu0 %v2048
  %v2050 = vand.u32 %v452, 4294901760
  %v2051 = vsub.f32 %v452, %v2050
  %v2052 = vand.u32 %v2051, 4294901760
  %2053 = vmatmul.f32.gmra.mxu0 %v2052
  %v2054 = vpop.f32.mrf.mxu0
  %v2055 = vadd.f32 %v2016, %v2054
  %2056 = vdwg.mxu0
  %v2057 = vand.u32 %v438, 4294901760
  %v2058 = vsub.f32 %v438, %v2057
  %v2059 = vand.u32 %v2058, 4294901760
  %2060 = vmatpush.msra.mxu0 %v2059
  %v2061 = vand.u32 %v433, 4294901760
  %v2062 = vsub.f32 %v433, %v2061
  %v2063 = vand.u32 %v2062, 4294901760
  %2064 = vmatpush.msra.mxu0 %v2063
  %v2065 = vand.u32 %v428, 4294901760
  %v2066 = vsub.f32 %v428, %v2065
  %v2067 = vand.u32 %v2066, 4294901760
  %2068 = vmatpush.msra.mxu0 %v2067
  %v2069 = vand.u32 %v423, 4294901760
  %v2070 = vsub.f32 %v423, %v2069
  %v2071 = vand.u32 %v2070, 4294901760
  %2072 = vmatpush.msra.mxu0 %v2071
  %v2073 = vand.u32 %v418, 4294901760
  %v2074 = vsub.f32 %v418, %v2073
  %v2075 = vand.u32 %v2074, 4294901760
  %2076 = vmatpush.msra.mxu0 %v2075
  %v2077 = vand.u32 %v413, 4294901760
  %v2078 = vsub.f32 %v413, %v2077
  %v2079 = vand.u32 %v2078, 4294901760
  %2080 = vmatpush.msra.mxu0 %v2079
  %v2081 = vand.u32 %v408, 4294901760
  %v2082 = vsub.f32 %v408, %v2081
  %v2083 = vand.u32 %v2082, 4294901760
  %2084 = vmatpush.msra.mxu0 %v2083
  %v2085 = vand.u32 %v403, 4294901760
  %v2086 = vsub.f32 %v403, %v2085
  %v2087 = vand.u32 %v2086, 4294901760
  %2088 = vmatpush.msra.mxu0 %v2087
  %v2089 = vand.u32 %v398, 4294901760
  %v2090 = vsub.f32 %v398, %v2089
  %v2091 = vand.u32 %v2090, 4294901760
  %2092 = vmatpush.msra.mxu0 %v2091
  %v2093 = vand.u32 %v393, 4294901760
  %v2094 = vsub.f32 %v393, %v2093
  %v2095 = vand.u32 %v2094, 4294901760
  %2096 = vmatpush.msra.mxu0 %v2095
  %v2097 = vand.u32 %v388, 4294901760
  %v2098 = vsub.f32 %v388, %v2097
  %v2099 = vand.u32 %v2098, 4294901760
  %2100 = vmatpush.msra.mxu0 %v2099
  %v2101 = vand.u32 %v383, 4294901760
  %v2102 = vsub.f32 %v383, %v2101
  %v2103 = vand.u32 %v2102, 4294901760
  %2104 = vmatpush.msra.mxu0 %v2103
  %v2105 = vand.u32 %v378, 4294901760
  %v2106 = vsub.f32 %v378, %v2105
  %v2107 = vand.u32 %v2106, 4294901760
  %2108 = vmatpush.msra.mxu0 %v2107
  %v2109 = vand.u32 %v373, 4294901760
  %v2110 = vsub.f32 %v373, %v2109
  %v2111 = vand.u32 %v2110, 4294901760
  %2112 = vmatpush.msra.mxu0 %v2111
  %v2113 = vand.u32 %v368, 4294901760
  %v2114 = vsub.f32 %v368, %v2113
  %v2115 = vand.u32 %v2114, 4294901760
  %2116 = vmatpush.msra.mxu0 %v2115
  %v2117 = vand.u32 %v363, 4294901760
  %v2118 = vsub.f32 %v363, %v2117
  %v2119 = vand.u32 %v2118, 4294901760
  %2120 = vmatpush.msra.mxu0 %v2119
  %v2121 = vand.u32 %v452, 4294901760
  %2122 = vmatmul.f32.gmra.mxu0 %v2121
  %v2123 = vpop.f32.mrf.mxu0
  %v2124 = vadd.f32 %v2055, %v2123
  %2125 = vdwg.mxu0
  %v2126 = vand.u32 %v438, 4294901760
  %2127 = vmatpush.msra.mxu0 %v2126
  %v2128 = vand.u32 %v433, 4294901760
  %2129 = vmatpush.msra.mxu0 %v2128
  %v2130 = vand.u32 %v428, 4294901760
  %2131 = vmatpush.msra.mxu0 %v2130
  %v2132 = vand.u32 %v423, 4294901760
  %2133 = vmatpush.msra.mxu0 %v2132
  %v2134 = vand.u32 %v418, 4294901760
  %2135 = vmatpush.msra.mxu0 %v2134
  %v2136 = vand.u32 %v413, 4294901760
  %2137 = vmatpush.msra.mxu0 %v2136
  %v2138 = vand.u32 %v408, 4294901760
  %2139 = vmatpush.msra.mxu0 %v2138
  %v2140 = vand.u32 %v403, 4294901760
  %2141 = vmatpush.msra.mxu0 %v2140
  %v2142 = vand.u32 %v398, 4294901760
  %2143 = vmatpush.msra.mxu0 %v2142
  %v2144 = vand.u32 %v393, 4294901760
  %2145 = vmatpush.msra.mxu0 %v2144
  %v2146 = vand.u32 %v388, 4294901760
  %2147 = vmatpush.msra.mxu0 %v2146
  %v2148 = vand.u32 %v383, 4294901760
  %2149 = vmatpush.msra.mxu0 %v2148
  %v2150 = vand.u32 %v378, 4294901760
  %2151 = vmatpush.msra.mxu0 %v2150
  %v2152 = vand.u32 %v373, 4294901760
  %2153 = vmatpush.msra.mxu0 %v2152
  %v2154 = vand.u32 %v368, 4294901760
  %2155 = vmatpush.msra.mxu0 %v2154
  %v2156 = vand.u32 %v363, 4294901760
  %2157 = vmatpush.msra.mxu0 %v2156
  %v2158 = vand.u32 %v452, 4294901760
  %2159 = vmatmul.f32.gmra.mxu0 %v2158
  %v2160 = vpop.f32.mrf.mxu0
  %v2161 = vadd.f32 %v2124, %v2160
  %2162 = vdwg.mxu0
  %v2163 = vand.u32 %v119, 4294901760
  %2164 = vmatpush.msra.mxu0 %v2163
  %v2165 = vand.u32 %v114, 4294901760
  %2166 = vmatpush.msra.mxu0 %v2165
  %v2167 = vand.u32 %v109, 4294901760
  %2168 = vmatpush.msra.mxu0 %v2167
  %v2169 = vand.u32 %v104, 4294901760
  %2170 = vmatpush.msra.mxu0 %v2169
  %v2171 = vand.u32 %v99, 4294901760
  %2172 = vmatpush.msra.mxu0 %v2171
  %v2173 = vand.u32 %v94, 4294901760
  %2174 = vmatpush.msra.mxu0 %v2173
  %v2175 = vand.u32 %v89, 4294901760
  %2176 = vmatpush.msra.mxu0 %v2175
  %v2177 = vand.u32 %v84, 4294901760
  %2178 = vmatpush.msra.mxu0 %v2177
  %v2179 = vand.u32 %v79, 4294901760
  %2180 = vmatpush.msra.mxu0 %v2179
  %v2181 = vand.u32 %v74, 4294901760
  %2182 = vmatpush.msra.mxu0 %v2181
  %v2183 = vand.u32 %v69, 4294901760
  %2184 = vmatpush.msra.mxu0 %v2183
  %v2185 = vand.u32 %v64, 4294901760
  %2186 = vmatpush.msra.mxu0 %v2185
  %v2187 = vand.u32 %v59, 4294901760
  %2188 = vmatpush.msra.mxu0 %v2187
  %v2189 = vand.u32 %v54, 4294901760
  %2190 = vmatpush.msra.mxu0 %v2189
  %v2191 = vand.u32 %v49, 4294901760
  %2192 = vmatpush.msra.mxu0 %v2191
  %v2193 = vand.u32 %v44, 4294901760
  %2194 = vmatpush.msra.mxu0 %v2193
  %v2195 = vand.u32 %v448, 4294901760
  %v2196 = vsub.f32 %v448, %v2195
  %v2197 = vand.u32 %v2196, 4294901760
  %v2198 = vsub.f32 %v2196, %v2197
  %v2199 = vand.u32 %v2198, 4294901760
  %2200 = vmatmul.f32.gmra.mxu0 %v2199
  %v2201 = vpop.f32.mrf.mxu0
  %v2202 = vadd.f32 0.0, %v2201
  %2203 = vdwg.mxu0
  %v2204 = vand.u32 %v119, 4294901760
  %v2205 = vsub.f32 %v119, %v2204
  %v2206 = vand.u32 %v2205, 4294901760
  %v2207 = vsub.f32 %v2205, %v2206
  %v2208 = vand.u32 %v2207, 4294901760
  %2209 = vmatpush.msra.mxu0 %v2208
  %v2210 = vand.u32 %v114, 4294901760
  %v2211 = vsub.f32 %v114, %v2210
  %v2212 = vand.u32 %v2211, 4294901760
  %v2213 = vsub.f32 %v2211, %v2212
  %v2214 = vand.u32 %v2213, 4294901760
  %2215 = vmatpush.msra.mxu0 %v2214
  %v2216 = vand.u32 %v109, 4294901760
  %v2217 = vsub.f32 %v109, %v2216
  %v2218 = vand.u32 %v2217, 4294901760
  %v2219 = vsub.f32 %v2217, %v2218
  %v2220 = vand.u32 %v2219, 4294901760
  %2221 = vmatpush.msra.mxu0 %v2220
  %v2222 = vand.u32 %v104, 4294901760
  %v2223 = vsub.f32 %v104, %v2222
  %v2224 = vand.u32 %v2223, 4294901760
  %v2225 = vsub.f32 %v2223, %v2224
  %v2226 = vand.u32 %v2225, 4294901760
  %2227 = vmatpush.msra.mxu0 %v2226
  %v2228 = vand.u32 %v99, 4294901760
  %v2229 = vsub.f32 %v99, %v2228
  %v2230 = vand.u32 %v2229, 4294901760
  %v2231 = vsub.f32 %v2229, %v2230
  %v2232 = vand.u32 %v2231, 4294901760
  %2233 = vmatpush.msra.mxu0 %v2232
  %v2234 = vand.u32 %v94, 4294901760
  %v2235 = vsub.f32 %v94, %v2234
  %v2236 = vand.u32 %v2235, 4294901760
  %v2237 = vsub.f32 %v2235, %v2236
  %v2238 = vand.u32 %v2237, 4294901760
  %2239 = vmatpush.msra.mxu0 %v2238
  %v2240 = vand.u32 %v89, 4294901760
  %v2241 = vsub.f32 %v89, %v2240
  %v2242 = vand.u32 %v2241, 4294901760
  %v2243 = vsub.f32 %v2241, %v2242
  %v2244 = vand.u32 %v2243, 4294901760
  %2245 = vmatpush.msra.mxu0 %v2244
  %v2246 = vand.u32 %v84, 4294901760
  %v2247 = vsub.f32 %v84, %v2246
  %v2248 = vand.u32 %v2247, 4294901760
  %v2249 = vsub.f32 %v2247, %v2248
  %v2250 = vand.u32 %v2249, 4294901760
  %2251 = vmatpush.msra.mxu0 %v2250
  %v2252 = vand.u32 %v79, 4294901760
  %v2253 = vsub.f32 %v79, %v2252
  %v2254 = vand.u32 %v2253, 4294901760
  %v2255 = vsub.f32 %v2253, %v2254
  %v2256 = vand.u32 %v2255, 4294901760
  %2257 = vmatpush.msra.mxu0 %v2256
  %v2258 = vand.u32 %v74, 4294901760
  %v2259 = vsub.f32 %v74, %v2258
  %v2260 = vand.u32 %v2259, 4294901760
  %v2261 = vsub.f32 %v2259, %v2260
  %v2262 = vand.u32 %v2261, 4294901760
  %2263 = vmatpush.msra.mxu0 %v2262
  %v2264 = vand.u32 %v69, 4294901760
  %v2265 = vsub.f32 %v69, %v2264
  %v2266 = vand.u32 %v2265, 4294901760
  %v2267 = vsub.f32 %v2265, %v2266
  %v2268 = vand.u32 %v2267, 4294901760
  %2269 = vmatpush.msra.mxu0 %v2268
  %v2270 = vand.u32 %v64, 4294901760
  %v2271 = vsub.f32 %v64, %v2270
  %v2272 = vand.u32 %v2271, 4294901760
  %v2273 = vsub.f32 %v2271, %v2272
  %v2274 = vand.u32 %v2273, 4294901760
  %2275 = vmatpush.msra.mxu0 %v2274
  %v2276 = vand.u32 %v59, 4294901760
  %v2277 = vsub.f32 %v59, %v2276
  %v2278 = vand.u32 %v2277, 4294901760
  %v2279 = vsub.f32 %v2277, %v2278
  %v2280 = vand.u32 %v2279, 4294901760
  %2281 = vmatpush.msra.mxu0 %v2280
  %v2282 = vand.u32 %v54, 4294901760
  %v2283 = vsub.f32 %v54, %v2282
  %v2284 = vand.u32 %v2283, 4294901760
  %v2285 = vsub.f32 %v2283, %v2284
  %v2286 = vand.u32 %v2285, 4294901760
  %2287 = vmatpush.msra.mxu0 %v2286
  %v2288 = vand.u32 %v49, 4294901760
  %v2289 = vsub.f32 %v49, %v2288
  %v2290 = vand.u32 %v2289, 4294901760
  %v2291 = vsub.f32 %v2289, %v2290
  %v2292 = vand.u32 %v2291, 4294901760
  %2293 = vmatpush.msra.mxu0 %v2292
  %v2294 = vand.u32 %v44, 4294901760
  %v2295 = vsub.f32 %v44, %v2294
  %v2296 = vand.u32 %v2295, 4294901760
  %v2297 = vsub.f32 %v2295, %v2296
  %v2298 = vand.u32 %v2297, 4294901760
  %2299 = vmatpush.msra.mxu0 %v2298
  %v2300 = vand.u32 %v448, 4294901760
  %2301 = vmatmul.f32.gmra.mxu0 %v2300
  %v2302 = vpop.f32.mrf.mxu0
  %v2303 = vadd.f32 %v2202, %v2302
  %2304 = vdwg.mxu0
  %v2305 = vand.u32 %v119, 4294901760
  %v2306 = vsub.f32 %v119, %v2305
  %2307 = vmatpush.msra.mxu0 %v2306
  %v2308 = vand.u32 %v114, 4294901760
  %v2309 = vsub.f32 %v114, %v2308
  %2310 = vmatpush.msra.mxu0 %v2309
  %v2311 = vand.u32 %v109, 4294901760
  %v2312 = vsub.f32 %v109, %v2311
  %2313 = vmatpush.msra.mxu0 %v2312
  %v2314 = vand.u32 %v104, 4294901760
  %v2315 = vsub.f32 %v104, %v2314
  %2316 = vmatpush.msra.mxu0 %v2315
  %v2317 = vand.u32 %v99, 4294901760
  %v2318 = vsub.f32 %v99, %v2317
  %2319 = vmatpush.msra.mxu0 %v2318
  %v2320 = vand.u32 %v94, 4294901760
  %v2321 = vsub.f32 %v94, %v2320
  %2322 = vmatpush.msra.mxu0 %v2321
  %v2323 = vand.u32 %v89, 4294901760
  %v2324 = vsub.f32 %v89, %v2323
  %2325 = vmatpush.msra.mxu0 %v2324
  %v2326 = vand.u32 %v84, 4294901760
  %v2327 = vsub.f32 %v84, %v2326
  %2328 = vmatpush.msra.mxu0 %v2327
  %v2329 = vand.u32 %v79, 4294901760
  %v2330 = vsub.f32 %v79, %v2329
  %2331 = vmatpush.msra.mxu0 %v2330
  %v2332 = vand.u32 %v74, 4294901760
  %v2333 = vsub.f32 %v74, %v2332
  %2334 = vmatpush.msra.mxu0 %v2333
  %v2335 = vand.u32 %v69, 4294901760
  %v2336 = vsub.f32 %v69, %v2335
  %2337 = vmatpush.msra.mxu0 %v2336
  %v2338 = vand.u32 %v64, 4294901760
  %v2339 = vsub.f32 %v64, %v2338
  %2340 = vmatpush.msra.mxu0 %v2339
  %v2341 = vand.u32 %v59, 4294901760
  %v2342 = vsub.f32 %v59, %v2341
  %2343 = vmatpush.msra.mxu0 %v2342
  %v2344 = vand.u32 %v54, 4294901760
  %v2345 = vsub.f32 %v54, %v2344
  %2346 = vmatpush.msra.mxu0 %v2345
  %v2347 = vand.u32 %v49, 4294901760
  %v2348 = vsub.f32 %v49, %v2347
  %2349 = vmatpush.msra.mxu0 %v2348
  %v2350 = vand.u32 %v44, 4294901760
  %v2351 = vsub.f32 %v44, %v2350
  %2352 = vmatpush.msra.mxu0 %v2351
  %v2353 = vand.u32 %v448, 4294901760
  %v2354 = vsub.f32 %v448, %v2353
  %2355 = vmatmul.f32.gmra.mxu0 %v2354
  %v2356 = vpop.f32.mrf.mxu0
  %v2357 = vadd.f32 %v2303, %v2356
  %2358 = vdwg.mxu0
  %v2359 = vand.u32 %v119, 4294901760
  %2360 = vmatpush.msra.mxu0 %v2359
  %v2361 = vand.u32 %v114, 4294901760
  %2362 = vmatpush.msra.mxu0 %v2361
  %v2363 = vand.u32 %v109, 4294901760
  %2364 = vmatpush.msra.mxu0 %v2363
  %v2365 = vand.u32 %v104, 4294901760
  %2366 = vmatpush.msra.mxu0 %v2365
  %v2367 = vand.u32 %v99, 4294901760
  %2368 = vmatpush.msra.mxu0 %v2367
  %v2369 = vand.u32 %v94, 4294901760
  %2370 = vmatpush.msra.mxu0 %v2369
  %v2371 = vand.u32 %v89, 4294901760
  %2372 = vmatpush.msra.mxu0 %v2371
  %v2373 = vand.u32 %v84, 4294901760
  %2374 = vmatpush.msra.mxu0 %v2373
  %v2375 = vand.u32 %v79, 4294901760
  %2376 = vmatpush.msra.mxu0 %v2375
  %v2377 = vand.u32 %v74, 4294901760
  %2378 = vmatpush.msra.mxu0 %v2377
  %v2379 = vand.u32 %v69, 4294901760
  %2380 = vmatpush.msra.mxu0 %v2379
  %v2381 = vand.u32 %v64, 4294901760
  %2382 = vmatpush.msra.mxu0 %v2381
  %v2383 = vand.u32 %v59, 4294901760
  %2384 = vmatpush.msra.mxu0 %v2383
  %v2385 = vand.u32 %v54, 4294901760
  %2386 = vmatpush.msra.mxu0 %v2385
  %v2387 = vand.u32 %v49, 4294901760
  %2388 = vmatpush.msra.mxu0 %v2387
  %v2389 = vand.u32 %v44, 4294901760
  %2390 = vmatpush.msra.mxu0 %v2389
  %v2391 = vand.u32 %v448, 4294901760
  %v2392 = vsub.f32 %v448, %v2391
  %v2393 = vand.u32 %v2392, 4294901760
  %2394 = vmatmul.f32.gmra.mxu0 %v2393
  %v2395 = vpop.f32.mrf.mxu0
  %v2396 = vadd.f32 %v2357, %v2395
  %2397 = vdwg.mxu0
  %v2398 = vand.u32 %v119, 4294901760
  %v2399 = vsub.f32 %v119, %v2398
  %v2400 = vand.u32 %v2399, 4294901760
  %2401 = vmatpush.msra.mxu0 %v2400
  %v2402 = vand.u32 %v114, 4294901760
  %v2403 = vsub.f32 %v114, %v2402
  %v2404 = vand.u32 %v2403, 4294901760
  %2405 = vmatpush.msra.mxu0 %v2404
  %v2406 = vand.u32 %v109, 4294901760
  %v2407 = vsub.f32 %v109, %v2406
  %v2408 = vand.u32 %v2407, 4294901760
  %2409 = vmatpush.msra.mxu0 %v2408
  %v2410 = vand.u32 %v104, 4294901760
  %v2411 = vsub.f32 %v104, %v2410
  %v2412 = vand.u32 %v2411, 4294901760
  %2413 = vmatpush.msra.mxu0 %v2412
  %v2414 = vand.u32 %v99, 4294901760
  %v2415 = vsub.f32 %v99, %v2414
  %v2416 = vand.u32 %v2415, 4294901760
  %2417 = vmatpush.msra.mxu0 %v2416
  %v2418 = vand.u32 %v94, 4294901760
  %v2419 = vsub.f32 %v94, %v2418
  %v2420 = vand.u32 %v2419, 4294901760
  %2421 = vmatpush.msra.mxu0 %v2420
  %v2422 = vand.u32 %v89, 4294901760
  %v2423 = vsub.f32 %v89, %v2422
  %v2424 = vand.u32 %v2423, 4294901760
  %2425 = vmatpush.msra.mxu0 %v2424
  %v2426 = vand.u32 %v84, 4294901760
  %v2427 = vsub.f32 %v84, %v2426
  %v2428 = vand.u32 %v2427, 4294901760
  %2429 = vmatpush.msra.mxu0 %v2428
  %v2430 = vand.u32 %v79, 4294901760
  %v2431 = vsub.f32 %v79, %v2430
  %v2432 = vand.u32 %v2431, 4294901760
  %2433 = vmatpush.msra.mxu0 %v2432
  %v2434 = vand.u32 %v74, 4294901760
  %v2435 = vsub.f32 %v74, %v2434
  %v2436 = vand.u32 %v2435, 4294901760
  %2437 = vmatpush.msra.mxu0 %v2436
  %v2438 = vand.u32 %v69, 4294901760
  %v2439 = vsub.f32 %v69, %v2438
  %v2440 = vand.u32 %v2439, 4294901760
  %2441 = vmatpush.msra.mxu0 %v2440
  %v2442 = vand.u32 %v64, 4294901760
  %v2443 = vsub.f32 %v64, %v2442
  %v2444 = vand.u32 %v2443, 4294901760
  %2445 = vmatpush.msra.mxu0 %v2444
  %v2446 = vand.u32 %v59, 4294901760
  %v2447 = vsub.f32 %v59, %v2446
  %v2448 = vand.u32 %v2447, 4294901760
  %2449 = vmatpush.msra.mxu0 %v2448
  %v2450 = vand.u32 %v54, 4294901760
  %v2451 = vsub.f32 %v54, %v2450
  %v2452 = vand.u32 %v2451, 4294901760
  %2453 = vmatpush.msra.mxu0 %v2452
  %v2454 = vand.u32 %v49, 4294901760
  %v2455 = vsub.f32 %v49, %v2454
  %v2456 = vand.u32 %v2455, 4294901760
  %2457 = vmatpush.msra.mxu0 %v2456
  %v2458 = vand.u32 %v44, 4294901760
  %v2459 = vsub.f32 %v44, %v2458
  %v2460 = vand.u32 %v2459, 4294901760
  %2461 = vmatpush.msra.mxu0 %v2460
  %v2462 = vand.u32 %v448, 4294901760
  %2463 = vmatmul.f32.gmra.mxu0 %v2462
  %v2464 = vpop.f32.mrf.mxu0
  %v2465 = vadd.f32 %v2396, %v2464
  %2466 = vdwg.mxu0
  %v2467 = vand.u32 %v119, 4294901760
  %2468 = vmatpush.msra.mxu0 %v2467
  %v2469 = vand.u32 %v114, 4294901760
  %2470 = vmatpush.msra.mxu0 %v2469
  %v2471 = vand.u32 %v109, 4294901760
  %2472 = vmatpush.msra.mxu0 %v2471
  %v2473 = vand.u32 %v104, 4294901760
  %2474 = vmatpush.msra.mxu0 %v2473
  %v2475 = vand.u32 %v99, 4294901760
  %2476 = vmatpush.msra.mxu0 %v2475
  %v2477 = vand.u32 %v94, 4294901760
  %2478 = vmatpush.msra.mxu0 %v2477
  %v2479 = vand.u32 %v89, 4294901760
  %2480 = vmatpush.msra.mxu0 %v2479
  %v2481 = vand.u32 %v84, 4294901760
  %2482 = vmatpush.msra.mxu0 %v2481
  %v2483 = vand.u32 %v79, 4294901760
  %2484 = vmatpush.msra.mxu0 %v2483
  %v2485 = vand.u32 %v74, 4294901760
  %2486 = vmatpush.msra.mxu0 %v2485
  %v2487 = vand.u32 %v69, 4294901760
  %2488 = vmatpush.msra.mxu0 %v2487
  %v2489 = vand.u32 %v64, 4294901760
  %2490 = vmatpush.msra.mxu0 %v2489
  %v2491 = vand.u32 %v59, 4294901760
  %2492 = vmatpush.msra.mxu0 %v2491
  %v2493 = vand.u32 %v54, 4294901760
  %2494 = vmatpush.msra.mxu0 %v2493
  %v2495 = vand.u32 %v49, 4294901760
  %2496 = vmatpush.msra.mxu0 %v2495
  %v2497 = vand.u32 %v44, 4294901760
  %2498 = vmatpush.msra.mxu0 %v2497
  %v2499 = vand.u32 %v448, 4294901760
  %2500 = vmatmul.f32.gmra.mxu0 %v2499
  %v2501 = vpop.f32.mrf.mxu0
  %v2502 = vadd.f32 %v2465, %v2501
  %2503 = vdwg.mxu0
  %v2504 = vand.u32 %v199, 4294901760
  %2505 = vmatpush.msra.mxu0 %v2504
  %v2506 = vand.u32 %v194, 4294901760
  %2507 = vmatpush.msra.mxu0 %v2506
  %v2508 = vand.u32 %v189, 4294901760
  %2509 = vmatpush.msra.mxu0 %v2508
  %v2510 = vand.u32 %v184, 4294901760
  %2511 = vmatpush.msra.mxu0 %v2510
  %v2512 = vand.u32 %v179, 4294901760
  %2513 = vmatpush.msra.mxu0 %v2512
  %v2514 = vand.u32 %v174, 4294901760
  %2515 = vmatpush.msra.mxu0 %v2514
  %v2516 = vand.u32 %v169, 4294901760
  %2517 = vmatpush.msra.mxu0 %v2516
  %v2518 = vand.u32 %v164, 4294901760
  %2519 = vmatpush.msra.mxu0 %v2518
  %v2520 = vand.u32 %v159, 4294901760
  %2521 = vmatpush.msra.mxu0 %v2520
  %v2522 = vand.u32 %v154, 4294901760
  %2523 = vmatpush.msra.mxu0 %v2522
  %v2524 = vand.u32 %v149, 4294901760
  %2525 = vmatpush.msra.mxu0 %v2524
  %v2526 = vand.u32 %v144, 4294901760
  %2527 = vmatpush.msra.mxu0 %v2526
  %v2528 = vand.u32 %v139, 4294901760
  %2529 = vmatpush.msra.mxu0 %v2528
  %v2530 = vand.u32 %v134, 4294901760
  %2531 = vmatpush.msra.mxu0 %v2530
  %v2532 = vand.u32 %v129, 4294901760
  %2533 = vmatpush.msra.mxu0 %v2532
  %v2534 = vand.u32 %v124, 4294901760
  %2535 = vmatpush.msra.mxu0 %v2534
  %v2536 = vand.u32 %v449, 4294901760
  %v2537 = vsub.f32 %v449, %v2536
  %v2538 = vand.u32 %v2537, 4294901760
  %v2539 = vsub.f32 %v2537, %v2538
  %v2540 = vand.u32 %v2539, 4294901760
  %2541 = vmatmul.f32.gmra.mxu0 %v2540
  %v2542 = vpop.f32.mrf.mxu0
  %v2543 = vadd.f32 %v2502, %v2542
  %2544 = vdwg.mxu0
  %v2545 = vand.u32 %v199, 4294901760
  %v2546 = vsub.f32 %v199, %v2545
  %v2547 = vand.u32 %v2546, 4294901760
  %v2548 = vsub.f32 %v2546, %v2547
  %v2549 = vand.u32 %v2548, 4294901760
  %2550 = vmatpush.msra.mxu0 %v2549
  %v2551 = vand.u32 %v194, 4294901760
  %v2552 = vsub.f32 %v194, %v2551
  %v2553 = vand.u32 %v2552, 4294901760
  %v2554 = vsub.f32 %v2552, %v2553
  %v2555 = vand.u32 %v2554, 4294901760
  %2556 = vmatpush.msra.mxu0 %v2555
  %v2557 = vand.u32 %v189, 4294901760
  %v2558 = vsub.f32 %v189, %v2557
  %v2559 = vand.u32 %v2558, 4294901760
  %v2560 = vsub.f32 %v2558, %v2559
  %v2561 = vand.u32 %v2560, 4294901760
  %2562 = vmatpush.msra.mxu0 %v2561
  %v2563 = vand.u32 %v184, 4294901760
  %v2564 = vsub.f32 %v184, %v2563
  %v2565 = vand.u32 %v2564, 4294901760
  %v2566 = vsub.f32 %v2564, %v2565
  %v2567 = vand.u32 %v2566, 4294901760
  %2568 = vmatpush.msra.mxu0 %v2567
  %v2569 = vand.u32 %v179, 4294901760
  %v2570 = vsub.f32 %v179, %v2569
  %v2571 = vand.u32 %v2570, 4294901760
  %v2572 = vsub.f32 %v2570, %v2571
  %v2573 = vand.u32 %v2572, 4294901760
  %2574 = vmatpush.msra.mxu0 %v2573
  %v2575 = vand.u32 %v174, 4294901760
  %v2576 = vsub.f32 %v174, %v2575
  %v2577 = vand.u32 %v2576, 4294901760
  %v2578 = vsub.f32 %v2576, %v2577
  %v2579 = vand.u32 %v2578, 4294901760
  %2580 = vmatpush.msra.mxu0 %v2579
  %v2581 = vand.u32 %v169, 4294901760
  %v2582 = vsub.f32 %v169, %v2581
  %v2583 = vand.u32 %v2582, 4294901760
  %v2584 = vsub.f32 %v2582, %v2583
  %v2585 = vand.u32 %v2584, 4294901760
  %2586 = vmatpush.msra.mxu0 %v2585
  %v2587 = vand.u32 %v164, 4294901760
  %v2588 = vsub.f32 %v164, %v2587
  %v2589 = vand.u32 %v2588, 4294901760
  %v2590 = vsub.f32 %v2588, %v2589
  %v2591 = vand.u32 %v2590, 4294901760
  %2592 = vmatpush.msra.mxu0 %v2591
  %v2593 = vand.u32 %v159, 4294901760
  %v2594 = vsub.f32 %v159, %v2593
  %v2595 = vand.u32 %v2594, 4294901760
  %v2596 = vsub.f32 %v2594, %v2595
  %v2597 = vand.u32 %v2596, 4294901760
  %2598 = vmatpush.msra.mxu0 %v2597
  %v2599 = vand.u32 %v154, 4294901760
  %v2600 = vsub.f32 %v154, %v2599
  %v2601 = vand.u32 %v2600, 4294901760
  %v2602 = vsub.f32 %v2600, %v2601
  %v2603 = vand.u32 %v2602, 4294901760
  %2604 = vmatpush.msra.mxu0 %v2603
  %v2605 = vand.u32 %v149, 4294901760
  %v2606 = vsub.f32 %v149, %v2605
  %v2607 = vand.u32 %v2606, 4294901760
  %v2608 = vsub.f32 %v2606, %v2607
  %v2609 = vand.u32 %v2608, 4294901760
  %2610 = vmatpush.msra.mxu0 %v2609
  %v2611 = vand.u32 %v144, 4294901760
  %v2612 = vsub.f32 %v144, %v2611
  %v2613 = vand.u32 %v2612, 4294901760
  %v2614 = vsub.f32 %v2612, %v2613
  %v2615 = vand.u32 %v2614, 4294901760
  %2616 = vmatpush.msra.mxu0 %v2615
  %v2617 = vand.u32 %v139, 4294901760
  %v2618 = vsub.f32 %v139, %v2617
  %v2619 = vand.u32 %v2618, 4294901760
  %v2620 = vsub.f32 %v2618, %v2619
  %v2621 = vand.u32 %v2620, 4294901760
  %2622 = vmatpush.msra.mxu0 %v2621
  %v2623 = vand.u32 %v134, 4294901760
  %v2624 = vsub.f32 %v134, %v2623
  %v2625 = vand.u32 %v2624, 4294901760
  %v2626 = vsub.f32 %v2624, %v2625
  %v2627 = vand.u32 %v2626, 4294901760
  %2628 = vmatpush.msra.mxu0 %v2627
  %v2629 = vand.u32 %v129, 4294901760
  %v2630 = vsub.f32 %v129, %v2629
  %v2631 = vand.u32 %v2630, 4294901760
  %v2632 = vsub.f32 %v2630, %v2631
  %v2633 = vand.u32 %v2632, 4294901760
  %2634 = vmatpush.msra.mxu0 %v2633
  %v2635 = vand.u32 %v124, 4294901760
  %v2636 = vsub.f32 %v124, %v2635
  %v2637 = vand.u32 %v2636, 4294901760
  %v2638 = vsub.f32 %v2636, %v2637
  %v2639 = vand.u32 %v2638, 4294901760
  %2640 = vmatpush.msra.mxu0 %v2639
  %v2641 = vand.u32 %v449, 4294901760
  %2642 = vmatmul.f32.gmra.mxu0 %v2641
  %v2643 = vpop.f32.mrf.mxu0
  %v2644 = vadd.f32 %v2543, %v2643
  %2645 = vdwg.mxu0
  %v2646 = vand.u32 %v199, 4294901760
  %v2647 = vsub.f32 %v199, %v2646
  %2648 = vmatpush.msra.mxu0 %v2647
  %v2649 = vand.u32 %v194, 4294901760
  %v2650 = vsub.f32 %v194, %v2649
  %2651 = vmatpush.msra.mxu0 %v2650
  %v2652 = vand.u32 %v189, 4294901760
  %v2653 = vsub.f32 %v189, %v2652
  %2654 = vmatpush.msra.mxu0 %v2653
  %v2655 = vand.u32 %v184, 4294901760
  %v2656 = vsub.f32 %v184, %v2655
  %2657 = vmatpush.msra.mxu0 %v2656
  %v2658 = vand.u32 %v179, 4294901760
  %v2659 = vsub.f32 %v179, %v2658
  %2660 = vmatpush.msra.mxu0 %v2659
  %v2661 = vand.u32 %v174, 4294901760
  %v2662 = vsub.f32 %v174, %v2661
  %2663 = vmatpush.msra.mxu0 %v2662
  %v2664 = vand.u32 %v169, 4294901760
  %v2665 = vsub.f32 %v169, %v2664
  %2666 = vmatpush.msra.mxu0 %v2665
  %v2667 = vand.u32 %v164, 4294901760
  %v2668 = vsub.f32 %v164, %v2667
  %2669 = vmatpush.msra.mxu0 %v2668
  %v2670 = vand.u32 %v159, 4294901760
  %v2671 = vsub.f32 %v159, %v2670
  %2672 = vmatpush.msra.mxu0 %v2671
  %v2673 = vand.u32 %v154, 4294901760
  %v2674 = vsub.f32 %v154, %v2673
  %2675 = vmatpush.msra.mxu0 %v2674
  %v2676 = vand.u32 %v149, 4294901760
  %v2677 = vsub.f32 %v149, %v2676
  %2678 = vmatpush.msra.mxu0 %v2677
  %v2679 = vand.u32 %v144, 4294901760
  %v2680 = vsub.f32 %v144, %v2679
  %2681 = vmatpush.msra.mxu0 %v2680
  %v2682 = vand.u32 %v139, 4294901760
  %v2683 = vsub.f32 %v139, %v2682
  %2684 = vmatpush.msra.mxu0 %v2683
  %v2685 = vand.u32 %v134, 4294901760
  %v2686 = vsub.f32 %v134, %v2685
  %2687 = vmatpush.msra.mxu0 %v2686
  %v2688 = vand.u32 %v129, 4294901760
  %v2689 = vsub.f32 %v129, %v2688
  %2690 = vmatpush.msra.mxu0 %v2689
  %v2691 = vand.u32 %v124, 4294901760
  %v2692 = vsub.f32 %v124, %v2691
  %2693 = vmatpush.msra.mxu0 %v2692
  %v2694 = vand.u32 %v449, 4294901760
  %v2695 = vsub.f32 %v449, %v2694
  %2696 = vmatmul.f32.gmra.mxu0 %v2695
  %v2697 = vpop.f32.mrf.mxu0
  %v2698 = vadd.f32 %v2644, %v2697
  %2699 = vdwg.mxu0
  %v2700 = vand.u32 %v199, 4294901760
  %2701 = vmatpush.msra.mxu0 %v2700
  %v2702 = vand.u32 %v194, 4294901760
  %2703 = vmatpush.msra.mxu0 %v2702
  %v2704 = vand.u32 %v189, 4294901760
  %2705 = vmatpush.msra.mxu0 %v2704
  %v2706 = vand.u32 %v184, 4294901760
  %2707 = vmatpush.msra.mxu0 %v2706
  %v2708 = vand.u32 %v179, 4294901760
  %2709 = vmatpush.msra.mxu0 %v2708
  %v2710 = vand.u32 %v174, 4294901760
  %2711 = vmatpush.msra.mxu0 %v2710
  %v2712 = vand.u32 %v169, 4294901760
  %2713 = vmatpush.msra.mxu0 %v2712
  %v2714 = vand.u32 %v164, 4294901760
  %2715 = vmatpush.msra.mxu0 %v2714
  %v2716 = vand.u32 %v159, 4294901760
  %2717 = vmatpush.msra.mxu0 %v2716
  %v2718 = vand.u32 %v154, 4294901760
  %2719 = vmatpush.msra.mxu0 %v2718
  %v2720 = vand.u32 %v149, 4294901760
  %2721 = vmatpush.msra.mxu0 %v2720
  %v2722 = vand.u32 %v144, 4294901760
  %2723 = vmatpush.msra.mxu0 %v2722
  %v2724 = vand.u32 %v139, 4294901760
  %2725 = vmatpush.msra.mxu0 %v2724
  %v2726 = vand.u32 %v134, 4294901760
  %2727 = vmatpush.msra.mxu0 %v2726
  %v2728 = vand.u32 %v129, 4294901760
  %2729 = vmatpush.msra.mxu0 %v2728
  %v2730 = vand.u32 %v124, 4294901760
  %2731 = vmatpush.msra.mxu0 %v2730
  %v2732 = vand.u32 %v449, 4294901760
  %v2733 = vsub.f32 %v449, %v2732
  %v2734 = vand.u32 %v2733, 4294901760
  %2735 = vmatmul.f32.gmra.mxu0 %v2734
  %v2736 = vpop.f32.mrf.mxu0
  %v2737 = vadd.f32 %v2698, %v2736
  %2738 = vdwg.mxu0
  %v2739 = vand.u32 %v199, 4294901760
  %v2740 = vsub.f32 %v199, %v2739
  %v2741 = vand.u32 %v2740, 4294901760
  %2742 = vmatpush.msra.mxu0 %v2741
  %v2743 = vand.u32 %v194, 4294901760
  %v2744 = vsub.f32 %v194, %v2743
  %v2745 = vand.u32 %v2744, 4294901760
  %2746 = vmatpush.msra.mxu0 %v2745
  %v2747 = vand.u32 %v189, 4294901760
  %v2748 = vsub.f32 %v189, %v2747
  %v2749 = vand.u32 %v2748, 4294901760
  %2750 = vmatpush.msra.mxu0 %v2749
  %v2751 = vand.u32 %v184, 4294901760
  %v2752 = vsub.f32 %v184, %v2751
  %v2753 = vand.u32 %v2752, 4294901760
  %2754 = vmatpush.msra.mxu0 %v2753
  %v2755 = vand.u32 %v179, 4294901760
  %v2756 = vsub.f32 %v179, %v2755
  %v2757 = vand.u32 %v2756, 4294901760
  %2758 = vmatpush.msra.mxu0 %v2757
  %v2759 = vand.u32 %v174, 4294901760
  %v2760 = vsub.f32 %v174, %v2759
  %v2761 = vand.u32 %v2760, 4294901760
  %2762 = vmatpush.msra.mxu0 %v2761
  %v2763 = vand.u32 %v169, 4294901760
  %v2764 = vsub.f32 %v169, %v2763
  %v2765 = vand.u32 %v2764, 4294901760
  %2766 = vmatpush.msra.mxu0 %v2765
  %v2767 = vand.u32 %v164, 4294901760
  %v2768 = vsub.f32 %v164, %v2767
  %v2769 = vand.u32 %v2768, 4294901760
  %2770 = vmatpush.msra.mxu0 %v2769
  %v2771 = vand.u32 %v159, 4294901760
  %v2772 = vsub.f32 %v159, %v2771
  %v2773 = vand.u32 %v2772, 4294901760
  %2774 = vmatpush.msra.mxu0 %v2773
  %v2775 = vand.u32 %v154, 4294901760
  %v2776 = vsub.f32 %v154, %v2775
  %v2777 = vand.u32 %v2776, 4294901760
  %2778 = vmatpush.msra.mxu0 %v2777
  %v2779 = vand.u32 %v149, 4294901760
  %v2780 = vsub.f32 %v149, %v2779
  %v2781 = vand.u32 %v2780, 4294901760
  %2782 = vmatpush.msra.mxu0 %v2781
  %v2783 = vand.u32 %v144, 4294901760
  %v2784 = vsub.f32 %v144, %v2783
  %v2785 = vand.u32 %v2784, 4294901760
  %2786 = vmatpush.msra.mxu0 %v2785
  %v2787 = vand.u32 %v139, 4294901760
  %v2788 = vsub.f32 %v139, %v2787
  %v2789 = vand.u32 %v2788, 4294901760
  %2790 = vmatpush.msra.mxu0 %v2789
  %v2791 = vand.u32 %v134, 4294901760
  %v2792 = vsub.f32 %v134, %v2791
  %v2793 = vand.u32 %v2792, 4294901760
  %2794 = vmatpush.msra.mxu0 %v2793
  %v2795 = vand.u32 %v129, 4294901760
  %v2796 = vsub.f32 %v129, %v2795
  %v2797 = vand.u32 %v2796, 4294901760
  %2798 = vmatpush.msra.mxu0 %v2797
  %v2799 = vand.u32 %v124, 4294901760
  %v2800 = vsub.f32 %v124, %v2799
  %v2801 = vand.u32 %v2800, 4294901760
  %2802 = vmatpush.msra.mxu0 %v2801
  %v2803 = vand.u32 %v449, 4294901760
  %2804 = vmatmul.f32.gmra.mxu0 %v2803
  %v2805 = vpop.f32.mrf.mxu0
  %v2806 = vadd.f32 %v2737, %v2805
  %2807 = vdwg.mxu0
  %v2808 = vand.u32 %v199, 4294901760
  %2809 = vmatpush.msra.mxu0 %v2808
  %v2810 = vand.u32 %v194, 4294901760
  %2811 = vmatpush.msra.mxu0 %v2810
  %v2812 = vand.u32 %v189, 4294901760
  %2813 = vmatpush.msra.mxu0 %v2812
  %v2814 = vand.u32 %v184, 4294901760
  %2815 = vmatpush.msra.mxu0 %v2814
  %v2816 = vand.u32 %v179, 4294901760
  %2817 = vmatpush.msra.mxu0 %v2816
  %v2818 = vand.u32 %v174, 4294901760
  %2819 = vmatpush.msra.mxu0 %v2818
  %v2820 = vand.u32 %v169, 4294901760
  %2821 = vmatpush.msra.mxu0 %v2820
  %v2822 = vand.u32 %v164, 4294901760
  %2823 = vmatpush.msra.mxu0 %v2822
  %v2824 = vand.u32 %v159, 4294901760
  %2825 = vmatpush.msra.mxu0 %v2824
  %v2826 = vand.u32 %v154, 4294901760
  %2827 = vmatpush.msra.mxu0 %v2826
  %v2828 = vand.u32 %v149, 4294901760
  %2829 = vmatpush.msra.mxu0 %v2828
  %v2830 = vand.u32 %v144, 4294901760
  %2831 = vmatpush.msra.mxu0 %v2830
  %v2832 = vand.u32 %v139, 4294901760
  %2833 = vmatpush.msra.mxu0 %v2832
  %v2834 = vand.u32 %v134, 4294901760
  %2835 = vmatpush.msra.mxu0 %v2834
  %v2836 = vand.u32 %v129, 4294901760
  %2837 = vmatpush.msra.mxu0 %v2836
  %v2838 = vand.u32 %v124, 4294901760
  %2839 = vmatpush.msra.mxu0 %v2838
  %v2840 = vand.u32 %v449, 4294901760
  %2841 = vmatmul.f32.gmra.mxu0 %v2840
  %v2842 = vpop.f32.mrf.mxu0
  %v2843 = vadd.f32 %v2806, %v2842
  %2844 = vdwg.mxu0
  %v2845 = vand.u32 %v279, 4294901760
  %2846 = vmatpush.msra.mxu0 %v2845
  %v2847 = vand.u32 %v274, 4294901760
  %2848 = vmatpush.msra.mxu0 %v2847
  %v2849 = vand.u32 %v269, 4294901760
  %2850 = vmatpush.msra.mxu0 %v2849
  %v2851 = vand.u32 %v264, 4294901760
  %2852 = vmatpush.msra.mxu0 %v2851
  %v2853 = vand.u32 %v259, 4294901760
  %2854 = vmatpush.msra.mxu0 %v2853
  %v2855 = vand.u32 %v254, 4294901760
  %2856 = vmatpush.msra.mxu0 %v2855
  %v2857 = vand.u32 %v249, 4294901760
  %2858 = vmatpush.msra.mxu0 %v2857
  %v2859 = vand.u32 %v244, 4294901760
  %2860 = vmatpush.msra.mxu0 %v2859
  %v2861 = vand.u32 %v239, 4294901760
  %2862 = vmatpush.msra.mxu0 %v2861
  %v2863 = vand.u32 %v234, 4294901760
  %2864 = vmatpush.msra.mxu0 %v2863
  %v2865 = vand.u32 %v229, 4294901760
  %2866 = vmatpush.msra.mxu0 %v2865
  %v2867 = vand.u32 %v224, 4294901760
  %2868 = vmatpush.msra.mxu0 %v2867
  %v2869 = vand.u32 %v219, 4294901760
  %2870 = vmatpush.msra.mxu0 %v2869
  %v2871 = vand.u32 %v214, 4294901760
  %2872 = vmatpush.msra.mxu0 %v2871
  %v2873 = vand.u32 %v209, 4294901760
  %2874 = vmatpush.msra.mxu0 %v2873
  %v2875 = vand.u32 %v204, 4294901760
  %2876 = vmatpush.msra.mxu0 %v2875
  %v2877 = vand.u32 %v450, 4294901760
  %v2878 = vsub.f32 %v450, %v2877
  %v2879 = vand.u32 %v2878, 4294901760
  %v2880 = vsub.f32 %v2878, %v2879
  %v2881 = vand.u32 %v2880, 4294901760
  %2882 = vmatmul.f32.gmra.mxu0 %v2881
  %v2883 = vpop.f32.mrf.mxu0
  %v2884 = vadd.f32 %v2843, %v2883
  %2885 = vdwg.mxu0
  %v2886 = vand.u32 %v279, 4294901760
  %v2887 = vsub.f32 %v279, %v2886
  %v2888 = vand.u32 %v2887, 4294901760
  %v2889 = vsub.f32 %v2887, %v2888
  %v2890 = vand.u32 %v2889, 4294901760
  %2891 = vmatpush.msra.mxu0 %v2890
  %v2892 = vand.u32 %v274, 4294901760
  %v2893 = vsub.f32 %v274, %v2892
  %v2894 = vand.u32 %v2893, 4294901760
  %v2895 = vsub.f32 %v2893, %v2894
  %v2896 = vand.u32 %v2895, 4294901760
  %2897 = vmatpush.msra.mxu0 %v2896
  %v2898 = vand.u32 %v269, 4294901760
  %v2899 = vsub.f32 %v269, %v2898
  %v2900 = vand.u32 %v2899, 4294901760
  %v2901 = vsub.f32 %v2899, %v2900
  %v2902 = vand.u32 %v2901, 4294901760
  %2903 = vmatpush.msra.mxu0 %v2902
  %v2904 = vand.u32 %v264, 4294901760
  %v2905 = vsub.f32 %v264, %v2904
  %v2906 = vand.u32 %v2905, 4294901760
  %v2907 = vsub.f32 %v2905, %v2906
  %v2908 = vand.u32 %v2907, 4294901760
  %2909 = vmatpush.msra.mxu0 %v2908
  %v2910 = vand.u32 %v259, 4294901760
  %v2911 = vsub.f32 %v259, %v2910
  %v2912 = vand.u32 %v2911, 4294901760
  %v2913 = vsub.f32 %v2911, %v2912
  %v2914 = vand.u32 %v2913, 4294901760
  %2915 = vmatpush.msra.mxu0 %v2914
  %v2916 = vand.u32 %v254, 4294901760
  %v2917 = vsub.f32 %v254, %v2916
  %v2918 = vand.u32 %v2917, 4294901760
  %v2919 = vsub.f32 %v2917, %v2918
  %v2920 = vand.u32 %v2919, 4294901760
  %2921 = vmatpush.msra.mxu0 %v2920
  %v2922 = vand.u32 %v249, 4294901760
  %v2923 = vsub.f32 %v249, %v2922
  %v2924 = vand.u32 %v2923, 4294901760
  %v2925 = vsub.f32 %v2923, %v2924
  %v2926 = vand.u32 %v2925, 4294901760
  %2927 = vmatpush.msra.mxu0 %v2926
  %v2928 = vand.u32 %v244, 4294901760
  %v2929 = vsub.f32 %v244, %v2928
  %v2930 = vand.u32 %v2929, 4294901760
  %v2931 = vsub.f32 %v2929, %v2930
  %v2932 = vand.u32 %v2931, 4294901760
  %2933 = vmatpush.msra.mxu0 %v2932
  %v2934 = vand.u32 %v239, 4294901760
  %v2935 = vsub.f32 %v239, %v2934
  %v2936 = vand.u32 %v2935, 4294901760
  %v2937 = vsub.f32 %v2935, %v2936
  %v2938 = vand.u32 %v2937, 4294901760
  %2939 = vmatpush.msra.mxu0 %v2938
  %v2940 = vand.u32 %v234, 4294901760
  %v2941 = vsub.f32 %v234, %v2940
  %v2942 = vand.u32 %v2941, 4294901760
  %v2943 = vsub.f32 %v2941, %v2942
  %v2944 = vand.u32 %v2943, 4294901760
  %2945 = vmatpush.msra.mxu0 %v2944
  %v2946 = vand.u32 %v229, 4294901760
  %v2947 = vsub.f32 %v229, %v2946
  %v2948 = vand.u32 %v2947, 4294901760
  %v2949 = vsub.f32 %v2947, %v2948
  %v2950 = vand.u32 %v2949, 4294901760
  %2951 = vmatpush.msra.mxu0 %v2950
  %v2952 = vand.u32 %v224, 4294901760
  %v2953 = vsub.f32 %v224, %v2952
  %v2954 = vand.u32 %v2953, 4294901760
  %v2955 = vsub.f32 %v2953, %v2954
  %v2956 = vand.u32 %v2955, 4294901760
  %2957 = vmatpush.msra.mxu0 %v2956
  %v2958 = vand.u32 %v219, 4294901760
  %v2959 = vsub.f32 %v219, %v2958
  %v2960 = vand.u32 %v2959, 4294901760
  %v2961 = vsub.f32 %v2959, %v2960
  %v2962 = vand.u32 %v2961, 4294901760
  %2963 = vmatpush.msra.mxu0 %v2962
  %v2964 = vand.u32 %v214, 4294901760
  %v2965 = vsub.f32 %v214, %v2964
  %v2966 = vand.u32 %v2965, 4294901760
  %v2967 = vsub.f32 %v2965, %v2966
  %v2968 = vand.u32 %v2967, 4294901760
  %2969 = vmatpush.msra.mxu0 %v2968
  %v2970 = vand.u32 %v209, 4294901760
  %v2971 = vsub.f32 %v209, %v2970
  %v2972 = vand.u32 %v2971, 4294901760
  %v2973 = vsub.f32 %v2971, %v2972
  %v2974 = vand.u32 %v2973, 4294901760
  %2975 = vmatpush.msra.mxu0 %v2974
  %v2976 = vand.u32 %v204, 4294901760
  %v2977 = vsub.f32 %v204, %v2976
  %v2978 = vand.u32 %v2977, 4294901760
  %v2979 = vsub.f32 %v2977, %v2978
  %v2980 = vand.u32 %v2979, 4294901760
  %2981 = vmatpush.msra.mxu0 %v2980
  %v2982 = vand.u32 %v450, 4294901760
  %2983 = vmatmul.f32.gmra.mxu0 %v2982
  %v2984 = vpop.f32.mrf.mxu0
  %v2985 = vadd.f32 %v2884, %v2984
  %2986 = vdwg.mxu0
  %v2987 = vand.u32 %v279, 4294901760
  %v2988 = vsub.f32 %v279, %v2987
  %2989 = vmatpush.msra.mxu0 %v2988
  %v2990 = vand.u32 %v274, 4294901760
  %v2991 = vsub.f32 %v274, %v2990
  %2992 = vmatpush.msra.mxu0 %v2991
  %v2993 = vand.u32 %v269, 4294901760
  %v2994 = vsub.f32 %v269, %v2993
  %2995 = vmatpush.msra.mxu0 %v2994
  %v2996 = vand.u32 %v264, 4294901760
  %v2997 = vsub.f32 %v264, %v2996
  %2998 = vmatpush.msra.mxu0 %v2997
  %v2999 = vand.u32 %v259, 4294901760
  %v3000 = vsub.f32 %v259, %v2999
  %3001 = vmatpush.msra.mxu0 %v3000
  %v3002 = vand.u32 %v254, 4294901760
  %v3003 = vsub.f32 %v254, %v3002
  %3004 = vmatpush.msra.mxu0 %v3003
  %v3005 = vand.u32 %v249, 4294901760
  %v3006 = vsub.f32 %v249, %v3005
  %3007 = vmatpush.msra.mxu0 %v3006
  %v3008 = vand.u32 %v244, 4294901760
  %v3009 = vsub.f32 %v244, %v3008
  %3010 = vmatpush.msra.mxu0 %v3009
  %v3011 = vand.u32 %v239, 4294901760
  %v3012 = vsub.f32 %v239, %v3011
  %3013 = vmatpush.msra.mxu0 %v3012
  %v3014 = vand.u32 %v234, 4294901760
  %v3015 = vsub.f32 %v234, %v3014
  %3016 = vmatpush.msra.mxu0 %v3015
  %v3017 = vand.u32 %v229, 4294901760
  %v3018 = vsub.f32 %v229, %v3017
  %3019 = vmatpush.msra.mxu0 %v3018
  %v3020 = vand.u32 %v224, 4294901760
  %v3021 = vsub.f32 %v224, %v3020
  %3022 = vmatpush.msra.mxu0 %v3021
  %v3023 = vand.u32 %v219, 4294901760
  %v3024 = vsub.f32 %v219, %v3023
  %3025 = vmatpush.msra.mxu0 %v3024
  %v3026 = vand.u32 %v214, 4294901760
  %v3027 = vsub.f32 %v214, %v3026
  %3028 = vmatpush.msra.mxu0 %v3027
  %v3029 = vand.u32 %v209, 4294901760
  %v3030 = vsub.f32 %v209, %v3029
  %3031 = vmatpush.msra.mxu0 %v3030
  %v3032 = vand.u32 %v204, 4294901760
  %v3033 = vsub.f32 %v204, %v3032
  %3034 = vmatpush.msra.mxu0 %v3033
  %v3035 = vand.u32 %v450, 4294901760
  %v3036 = vsub.f32 %v450, %v3035
  %3037 = vmatmul.f32.gmra.mxu0 %v3036
  %v3038 = vpop.f32.mrf.mxu0
  %v3039 = vadd.f32 %v2985, %v3038
  %3040 = vdwg.mxu0
  %v3041 = vand.u32 %v279, 4294901760
  %3042 = vmatpush.msra.mxu0 %v3041
  %v3043 = vand.u32 %v274, 4294901760
  %3044 = vmatpush.msra.mxu0 %v3043
  %v3045 = vand.u32 %v269, 4294901760
  %3046 = vmatpush.msra.mxu0 %v3045
  %v3047 = vand.u32 %v264, 4294901760
  %3048 = vmatpush.msra.mxu0 %v3047
  %v3049 = vand.u32 %v259, 4294901760
  %3050 = vmatpush.msra.mxu0 %v3049
  %v3051 = vand.u32 %v254, 4294901760
  %3052 = vmatpush.msra.mxu0 %v3051
  %v3053 = vand.u32 %v249, 4294901760
  %3054 = vmatpush.msra.mxu0 %v3053
  %v3055 = vand.u32 %v244, 4294901760
  %3056 = vmatpush.msra.mxu0 %v3055
  %v3057 = vand.u32 %v239, 4294901760
  %3058 = vmatpush.msra.mxu0 %v3057
  %v3059 = vand.u32 %v234, 4294901760
  %3060 = vmatpush.msra.mxu0 %v3059
  %v3061 = vand.u32 %v229, 4294901760
  %3062 = vmatpush.msra.mxu0 %v3061
  %v3063 = vand.u32 %v224, 4294901760
  %3064 = vmatpush.msra.mxu0 %v3063
  %v3065 = vand.u32 %v219, 4294901760
  %3066 = vmatpush.msra.mxu0 %v3065
  %v3067 = vand.u32 %v214, 4294901760
  %3068 = vmatpush.msra.mxu0 %v3067
  %v3069 = vand.u32 %v209, 4294901760
  %3070 = vmatpush.msra.mxu0 %v3069
  %v3071 = vand.u32 %v204, 4294901760
  %3072 = vmatpush.msra.mxu0 %v3071
  %v3073 = vand.u32 %v450, 4294901760
  %v3074 = vsub.f32 %v450, %v3073
  %v3075 = vand.u32 %v3074, 4294901760
  %3076 = vmatmul.f32.gmra.mxu0 %v3075
  %v3077 = vpop.f32.mrf.mxu0
  %v3078 = vadd.f32 %v3039, %v3077
  %3079 = vdwg.mxu0
  %v3080 = vand.u32 %v279, 4294901760
  %v3081 = vsub.f32 %v279, %v3080
  %v3082 = vand.u32 %v3081, 4294901760
  %3083 = vmatpush.msra.mxu0 %v3082
  %v3084 = vand.u32 %v274, 4294901760
  %v3085 = vsub.f32 %v274, %v3084
  %v3086 = vand.u32 %v3085, 4294901760
  %3087 = vmatpush.msra.mxu0 %v3086
  %v3088 = vand.u32 %v269, 4294901760
  %v3089 = vsub.f32 %v269, %v3088
  %v3090 = vand.u32 %v3089, 4294901760
  %3091 = vmatpush.msra.mxu0 %v3090
  %v3092 = vand.u32 %v264, 4294901760
  %v3093 = vsub.f32 %v264, %v3092
  %v3094 = vand.u32 %v3093, 4294901760
  %3095 = vmatpush.msra.mxu0 %v3094
  %v3096 = vand.u32 %v259, 4294901760
  %v3097 = vsub.f32 %v259, %v3096
  %v3098 = vand.u32 %v3097, 4294901760
  %3099 = vmatpush.msra.mxu0 %v3098
  %v3100 = vand.u32 %v254, 4294901760
  %v3101 = vsub.f32 %v254, %v3100
  %v3102 = vand.u32 %v3101, 4294901760
  %3103 = vmatpush.msra.mxu0 %v3102
  %v3104 = vand.u32 %v249, 4294901760
  %v3105 = vsub.f32 %v249, %v3104
  %v3106 = vand.u32 %v3105, 4294901760
  %3107 = vmatpush.msra.mxu0 %v3106
  %v3108 = vand.u32 %v244, 4294901760
  %v3109 = vsub.f32 %v244, %v3108
  %v3110 = vand.u32 %v3109, 4294901760
  %3111 = vmatpush.msra.mxu0 %v3110
  %v3112 = vand.u32 %v239, 4294901760
  %v3113 = vsub.f32 %v239, %v3112
  %v3114 = vand.u32 %v3113, 4294901760
  %3115 = vmatpush.msra.mxu0 %v3114
  %v3116 = vand.u32 %v234, 4294901760
  %v3117 = vsub.f32 %v234, %v3116
  %v3118 = vand.u32 %v3117, 4294901760
  %3119 = vmatpush.msra.mxu0 %v3118
  %v3120 = vand.u32 %v229, 4294901760
  %v3121 = vsub.f32 %v229, %v3120
  %v3122 = vand.u32 %v3121, 4294901760
  %3123 = vmatpush.msra.mxu0 %v3122
  %v3124 = vand.u32 %v224, 4294901760
  %v3125 = vsub.f32 %v224, %v3124
  %v3126 = vand.u32 %v3125, 4294901760
  %3127 = vmatpush.msra.mxu0 %v3126
  %v3128 = vand.u32 %v219, 4294901760
  %v3129 = vsub.f32 %v219, %v3128
  %v3130 = vand.u32 %v3129, 4294901760
  %3131 = vmatpush.msra.mxu0 %v3130
  %v3132 = vand.u32 %v214, 4294901760
  %v3133 = vsub.f32 %v214, %v3132
  %v3134 = vand.u32 %v3133, 4294901760
  %3135 = vmatpush.msra.mxu0 %v3134
  %v3136 = vand.u32 %v209, 4294901760
  %v3137 = vsub.f32 %v209, %v3136
  %v3138 = vand.u32 %v3137, 4294901760
  %3139 = vmatpush.msra.mxu0 %v3138
  %v3140 = vand.u32 %v204, 4294901760
  %v3141 = vsub.f32 %v204, %v3140
  %v3142 = vand.u32 %v3141, 4294901760
  %3143 = vmatpush.msra.mxu0 %v3142
  %v3144 = vand.u32 %v450, 4294901760
  %3145 = vmatmul.f32.gmra.mxu0 %v3144
  %v3146 = vpop.f32.mrf.mxu0
  %v3147 = vadd.f32 %v3078, %v3146
  %3148 = vdwg.mxu0
  %v3149 = vand.u32 %v279, 4294901760
  %3150 = vmatpush.msra.mxu0 %v3149
  %v3151 = vand.u32 %v274, 4294901760
  %3152 = vmatpush.msra.mxu0 %v3151
  %v3153 = vand.u32 %v269, 4294901760
  %3154 = vmatpush.msra.mxu0 %v3153
  %v3155 = vand.u32 %v264, 4294901760
  %3156 = vmatpush.msra.mxu0 %v3155
  %v3157 = vand.u32 %v259, 4294901760
  %3158 = vmatpush.msra.mxu0 %v3157
  %v3159 = vand.u32 %v254, 4294901760
  %3160 = vmatpush.msra.mxu0 %v3159
  %v3161 = vand.u32 %v249, 4294901760
  %3162 = vmatpush.msra.mxu0 %v3161
  %v3163 = vand.u32 %v244, 4294901760
  %3164 = vmatpush.msra.mxu0 %v3163
  %v3165 = vand.u32 %v239, 4294901760
  %3166 = vmatpush.msra.mxu0 %v3165
  %v3167 = vand.u32 %v234, 4294901760
  %3168 = vmatpush.msra.mxu0 %v3167
  %v3169 = vand.u32 %v229, 4294901760
  %3170 = vmatpush.msra.mxu0 %v3169
  %v3171 = vand.u32 %v224, 4294901760
  %3172 = vmatpush.msra.mxu0 %v3171
  %v3173 = vand.u32 %v219, 4294901760
  %3174 = vmatpush.msra.mxu0 %v3173
  %v3175 = vand.u32 %v214, 4294901760
  %3176 = vmatpush.msra.mxu0 %v3175
  %v3177 = vand.u32 %v209, 4294901760
  %3178 = vmatpush.msra.mxu0 %v3177
  %v3179 = vand.u32 %v204, 4294901760
  %3180 = vmatpush.msra.mxu0 %v3179
  %v3181 = vand.u32 %v450, 4294901760
  %3182 = vmatmul.f32.gmra.mxu0 %v3181
  %v3183 = vpop.f32.mrf.mxu0
  %v3184 = vadd.f32 %v3147, %v3183
  %3185 = vdwg.mxu0
  %v3186 = vand.u32 %v359, 4294901760
  %3187 = vmatpush.msra.mxu0 %v3186
  %v3188 = vand.u32 %v354, 4294901760
  %3189 = vmatpush.msra.mxu0 %v3188
  %v3190 = vand.u32 %v349, 4294901760
  %3191 = vmatpush.msra.mxu0 %v3190
  %v3192 = vand.u32 %v344, 4294901760
  %3193 = vmatpush.msra.mxu0 %v3192
  %v3194 = vand.u32 %v339, 4294901760
  %3195 = vmatpush.msra.mxu0 %v3194
  %v3196 = vand.u32 %v334, 4294901760
  %3197 = vmatpush.msra.mxu0 %v3196
  %v3198 = vand.u32 %v329, 4294901760
  %3199 = vmatpush.msra.mxu0 %v3198
  %v3200 = vand.u32 %v324, 4294901760
  %3201 = vmatpush.msra.mxu0 %v3200
  %v3202 = vand.u32 %v319, 4294901760
  %3203 = vmatpush.msra.mxu0 %v3202
  %v3204 = vand.u32 %v314, 4294901760
  %3205 = vmatpush.msra.mxu0 %v3204
  %v3206 = vand.u32 %v309, 4294901760
  %3207 = vmatpush.msra.mxu0 %v3206
  %v3208 = vand.u32 %v304, 4294901760
  %3209 = vmatpush.msra.mxu0 %v3208
  %v3210 = vand.u32 %v299, 4294901760
  %3211 = vmatpush.msra.mxu0 %v3210
  %v3212 = vand.u32 %v294, 4294901760
  %3213 = vmatpush.msra.mxu0 %v3212
  %v3214 = vand.u32 %v289, 4294901760
  %3215 = vmatpush.msra.mxu0 %v3214
  %v3216 = vand.u32 %v284, 4294901760
  %3217 = vmatpush.msra.mxu0 %v3216
  %v3218 = vand.u32 %v451, 4294901760
  %v3219 = vsub.f32 %v451, %v3218
  %v3220 = vand.u32 %v3219, 4294901760
  %v3221 = vsub.f32 %v3219, %v3220
  %v3222 = vand.u32 %v3221, 4294901760
  %3223 = vmatmul.f32.gmra.mxu0 %v3222
  %v3224 = vpop.f32.mrf.mxu0
  %v3225 = vadd.f32 %v3184, %v3224
  %3226 = vdwg.mxu0
  %v3227 = vand.u32 %v359, 4294901760
  %v3228 = vsub.f32 %v359, %v3227
  %v3229 = vand.u32 %v3228, 4294901760
  %v3230 = vsub.f32 %v3228, %v3229
  %v3231 = vand.u32 %v3230, 4294901760
  %3232 = vmatpush.msra.mxu0 %v3231
  %v3233 = vand.u32 %v354, 4294901760
  %v3234 = vsub.f32 %v354, %v3233
  %v3235 = vand.u32 %v3234, 4294901760
  %v3236 = vsub.f32 %v3234, %v3235
  %v3237 = vand.u32 %v3236, 4294901760
  %3238 = vmatpush.msra.mxu0 %v3237
  %v3239 = vand.u32 %v349, 4294901760
  %v3240 = vsub.f32 %v349, %v3239
  %v3241 = vand.u32 %v3240, 4294901760
  %v3242 = vsub.f32 %v3240, %v3241
  %v3243 = vand.u32 %v3242, 4294901760
  %3244 = vmatpush.msra.mxu0 %v3243
  %v3245 = vand.u32 %v344, 4294901760
  %v3246 = vsub.f32 %v344, %v3245
  %v3247 = vand.u32 %v3246, 4294901760
  %v3248 = vsub.f32 %v3246, %v3247
  %v3249 = vand.u32 %v3248, 4294901760
  %3250 = vmatpush.msra.mxu0 %v3249
  %v3251 = vand.u32 %v339, 4294901760
  %v3252 = vsub.f32 %v339, %v3251
  %v3253 = vand.u32 %v3252, 4294901760
  %v3254 = vsub.f32 %v3252, %v3253
  %v3255 = vand.u32 %v3254, 4294901760
  %3256 = vmatpush.msra.mxu0 %v3255
  %v3257 = vand.u32 %v334, 4294901760
  %v3258 = vsub.f32 %v334, %v3257
  %v3259 = vand.u32 %v3258, 4294901760
  %v3260 = vsub.f32 %v3258, %v3259
  %v3261 = vand.u32 %v3260, 4294901760
  %3262 = vmatpush.msra.mxu0 %v3261
  %v3263 = vand.u32 %v329, 4294901760
  %v3264 = vsub.f32 %v329, %v3263
  %v3265 = vand.u32 %v3264, 4294901760
  %v3266 = vsub.f32 %v3264, %v3265
  %v3267 = vand.u32 %v3266, 4294901760
  %3268 = vmatpush.msra.mxu0 %v3267
  %v3269 = vand.u32 %v324, 4294901760
  %v3270 = vsub.f32 %v324, %v3269
  %v3271 = vand.u32 %v3270, 4294901760
  %v3272 = vsub.f32 %v3270, %v3271
  %v3273 = vand.u32 %v3272, 4294901760
  %3274 = vmatpush.msra.mxu0 %v3273
  %v3275 = vand.u32 %v319, 4294901760
  %v3276 = vsub.f32 %v319, %v3275
  %v3277 = vand.u32 %v3276, 4294901760
  %v3278 = vsub.f32 %v3276, %v3277
  %v3279 = vand.u32 %v3278, 4294901760
  %3280 = vmatpush.msra.mxu0 %v3279
  %v3281 = vand.u32 %v314, 4294901760
  %v3282 = vsub.f32 %v314, %v3281
  %v3283 = vand.u32 %v3282, 4294901760
  %v3284 = vsub.f32 %v3282, %v3283
  %v3285 = vand.u32 %v3284, 4294901760
  %3286 = vmatpush.msra.mxu0 %v3285
  %v3287 = vand.u32 %v309, 4294901760
  %v3288 = vsub.f32 %v309, %v3287
  %v3289 = vand.u32 %v3288, 4294901760
  %v3290 = vsub.f32 %v3288, %v3289
  %v3291 = vand.u32 %v3290, 4294901760
  %3292 = vmatpush.msra.mxu0 %v3291
  %v3293 = vand.u32 %v304, 4294901760
  %v3294 = vsub.f32 %v304, %v3293
  %v3295 = vand.u32 %v3294, 4294901760
  %v3296 = vsub.f32 %v3294, %v3295
  %v3297 = vand.u32 %v3296, 4294901760
  %3298 = vmatpush.msra.mxu0 %v3297
  %v3299 = vand.u32 %v299, 4294901760
  %v3300 = vsub.f32 %v299, %v3299
  %v3301 = vand.u32 %v3300, 4294901760
  %v3302 = vsub.f32 %v3300, %v3301
  %v3303 = vand.u32 %v3302, 4294901760
  %3304 = vmatpush.msra.mxu0 %v3303
  %v3305 = vand.u32 %v294, 4294901760
  %v3306 = vsub.f32 %v294, %v3305
  %v3307 = vand.u32 %v3306, 4294901760
  %v3308 = vsub.f32 %v3306, %v3307
  %v3309 = vand.u32 %v3308, 4294901760
  %3310 = vmatpush.msra.mxu0 %v3309
  %v3311 = vand.u32 %v289, 4294901760
  %v3312 = vsub.f32 %v289, %v3311
  %v3313 = vand.u32 %v3312, 4294901760
  %v3314 = vsub.f32 %v3312, %v3313
  %v3315 = vand.u32 %v3314, 4294901760
  %3316 = vmatpush.msra.mxu0 %v3315
  %v3317 = vand.u32 %v284, 4294901760
  %v3318 = vsub.f32 %v284, %v3317
  %v3319 = vand.u32 %v3318, 4294901760
  %v3320 = vsub.f32 %v3318, %v3319
  %v3321 = vand.u32 %v3320, 4294901760
  %3322 = vmatpush.msra.mxu0 %v3321
  %v3323 = vand.u32 %v451, 4294901760
  %3324 = vmatmul.f32.gmra.mxu0 %v3323
  %v3325 = vpop.f32.mrf.mxu0
  %v3326 = vadd.f32 %v3225, %v3325
  %3327 = vdwg.mxu0
  %v3328 = vand.u32 %v359, 4294901760
  %v3329 = vsub.f32 %v359, %v3328
  %3330 = vmatpush.msra.mxu0 %v3329
  %v3331 = vand.u32 %v354, 4294901760
  %v3332 = vsub.f32 %v354, %v3331
  %3333 = vmatpush.msra.mxu0 %v3332
  %v3334 = vand.u32 %v349, 4294901760
  %v3335 = vsub.f32 %v349, %v3334
  %3336 = vmatpush.msra.mxu0 %v3335
  %v3337 = vand.u32 %v344, 4294901760
  %v3338 = vsub.f32 %v344, %v3337
  %3339 = vmatpush.msra.mxu0 %v3338
  %v3340 = vand.u32 %v339, 4294901760
  %v3341 = vsub.f32 %v339, %v3340
  %3342 = vmatpush.msra.mxu0 %v3341
  %v3343 = vand.u32 %v334, 4294901760
  %v3344 = vsub.f32 %v334, %v3343
  %3345 = vmatpush.msra.mxu0 %v3344
  %v3346 = vand.u32 %v329, 4294901760
  %v3347 = vsub.f32 %v329, %v3346
  %3348 = vmatpush.msra.mxu0 %v3347
  %v3349 = vand.u32 %v324, 4294901760
  %v3350 = vsub.f32 %v324, %v3349
  %3351 = vmatpush.msra.mxu0 %v3350
  %v3352 = vand.u32 %v319, 4294901760
  %v3353 = vsub.f32 %v319, %v3352
  %3354 = vmatpush.msra.mxu0 %v3353
  %v3355 = vand.u32 %v314, 4294901760
  %v3356 = vsub.f32 %v314, %v3355
  %3357 = vmatpush.msra.mxu0 %v3356
  %v3358 = vand.u32 %v309, 4294901760
  %v3359 = vsub.f32 %v309, %v3358
  %3360 = vmatpush.msra.mxu0 %v3359
  %v3361 = vand.u32 %v304, 4294901760
  %v3362 = vsub.f32 %v304, %v3361
  %3363 = vmatpush.msra.mxu0 %v3362
  %v3364 = vand.u32 %v299, 4294901760
  %v3365 = vsub.f32 %v299, %v3364
  %3366 = vmatpush.msra.mxu0 %v3365
  %v3367 = vand.u32 %v294, 4294901760
  %v3368 = vsub.f32 %v294, %v3367
  %3369 = vmatpush.msra.mxu0 %v3368
  %v3370 = vand.u32 %v289, 4294901760
  %v3371 = vsub.f32 %v289, %v3370
  %3372 = vmatpush.msra.mxu0 %v3371
  %v3373 = vand.u32 %v284, 4294901760
  %v3374 = vsub.f32 %v284, %v3373
  %3375 = vmatpush.msra.mxu0 %v3374
  %v3376 = vand.u32 %v451, 4294901760
  %v3377 = vsub.f32 %v451, %v3376
  %3378 = vmatmul.f32.gmra.mxu0 %v3377
  %v3379 = vpop.f32.mrf.mxu0
  %v3380 = vadd.f32 %v3326, %v3379
  %3381 = vdwg.mxu0
  %v3382 = vand.u32 %v359, 4294901760
  %3383 = vmatpush.msra.mxu0 %v3382
  %v3384 = vand.u32 %v354, 4294901760
  %3385 = vmatpush.msra.mxu0 %v3384
  %v3386 = vand.u32 %v349, 4294901760
  %3387 = vmatpush.msra.mxu0 %v3386
  %v3388 = vand.u32 %v344, 4294901760
  %3389 = vmatpush.msra.mxu0 %v3388
  %v3390 = vand.u32 %v339, 4294901760
  %3391 = vmatpush.msra.mxu0 %v3390
  %v3392 = vand.u32 %v334, 4294901760
  %3393 = vmatpush.msra.mxu0 %v3392
  %v3394 = vand.u32 %v329, 4294901760
  %3395 = vmatpush.msra.mxu0 %v3394
  %v3396 = vand.u32 %v324, 4294901760
  %3397 = vmatpush.msra.mxu0 %v3396
  %v3398 = vand.u32 %v319, 4294901760
  %3399 = vmatpush.msra.mxu0 %v3398
  %v3400 = vand.u32 %v314, 4294901760
  %3401 = vmatpush.msra.mxu0 %v3400
  %v3402 = vand.u32 %v309, 4294901760
  %3403 = vmatpush.msra.mxu0 %v3402
  %v3404 = vand.u32 %v304, 4294901760
  %3405 = vmatpush.msra.mxu0 %v3404
  %v3406 = vand.u32 %v299, 4294901760
  %3407 = vmatpush.msra.mxu0 %v3406
  %v3408 = vand.u32 %v294, 4294901760
  %3409 = vmatpush.msra.mxu0 %v3408
  %v3410 = vand.u32 %v289, 4294901760
  %3411 = vmatpush.msra.mxu0 %v3410
  %v3412 = vand.u32 %v284, 4294901760
  %3413 = vmatpush.msra.mxu0 %v3412
  %v3414 = vand.u32 %v451, 4294901760
  %v3415 = vsub.f32 %v451, %v3414
  %v3416 = vand.u32 %v3415, 4294901760
  %3417 = vmatmul.f32.gmra.mxu0 %v3416
  %v3418 = vpop.f32.mrf.mxu0
  %v3419 = vadd.f32 %v3380, %v3418
  %3420 = vdwg.mxu0
  %v3421 = vand.u32 %v359, 4294901760
  %v3422 = vsub.f32 %v359, %v3421
  %v3423 = vand.u32 %v3422, 4294901760
  %3424 = vmatpush.msra.mxu0 %v3423
  %v3425 = vand.u32 %v354, 4294901760
  %v3426 = vsub.f32 %v354, %v3425
  %v3427 = vand.u32 %v3426, 4294901760
  %3428 = vmatpush.msra.mxu0 %v3427
  %v3429 = vand.u32 %v349, 4294901760
  %v3430 = vsub.f32 %v349, %v3429
  %v3431 = vand.u32 %v3430, 4294901760
  %3432 = vmatpush.msra.mxu0 %v3431
  %v3433 = vand.u32 %v344, 4294901760
  %v3434 = vsub.f32 %v344, %v3433
  %v3435 = vand.u32 %v3434, 4294901760
  %3436 = vmatpush.msra.mxu0 %v3435
  %v3437 = vand.u32 %v339, 4294901760
  %v3438 = vsub.f32 %v339, %v3437
  %v3439 = vand.u32 %v3438, 4294901760
  %3440 = vmatpush.msra.mxu0 %v3439
  %v3441 = vand.u32 %v334, 4294901760
  %v3442 = vsub.f32 %v334, %v3441
  %v3443 = vand.u32 %v3442, 4294901760
  %3444 = vmatpush.msra.mxu0 %v3443
  %v3445 = vand.u32 %v329, 4294901760
  %v3446 = vsub.f32 %v329, %v3445
  %v3447 = vand.u32 %v3446, 4294901760
  %3448 = vmatpush.msra.mxu0 %v3447
  %v3449 = vand.u32 %v324, 4294901760
  %v3450 = vsub.f32 %v324, %v3449
  %v3451 = vand.u32 %v3450, 4294901760
  %3452 = vmatpush.msra.mxu0 %v3451
  %v3453 = vand.u32 %v319, 4294901760
  %v3454 = vsub.f32 %v319, %v3453
  %v3455 = vand.u32 %v3454, 4294901760
  %3456 = vmatpush.msra.mxu0 %v3455
  %v3457 = vand.u32 %v314, 4294901760
  %v3458 = vsub.f32 %v314, %v3457
  %v3459 = vand.u32 %v3458, 4294901760
  %3460 = vmatpush.msra.mxu0 %v3459
  %v3461 = vand.u32 %v309, 4294901760
  %v3462 = vsub.f32 %v309, %v3461
  %v3463 = vand.u32 %v3462, 4294901760
  %3464 = vmatpush.msra.mxu0 %v3463
  %v3465 = vand.u32 %v304, 4294901760
  %v3466 = vsub.f32 %v304, %v3465
  %v3467 = vand.u32 %v3466, 4294901760
  %3468 = vmatpush.msra.mxu0 %v3467
  %v3469 = vand.u32 %v299, 4294901760
  %v3470 = vsub.f32 %v299, %v3469
  %v3471 = vand.u32 %v3470, 4294901760
  %3472 = vmatpush.msra.mxu0 %v3471
  %v3473 = vand.u32 %v294, 4294901760
  %v3474 = vsub.f32 %v294, %v3473
  %v3475 = vand.u32 %v3474, 4294901760
  %3476 = vmatpush.msra.mxu0 %v3475
  %v3477 = vand.u32 %v289, 4294901760
  %v3478 = vsub.f32 %v289, %v3477
  %v3479 = vand.u32 %v3478, 4294901760
  %3480 = vmatpush.msra.mxu0 %v3479
  %v3481 = vand.u32 %v284, 4294901760
  %v3482 = vsub.f32 %v284, %v3481
  %v3483 = vand.u32 %v3482, 4294901760
  %3484 = vmatpush.msra.mxu0 %v3483
  %v3485 = vand.u32 %v451, 4294901760
  %3486 = vmatmul.f32.gmra.mxu0 %v3485
  %v3487 = vpop.f32.mrf.mxu0
  %v3488 = vadd.f32 %v3419, %v3487
  %3489 = vdwg.mxu0
  %v3490 = vand.u32 %v359, 4294901760
  %3491 = vmatpush.msra.mxu0 %v3490
  %v3492 = vand.u32 %v354, 4294901760
  %3493 = vmatpush.msra.mxu0 %v3492
  %v3494 = vand.u32 %v349, 4294901760
  %3495 = vmatpush.msra.mxu0 %v3494
  %v3496 = vand.u32 %v344, 4294901760
  %3497 = vmatpush.msra.mxu0 %v3496
  %v3498 = vand.u32 %v339, 4294901760
  %3499 = vmatpush.msra.mxu0 %v3498
  %v3500 = vand.u32 %v334, 4294901760
  %3501 = vmatpush.msra.mxu0 %v3500
  %v3502 = vand.u32 %v329, 4294901760
  %3503 = vmatpush.msra.mxu0 %v3502
  %v3504 = vand.u32 %v324, 4294901760
  %3505 = vmatpush.msra.mxu0 %v3504
  %v3506 = vand.u32 %v319, 4294901760
  %3507 = vmatpush.msra.mxu0 %v3506
  %v3508 = vand.u32 %v314, 4294901760
  %3509 = vmatpush.msra.mxu0 %v3508
  %v3510 = vand.u32 %v309, 4294901760
  %3511 = vmatpush.msra.mxu0 %v3510
  %v3512 = vand.u32 %v304, 4294901760
  %3513 = vmatpush.msra.mxu0 %v3512
  %v3514 = vand.u32 %v299, 4294901760
  %3515 = vmatpush.msra.mxu0 %v3514
  %v3516 = vand.u32 %v294, 4294901760
  %3517 = vmatpush.msra.mxu0 %v3516
  %v3518 = vand.u32 %v289, 4294901760
  %3519 = vmatpush.msra.mxu0 %v3518
  %v3520 = vand.u32 %v284, 4294901760
  %3521 = vmatpush.msra.mxu0 %v3520
  %v3522 = vand.u32 %v451, 4294901760
  %3523 = vmatmul.f32.gmra.mxu0 %v3522
  %v3524 = vpop.f32.mrf.mxu0
  %v3525 = vadd.f32 %v3488, %v3524
  %3526 = vdwg.mxu0
  %v3527 = vand.u32 %v439, 4294901760
  %3528 = vmatpush.msra.mxu0 %v3527
  %v3529 = vand.u32 %v434, 4294901760
  %3530 = vmatpush.msra.mxu0 %v3529
  %v3531 = vand.u32 %v429, 4294901760
  %3532 = vmatpush.msra.mxu0 %v3531
  %v3533 = vand.u32 %v424, 4294901760
  %3534 = vmatpush.msra.mxu0 %v3533
  %v3535 = vand.u32 %v419, 4294901760
  %3536 = vmatpush.msra.mxu0 %v3535
  %v3537 = vand.u32 %v414, 4294901760
  %3538 = vmatpush.msra.mxu0 %v3537
  %v3539 = vand.u32 %v409, 4294901760
  %3540 = vmatpush.msra.mxu0 %v3539
  %v3541 = vand.u32 %v404, 4294901760
  %3542 = vmatpush.msra.mxu0 %v3541
  %v3543 = vand.u32 %v399, 4294901760
  %3544 = vmatpush.msra.mxu0 %v3543
  %v3545 = vand.u32 %v394, 4294901760
  %3546 = vmatpush.msra.mxu0 %v3545
  %v3547 = vand.u32 %v389, 4294901760
  %3548 = vmatpush.msra.mxu0 %v3547
  %v3549 = vand.u32 %v384, 4294901760
  %3550 = vmatpush.msra.mxu0 %v3549
  %v3551 = vand.u32 %v379, 4294901760
  %3552 = vmatpush.msra.mxu0 %v3551
  %v3553 = vand.u32 %v374, 4294901760
  %3554 = vmatpush.msra.mxu0 %v3553
  %v3555 = vand.u32 %v369, 4294901760
  %3556 = vmatpush.msra.mxu0 %v3555
  %v3557 = vand.u32 %v364, 4294901760
  %3558 = vmatpush.msra.mxu0 %v3557
  %v3559 = vand.u32 %v452, 4294901760
  %v3560 = vsub.f32 %v452, %v3559
  %v3561 = vand.u32 %v3560, 4294901760
  %v3562 = vsub.f32 %v3560, %v3561
  %v3563 = vand.u32 %v3562, 4294901760
  %3564 = vmatmul.f32.gmra.mxu0 %v3563
  %v3565 = vpop.f32.mrf.mxu0
  %v3566 = vadd.f32 %v3525, %v3565
  %3567 = vdwg.mxu0
  %v3568 = vand.u32 %v439, 4294901760
  %v3569 = vsub.f32 %v439, %v3568
  %v3570 = vand.u32 %v3569, 4294901760
  %v3571 = vsub.f32 %v3569, %v3570
  %v3572 = vand.u32 %v3571, 4294901760
  %3573 = vmatpush.msra.mxu0 %v3572
  %v3574 = vand.u32 %v434, 4294901760
  %v3575 = vsub.f32 %v434, %v3574
  %v3576 = vand.u32 %v3575, 4294901760
  %v3577 = vsub.f32 %v3575, %v3576
  %v3578 = vand.u32 %v3577, 4294901760
  %3579 = vmatpush.msra.mxu0 %v3578
  %v3580 = vand.u32 %v429, 4294901760
  %v3581 = vsub.f32 %v429, %v3580
  %v3582 = vand.u32 %v3581, 4294901760
  %v3583 = vsub.f32 %v3581, %v3582
  %v3584 = vand.u32 %v3583, 4294901760
  %3585 = vmatpush.msra.mxu0 %v3584
  %v3586 = vand.u32 %v424, 4294901760
  %v3587 = vsub.f32 %v424, %v3586
  %v3588 = vand.u32 %v3587, 4294901760
  %v3589 = vsub.f32 %v3587, %v3588
  %v3590 = vand.u32 %v3589, 4294901760
  %3591 = vmatpush.msra.mxu0 %v3590
  %v3592 = vand.u32 %v419, 4294901760
  %v3593 = vsub.f32 %v419, %v3592
  %v3594 = vand.u32 %v3593, 4294901760
  %v3595 = vsub.f32 %v3593, %v3594
  %v3596 = vand.u32 %v3595, 4294901760
  %3597 = vmatpush.msra.mxu0 %v3596
  %v3598 = vand.u32 %v414, 4294901760
  %v3599 = vsub.f32 %v414, %v3598
  %v3600 = vand.u32 %v3599, 4294901760
  %v3601 = vsub.f32 %v3599, %v3600
  %v3602 = vand.u32 %v3601, 4294901760
  %3603 = vmatpush.msra.mxu0 %v3602
  %v3604 = vand.u32 %v409, 4294901760
  %v3605 = vsub.f32 %v409, %v3604
  %v3606 = vand.u32 %v3605, 4294901760
  %v3607 = vsub.f32 %v3605, %v3606
  %v3608 = vand.u32 %v3607, 4294901760
  %3609 = vmatpush.msra.mxu0 %v3608
  %v3610 = vand.u32 %v404, 4294901760
  %v3611 = vsub.f32 %v404, %v3610
  %v3612 = vand.u32 %v3611, 4294901760
  %v3613 = vsub.f32 %v3611, %v3612
  %v3614 = vand.u32 %v3613, 4294901760
  %3615 = vmatpush.msra.mxu0 %v3614
  %v3616 = vand.u32 %v399, 4294901760
  %v3617 = vsub.f32 %v399, %v3616
  %v3618 = vand.u32 %v3617, 4294901760
  %v3619 = vsub.f32 %v3617, %v3618
  %v3620 = vand.u32 %v3619, 4294901760
  %3621 = vmatpush.msra.mxu0 %v3620
  %v3622 = vand.u32 %v394, 4294901760
  %v3623 = vsub.f32 %v394, %v3622
  %v3624 = vand.u32 %v3623, 4294901760
  %v3625 = vsub.f32 %v3623, %v3624
  %v3626 = vand.u32 %v3625, 4294901760
  %3627 = vmatpush.msra.mxu0 %v3626
  %v3628 = vand.u32 %v389, 4294901760
  %v3629 = vsub.f32 %v389, %v3628
  %v3630 = vand.u32 %v3629, 4294901760
  %v3631 = vsub.f32 %v3629, %v3630
  %v3632 = vand.u32 %v3631, 4294901760
  %3633 = vmatpush.msra.mxu0 %v3632
  %v3634 = vand.u32 %v384, 4294901760
  %v3635 = vsub.f32 %v384, %v3634
  %v3636 = vand.u32 %v3635, 4294901760
  %v3637 = vsub.f32 %v3635, %v3636
  %v3638 = vand.u32 %v3637, 4294901760
  %3639 = vmatpush.msra.mxu0 %v3638
  %v3640 = vand.u32 %v379, 4294901760
  %v3641 = vsub.f32 %v379, %v3640
  %v3642 = vand.u32 %v3641, 4294901760
  %v3643 = vsub.f32 %v3641, %v3642
  %v3644 = vand.u32 %v3643, 4294901760
  %3645 = vmatpush.msra.mxu0 %v3644
  %v3646 = vand.u32 %v374, 4294901760
  %v3647 = vsub.f32 %v374, %v3646
  %v3648 = vand.u32 %v3647, 4294901760
  %v3649 = vsub.f32 %v3647, %v3648
  %v3650 = vand.u32 %v3649, 4294901760
  %3651 = vmatpush.msra.mxu0 %v3650
  %v3652 = vand.u32 %v369, 4294901760
  %v3653 = vsub.f32 %v369, %v3652
  %v3654 = vand.u32 %v3653, 4294901760
  %v3655 = vsub.f32 %v3653, %v3654
  %v3656 = vand.u32 %v3655, 4294901760
  %3657 = vmatpush.msra.mxu0 %v3656
  %v3658 = vand.u32 %v364, 4294901760
  %v3659 = vsub.f32 %v364, %v3658
  %v3660 = vand.u32 %v3659, 4294901760
  %v3661 = vsub.f32 %v3659, %v3660
  %v3662 = vand.u32 %v3661, 4294901760
  %3663 = vmatpush.msra.mxu0 %v3662
  %v3664 = vand.u32 %v452, 4294901760
  %3665 = vmatmul.f32.gmra.mxu0 %v3664
  %v3666 = vpop.f32.mrf.mxu0
  %v3667 = vadd.f32 %v3566, %v3666
  %3668 = vdwg.mxu0
  %v3669 = vand.u32 %v439, 4294901760
  %v3670 = vsub.f32 %v439, %v3669
  %3671 = vmatpush.msra.mxu0 %v3670
  %v3672 = vand.u32 %v434, 4294901760
  %v3673 = vsub.f32 %v434, %v3672
  %3674 = vmatpush.msra.mxu0 %v3673
  %v3675 = vand.u32 %v429, 4294901760
  %v3676 = vsub.f32 %v429, %v3675
  %3677 = vmatpush.msra.mxu0 %v3676
  %v3678 = vand.u32 %v424, 4294901760
  %v3679 = vsub.f32 %v424, %v3678
  %3680 = vmatpush.msra.mxu0 %v3679
  %v3681 = vand.u32 %v419, 4294901760
  %v3682 = vsub.f32 %v419, %v3681
  %3683 = vmatpush.msra.mxu0 %v3682
  %v3684 = vand.u32 %v414, 4294901760
  %v3685 = vsub.f32 %v414, %v3684
  %3686 = vmatpush.msra.mxu0 %v3685
  %v3687 = vand.u32 %v409, 4294901760
  %v3688 = vsub.f32 %v409, %v3687
  %3689 = vmatpush.msra.mxu0 %v3688
  %v3690 = vand.u32 %v404, 4294901760
  %v3691 = vsub.f32 %v404, %v3690
  %3692 = vmatpush.msra.mxu0 %v3691
  %v3693 = vand.u32 %v399, 4294901760
  %v3694 = vsub.f32 %v399, %v3693
  %3695 = vmatpush.msra.mxu0 %v3694
  %v3696 = vand.u32 %v394, 4294901760
  %v3697 = vsub.f32 %v394, %v3696
  %3698 = vmatpush.msra.mxu0 %v3697
  %v3699 = vand.u32 %v389, 4294901760
  %v3700 = vsub.f32 %v389, %v3699
  %3701 = vmatpush.msra.mxu0 %v3700
  %v3702 = vand.u32 %v384, 4294901760
  %v3703 = vsub.f32 %v384, %v3702
  %3704 = vmatpush.msra.mxu0 %v3703
  %v3705 = vand.u32 %v379, 4294901760
  %v3706 = vsub.f32 %v379, %v3705
  %3707 = vmatpush.msra.mxu0 %v3706
  %v3708 = vand.u32 %v374, 4294901760
  %v3709 = vsub.f32 %v374, %v3708
  %3710 = vmatpush.msra.mxu0 %v3709
  %v3711 = vand.u32 %v369, 4294901760
  %v3712 = vsub.f32 %v369, %v3711
  %3713 = vmatpush.msra.mxu0 %v3712
  %v3714 = vand.u32 %v364, 4294901760
  %v3715 = vsub.f32 %v364, %v3714
  %3716 = vmatpush.msra.mxu0 %v3715
  %v3717 = vand.u32 %v452, 4294901760
  %v3718 = vsub.f32 %v452, %v3717
  %3719 = vmatmul.f32.gmra.mxu0 %v3718
  %v3720 = vpop.f32.mrf.mxu0
  %v3721 = vadd.f32 %v3667, %v3720
  %3722 = vdwg.mxu0
  %v3723 = vand.u32 %v439, 4294901760
  %3724 = vmatpush.msra.mxu0 %v3723
  %v3725 = vand.u32 %v434, 4294901760
  %3726 = vmatpush.msra.mxu0 %v3725
  %v3727 = vand.u32 %v429, 4294901760
  %3728 = vmatpush.msra.mxu0 %v3727
  %v3729 = vand.u32 %v424, 4294901760
  %3730 = vmatpush.msra.mxu0 %v3729
  %v3731 = vand.u32 %v419, 4294901760
  %3732 = vmatpush.msra.mxu0 %v3731
  %v3733 = vand.u32 %v414, 4294901760
  %3734 = vmatpush.msra.mxu0 %v3733
  %v3735 = vand.u32 %v409, 4294901760
  %3736 = vmatpush.msra.mxu0 %v3735
  %v3737 = vand.u32 %v404, 4294901760
  %3738 = vmatpush.msra.mxu0 %v3737
  %v3739 = vand.u32 %v399, 4294901760
  %3740 = vmatpush.msra.mxu0 %v3739
  %v3741 = vand.u32 %v394, 4294901760
  %3742 = vmatpush.msra.mxu0 %v3741
  %v3743 = vand.u32 %v389, 4294901760
  %3744 = vmatpush.msra.mxu0 %v3743
  %v3745 = vand.u32 %v384, 4294901760
  %3746 = vmatpush.msra.mxu0 %v3745
  %v3747 = vand.u32 %v379, 4294901760
  %3748 = vmatpush.msra.mxu0 %v3747
  %v3749 = vand.u32 %v374, 4294901760
  %3750 = vmatpush.msra.mxu0 %v3749
  %v3751 = vand.u32 %v369, 4294901760
  %3752 = vmatpush.msra.mxu0 %v3751
  %v3753 = vand.u32 %v364, 4294901760
  %3754 = vmatpush.msra.mxu0 %v3753
  %v3755 = vand.u32 %v452, 4294901760
  %v3756 = vsub.f32 %v452, %v3755
  %v3757 = vand.u32 %v3756, 4294901760
  %3758 = vmatmul.f32.gmra.mxu0 %v3757
  %v3759 = vpop.f32.mrf.mxu0
  %v3760 = vadd.f32 %v3721, %v3759
  %3761 = vdwg.mxu0
  %v3762 = vand.u32 %v439, 4294901760
  %v3763 = vsub.f32 %v439, %v3762
  %v3764 = vand.u32 %v3763, 4294901760
  %3765 = vmatpush.msra.mxu0 %v3764
  %v3766 = vand.u32 %v434, 4294901760
  %v3767 = vsub.f32 %v434, %v3766
  %v3768 = vand.u32 %v3767, 4294901760
  %3769 = vmatpush.msra.mxu0 %v3768
  %v3770 = vand.u32 %v429, 4294901760
  %v3771 = vsub.f32 %v429, %v3770
  %v3772 = vand.u32 %v3771, 4294901760
  %3773 = vmatpush.msra.mxu0 %v3772
  %v3774 = vand.u32 %v424, 4294901760
  %v3775 = vsub.f32 %v424, %v3774
  %v3776 = vand.u32 %v3775, 4294901760
  %3777 = vmatpush.msra.mxu0 %v3776
  %v3778 = vand.u32 %v419, 4294901760
  %v3779 = vsub.f32 %v419, %v3778
  %v3780 = vand.u32 %v3779, 4294901760
  %3781 = vmatpush.msra.mxu0 %v3780
  %v3782 = vand.u32 %v414, 4294901760
  %v3783 = vsub.f32 %v414, %v3782
  %v3784 = vand.u32 %v3783, 4294901760
  %3785 = vmatpush.msra.mxu0 %v3784
  %v3786 = vand.u32 %v409, 4294901760
  %v3787 = vsub.f32 %v409, %v3786
  %v3788 = vand.u32 %v3787, 4294901760
  %3789 = vmatpush.msra.mxu0 %v3788
  %v3790 = vand.u32 %v404, 4294901760
  %v3791 = vsub.f32 %v404, %v3790
  %v3792 = vand.u32 %v3791, 4294901760
  %3793 = vmatpush.msra.mxu0 %v3792
  %v3794 = vand.u32 %v399, 4294901760
  %v3795 = vsub.f32 %v399, %v3794
  %v3796 = vand.u32 %v3795, 4294901760
  %3797 = vmatpush.msra.mxu0 %v3796
  %v3798 = vand.u32 %v394, 4294901760
  %v3799 = vsub.f32 %v394, %v3798
  %v3800 = vand.u32 %v3799, 4294901760
  %3801 = vmatpush.msra.mxu0 %v3800
  %v3802 = vand.u32 %v389, 4294901760
  %v3803 = vsub.f32 %v389, %v3802
  %v3804 = vand.u32 %v3803, 4294901760
  %3805 = vmatpush.msra.mxu0 %v3804
  %v3806 = vand.u32 %v384, 4294901760
  %v3807 = vsub.f32 %v384, %v3806
  %v3808 = vand.u32 %v3807, 4294901760
  %3809 = vmatpush.msra.mxu0 %v3808
  %v3810 = vand.u32 %v379, 4294901760
  %v3811 = vsub.f32 %v379, %v3810
  %v3812 = vand.u32 %v3811, 4294901760
  %3813 = vmatpush.msra.mxu0 %v3812
  %v3814 = vand.u32 %v374, 4294901760
  %v3815 = vsub.f32 %v374, %v3814
  %v3816 = vand.u32 %v3815, 4294901760
  %3817 = vmatpush.msra.mxu0 %v3816
  %v3818 = vand.u32 %v369, 4294901760
  %v3819 = vsub.f32 %v369, %v3818
  %v3820 = vand.u32 %v3819, 4294901760
  %3821 = vmatpush.msra.mxu0 %v3820
  %v3822 = vand.u32 %v364, 4294901760
  %v3823 = vsub.f32 %v364, %v3822
  %v3824 = vand.u32 %v3823, 4294901760
  %3825 = vmatpush.msra.mxu0 %v3824
  %v3826 = vand.u32 %v452, 4294901760
  %3827 = vmatmul.f32.gmra.mxu0 %v3826
  %v3828 = vpop.f32.mrf.mxu0
  %v3829 = vadd.f32 %v3760, %v3828
  %3830 = vdwg.mxu0
  %v3831 = vand.u32 %v439, 4294901760
  %3832 = vmatpush.msra.mxu0 %v3831
  %v3833 = vand.u32 %v434, 4294901760
  %3834 = vmatpush.msra.mxu0 %v3833
  %v3835 = vand.u32 %v429, 4294901760
  %3836 = vmatpush.msra.mxu0 %v3835
  %v3837 = vand.u32 %v424, 4294901760
  %3838 = vmatpush.msra.mxu0 %v3837
  %v3839 = vand.u32 %v419, 4294901760
  %3840 = vmatpush.msra.mxu0 %v3839
  %v3841 = vand.u32 %v414, 4294901760
  %3842 = vmatpush.msra.mxu0 %v3841
  %v3843 = vand.u32 %v409, 4294901760
  %3844 = vmatpush.msra.mxu0 %v3843
  %v3845 = vand.u32 %v404, 4294901760
  %3846 = vmatpush.msra.mxu0 %v3845
  %v3847 = vand.u32 %v399, 4294901760
  %3848 = vmatpush.msra.mxu0 %v3847
  %v3849 = vand.u32 %v394, 4294901760
  %3850 = vmatpush.msra.mxu0 %v3849
  %v3851 = vand.u32 %v389, 4294901760
  %3852 = vmatpush.msra.mxu0 %v3851
  %v3853 = vand.u32 %v384, 4294901760
  %3854 = vmatpush.msra.mxu0 %v3853
  %v3855 = vand.u32 %v379, 4294901760
  %3856 = vmatpush.msra.mxu0 %v3855
  %v3857 = vand.u32 %v374, 4294901760
  %3858 = vmatpush.msra.mxu0 %v3857
  %v3859 = vand.u32 %v369, 4294901760
  %3860 = vmatpush.msra.mxu0 %v3859
  %v3861 = vand.u32 %v364, 4294901760
  %3862 = vmatpush.msra.mxu0 %v3861
  %v3863 = vand.u32 %v452, 4294901760
  %3864 = vmatmul.f32.gmra.mxu0 %v3863
  %v3865 = vpop.f32.mrf.mxu0
  %v3866 = vadd.f32 %v3829, %v3865
  %3867 = vdwg.mxu0
  %v3868 = vand.u32 %v120, 4294901760
  %3869 = vmatpush.msra.mxu0 %v3868
  %v3870 = vand.u32 %v115, 4294901760
  %3871 = vmatpush.msra.mxu0 %v3870
  %v3872 = vand.u32 %v110, 4294901760
  %3873 = vmatpush.msra.mxu0 %v3872
  %v3874 = vand.u32 %v105, 4294901760
  %3875 = vmatpush.msra.mxu0 %v3874
  %v3876 = vand.u32 %v100, 4294901760
  %3877 = vmatpush.msra.mxu0 %v3876
  %v3878 = vand.u32 %v95, 4294901760
  %3879 = vmatpush.msra.mxu0 %v3878
  %v3880 = vand.u32 %v90, 4294901760
  %3881 = vmatpush.msra.mxu0 %v3880
  %v3882 = vand.u32 %v85, 4294901760
  %3883 = vmatpush.msra.mxu0 %v3882
  %v3884 = vand.u32 %v80, 4294901760
  %3885 = vmatpush.msra.mxu0 %v3884
  %v3886 = vand.u32 %v75, 4294901760
  %3887 = vmatpush.msra.mxu0 %v3886
  %v3888 = vand.u32 %v70, 4294901760
  %3889 = vmatpush.msra.mxu0 %v3888
  %v3890 = vand.u32 %v65, 4294901760
  %3891 = vmatpush.msra.mxu0 %v3890
  %v3892 = vand.u32 %v60, 4294901760
  %3893 = vmatpush.msra.mxu0 %v3892
  %v3894 = vand.u32 %v55, 4294901760
  %3895 = vmatpush.msra.mxu0 %v3894
  %v3896 = vand.u32 %v50, 4294901760
  %3897 = vmatpush.msra.mxu0 %v3896
  %v3898 = vand.u32 %v45, 4294901760
  %3899 = vmatpush.msra.mxu0 %v3898
  %v3900 = vand.u32 %v448, 4294901760
  %v3901 = vsub.f32 %v448, %v3900
  %v3902 = vand.u32 %v3901, 4294901760
  %v3903 = vsub.f32 %v3901, %v3902
  %v3904 = vand.u32 %v3903, 4294901760
  %3905 = vmatmul.f32.gmra.mxu0 %v3904
  %v3906 = vpop.f32.mrf.mxu0
  %v3907 = vadd.f32 0.0, %v3906
  %3908 = vdwg.mxu0
  %v3909 = vand.u32 %v120, 4294901760
  %v3910 = vsub.f32 %v120, %v3909
  %v3911 = vand.u32 %v3910, 4294901760
  %v3912 = vsub.f32 %v3910, %v3911
  %v3913 = vand.u32 %v3912, 4294901760
  %3914 = vmatpush.msra.mxu0 %v3913
  %v3915 = vand.u32 %v115, 4294901760
  %v3916 = vsub.f32 %v115, %v3915
  %v3917 = vand.u32 %v3916, 4294901760
  %v3918 = vsub.f32 %v3916, %v3917
  %v3919 = vand.u32 %v3918, 4294901760
  %3920 = vmatpush.msra.mxu0 %v3919
  %v3921 = vand.u32 %v110, 4294901760
  %v3922 = vsub.f32 %v110, %v3921
  %v3923 = vand.u32 %v3922, 4294901760
  %v3924 = vsub.f32 %v3922, %v3923
  %v3925 = vand.u32 %v3924, 4294901760
  %3926 = vmatpush.msra.mxu0 %v3925
  %v3927 = vand.u32 %v105, 4294901760
  %v3928 = vsub.f32 %v105, %v3927
  %v3929 = vand.u32 %v3928, 4294901760
  %v3930 = vsub.f32 %v3928, %v3929
  %v3931 = vand.u32 %v3930, 4294901760
  %3932 = vmatpush.msra.mxu0 %v3931
  %v3933 = vand.u32 %v100, 4294901760
  %v3934 = vsub.f32 %v100, %v3933
  %v3935 = vand.u32 %v3934, 4294901760
  %v3936 = vsub.f32 %v3934, %v3935
  %v3937 = vand.u32 %v3936, 4294901760
  %3938 = vmatpush.msra.mxu0 %v3937
  %v3939 = vand.u32 %v95, 4294901760
  %v3940 = vsub.f32 %v95, %v3939
  %v3941 = vand.u32 %v3940, 4294901760
  %v3942 = vsub.f32 %v3940, %v3941
  %v3943 = vand.u32 %v3942, 4294901760
  %3944 = vmatpush.msra.mxu0 %v3943
  %v3945 = vand.u32 %v90, 4294901760
  %v3946 = vsub.f32 %v90, %v3945
  %v3947 = vand.u32 %v3946, 4294901760
  %v3948 = vsub.f32 %v3946, %v3947
  %v3949 = vand.u32 %v3948, 4294901760
  %3950 = vmatpush.msra.mxu0 %v3949
  %v3951 = vand.u32 %v85, 4294901760
  %v3952 = vsub.f32 %v85, %v3951
  %v3953 = vand.u32 %v3952, 4294901760
  %v3954 = vsub.f32 %v3952, %v3953
  %v3955 = vand.u32 %v3954, 4294901760
  %3956 = vmatpush.msra.mxu0 %v3955
  %v3957 = vand.u32 %v80, 4294901760
  %v3958 = vsub.f32 %v80, %v3957
  %v3959 = vand.u32 %v3958, 4294901760
  %v3960 = vsub.f32 %v3958, %v3959
  %v3961 = vand.u32 %v3960, 4294901760
  %3962 = vmatpush.msra.mxu0 %v3961
  %v3963 = vand.u32 %v75, 4294901760
  %v3964 = vsub.f32 %v75, %v3963
  %v3965 = vand.u32 %v3964, 4294901760
  %v3966 = vsub.f32 %v3964, %v3965
  %v3967 = vand.u32 %v3966, 4294901760
  %3968 = vmatpush.msra.mxu0 %v3967
  %v3969 = vand.u32 %v70, 4294901760
  %v3970 = vsub.f32 %v70, %v3969
  %v3971 = vand.u32 %v3970, 4294901760
  %v3972 = vsub.f32 %v3970, %v3971
  %v3973 = vand.u32 %v3972, 4294901760
  %3974 = vmatpush.msra.mxu0 %v3973
  %v3975 = vand.u32 %v65, 4294901760
  %v3976 = vsub.f32 %v65, %v3975
  %v3977 = vand.u32 %v3976, 4294901760
  %v3978 = vsub.f32 %v3976, %v3977
  %v3979 = vand.u32 %v3978, 4294901760
  %3980 = vmatpush.msra.mxu0 %v3979
  %v3981 = vand.u32 %v60, 4294901760
  %v3982 = vsub.f32 %v60, %v3981
  %v3983 = vand.u32 %v3982, 4294901760
  %v3984 = vsub.f32 %v3982, %v3983
  %v3985 = vand.u32 %v3984, 4294901760
  %3986 = vmatpush.msra.mxu0 %v3985
  %v3987 = vand.u32 %v55, 4294901760
  %v3988 = vsub.f32 %v55, %v3987
  %v3989 = vand.u32 %v3988, 4294901760
  %v3990 = vsub.f32 %v3988, %v3989
  %v3991 = vand.u32 %v3990, 4294901760
  %3992 = vmatpush.msra.mxu0 %v3991
  %v3993 = vand.u32 %v50, 4294901760
  %v3994 = vsub.f32 %v50, %v3993
  %v3995 = vand.u32 %v3994, 4294901760
  %v3996 = vsub.f32 %v3994, %v3995
  %v3997 = vand.u32 %v3996, 4294901760
  %3998 = vmatpush.msra.mxu0 %v3997
  %v3999 = vand.u32 %v45, 4294901760
  %v4000 = vsub.f32 %v45, %v3999
  %v4001 = vand.u32 %v4000, 4294901760
  %v4002 = vsub.f32 %v4000, %v4001
  %v4003 = vand.u32 %v4002, 4294901760
  %4004 = vmatpush.msra.mxu0 %v4003
  %v4005 = vand.u32 %v448, 4294901760
  %4006 = vmatmul.f32.gmra.mxu0 %v4005
  %v4007 = vpop.f32.mrf.mxu0
  %v4008 = vadd.f32 %v3907, %v4007
  %4009 = vdwg.mxu0
  %v4010 = vand.u32 %v120, 4294901760
  %v4011 = vsub.f32 %v120, %v4010
  %4012 = vmatpush.msra.mxu0 %v4011
  %v4013 = vand.u32 %v115, 4294901760
  %v4014 = vsub.f32 %v115, %v4013
  %4015 = vmatpush.msra.mxu0 %v4014
  %v4016 = vand.u32 %v110, 4294901760
  %v4017 = vsub.f32 %v110, %v4016
  %4018 = vmatpush.msra.mxu0 %v4017
  %v4019 = vand.u32 %v105, 4294901760
  %v4020 = vsub.f32 %v105, %v4019
  %4021 = vmatpush.msra.mxu0 %v4020
  %v4022 = vand.u32 %v100, 4294901760
  %v4023 = vsub.f32 %v100, %v4022
  %4024 = vmatpush.msra.mxu0 %v4023
  %v4025 = vand.u32 %v95, 4294901760
  %v4026 = vsub.f32 %v95, %v4025
  %4027 = vmatpush.msra.mxu0 %v4026
  %v4028 = vand.u32 %v90, 4294901760
  %v4029 = vsub.f32 %v90, %v4028
  %4030 = vmatpush.msra.mxu0 %v4029
  %v4031 = vand.u32 %v85, 4294901760
  %v4032 = vsub.f32 %v85, %v4031
  %4033 = vmatpush.msra.mxu0 %v4032
  %v4034 = vand.u32 %v80, 4294901760
  %v4035 = vsub.f32 %v80, %v4034
  %4036 = vmatpush.msra.mxu0 %v4035
  %v4037 = vand.u32 %v75, 4294901760
  %v4038 = vsub.f32 %v75, %v4037
  %4039 = vmatpush.msra.mxu0 %v4038
  %v4040 = vand.u32 %v70, 4294901760
  %v4041 = vsub.f32 %v70, %v4040
  %4042 = vmatpush.msra.mxu0 %v4041
  %v4043 = vand.u32 %v65, 4294901760
  %v4044 = vsub.f32 %v65, %v4043
  %4045 = vmatpush.msra.mxu0 %v4044
  %v4046 = vand.u32 %v60, 4294901760
  %v4047 = vsub.f32 %v60, %v4046
  %4048 = vmatpush.msra.mxu0 %v4047
  %v4049 = vand.u32 %v55, 4294901760
  %v4050 = vsub.f32 %v55, %v4049
  %4051 = vmatpush.msra.mxu0 %v4050
  %v4052 = vand.u32 %v50, 4294901760
  %v4053 = vsub.f32 %v50, %v4052
  %4054 = vmatpush.msra.mxu0 %v4053
  %v4055 = vand.u32 %v45, 4294901760
  %v4056 = vsub.f32 %v45, %v4055
  %4057 = vmatpush.msra.mxu0 %v4056
  %v4058 = vand.u32 %v448, 4294901760
  %v4059 = vsub.f32 %v448, %v4058
  %4060 = vmatmul.f32.gmra.mxu0 %v4059
  %v4061 = vpop.f32.mrf.mxu0
  %v4062 = vadd.f32 %v4008, %v4061
  %4063 = vdwg.mxu0
  %v4064 = vand.u32 %v120, 4294901760
  %4065 = vmatpush.msra.mxu0 %v4064
  %v4066 = vand.u32 %v115, 4294901760
  %4067 = vmatpush.msra.mxu0 %v4066
  %v4068 = vand.u32 %v110, 4294901760
  %4069 = vmatpush.msra.mxu0 %v4068
  %v4070 = vand.u32 %v105, 4294901760
  %4071 = vmatpush.msra.mxu0 %v4070
  %v4072 = vand.u32 %v100, 4294901760
  %4073 = vmatpush.msra.mxu0 %v4072
  %v4074 = vand.u32 %v95, 4294901760
  %4075 = vmatpush.msra.mxu0 %v4074
  %v4076 = vand.u32 %v90, 4294901760
  %4077 = vmatpush.msra.mxu0 %v4076
  %v4078 = vand.u32 %v85, 4294901760
  %4079 = vmatpush.msra.mxu0 %v4078
  %v4080 = vand.u32 %v80, 4294901760
  %4081 = vmatpush.msra.mxu0 %v4080
  %v4082 = vand.u32 %v75, 4294901760
  %4083 = vmatpush.msra.mxu0 %v4082
  %v4084 = vand.u32 %v70, 4294901760
  %4085 = vmatpush.msra.mxu0 %v4084
  %v4086 = vand.u32 %v65, 4294901760
  %4087 = vmatpush.msra.mxu0 %v4086
  %v4088 = vand.u32 %v60, 4294901760
  %4089 = vmatpush.msra.mxu0 %v4088
  %v4090 = vand.u32 %v55, 4294901760
  %4091 = vmatpush.msra.mxu0 %v4090
  %v4092 = vand.u32 %v50, 4294901760
  %4093 = vmatpush.msra.mxu0 %v4092
  %v4094 = vand.u32 %v45, 4294901760
  %4095 = vmatpush.msra.mxu0 %v4094
  %v4096 = vand.u32 %v448, 4294901760
  %v4097 = vsub.f32 %v448, %v4096
  %v4098 = vand.u32 %v4097, 4294901760
  %4099 = vmatmul.f32.gmra.mxu0 %v4098
  %v4100 = vpop.f32.mrf.mxu0
  %v4101 = vadd.f32 %v4062, %v4100
  %4102 = vdwg.mxu0
  %v4103 = vand.u32 %v120, 4294901760
  %v4104 = vsub.f32 %v120, %v4103
  %v4105 = vand.u32 %v4104, 4294901760
  %4106 = vmatpush.msra.mxu0 %v4105
  %v4107 = vand.u32 %v115, 4294901760
  %v4108 = vsub.f32 %v115, %v4107
  %v4109 = vand.u32 %v4108, 4294901760
  %4110 = vmatpush.msra.mxu0 %v4109
  %v4111 = vand.u32 %v110, 4294901760
  %v4112 = vsub.f32 %v110, %v4111
  %v4113 = vand.u32 %v4112, 4294901760
  %4114 = vmatpush.msra.mxu0 %v4113
  %v4115 = vand.u32 %v105, 4294901760
  %v4116 = vsub.f32 %v105, %v4115
  %v4117 = vand.u32 %v4116, 4294901760
  %4118 = vmatpush.msra.mxu0 %v4117
  %v4119 = vand.u32 %v100, 4294901760
  %v4120 = vsub.f32 %v100, %v4119
  %v4121 = vand.u32 %v4120, 4294901760
  %4122 = vmatpush.msra.mxu0 %v4121
  %v4123 = vand.u32 %v95, 4294901760
  %v4124 = vsub.f32 %v95, %v4123
  %v4125 = vand.u32 %v4124, 4294901760
  %4126 = vmatpush.msra.mxu0 %v4125
  %v4127 = vand.u32 %v90, 4294901760
  %v4128 = vsub.f32 %v90, %v4127
  %v4129 = vand.u32 %v4128, 4294901760
  %4130 = vmatpush.msra.mxu0 %v4129
  %v4131 = vand.u32 %v85, 4294901760
  %v4132 = vsub.f32 %v85, %v4131
  %v4133 = vand.u32 %v4132, 4294901760
  %4134 = vmatpush.msra.mxu0 %v4133
  %v4135 = vand.u32 %v80, 4294901760
  %v4136 = vsub.f32 %v80, %v4135
  %v4137 = vand.u32 %v4136, 4294901760
  %4138 = vmatpush.msra.mxu0 %v4137
  %v4139 = vand.u32 %v75, 4294901760
  %v4140 = vsub.f32 %v75, %v4139
  %v4141 = vand.u32 %v4140, 4294901760
  %4142 = vmatpush.msra.mxu0 %v4141
  %v4143 = vand.u32 %v70, 4294901760
  %v4144 = vsub.f32 %v70, %v4143
  %v4145 = vand.u32 %v4144, 4294901760
  %4146 = vmatpush.msra.mxu0 %v4145
  %v4147 = vand.u32 %v65, 4294901760
  %v4148 = vsub.f32 %v65, %v4147
  %v4149 = vand.u32 %v4148, 4294901760
  %4150 = vmatpush.msra.mxu0 %v4149
  %v4151 = vand.u32 %v60, 4294901760
  %v4152 = vsub.f32 %v60, %v4151
  %v4153 = vand.u32 %v4152, 4294901760
  %4154 = vmatpush.msra.mxu0 %v4153
  %v4155 = vand.u32 %v55, 4294901760
  %v4156 = vsub.f32 %v55, %v4155
  %v4157 = vand.u32 %v4156, 4294901760
  %4158 = vmatpush.msra.mxu0 %v4157
  %v4159 = vand.u32 %v50, 4294901760
  %v4160 = vsub.f32 %v50, %v4159
  %v4161 = vand.u32 %v4160, 4294901760
  %4162 = vmatpush.msra.mxu0 %v4161
  %v4163 = vand.u32 %v45, 4294901760
  %v4164 = vsub.f32 %v45, %v4163
  %v4165 = vand.u32 %v4164, 4294901760
  %4166 = vmatpush.msra.mxu0 %v4165
  %v4167 = vand.u32 %v448, 4294901760
  %4168 = vmatmul.f32.gmra.mxu0 %v4167
  %v4169 = vpop.f32.mrf.mxu0
  %v4170 = vadd.f32 %v4101, %v4169
  %4171 = vdwg.mxu0
  %v4172 = vand.u32 %v120, 4294901760
  %4173 = vmatpush.msra.mxu0 %v4172
  %v4174 = vand.u32 %v115, 4294901760
  %4175 = vmatpush.msra.mxu0 %v4174
  %v4176 = vand.u32 %v110, 4294901760
  %4177 = vmatpush.msra.mxu0 %v4176
  %v4178 = vand.u32 %v105, 4294901760
  %4179 = vmatpush.msra.mxu0 %v4178
  %v4180 = vand.u32 %v100, 4294901760
  %4181 = vmatpush.msra.mxu0 %v4180
  %v4182 = vand.u32 %v95, 4294901760
  %4183 = vmatpush.msra.mxu0 %v4182
  %v4184 = vand.u32 %v90, 4294901760
  %4185 = vmatpush.msra.mxu0 %v4184
  %v4186 = vand.u32 %v85, 4294901760
  %4187 = vmatpush.msra.mxu0 %v4186
  %v4188 = vand.u32 %v80, 4294901760
  %4189 = vmatpush.msra.mxu0 %v4188
  %v4190 = vand.u32 %v75, 4294901760
  %4191 = vmatpush.msra.mxu0 %v4190
  %v4192 = vand.u32 %v70, 4294901760
  %4193 = vmatpush.msra.mxu0 %v4192
  %v4194 = vand.u32 %v65, 4294901760
  %4195 = vmatpush.msra.mxu0 %v4194
  %v4196 = vand.u32 %v60, 4294901760
  %4197 = vmatpush.msra.mxu0 %v4196
  %v4198 = vand.u32 %v55, 4294901760
  %4199 = vmatpush.msra.mxu0 %v4198
  %v4200 = vand.u32 %v50, 4294901760
  %4201 = vmatpush.msra.mxu0 %v4200
  %v4202 = vand.u32 %v45, 4294901760
  %4203 = vmatpush.msra.mxu0 %v4202
  %v4204 = vand.u32 %v448, 4294901760
  %4205 = vmatmul.f32.gmra.mxu0 %v4204
  %v4206 = vpop.f32.mrf.mxu0
  %v4207 = vadd.f32 %v4170, %v4206
  %4208 = vdwg.mxu0
  %v4209 = vand.u32 %v200, 4294901760
  %4210 = vmatpush.msra.mxu0 %v4209
  %v4211 = vand.u32 %v195, 4294901760
  %4212 = vmatpush.msra.mxu0 %v4211
  %v4213 = vand.u32 %v190, 4294901760
  %4214 = vmatpush.msra.mxu0 %v4213
  %v4215 = vand.u32 %v185, 4294901760
  %4216 = vmatpush.msra.mxu0 %v4215
  %v4217 = vand.u32 %v180, 4294901760
  %4218 = vmatpush.msra.mxu0 %v4217
  %v4219 = vand.u32 %v175, 4294901760
  %4220 = vmatpush.msra.mxu0 %v4219
  %v4221 = vand.u32 %v170, 4294901760
  %4222 = vmatpush.msra.mxu0 %v4221
  %v4223 = vand.u32 %v165, 4294901760
  %4224 = vmatpush.msra.mxu0 %v4223
  %v4225 = vand.u32 %v160, 4294901760
  %4226 = vmatpush.msra.mxu0 %v4225
  %v4227 = vand.u32 %v155, 4294901760
  %4228 = vmatpush.msra.mxu0 %v4227
  %v4229 = vand.u32 %v150, 4294901760
  %4230 = vmatpush.msra.mxu0 %v4229
  %v4231 = vand.u32 %v145, 4294901760
  %4232 = vmatpush.msra.mxu0 %v4231
  %v4233 = vand.u32 %v140, 4294901760
  %4234 = vmatpush.msra.mxu0 %v4233
  %v4235 = vand.u32 %v135, 4294901760
  %4236 = vmatpush.msra.mxu0 %v4235
  %v4237 = vand.u32 %v130, 4294901760
  %4238 = vmatpush.msra.mxu0 %v4237
  %v4239 = vand.u32 %v125, 4294901760
  %4240 = vmatpush.msra.mxu0 %v4239
  %v4241 = vand.u32 %v449, 4294901760
  %v4242 = vsub.f32 %v449, %v4241
  %v4243 = vand.u32 %v4242, 4294901760
  %v4244 = vsub.f32 %v4242, %v4243
  %v4245 = vand.u32 %v4244, 4294901760
  %4246 = vmatmul.f32.gmra.mxu0 %v4245
  %v4247 = vpop.f32.mrf.mxu0
  %v4248 = vadd.f32 %v4207, %v4247
  %4249 = vdwg.mxu0
  %v4250 = vand.u32 %v200, 4294901760
  %v4251 = vsub.f32 %v200, %v4250
  %v4252 = vand.u32 %v4251, 4294901760
  %v4253 = vsub.f32 %v4251, %v4252
  %v4254 = vand.u32 %v4253, 4294901760
  %4255 = vmatpush.msra.mxu0 %v4254
  %v4256 = vand.u32 %v195, 4294901760
  %v4257 = vsub.f32 %v195, %v4256
  %v4258 = vand.u32 %v4257, 4294901760
  %v4259 = vsub.f32 %v4257, %v4258
  %v4260 = vand.u32 %v4259, 4294901760
  %4261 = vmatpush.msra.mxu0 %v4260
  %v4262 = vand.u32 %v190, 4294901760
  %v4263 = vsub.f32 %v190, %v4262
  %v4264 = vand.u32 %v4263, 4294901760
  %v4265 = vsub.f32 %v4263, %v4264
  %v4266 = vand.u32 %v4265, 4294901760
  %4267 = vmatpush.msra.mxu0 %v4266
  %v4268 = vand.u32 %v185, 4294901760
  %v4269 = vsub.f32 %v185, %v4268
  %v4270 = vand.u32 %v4269, 4294901760
  %v4271 = vsub.f32 %v4269, %v4270
  %v4272 = vand.u32 %v4271, 4294901760
  %4273 = vmatpush.msra.mxu0 %v4272
  %v4274 = vand.u32 %v180, 4294901760
  %v4275 = vsub.f32 %v180, %v4274
  %v4276 = vand.u32 %v4275, 4294901760
  %v4277 = vsub.f32 %v4275, %v4276
  %v4278 = vand.u32 %v4277, 4294901760
  %4279 = vmatpush.msra.mxu0 %v4278
  %v4280 = vand.u32 %v175, 4294901760
  %v4281 = vsub.f32 %v175, %v4280
  %v4282 = vand.u32 %v4281, 4294901760
  %v4283 = vsub.f32 %v4281, %v4282
  %v4284 = vand.u32 %v4283, 4294901760
  %4285 = vmatpush.msra.mxu0 %v4284
  %v4286 = vand.u32 %v170, 4294901760
  %v4287 = vsub.f32 %v170, %v4286
  %v4288 = vand.u32 %v4287, 4294901760
  %v4289 = vsub.f32 %v4287, %v4288
  %v4290 = vand.u32 %v4289, 4294901760
  %4291 = vmatpush.msra.mxu0 %v4290
  %v4292 = vand.u32 %v165, 4294901760
  %v4293 = vsub.f32 %v165, %v4292
  %v4294 = vand.u32 %v4293, 4294901760
  %v4295 = vsub.f32 %v4293, %v4294
  %v4296 = vand.u32 %v4295, 4294901760
  %4297 = vmatpush.msra.mxu0 %v4296
  %v4298 = vand.u32 %v160, 4294901760
  %v4299 = vsub.f32 %v160, %v4298
  %v4300 = vand.u32 %v4299, 4294901760
  %v4301 = vsub.f32 %v4299, %v4300
  %v4302 = vand.u32 %v4301, 4294901760
  %4303 = vmatpush.msra.mxu0 %v4302
  %v4304 = vand.u32 %v155, 4294901760
  %v4305 = vsub.f32 %v155, %v4304
  %v4306 = vand.u32 %v4305, 4294901760
  %v4307 = vsub.f32 %v4305, %v4306
  %v4308 = vand.u32 %v4307, 4294901760
  %4309 = vmatpush.msra.mxu0 %v4308
  %v4310 = vand.u32 %v150, 4294901760
  %v4311 = vsub.f32 %v150, %v4310
  %v4312 = vand.u32 %v4311, 4294901760
  %v4313 = vsub.f32 %v4311, %v4312
  %v4314 = vand.u32 %v4313, 4294901760
  %4315 = vmatpush.msra.mxu0 %v4314
  %v4316 = vand.u32 %v145, 4294901760
  %v4317 = vsub.f32 %v145, %v4316
  %v4318 = vand.u32 %v4317, 4294901760
  %v4319 = vsub.f32 %v4317, %v4318
  %v4320 = vand.u32 %v4319, 4294901760
  %4321 = vmatpush.msra.mxu0 %v4320
  %v4322 = vand.u32 %v140, 4294901760
  %v4323 = vsub.f32 %v140, %v4322
  %v4324 = vand.u32 %v4323, 4294901760
  %v4325 = vsub.f32 %v4323, %v4324
  %v4326 = vand.u32 %v4325, 4294901760
  %4327 = vmatpush.msra.mxu0 %v4326
  %v4328 = vand.u32 %v135, 4294901760
  %v4329 = vsub.f32 %v135, %v4328
  %v4330 = vand.u32 %v4329, 4294901760
  %v4331 = vsub.f32 %v4329, %v4330
  %v4332 = vand.u32 %v4331, 4294901760
  %4333 = vmatpush.msra.mxu0 %v4332
  %v4334 = vand.u32 %v130, 4294901760
  %v4335 = vsub.f32 %v130, %v4334
  %v4336 = vand.u32 %v4335, 4294901760
  %v4337 = vsub.f32 %v4335, %v4336
  %v4338 = vand.u32 %v4337, 4294901760
  %4339 = vmatpush.msra.mxu0 %v4338
  %v4340 = vand.u32 %v125, 4294901760
  %v4341 = vsub.f32 %v125, %v4340
  %v4342 = vand.u32 %v4341, 4294901760
  %v4343 = vsub.f32 %v4341, %v4342
  %v4344 = vand.u32 %v4343, 4294901760
  %4345 = vmatpush.msra.mxu0 %v4344
  %v4346 = vand.u32 %v449, 4294901760
  %4347 = vmatmul.f32.gmra.mxu0 %v4346
  %v4348 = vpop.f32.mrf.mxu0
  %v4349 = vadd.f32 %v4248, %v4348
  %4350 = vdwg.mxu0
  %v4351 = vand.u32 %v200, 4294901760
  %v4352 = vsub.f32 %v200, %v4351
  %4353 = vmatpush.msra.mxu0 %v4352
  %v4354 = vand.u32 %v195, 4294901760
  %v4355 = vsub.f32 %v195, %v4354
  %4356 = vmatpush.msra.mxu0 %v4355
  %v4357 = vand.u32 %v190, 4294901760
  %v4358 = vsub.f32 %v190, %v4357
  %4359 = vmatpush.msra.mxu0 %v4358
  %v4360 = vand.u32 %v185, 4294901760
  %v4361 = vsub.f32 %v185, %v4360
  %4362 = vmatpush.msra.mxu0 %v4361
  %v4363 = vand.u32 %v180, 4294901760
  %v4364 = vsub.f32 %v180, %v4363
  %4365 = vmatpush.msra.mxu0 %v4364
  %v4366 = vand.u32 %v175, 4294901760
  %v4367 = vsub.f32 %v175, %v4366
  %4368 = vmatpush.msra.mxu0 %v4367
  %v4369 = vand.u32 %v170, 4294901760
  %v4370 = vsub.f32 %v170, %v4369
  %4371 = vmatpush.msra.mxu0 %v4370
  %v4372 = vand.u32 %v165, 4294901760
  %v4373 = vsub.f32 %v165, %v4372
  %4374 = vmatpush.msra.mxu0 %v4373
  %v4375 = vand.u32 %v160, 4294901760
  %v4376 = vsub.f32 %v160, %v4375
  %4377 = vmatpush.msra.mxu0 %v4376
  %v4378 = vand.u32 %v155, 4294901760
  %v4379 = vsub.f32 %v155, %v4378
  %4380 = vmatpush.msra.mxu0 %v4379
  %v4381 = vand.u32 %v150, 4294901760
  %v4382 = vsub.f32 %v150, %v4381
  %4383 = vmatpush.msra.mxu0 %v4382
  %v4384 = vand.u32 %v145, 4294901760
  %v4385 = vsub.f32 %v145, %v4384
  %4386 = vmatpush.msra.mxu0 %v4385
  %v4387 = vand.u32 %v140, 4294901760
  %v4388 = vsub.f32 %v140, %v4387
  %4389 = vmatpush.msra.mxu0 %v4388
  %v4390 = vand.u32 %v135, 4294901760
  %v4391 = vsub.f32 %v135, %v4390
  %4392 = vmatpush.msra.mxu0 %v4391
  %v4393 = vand.u32 %v130, 4294901760
  %v4394 = vsub.f32 %v130, %v4393
  %4395 = vmatpush.msra.mxu0 %v4394
  %v4396 = vand.u32 %v125, 4294901760
  %v4397 = vsub.f32 %v125, %v4396
  %4398 = vmatpush.msra.mxu0 %v4397
  %v4399 = vand.u32 %v449, 4294901760
  %v4400 = vsub.f32 %v449, %v4399
  %4401 = vmatmul.f32.gmra.mxu0 %v4400
  %v4402 = vpop.f32.mrf.mxu0
  %v4403 = vadd.f32 %v4349, %v4402
  %4404 = vdwg.mxu0
  %v4405 = vand.u32 %v200, 4294901760
  %4406 = vmatpush.msra.mxu0 %v4405
  %v4407 = vand.u32 %v195, 4294901760
  %4408 = vmatpush.msra.mxu0 %v4407
  %v4409 = vand.u32 %v190, 4294901760
  %4410 = vmatpush.msra.mxu0 %v4409
  %v4411 = vand.u32 %v185, 4294901760
  %4412 = vmatpush.msra.mxu0 %v4411
  %v4413 = vand.u32 %v180, 4294901760
  %4414 = vmatpush.msra.mxu0 %v4413
  %v4415 = vand.u32 %v175, 4294901760
  %4416 = vmatpush.msra.mxu0 %v4415
  %v4417 = vand.u32 %v170, 4294901760
  %4418 = vmatpush.msra.mxu0 %v4417
  %v4419 = vand.u32 %v165, 4294901760
  %4420 = vmatpush.msra.mxu0 %v4419
  %v4421 = vand.u32 %v160, 4294901760
  %4422 = vmatpush.msra.mxu0 %v4421
  %v4423 = vand.u32 %v155, 4294901760
  %4424 = vmatpush.msra.mxu0 %v4423
  %v4425 = vand.u32 %v150, 4294901760
  %4426 = vmatpush.msra.mxu0 %v4425
  %v4427 = vand.u32 %v145, 4294901760
  %4428 = vmatpush.msra.mxu0 %v4427
  %v4429 = vand.u32 %v140, 4294901760
  %4430 = vmatpush.msra.mxu0 %v4429
  %v4431 = vand.u32 %v135, 4294901760
  %4432 = vmatpush.msra.mxu0 %v4431
  %v4433 = vand.u32 %v130, 4294901760
  %4434 = vmatpush.msra.mxu0 %v4433
  %v4435 = vand.u32 %v125, 4294901760
  %4436 = vmatpush.msra.mxu0 %v4435
  %v4437 = vand.u32 %v449, 4294901760
  %v4438 = vsub.f32 %v449, %v4437
  %v4439 = vand.u32 %v4438, 4294901760
  %4440 = vmatmul.f32.gmra.mxu0 %v4439
  %v4441 = vpop.f32.mrf.mxu0
  %v4442 = vadd.f32 %v4403, %v4441
  %4443 = vdwg.mxu0
  %v4444 = vand.u32 %v200, 4294901760
  %v4445 = vsub.f32 %v200, %v4444
  %v4446 = vand.u32 %v4445, 4294901760
  %4447 = vmatpush.msra.mxu0 %v4446
  %v4448 = vand.u32 %v195, 4294901760
  %v4449 = vsub.f32 %v195, %v4448
  %v4450 = vand.u32 %v4449, 4294901760
  %4451 = vmatpush.msra.mxu0 %v4450
  %v4452 = vand.u32 %v190, 4294901760
  %v4453 = vsub.f32 %v190, %v4452
  %v4454 = vand.u32 %v4453, 4294901760
  %4455 = vmatpush.msra.mxu0 %v4454
  %v4456 = vand.u32 %v185, 4294901760
  %v4457 = vsub.f32 %v185, %v4456
  %v4458 = vand.u32 %v4457, 4294901760
  %4459 = vmatpush.msra.mxu0 %v4458
  %v4460 = vand.u32 %v180, 4294901760
  %v4461 = vsub.f32 %v180, %v4460
  %v4462 = vand.u32 %v4461, 4294901760
  %4463 = vmatpush.msra.mxu0 %v4462
  %v4464 = vand.u32 %v175, 4294901760
  %v4465 = vsub.f32 %v175, %v4464
  %v4466 = vand.u32 %v4465, 4294901760
  %4467 = vmatpush.msra.mxu0 %v4466
  %v4468 = vand.u32 %v170, 4294901760
  %v4469 = vsub.f32 %v170, %v4468
  %v4470 = vand.u32 %v4469, 4294901760
  %4471 = vmatpush.msra.mxu0 %v4470
  %v4472 = vand.u32 %v165, 4294901760
  %v4473 = vsub.f32 %v165, %v4472
  %v4474 = vand.u32 %v4473, 4294901760
  %4475 = vmatpush.msra.mxu0 %v4474
  %v4476 = vand.u32 %v160, 4294901760
  %v4477 = vsub.f32 %v160, %v4476
  %v4478 = vand.u32 %v4477, 4294901760
  %4479 = vmatpush.msra.mxu0 %v4478
  %v4480 = vand.u32 %v155, 4294901760
  %v4481 = vsub.f32 %v155, %v4480
  %v4482 = vand.u32 %v4481, 4294901760
  %4483 = vmatpush.msra.mxu0 %v4482
  %v4484 = vand.u32 %v150, 4294901760
  %v4485 = vsub.f32 %v150, %v4484
  %v4486 = vand.u32 %v4485, 4294901760
  %4487 = vmatpush.msra.mxu0 %v4486
  %v4488 = vand.u32 %v145, 4294901760
  %v4489 = vsub.f32 %v145, %v4488
  %v4490 = vand.u32 %v4489, 4294901760
  %4491 = vmatpush.msra.mxu0 %v4490
  %v4492 = vand.u32 %v140, 4294901760
  %v4493 = vsub.f32 %v140, %v4492
  %v4494 = vand.u32 %v4493, 4294901760
  %4495 = vmatpush.msra.mxu0 %v4494
  %v4496 = vand.u32 %v135, 4294901760
  %v4497 = vsub.f32 %v135, %v4496
  %v4498 = vand.u32 %v4497, 4294901760
  %4499 = vmatpush.msra.mxu0 %v4498
  %v4500 = vand.u32 %v130, 4294901760
  %v4501 = vsub.f32 %v130, %v4500
  %v4502 = vand.u32 %v4501, 4294901760
  %4503 = vmatpush.msra.mxu0 %v4502
  %v4504 = vand.u32 %v125, 4294901760
  %v4505 = vsub.f32 %v125, %v4504
  %v4506 = vand.u32 %v4505, 4294901760
  %4507 = vmatpush.msra.mxu0 %v4506
  %v4508 = vand.u32 %v449, 4294901760
  %4509 = vmatmul.f32.gmra.mxu0 %v4508
  %v4510 = vpop.f32.mrf.mxu0
  %v4511 = vadd.f32 %v4442, %v4510
  %4512 = vdwg.mxu0
  %v4513 = vand.u32 %v200, 4294901760
  %4514 = vmatpush.msra.mxu0 %v4513
  %v4515 = vand.u32 %v195, 4294901760
  %4516 = vmatpush.msra.mxu0 %v4515
  %v4517 = vand.u32 %v190, 4294901760
  %4518 = vmatpush.msra.mxu0 %v4517
  %v4519 = vand.u32 %v185, 4294901760
  %4520 = vmatpush.msra.mxu0 %v4519
  %v4521 = vand.u32 %v180, 4294901760
  %4522 = vmatpush.msra.mxu0 %v4521
  %v4523 = vand.u32 %v175, 4294901760
  %4524 = vmatpush.msra.mxu0 %v4523
  %v4525 = vand.u32 %v170, 4294901760
  %4526 = vmatpush.msra.mxu0 %v4525
  %v4527 = vand.u32 %v165, 4294901760
  %4528 = vmatpush.msra.mxu0 %v4527
  %v4529 = vand.u32 %v160, 4294901760
  %4530 = vmatpush.msra.mxu0 %v4529
  %v4531 = vand.u32 %v155, 4294901760
  %4532 = vmatpush.msra.mxu0 %v4531
  %v4533 = vand.u32 %v150, 4294901760
  %4534 = vmatpush.msra.mxu0 %v4533
  %v4535 = vand.u32 %v145, 4294901760
  %4536 = vmatpush.msra.mxu0 %v4535
  %v4537 = vand.u32 %v140, 4294901760
  %4538 = vmatpush.msra.mxu0 %v4537
  %v4539 = vand.u32 %v135, 4294901760
  %4540 = vmatpush.msra.mxu0 %v4539
  %v4541 = vand.u32 %v130, 4294901760
  %4542 = vmatpush.msra.mxu0 %v4541
  %v4543 = vand.u32 %v125, 4294901760
  %4544 = vmatpush.msra.mxu0 %v4543
  %v4545 = vand.u32 %v449, 4294901760
  %4546 = vmatmul.f32.gmra.mxu0 %v4545
  %v4547 = vpop.f32.mrf.mxu0
  %v4548 = vadd.f32 %v4511, %v4547
  %4549 = vdwg.mxu0
  %v4550 = vand.u32 %v280, 4294901760
  %4551 = vmatpush.msra.mxu0 %v4550
  %v4552 = vand.u32 %v275, 4294901760
  %4553 = vmatpush.msra.mxu0 %v4552
  %v4554 = vand.u32 %v270, 4294901760
  %4555 = vmatpush.msra.mxu0 %v4554
  %v4556 = vand.u32 %v265, 4294901760
  %4557 = vmatpush.msra.mxu0 %v4556
  %v4558 = vand.u32 %v260, 4294901760
  %4559 = vmatpush.msra.mxu0 %v4558
  %v4560 = vand.u32 %v255, 4294901760
  %4561 = vmatpush.msra.mxu0 %v4560
  %v4562 = vand.u32 %v250, 4294901760
  %4563 = vmatpush.msra.mxu0 %v4562
  %v4564 = vand.u32 %v245, 4294901760
  %4565 = vmatpush.msra.mxu0 %v4564
  %v4566 = vand.u32 %v240, 4294901760
  %4567 = vmatpush.msra.mxu0 %v4566
  %v4568 = vand.u32 %v235, 4294901760
  %4569 = vmatpush.msra.mxu0 %v4568
  %v4570 = vand.u32 %v230, 4294901760
  %4571 = vmatpush.msra.mxu0 %v4570
  %v4572 = vand.u32 %v225, 4294901760
  %4573 = vmatpush.msra.mxu0 %v4572
  %v4574 = vand.u32 %v220, 4294901760
  %4575 = vmatpush.msra.mxu0 %v4574
  %v4576 = vand.u32 %v215, 4294901760
  %4577 = vmatpush.msra.mxu0 %v4576
  %v4578 = vand.u32 %v210, 4294901760
  %4579 = vmatpush.msra.mxu0 %v4578
  %v4580 = vand.u32 %v205, 4294901760
  %4581 = vmatpush.msra.mxu0 %v4580
  %v4582 = vand.u32 %v450, 4294901760
  %v4583 = vsub.f32 %v450, %v4582
  %v4584 = vand.u32 %v4583, 4294901760
  %v4585 = vsub.f32 %v4583, %v4584
  %v4586 = vand.u32 %v4585, 4294901760
  %4587 = vmatmul.f32.gmra.mxu0 %v4586
  %v4588 = vpop.f32.mrf.mxu0
  %v4589 = vadd.f32 %v4548, %v4588
  %4590 = vdwg.mxu0
  %v4591 = vand.u32 %v280, 4294901760
  %v4592 = vsub.f32 %v280, %v4591
  %v4593 = vand.u32 %v4592, 4294901760
  %v4594 = vsub.f32 %v4592, %v4593
  %v4595 = vand.u32 %v4594, 4294901760
  %4596 = vmatpush.msra.mxu0 %v4595
  %v4597 = vand.u32 %v275, 4294901760
  %v4598 = vsub.f32 %v275, %v4597
  %v4599 = vand.u32 %v4598, 4294901760
  %v4600 = vsub.f32 %v4598, %v4599
  %v4601 = vand.u32 %v4600, 4294901760
  %4602 = vmatpush.msra.mxu0 %v4601
  %v4603 = vand.u32 %v270, 4294901760
  %v4604 = vsub.f32 %v270, %v4603
  %v4605 = vand.u32 %v4604, 4294901760
  %v4606 = vsub.f32 %v4604, %v4605
  %v4607 = vand.u32 %v4606, 4294901760
  %4608 = vmatpush.msra.mxu0 %v4607
  %v4609 = vand.u32 %v265, 4294901760
  %v4610 = vsub.f32 %v265, %v4609
  %v4611 = vand.u32 %v4610, 4294901760
  %v4612 = vsub.f32 %v4610, %v4611
  %v4613 = vand.u32 %v4612, 4294901760
  %4614 = vmatpush.msra.mxu0 %v4613
  %v4615 = vand.u32 %v260, 4294901760
  %v4616 = vsub.f32 %v260, %v4615
  %v4617 = vand.u32 %v4616, 4294901760
  %v4618 = vsub.f32 %v4616, %v4617
  %v4619 = vand.u32 %v4618, 4294901760
  %4620 = vmatpush.msra.mxu0 %v4619
  %v4621 = vand.u32 %v255, 4294901760
  %v4622 = vsub.f32 %v255, %v4621
  %v4623 = vand.u32 %v4622, 4294901760
  %v4624 = vsub.f32 %v4622, %v4623
  %v4625 = vand.u32 %v4624, 4294901760
  %4626 = vmatpush.msra.mxu0 %v4625
  %v4627 = vand.u32 %v250, 4294901760
  %v4628 = vsub.f32 %v250, %v4627
  %v4629 = vand.u32 %v4628, 4294901760
  %v4630 = vsub.f32 %v4628, %v4629
  %v4631 = vand.u32 %v4630, 4294901760
  %4632 = vmatpush.msra.mxu0 %v4631
  %v4633 = vand.u32 %v245, 4294901760
  %v4634 = vsub.f32 %v245, %v4633
  %v4635 = vand.u32 %v4634, 4294901760
  %v4636 = vsub.f32 %v4634, %v4635
  %v4637 = vand.u32 %v4636, 4294901760
  %4638 = vmatpush.msra.mxu0 %v4637
  %v4639 = vand.u32 %v240, 4294901760
  %v4640 = vsub.f32 %v240, %v4639
  %v4641 = vand.u32 %v4640, 4294901760
  %v4642 = vsub.f32 %v4640, %v4641
  %v4643 = vand.u32 %v4642, 4294901760
  %4644 = vmatpush.msra.mxu0 %v4643
  %v4645 = vand.u32 %v235, 4294901760
  %v4646 = vsub.f32 %v235, %v4645
  %v4647 = vand.u32 %v4646, 4294901760
  %v4648 = vsub.f32 %v4646, %v4647
  %v4649 = vand.u32 %v4648, 4294901760
  %4650 = vmatpush.msra.mxu0 %v4649
  %v4651 = vand.u32 %v230, 4294901760
  %v4652 = vsub.f32 %v230, %v4651
  %v4653 = vand.u32 %v4652, 4294901760
  %v4654 = vsub.f32 %v4652, %v4653
  %v4655 = vand.u32 %v4654, 4294901760
  %4656 = vmatpush.msra.mxu0 %v4655
  %v4657 = vand.u32 %v225, 4294901760
  %v4658 = vsub.f32 %v225, %v4657
  %v4659 = vand.u32 %v4658, 4294901760
  %v4660 = vsub.f32 %v4658, %v4659
  %v4661 = vand.u32 %v4660, 4294901760
  %4662 = vmatpush.msra.mxu0 %v4661
  %v4663 = vand.u32 %v220, 4294901760
  %v4664 = vsub.f32 %v220, %v4663
  %v4665 = vand.u32 %v4664, 4294901760
  %v4666 = vsub.f32 %v4664, %v4665
  %v4667 = vand.u32 %v4666, 4294901760
  %4668 = vmatpush.msra.mxu0 %v4667
  %v4669 = vand.u32 %v215, 4294901760
  %v4670 = vsub.f32 %v215, %v4669
  %v4671 = vand.u32 %v4670, 4294901760
  %v4672 = vsub.f32 %v4670, %v4671
  %v4673 = vand.u32 %v4672, 4294901760
  %4674 = vmatpush.msra.mxu0 %v4673
  %v4675 = vand.u32 %v210, 4294901760
  %v4676 = vsub.f32 %v210, %v4675
  %v4677 = vand.u32 %v4676, 4294901760
  %v4678 = vsub.f32 %v4676, %v4677
  %v4679 = vand.u32 %v4678, 4294901760
  %4680 = vmatpush.msra.mxu0 %v4679
  %v4681 = vand.u32 %v205, 4294901760
  %v4682 = vsub.f32 %v205, %v4681
  %v4683 = vand.u32 %v4682, 4294901760
  %v4684 = vsub.f32 %v4682, %v4683
  %v4685 = vand.u32 %v4684, 4294901760
  %4686 = vmatpush.msra.mxu0 %v4685
  %v4687 = vand.u32 %v450, 4294901760
  %4688 = vmatmul.f32.gmra.mxu0 %v4687
  %v4689 = vpop.f32.mrf.mxu0
  %v4690 = vadd.f32 %v4589, %v4689
  %4691 = vdwg.mxu0
  %v4692 = vand.u32 %v280, 4294901760
  %v4693 = vsub.f32 %v280, %v4692
  %4694 = vmatpush.msra.mxu0 %v4693
  %v4695 = vand.u32 %v275, 4294901760
  %v4696 = vsub.f32 %v275, %v4695
  %4697 = vmatpush.msra.mxu0 %v4696
  %v4698 = vand.u32 %v270, 4294901760
  %v4699 = vsub.f32 %v270, %v4698
  %4700 = vmatpush.msra.mxu0 %v4699
  %v4701 = vand.u32 %v265, 4294901760
  %v4702 = vsub.f32 %v265, %v4701
  %4703 = vmatpush.msra.mxu0 %v4702
  %v4704 = vand.u32 %v260, 4294901760
  %v4705 = vsub.f32 %v260, %v4704
  %4706 = vmatpush.msra.mxu0 %v4705
  %v4707 = vand.u32 %v255, 4294901760
  %v4708 = vsub.f32 %v255, %v4707
  %4709 = vmatpush.msra.mxu0 %v4708
  %v4710 = vand.u32 %v250, 4294901760
  %v4711 = vsub.f32 %v250, %v4710
  %4712 = vmatpush.msra.mxu0 %v4711
  %v4713 = vand.u32 %v245, 4294901760
  %v4714 = vsub.f32 %v245, %v4713
  %4715 = vmatpush.msra.mxu0 %v4714
  %v4716 = vand.u32 %v240, 4294901760
  %v4717 = vsub.f32 %v240, %v4716
  %4718 = vmatpush.msra.mxu0 %v4717
  %v4719 = vand.u32 %v235, 4294901760
  %v4720 = vsub.f32 %v235, %v4719
  %4721 = vmatpush.msra.mxu0 %v4720
  %v4722 = vand.u32 %v230, 4294901760
  %v4723 = vsub.f32 %v230, %v4722
  %4724 = vmatpush.msra.mxu0 %v4723
  %v4725 = vand.u32 %v225, 4294901760
  %v4726 = vsub.f32 %v225, %v4725
  %4727 = vmatpush.msra.mxu0 %v4726
  %v4728 = vand.u32 %v220, 4294901760
  %v4729 = vsub.f32 %v220, %v4728
  %4730 = vmatpush.msra.mxu0 %v4729
  %v4731 = vand.u32 %v215, 4294901760
  %v4732 = vsub.f32 %v215, %v4731
  %4733 = vmatpush.msra.mxu0 %v4732
  %v4734 = vand.u32 %v210, 4294901760
  %v4735 = vsub.f32 %v210, %v4734
  %4736 = vmatpush.msra.mxu0 %v4735
  %v4737 = vand.u32 %v205, 4294901760
  %v4738 = vsub.f32 %v205, %v4737
  %4739 = vmatpush.msra.mxu0 %v4738
  %v4740 = vand.u32 %v450, 4294901760
  %v4741 = vsub.f32 %v450, %v4740
  %4742 = vmatmul.f32.gmra.mxu0 %v4741
  %v4743 = vpop.f32.mrf.mxu0
  %v4744 = vadd.f32 %v4690, %v4743
  %4745 = vdwg.mxu0
  %v4746 = vand.u32 %v280, 4294901760
  %4747 = vmatpush.msra.mxu0 %v4746
  %v4748 = vand.u32 %v275, 4294901760
  %4749 = vmatpush.msra.mxu0 %v4748
  %v4750 = vand.u32 %v270, 4294901760
  %4751 = vmatpush.msra.mxu0 %v4750
  %v4752 = vand.u32 %v265, 4294901760
  %4753 = vmatpush.msra.mxu0 %v4752
  %v4754 = vand.u32 %v260, 4294901760
  %4755 = vmatpush.msra.mxu0 %v4754
  %v4756 = vand.u32 %v255, 4294901760
  %4757 = vmatpush.msra.mxu0 %v4756
  %v4758 = vand.u32 %v250, 4294901760
  %4759 = vmatpush.msra.mxu0 %v4758
  %v4760 = vand.u32 %v245, 4294901760
  %4761 = vmatpush.msra.mxu0 %v4760
  %v4762 = vand.u32 %v240, 4294901760
  %4763 = vmatpush.msra.mxu0 %v4762
  %v4764 = vand.u32 %v235, 4294901760
  %4765 = vmatpush.msra.mxu0 %v4764
  %v4766 = vand.u32 %v230, 4294901760
  %4767 = vmatpush.msra.mxu0 %v4766
  %v4768 = vand.u32 %v225, 4294901760
  %4769 = vmatpush.msra.mxu0 %v4768
  %v4770 = vand.u32 %v220, 4294901760
  %4771 = vmatpush.msra.mxu0 %v4770
  %v4772 = vand.u32 %v215, 4294901760
  %4773 = vmatpush.msra.mxu0 %v4772
  %v4774 = vand.u32 %v210, 4294901760
  %4775 = vmatpush.msra.mxu0 %v4774
  %v4776 = vand.u32 %v205, 4294901760
  %4777 = vmatpush.msra.mxu0 %v4776
  %v4778 = vand.u32 %v450, 4294901760
  %v4779 = vsub.f32 %v450, %v4778
  %v4780 = vand.u32 %v4779, 4294901760
  %4781 = vmatmul.f32.gmra.mxu0 %v4780
  %v4782 = vpop.f32.mrf.mxu0
  %v4783 = vadd.f32 %v4744, %v4782
  %4784 = vdwg.mxu0
  %v4785 = vand.u32 %v280, 4294901760
  %v4786 = vsub.f32 %v280, %v4785
  %v4787 = vand.u32 %v4786, 4294901760
  %4788 = vmatpush.msra.mxu0 %v4787
  %v4789 = vand.u32 %v275, 4294901760
  %v4790 = vsub.f32 %v275, %v4789
  %v4791 = vand.u32 %v4790, 4294901760
  %4792 = vmatpush.msra.mxu0 %v4791
  %v4793 = vand.u32 %v270, 4294901760
  %v4794 = vsub.f32 %v270, %v4793
  %v4795 = vand.u32 %v4794, 4294901760
  %4796 = vmatpush.msra.mxu0 %v4795
  %v4797 = vand.u32 %v265, 4294901760
  %v4798 = vsub.f32 %v265, %v4797
  %v4799 = vand.u32 %v4798, 4294901760
  %4800 = vmatpush.msra.mxu0 %v4799
  %v4801 = vand.u32 %v260, 4294901760
  %v4802 = vsub.f32 %v260, %v4801
  %v4803 = vand.u32 %v4802, 4294901760
  %4804 = vmatpush.msra.mxu0 %v4803
  %v4805 = vand.u32 %v255, 4294901760
  %v4806 = vsub.f32 %v255, %v4805
  %v4807 = vand.u32 %v4806, 4294901760
  %4808 = vmatpush.msra.mxu0 %v4807
  %v4809 = vand.u32 %v250, 4294901760
  %v4810 = vsub.f32 %v250, %v4809
  %v4811 = vand.u32 %v4810, 4294901760
  %4812 = vmatpush.msra.mxu0 %v4811
  %v4813 = vand.u32 %v245, 4294901760
  %v4814 = vsub.f32 %v245, %v4813
  %v4815 = vand.u32 %v4814, 4294901760
  %4816 = vmatpush.msra.mxu0 %v4815
  %v4817 = vand.u32 %v240, 4294901760
  %v4818 = vsub.f32 %v240, %v4817
  %v4819 = vand.u32 %v4818, 4294901760
  %4820 = vmatpush.msra.mxu0 %v4819
  %v4821 = vand.u32 %v235, 4294901760
  %v4822 = vsub.f32 %v235, %v4821
  %v4823 = vand.u32 %v4822, 4294901760
  %4824 = vmatpush.msra.mxu0 %v4823
  %v4825 = vand.u32 %v230, 4294901760
  %v4826 = vsub.f32 %v230, %v4825
  %v4827 = vand.u32 %v4826, 4294901760
  %4828 = vmatpush.msra.mxu0 %v4827
  %v4829 = vand.u32 %v225, 4294901760
  %v4830 = vsub.f32 %v225, %v4829
  %v4831 = vand.u32 %v4830, 4294901760
  %4832 = vmatpush.msra.mxu0 %v4831
  %v4833 = vand.u32 %v220, 4294901760
  %v4834 = vsub.f32 %v220, %v4833
  %v4835 = vand.u32 %v4834, 4294901760
  %4836 = vmatpush.msra.mxu0 %v4835
  %v4837 = vand.u32 %v215, 4294901760
  %v4838 = vsub.f32 %v215, %v4837
  %v4839 = vand.u32 %v4838, 4294901760
  %4840 = vmatpush.msra.mxu0 %v4839
  %v4841 = vand.u32 %v210, 4294901760
  %v4842 = vsub.f32 %v210, %v4841
  %v4843 = vand.u32 %v4842, 4294901760
  %4844 = vmatpush.msra.mxu0 %v4843
  %v4845 = vand.u32 %v205, 4294901760
  %v4846 = vsub.f32 %v205, %v4845
  %v4847 = vand.u32 %v4846, 4294901760
  %4848 = vmatpush.msra.mxu0 %v4847
  %v4849 = vand.u32 %v450, 4294901760
  %4850 = vmatmul.f32.gmra.mxu0 %v4849
  %v4851 = vpop.f32.mrf.mxu0
  %v4852 = vadd.f32 %v4783, %v4851
  %4853 = vdwg.mxu0
  %v4854 = vand.u32 %v280, 4294901760
  %4855 = vmatpush.msra.mxu0 %v4854
  %v4856 = vand.u32 %v275, 4294901760
  %4857 = vmatpush.msra.mxu0 %v4856
  %v4858 = vand.u32 %v270, 4294901760
  %4859 = vmatpush.msra.mxu0 %v4858
  %v4860 = vand.u32 %v265, 4294901760
  %4861 = vmatpush.msra.mxu0 %v4860
  %v4862 = vand.u32 %v260, 4294901760
  %4863 = vmatpush.msra.mxu0 %v4862
  %v4864 = vand.u32 %v255, 4294901760
  %4865 = vmatpush.msra.mxu0 %v4864
  %v4866 = vand.u32 %v250, 4294901760
  %4867 = vmatpush.msra.mxu0 %v4866
  %v4868 = vand.u32 %v245, 4294901760
  %4869 = vmatpush.msra.mxu0 %v4868
  %v4870 = vand.u32 %v240, 4294901760
  %4871 = vmatpush.msra.mxu0 %v4870
  %v4872 = vand.u32 %v235, 4294901760
  %4873 = vmatpush.msra.mxu0 %v4872
  %v4874 = vand.u32 %v230, 4294901760
  %4875 = vmatpush.msra.mxu0 %v4874
  %v4876 = vand.u32 %v225, 4294901760
  %4877 = vmatpush.msra.mxu0 %v4876
  %v4878 = vand.u32 %v220, 4294901760
  %4879 = vmatpush.msra.mxu0 %v4878
  %v4880 = vand.u32 %v215, 4294901760
  %4881 = vmatpush.msra.mxu0 %v4880
  %v4882 = vand.u32 %v210, 4294901760
  %4883 = vmatpush.msra.mxu0 %v4882
  %v4884 = vand.u32 %v205, 4294901760
  %4885 = vmatpush.msra.mxu0 %v4884
  %v4886 = vand.u32 %v450, 4294901760
  %4887 = vmatmul.f32.gmra.mxu0 %v4886
  %v4888 = vpop.f32.mrf.mxu0
  %v4889 = vadd.f32 %v4852, %v4888
  %4890 = vdwg.mxu0
  %v4891 = vand.u32 %v360, 4294901760
  %4892 = vmatpush.msra.mxu0 %v4891
  %v4893 = vand.u32 %v355, 4294901760
  %4894 = vmatpush.msra.mxu0 %v4893
  %v4895 = vand.u32 %v350, 4294901760
  %4896 = vmatpush.msra.mxu0 %v4895
  %v4897 = vand.u32 %v345, 4294901760
  %4898 = vmatpush.msra.mxu0 %v4897
  %v4899 = vand.u32 %v340, 4294901760
  %4900 = vmatpush.msra.mxu0 %v4899
  %v4901 = vand.u32 %v335, 4294901760
  %4902 = vmatpush.msra.mxu0 %v4901
  %v4903 = vand.u32 %v330, 4294901760
  %4904 = vmatpush.msra.mxu0 %v4903
  %v4905 = vand.u32 %v325, 4294901760
  %4906 = vmatpush.msra.mxu0 %v4905
  %v4907 = vand.u32 %v320, 4294901760
  %4908 = vmatpush.msra.mxu0 %v4907
  %v4909 = vand.u32 %v315, 4294901760
  %4910 = vmatpush.msra.mxu0 %v4909
  %v4911 = vand.u32 %v310, 4294901760
  %4912 = vmatpush.msra.mxu0 %v4911
  %v4913 = vand.u32 %v305, 4294901760
  %4914 = vmatpush.msra.mxu0 %v4913
  %v4915 = vand.u32 %v300, 4294901760
  %4916 = vmatpush.msra.mxu0 %v4915
  %v4917 = vand.u32 %v295, 4294901760
  %4918 = vmatpush.msra.mxu0 %v4917
  %v4919 = vand.u32 %v290, 4294901760
  %4920 = vmatpush.msra.mxu0 %v4919
  %v4921 = vand.u32 %v285, 4294901760
  %4922 = vmatpush.msra.mxu0 %v4921
  %v4923 = vand.u32 %v451, 4294901760
  %v4924 = vsub.f32 %v451, %v4923
  %v4925 = vand.u32 %v4924, 4294901760
  %v4926 = vsub.f32 %v4924, %v4925
  %v4927 = vand.u32 %v4926, 4294901760
  %4928 = vmatmul.f32.gmra.mxu0 %v4927
  %v4929 = vpop.f32.mrf.mxu0
  %v4930 = vadd.f32 %v4889, %v4929
  %4931 = vdwg.mxu0
  %v4932 = vand.u32 %v360, 4294901760
  %v4933 = vsub.f32 %v360, %v4932
  %v4934 = vand.u32 %v4933, 4294901760
  %v4935 = vsub.f32 %v4933, %v4934
  %v4936 = vand.u32 %v4935, 4294901760
  %4937 = vmatpush.msra.mxu0 %v4936
  %v4938 = vand.u32 %v355, 4294901760
  %v4939 = vsub.f32 %v355, %v4938
  %v4940 = vand.u32 %v4939, 4294901760
  %v4941 = vsub.f32 %v4939, %v4940
  %v4942 = vand.u32 %v4941, 4294901760
  %4943 = vmatpush.msra.mxu0 %v4942
  %v4944 = vand.u32 %v350, 4294901760
  %v4945 = vsub.f32 %v350, %v4944
  %v4946 = vand.u32 %v4945, 4294901760
  %v4947 = vsub.f32 %v4945, %v4946
  %v4948 = vand.u32 %v4947, 4294901760
  %4949 = vmatpush.msra.mxu0 %v4948
  %v4950 = vand.u32 %v345, 4294901760
  %v4951 = vsub.f32 %v345, %v4950
  %v4952 = vand.u32 %v4951, 4294901760
  %v4953 = vsub.f32 %v4951, %v4952
  %v4954 = vand.u32 %v4953, 4294901760
  %4955 = vmatpush.msra.mxu0 %v4954
  %v4956 = vand.u32 %v340, 4294901760
  %v4957 = vsub.f32 %v340, %v4956
  %v4958 = vand.u32 %v4957, 4294901760
  %v4959 = vsub.f32 %v4957, %v4958
  %v4960 = vand.u32 %v4959, 4294901760
  %4961 = vmatpush.msra.mxu0 %v4960
  %v4962 = vand.u32 %v335, 4294901760
  %v4963 = vsub.f32 %v335, %v4962
  %v4964 = vand.u32 %v4963, 4294901760
  %v4965 = vsub.f32 %v4963, %v4964
  %v4966 = vand.u32 %v4965, 4294901760
  %4967 = vmatpush.msra.mxu0 %v4966
  %v4968 = vand.u32 %v330, 4294901760
  %v4969 = vsub.f32 %v330, %v4968
  %v4970 = vand.u32 %v4969, 4294901760
  %v4971 = vsub.f32 %v4969, %v4970
  %v4972 = vand.u32 %v4971, 4294901760
  %4973 = vmatpush.msra.mxu0 %v4972
  %v4974 = vand.u32 %v325, 4294901760
  %v4975 = vsub.f32 %v325, %v4974
  %v4976 = vand.u32 %v4975, 4294901760
  %v4977 = vsub.f32 %v4975, %v4976
  %v4978 = vand.u32 %v4977, 4294901760
  %4979 = vmatpush.msra.mxu0 %v4978
  %v4980 = vand.u32 %v320, 4294901760
  %v4981 = vsub.f32 %v320, %v4980
  %v4982 = vand.u32 %v4981, 4294901760
  %v4983 = vsub.f32 %v4981, %v4982
  %v4984 = vand.u32 %v4983, 4294901760
  %4985 = vmatpush.msra.mxu0 %v4984
  %v4986 = vand.u32 %v315, 4294901760
  %v4987 = vsub.f32 %v315, %v4986
  %v4988 = vand.u32 %v4987, 4294901760
  %v4989 = vsub.f32 %v4987, %v4988
  %v4990 = vand.u32 %v4989, 4294901760
  %4991 = vmatpush.msra.mxu0 %v4990
  %v4992 = vand.u32 %v310, 4294901760
  %v4993 = vsub.f32 %v310, %v4992
  %v4994 = vand.u32 %v4993, 4294901760
  %v4995 = vsub.f32 %v4993, %v4994
  %v4996 = vand.u32 %v4995, 4294901760
  %4997 = vmatpush.msra.mxu0 %v4996
  %v4998 = vand.u32 %v305, 4294901760
  %v4999 = vsub.f32 %v305, %v4998
  %v5000 = vand.u32 %v4999, 4294901760
  %v5001 = vsub.f32 %v4999, %v5000
  %v5002 = vand.u32 %v5001, 4294901760
  %5003 = vmatpush.msra.mxu0 %v5002
  %v5004 = vand.u32 %v300, 4294901760
  %v5005 = vsub.f32 %v300, %v5004
  %v5006 = vand.u32 %v5005, 4294901760
  %v5007 = vsub.f32 %v5005, %v5006
  %v5008 = vand.u32 %v5007, 4294901760
  %5009 = vmatpush.msra.mxu0 %v5008
  %v5010 = vand.u32 %v295, 4294901760
  %v5011 = vsub.f32 %v295, %v5010
  %v5012 = vand.u32 %v5011, 4294901760
  %v5013 = vsub.f32 %v5011, %v5012
  %v5014 = vand.u32 %v5013, 4294901760
  %5015 = vmatpush.msra.mxu0 %v5014
  %v5016 = vand.u32 %v290, 4294901760
  %v5017 = vsub.f32 %v290, %v5016
  %v5018 = vand.u32 %v5017, 4294901760
  %v5019 = vsub.f32 %v5017, %v5018
  %v5020 = vand.u32 %v5019, 4294901760
  %5021 = vmatpush.msra.mxu0 %v5020
  %v5022 = vand.u32 %v285, 4294901760
  %v5023 = vsub.f32 %v285, %v5022
  %v5024 = vand.u32 %v5023, 4294901760
  %v5025 = vsub.f32 %v5023, %v5024
  %v5026 = vand.u32 %v5025, 4294901760
  %5027 = vmatpush.msra.mxu0 %v5026
  %v5028 = vand.u32 %v451, 4294901760
  %5029 = vmatmul.f32.gmra.mxu0 %v5028
  %v5030 = vpop.f32.mrf.mxu0
  %v5031 = vadd.f32 %v4930, %v5030
  %5032 = vdwg.mxu0
  %v5033 = vand.u32 %v360, 4294901760
  %v5034 = vsub.f32 %v360, %v5033
  %5035 = vmatpush.msra.mxu0 %v5034
  %v5036 = vand.u32 %v355, 4294901760
  %v5037 = vsub.f32 %v355, %v5036
  %5038 = vmatpush.msra.mxu0 %v5037
  %v5039 = vand.u32 %v350, 4294901760
  %v5040 = vsub.f32 %v350, %v5039
  %5041 = vmatpush.msra.mxu0 %v5040
  %v5042 = vand.u32 %v345, 4294901760
  %v5043 = vsub.f32 %v345, %v5042
  %5044 = vmatpush.msra.mxu0 %v5043
  %v5045 = vand.u32 %v340, 4294901760
  %v5046 = vsub.f32 %v340, %v5045
  %5047 = vmatpush.msra.mxu0 %v5046
  %v5048 = vand.u32 %v335, 4294901760
  %v5049 = vsub.f32 %v335, %v5048
  %5050 = vmatpush.msra.mxu0 %v5049
  %v5051 = vand.u32 %v330, 4294901760
  %v5052 = vsub.f32 %v330, %v5051
  %5053 = vmatpush.msra.mxu0 %v5052
  %v5054 = vand.u32 %v325, 4294901760
  %v5055 = vsub.f32 %v325, %v5054
  %5056 = vmatpush.msra.mxu0 %v5055
  %v5057 = vand.u32 %v320, 4294901760
  %v5058 = vsub.f32 %v320, %v5057
  %5059 = vmatpush.msra.mxu0 %v5058
  %v5060 = vand.u32 %v315, 4294901760
  %v5061 = vsub.f32 %v315, %v5060
  %5062 = vmatpush.msra.mxu0 %v5061
  %v5063 = vand.u32 %v310, 4294901760
  %v5064 = vsub.f32 %v310, %v5063
  %5065 = vmatpush.msra.mxu0 %v5064
  %v5066 = vand.u32 %v305, 4294901760
  %v5067 = vsub.f32 %v305, %v5066
  %5068 = vmatpush.msra.mxu0 %v5067
  %v5069 = vand.u32 %v300, 4294901760
  %v5070 = vsub.f32 %v300, %v5069
  %5071 = vmatpush.msra.mxu0 %v5070
  %v5072 = vand.u32 %v295, 4294901760
  %v5073 = vsub.f32 %v295, %v5072
  %5074 = vmatpush.msra.mxu0 %v5073
  %v5075 = vand.u32 %v290, 4294901760
  %v5076 = vsub.f32 %v290, %v5075
  %5077 = vmatpush.msra.mxu0 %v5076
  %v5078 = vand.u32 %v285, 4294901760
  %v5079 = vsub.f32 %v285, %v5078
  %5080 = vmatpush.msra.mxu0 %v5079
  %v5081 = vand.u32 %v451, 4294901760
  %v5082 = vsub.f32 %v451, %v5081
  %5083 = vmatmul.f32.gmra.mxu0 %v5082
  %v5084 = vpop.f32.mrf.mxu0
  %v5085 = vadd.f32 %v5031, %v5084
  %5086 = vdwg.mxu0
  %v5087 = vand.u32 %v360, 4294901760
  %5088 = vmatpush.msra.mxu0 %v5087
  %v5089 = vand.u32 %v355, 4294901760
  %5090 = vmatpush.msra.mxu0 %v5089
  %v5091 = vand.u32 %v350, 4294901760
  %5092 = vmatpush.msra.mxu0 %v5091
  %v5093 = vand.u32 %v345, 4294901760
  %5094 = vmatpush.msra.mxu0 %v5093
  %v5095 = vand.u32 %v340, 4294901760
  %5096 = vmatpush.msra.mxu0 %v5095
  %v5097 = vand.u32 %v335, 4294901760
  %5098 = vmatpush.msra.mxu0 %v5097
  %v5099 = vand.u32 %v330, 4294901760
  %5100 = vmatpush.msra.mxu0 %v5099
  %v5101 = vand.u32 %v325, 4294901760
  %5102 = vmatpush.msra.mxu0 %v5101
  %v5103 = vand.u32 %v320, 4294901760
  %5104 = vmatpush.msra.mxu0 %v5103
  %v5105 = vand.u32 %v315, 4294901760
  %5106 = vmatpush.msra.mxu0 %v5105
  %v5107 = vand.u32 %v310, 4294901760
  %5108 = vmatpush.msra.mxu0 %v5107
  %v5109 = vand.u32 %v305, 4294901760
  %5110 = vmatpush.msra.mxu0 %v5109
  %v5111 = vand.u32 %v300, 4294901760
  %5112 = vmatpush.msra.mxu0 %v5111
  %v5113 = vand.u32 %v295, 4294901760
  %5114 = vmatpush.msra.mxu0 %v5113
  %v5115 = vand.u32 %v290, 4294901760
  %5116 = vmatpush.msra.mxu0 %v5115
  %v5117 = vand.u32 %v285, 4294901760
  %5118 = vmatpush.msra.mxu0 %v5117
  %v5119 = vand.u32 %v451, 4294901760
  %v5120 = vsub.f32 %v451, %v5119
  %v5121 = vand.u32 %v5120, 4294901760
  %5122 = vmatmul.f32.gmra.mxu0 %v5121
  %v5123 = vpop.f32.mrf.mxu0
  %v5124 = vadd.f32 %v5085, %v5123
  %5125 = vdwg.mxu0
  %v5126 = vand.u32 %v360, 4294901760
  %v5127 = vsub.f32 %v360, %v5126
  %v5128 = vand.u32 %v5127, 4294901760
  %5129 = vmatpush.msra.mxu0 %v5128
  %v5130 = vand.u32 %v355, 4294901760
  %v5131 = vsub.f32 %v355, %v5130
  %v5132 = vand.u32 %v5131, 4294901760
  %5133 = vmatpush.msra.mxu0 %v5132
  %v5134 = vand.u32 %v350, 4294901760
  %v5135 = vsub.f32 %v350, %v5134
  %v5136 = vand.u32 %v5135, 4294901760
  %5137 = vmatpush.msra.mxu0 %v5136
  %v5138 = vand.u32 %v345, 4294901760
  %v5139 = vsub.f32 %v345, %v5138
  %v5140 = vand.u32 %v5139, 4294901760
  %5141 = vmatpush.msra.mxu0 %v5140
  %v5142 = vand.u32 %v340, 4294901760
  %v5143 = vsub.f32 %v340, %v5142
  %v5144 = vand.u32 %v5143, 4294901760
  %5145 = vmatpush.msra.mxu0 %v5144
  %v5146 = vand.u32 %v335, 4294901760
  %v5147 = vsub.f32 %v335, %v5146
  %v5148 = vand.u32 %v5147, 4294901760
  %5149 = vmatpush.msra.mxu0 %v5148
  %v5150 = vand.u32 %v330, 4294901760
  %v5151 = vsub.f32 %v330, %v5150
  %v5152 = vand.u32 %v5151, 4294901760
  %5153 = vmatpush.msra.mxu0 %v5152
  %v5154 = vand.u32 %v325, 4294901760
  %v5155 = vsub.f32 %v325, %v5154
  %v5156 = vand.u32 %v5155, 4294901760
  %5157 = vmatpush.msra.mxu0 %v5156
  %v5158 = vand.u32 %v320, 4294901760
  %v5159 = vsub.f32 %v320, %v5158
  %v5160 = vand.u32 %v5159, 4294901760
  %5161 = vmatpush.msra.mxu0 %v5160
  %v5162 = vand.u32 %v315, 4294901760
  %v5163 = vsub.f32 %v315, %v5162
  %v5164 = vand.u32 %v5163, 4294901760
  %5165 = vmatpush.msra.mxu0 %v5164
  %v5166 = vand.u32 %v310, 4294901760
  %v5167 = vsub.f32 %v310, %v5166
  %v5168 = vand.u32 %v5167, 4294901760
  %5169 = vmatpush.msra.mxu0 %v5168
  %v5170 = vand.u32 %v305, 4294901760
  %v5171 = vsub.f32 %v305, %v5170
  %v5172 = vand.u32 %v5171, 4294901760
  %5173 = vmatpush.msra.mxu0 %v5172
  %v5174 = vand.u32 %v300, 4294901760
  %v5175 = vsub.f32 %v300, %v5174
  %v5176 = vand.u32 %v5175, 4294901760
  %5177 = vmatpush.msra.mxu0 %v5176
  %v5178 = vand.u32 %v295, 4294901760
  %v5179 = vsub.f32 %v295, %v5178
  %v5180 = vand.u32 %v5179, 4294901760
  %5181 = vmatpush.msra.mxu0 %v5180
  %v5182 = vand.u32 %v290, 4294901760
  %v5183 = vsub.f32 %v290, %v5182
  %v5184 = vand.u32 %v5183, 4294901760
  %5185 = vmatpush.msra.mxu0 %v5184
  %v5186 = vand.u32 %v285, 4294901760
  %v5187 = vsub.f32 %v285, %v5186
  %v5188 = vand.u32 %v5187, 4294901760
  %5189 = vmatpush.msra.mxu0 %v5188
  %v5190 = vand.u32 %v451, 4294901760
  %5191 = vmatmul.f32.gmra.mxu0 %v5190
  %v5192 = vpop.f32.mrf.mxu0
  %v5193 = vadd.f32 %v5124, %v5192
  %5194 = vdwg.mxu0
  %v5195 = vand.u32 %v360, 4294901760
  %5196 = vmatpush.msra.mxu0 %v5195
  %v5197 = vand.u32 %v355, 4294901760
  %5198 = vmatpush.msra.mxu0 %v5197
  %v5199 = vand.u32 %v350, 4294901760
  %5200 = vmatpush.msra.mxu0 %v5199
  %v5201 = vand.u32 %v345, 4294901760
  %5202 = vmatpush.msra.mxu0 %v5201
  %v5203 = vand.u32 %v340, 4294901760
  %5204 = vmatpush.msra.mxu0 %v5203
  %v5205 = vand.u32 %v335, 4294901760
  %5206 = vmatpush.msra.mxu0 %v5205
  %v5207 = vand.u32 %v330, 4294901760
  %5208 = vmatpush.msra.mxu0 %v5207
  %v5209 = vand.u32 %v325, 4294901760
  %5210 = vmatpush.msra.mxu0 %v5209
  %v5211 = vand.u32 %v320, 4294901760
  %5212 = vmatpush.msra.mxu0 %v5211
  %v5213 = vand.u32 %v315, 4294901760
  %5214 = vmatpush.msra.mxu0 %v5213
  %v5215 = vand.u32 %v310, 4294901760
  %5216 = vmatpush.msra.mxu0 %v5215
  %v5217 = vand.u32 %v305, 4294901760
  %5218 = vmatpush.msra.mxu0 %v5217
  %v5219 = vand.u32 %v300, 4294901760
  %5220 = vmatpush.msra.mxu0 %v5219
  %v5221 = vand.u32 %v295, 4294901760
  %5222 = vmatpush.msra.mxu0 %v5221
  %v5223 = vand.u32 %v290, 4294901760
  %5224 = vmatpush.msra.mxu0 %v5223
  %v5225 = vand.u32 %v285, 4294901760
  %5226 = vmatpush.msra.mxu0 %v5225
  %v5227 = vand.u32 %v451, 4294901760
  %5228 = vmatmul.f32.gmra.mxu0 %v5227
  %v5229 = vpop.f32.mrf.mxu0
  %v5230 = vadd.f32 %v5193, %v5229
  %5231 = vdwg.mxu0
  %v5232 = vand.u32 %v440, 4294901760
  %5233 = vmatpush.msra.mxu0 %v5232
  %v5234 = vand.u32 %v435, 4294901760
  %5235 = vmatpush.msra.mxu0 %v5234
  %v5236 = vand.u32 %v430, 4294901760
  %5237 = vmatpush.msra.mxu0 %v5236
  %v5238 = vand.u32 %v425, 4294901760
  %5239 = vmatpush.msra.mxu0 %v5238
  %v5240 = vand.u32 %v420, 4294901760
  %5241 = vmatpush.msra.mxu0 %v5240
  %v5242 = vand.u32 %v415, 4294901760
  %5243 = vmatpush.msra.mxu0 %v5242
  %v5244 = vand.u32 %v410, 4294901760
  %5245 = vmatpush.msra.mxu0 %v5244
  %v5246 = vand.u32 %v405, 4294901760
  %5247 = vmatpush.msra.mxu0 %v5246
  %v5248 = vand.u32 %v400, 4294901760
  %5249 = vmatpush.msra.mxu0 %v5248
  %v5250 = vand.u32 %v395, 4294901760
  %5251 = vmatpush.msra.mxu0 %v5250
  %v5252 = vand.u32 %v390, 4294901760
  %5253 = vmatpush.msra.mxu0 %v5252
  %v5254 = vand.u32 %v385, 4294901760
  %5255 = vmatpush.msra.mxu0 %v5254
  %v5256 = vand.u32 %v380, 4294901760
  %5257 = vmatpush.msra.mxu0 %v5256
  %v5258 = vand.u32 %v375, 4294901760
  %5259 = vmatpush.msra.mxu0 %v5258
  %v5260 = vand.u32 %v370, 4294901760
  %5261 = vmatpush.msra.mxu0 %v5260
  %v5262 = vand.u32 %v365, 4294901760
  %5263 = vmatpush.msra.mxu0 %v5262
  %v5264 = vand.u32 %v452, 4294901760
  %v5265 = vsub.f32 %v452, %v5264
  %v5266 = vand.u32 %v5265, 4294901760
  %v5267 = vsub.f32 %v5265, %v5266
  %v5268 = vand.u32 %v5267, 4294901760
  %5269 = vmatmul.f32.gmra.mxu0 %v5268
  %v5270 = vpop.f32.mrf.mxu0
  %v5271 = vadd.f32 %v5230, %v5270
  %5272 = vdwg.mxu0
  %v5273 = vand.u32 %v440, 4294901760
  %v5274 = vsub.f32 %v440, %v5273
  %v5275 = vand.u32 %v5274, 4294901760
  %v5276 = vsub.f32 %v5274, %v5275
  %v5277 = vand.u32 %v5276, 4294901760
  %5278 = vmatpush.msra.mxu0 %v5277
  %v5279 = vand.u32 %v435, 4294901760
  %v5280 = vsub.f32 %v435, %v5279
  %v5281 = vand.u32 %v5280, 4294901760
  %v5282 = vsub.f32 %v5280, %v5281
  %v5283 = vand.u32 %v5282, 4294901760
  %5284 = vmatpush.msra.mxu0 %v5283
  %v5285 = vand.u32 %v430, 4294901760
  %v5286 = vsub.f32 %v430, %v5285
  %v5287 = vand.u32 %v5286, 4294901760
  %v5288 = vsub.f32 %v5286, %v5287
  %v5289 = vand.u32 %v5288, 4294901760
  %5290 = vmatpush.msra.mxu0 %v5289
  %v5291 = vand.u32 %v425, 4294901760
  %v5292 = vsub.f32 %v425, %v5291
  %v5293 = vand.u32 %v5292, 4294901760
  %v5294 = vsub.f32 %v5292, %v5293
  %v5295 = vand.u32 %v5294, 4294901760
  %5296 = vmatpush.msra.mxu0 %v5295
  %v5297 = vand.u32 %v420, 4294901760
  %v5298 = vsub.f32 %v420, %v5297
  %v5299 = vand.u32 %v5298, 4294901760
  %v5300 = vsub.f32 %v5298, %v5299
  %v5301 = vand.u32 %v5300, 4294901760
  %5302 = vmatpush.msra.mxu0 %v5301
  %v5303 = vand.u32 %v415, 4294901760
  %v5304 = vsub.f32 %v415, %v5303
  %v5305 = vand.u32 %v5304, 4294901760
  %v5306 = vsub.f32 %v5304, %v5305
  %v5307 = vand.u32 %v5306, 4294901760
  %5308 = vmatpush.msra.mxu0 %v5307
  %v5309 = vand.u32 %v410, 4294901760
  %v5310 = vsub.f32 %v410, %v5309
  %v5311 = vand.u32 %v5310, 4294901760
  %v5312 = vsub.f32 %v5310, %v5311
  %v5313 = vand.u32 %v5312, 4294901760
  %5314 = vmatpush.msra.mxu0 %v5313
  %v5315 = vand.u32 %v405, 4294901760
  %v5316 = vsub.f32 %v405, %v5315
  %v5317 = vand.u32 %v5316, 4294901760
  %v5318 = vsub.f32 %v5316, %v5317
  %v5319 = vand.u32 %v5318, 4294901760
  %5320 = vmatpush.msra.mxu0 %v5319
  %v5321 = vand.u32 %v400, 4294901760
  %v5322 = vsub.f32 %v400, %v5321
  %v5323 = vand.u32 %v5322, 4294901760
  %v5324 = vsub.f32 %v5322, %v5323
  %v5325 = vand.u32 %v5324, 4294901760
  %5326 = vmatpush.msra.mxu0 %v5325
  %v5327 = vand.u32 %v395, 4294901760
  %v5328 = vsub.f32 %v395, %v5327
  %v5329 = vand.u32 %v5328, 4294901760
  %v5330 = vsub.f32 %v5328, %v5329
  %v5331 = vand.u32 %v5330, 4294901760
  %5332 = vmatpush.msra.mxu0 %v5331
  %v5333 = vand.u32 %v390, 4294901760
  %v5334 = vsub.f32 %v390, %v5333
  %v5335 = vand.u32 %v5334, 4294901760
  %v5336 = vsub.f32 %v5334, %v5335
  %v5337 = vand.u32 %v5336, 4294901760
  %5338 = vmatpush.msra.mxu0 %v5337
  %v5339 = vand.u32 %v385, 4294901760
  %v5340 = vsub.f32 %v385, %v5339
  %v5341 = vand.u32 %v5340, 4294901760
  %v5342 = vsub.f32 %v5340, %v5341
  %v5343 = vand.u32 %v5342, 4294901760
  %5344 = vmatpush.msra.mxu0 %v5343
  %v5345 = vand.u32 %v380, 4294901760
  %v5346 = vsub.f32 %v380, %v5345
  %v5347 = vand.u32 %v5346, 4294901760
  %v5348 = vsub.f32 %v5346, %v5347
  %v5349 = vand.u32 %v5348, 4294901760
  %5350 = vmatpush.msra.mxu0 %v5349
  %v5351 = vand.u32 %v375, 4294901760
  %v5352 = vsub.f32 %v375, %v5351
  %v5353 = vand.u32 %v5352, 4294901760
  %v5354 = vsub.f32 %v5352, %v5353
  %v5355 = vand.u32 %v5354, 4294901760
  %5356 = vmatpush.msra.mxu0 %v5355
  %v5357 = vand.u32 %v370, 4294901760
  %v5358 = vsub.f32 %v370, %v5357
  %v5359 = vand.u32 %v5358, 4294901760
  %v5360 = vsub.f32 %v5358, %v5359
  %v5361 = vand.u32 %v5360, 4294901760
  %5362 = vmatpush.msra.mxu0 %v5361
  %v5363 = vand.u32 %v365, 4294901760
  %v5364 = vsub.f32 %v365, %v5363
  %v5365 = vand.u32 %v5364, 4294901760
  %v5366 = vsub.f32 %v5364, %v5365
  %v5367 = vand.u32 %v5366, 4294901760
  %5368 = vmatpush.msra.mxu0 %v5367
  %v5369 = vand.u32 %v452, 4294901760
  %5370 = vmatmul.f32.gmra.mxu0 %v5369
  %v5371 = vpop.f32.mrf.mxu0
  %v5372 = vadd.f32 %v5271, %v5371
  %5373 = vdwg.mxu0
  %v5374 = vand.u32 %v440, 4294901760
  %v5375 = vsub.f32 %v440, %v5374
  %5376 = vmatpush.msra.mxu0 %v5375
  %v5377 = vand.u32 %v435, 4294901760
  %v5378 = vsub.f32 %v435, %v5377
  %5379 = vmatpush.msra.mxu0 %v5378
  %v5380 = vand.u32 %v430, 4294901760
  %v5381 = vsub.f32 %v430, %v5380
  %5382 = vmatpush.msra.mxu0 %v5381
  %v5383 = vand.u32 %v425, 4294901760
  %v5384 = vsub.f32 %v425, %v5383
  %5385 = vmatpush.msra.mxu0 %v5384
  %v5386 = vand.u32 %v420, 4294901760
  %v5387 = vsub.f32 %v420, %v5386
  %5388 = vmatpush.msra.mxu0 %v5387
  %v5389 = vand.u32 %v415, 4294901760
  %v5390 = vsub.f32 %v415, %v5389
  %5391 = vmatpush.msra.mxu0 %v5390
  %v5392 = vand.u32 %v410, 4294901760
  %v5393 = vsub.f32 %v410, %v5392
  %5394 = vmatpush.msra.mxu0 %v5393
  %v5395 = vand.u32 %v405, 4294901760
  %v5396 = vsub.f32 %v405, %v5395
  %5397 = vmatpush.msra.mxu0 %v5396
  %v5398 = vand.u32 %v400, 4294901760
  %v5399 = vsub.f32 %v400, %v5398
  %5400 = vmatpush.msra.mxu0 %v5399
  %v5401 = vand.u32 %v395, 4294901760
  %v5402 = vsub.f32 %v395, %v5401
  %5403 = vmatpush.msra.mxu0 %v5402
  %v5404 = vand.u32 %v390, 4294901760
  %v5405 = vsub.f32 %v390, %v5404
  %5406 = vmatpush.msra.mxu0 %v5405
  %v5407 = vand.u32 %v385, 4294901760
  %v5408 = vsub.f32 %v385, %v5407
  %5409 = vmatpush.msra.mxu0 %v5408
  %v5410 = vand.u32 %v380, 4294901760
  %v5411 = vsub.f32 %v380, %v5410
  %5412 = vmatpush.msra.mxu0 %v5411
  %v5413 = vand.u32 %v375, 4294901760
  %v5414 = vsub.f32 %v375, %v5413
  %5415 = vmatpush.msra.mxu0 %v5414
  %v5416 = vand.u32 %v370, 4294901760
  %v5417 = vsub.f32 %v370, %v5416
  %5418 = vmatpush.msra.mxu0 %v5417
  %v5419 = vand.u32 %v365, 4294901760
  %v5420 = vsub.f32 %v365, %v5419
  %5421 = vmatpush.msra.mxu0 %v5420
  %v5422 = vand.u32 %v452, 4294901760
  %v5423 = vsub.f32 %v452, %v5422
  %5424 = vmatmul.f32.gmra.mxu0 %v5423
  %v5425 = vpop.f32.mrf.mxu0
  %v5426 = vadd.f32 %v5372, %v5425
  %5427 = vdwg.mxu0
  %v5428 = vand.u32 %v440, 4294901760
  %5429 = vmatpush.msra.mxu0 %v5428
  %v5430 = vand.u32 %v435, 4294901760
  %5431 = vmatpush.msra.mxu0 %v5430
  %v5432 = vand.u32 %v430, 4294901760
  %5433 = vmatpush.msra.mxu0 %v5432
  %v5434 = vand.u32 %v425, 4294901760
  %5435 = vmatpush.msra.mxu0 %v5434
  %v5436 = vand.u32 %v420, 4294901760
  %5437 = vmatpush.msra.mxu0 %v5436
  %v5438 = vand.u32 %v415, 4294901760
  %5439 = vmatpush.msra.mxu0 %v5438
  %v5440 = vand.u32 %v410, 4294901760
  %5441 = vmatpush.msra.mxu0 %v5440
  %v5442 = vand.u32 %v405, 4294901760
  %5443 = vmatpush.msra.mxu0 %v5442
  %v5444 = vand.u32 %v400, 4294901760
  %5445 = vmatpush.msra.mxu0 %v5444
  %v5446 = vand.u32 %v395, 4294901760
  %5447 = vmatpush.msra.mxu0 %v5446
  %v5448 = vand.u32 %v390, 4294901760
  %5449 = vmatpush.msra.mxu0 %v5448
  %v5450 = vand.u32 %v385, 4294901760
  %5451 = vmatpush.msra.mxu0 %v5450
  %v5452 = vand.u32 %v380, 4294901760
  %5453 = vmatpush.msra.mxu0 %v5452
  %v5454 = vand.u32 %v375, 4294901760
  %5455 = vmatpush.msra.mxu0 %v5454
  %v5456 = vand.u32 %v370, 4294901760
  %5457 = vmatpush.msra.mxu0 %v5456
  %v5458 = vand.u32 %v365, 4294901760
  %5459 = vmatpush.msra.mxu0 %v5458
  %v5460 = vand.u32 %v452, 4294901760
  %v5461 = vsub.f32 %v452, %v5460
  %v5462 = vand.u32 %v5461, 4294901760
  %5463 = vmatmul.f32.gmra.mxu0 %v5462
  %v5464 = vpop.f32.mrf.mxu0
  %v5465 = vadd.f32 %v5426, %v5464
  %5466 = vdwg.mxu0
  %v5467 = vand.u32 %v440, 4294901760
  %v5468 = vsub.f32 %v440, %v5467
  %v5469 = vand.u32 %v5468, 4294901760
  %5470 = vmatpush.msra.mxu0 %v5469
  %v5471 = vand.u32 %v435, 4294901760
  %v5472 = vsub.f32 %v435, %v5471
  %v5473 = vand.u32 %v5472, 4294901760
  %5474 = vmatpush.msra.mxu0 %v5473
  %v5475 = vand.u32 %v430, 4294901760
  %v5476 = vsub.f32 %v430, %v5475
  %v5477 = vand.u32 %v5476, 4294901760
  %5478 = vmatpush.msra.mxu0 %v5477
  %v5479 = vand.u32 %v425, 4294901760
  %v5480 = vsub.f32 %v425, %v5479
  %v5481 = vand.u32 %v5480, 4294901760
  %5482 = vmatpush.msra.mxu0 %v5481
  %v5483 = vand.u32 %v420, 4294901760
  %v5484 = vsub.f32 %v420, %v5483
  %v5485 = vand.u32 %v5484, 4294901760
  %5486 = vmatpush.msra.mxu0 %v5485
  %v5487 = vand.u32 %v415, 4294901760
  %v5488 = vsub.f32 %v415, %v5487
  %v5489 = vand.u32 %v5488, 4294901760
  %5490 = vmatpush.msra.mxu0 %v5489
  %v5491 = vand.u32 %v410, 4294901760
  %v5492 = vsub.f32 %v410, %v5491
  %v5493 = vand.u32 %v5492, 4294901760
  %5494 = vmatpush.msra.mxu0 %v5493
  %v5495 = vand.u32 %v405, 4294901760
  %v5496 = vsub.f32 %v405, %v5495
  %v5497 = vand.u32 %v5496, 4294901760
  %5498 = vmatpush.msra.mxu0 %v5497
  %v5499 = vand.u32 %v400, 4294901760
  %v5500 = vsub.f32 %v400, %v5499
  %v5501 = vand.u32 %v5500, 4294901760
  %5502 = vmatpush.msra.mxu0 %v5501
  %v5503 = vand.u32 %v395, 4294901760
  %v5504 = vsub.f32 %v395, %v5503
  %v5505 = vand.u32 %v5504, 4294901760
  %5506 = vmatpush.msra.mxu0 %v5505
  %v5507 = vand.u32 %v390, 4294901760
  %v5508 = vsub.f32 %v390, %v5507
  %v5509 = vand.u32 %v5508, 4294901760
  %5510 = vmatpush.msra.mxu0 %v5509
  %v5511 = vand.u32 %v385, 4294901760
  %v5512 = vsub.f32 %v385, %v5511
  %v5513 = vand.u32 %v5512, 4294901760
  %5514 = vmatpush.msra.mxu0 %v5513
  %v5515 = vand.u32 %v380, 4294901760
  %v5516 = vsub.f32 %v380, %v5515
  %v5517 = vand.u32 %v5516, 4294901760
  %5518 = vmatpush.msra.mxu0 %v5517
  %v5519 = vand.u32 %v375, 4294901760
  %v5520 = vsub.f32 %v375, %v5519
  %v5521 = vand.u32 %v5520, 4294901760
  %5522 = vmatpush.msra.mxu0 %v5521
  %v5523 = vand.u32 %v370, 4294901760
  %v5524 = vsub.f32 %v370, %v5523
  %v5525 = vand.u32 %v5524, 4294901760
  %5526 = vmatpush.msra.mxu0 %v5525
  %v5527 = vand.u32 %v365, 4294901760
  %v5528 = vsub.f32 %v365, %v5527
  %v5529 = vand.u32 %v5528, 4294901760
  %5530 = vmatpush.msra.mxu0 %v5529
  %v5531 = vand.u32 %v452, 4294901760
  %5532 = vmatmul.f32.gmra.mxu0 %v5531
  %v5533 = vpop.f32.mrf.mxu0
  %v5534 = vadd.f32 %v5465, %v5533
  %5535 = vdwg.mxu0
  %v5536 = vand.u32 %v440, 4294901760
  %5537 = vmatpush.msra.mxu0 %v5536
  %v5538 = vand.u32 %v435, 4294901760
  %5539 = vmatpush.msra.mxu0 %v5538
  %v5540 = vand.u32 %v430, 4294901760
  %5541 = vmatpush.msra.mxu0 %v5540
  %v5542 = vand.u32 %v425, 4294901760
  %5543 = vmatpush.msra.mxu0 %v5542
  %v5544 = vand.u32 %v420, 4294901760
  %5545 = vmatpush.msra.mxu0 %v5544
  %v5546 = vand.u32 %v415, 4294901760
  %5547 = vmatpush.msra.mxu0 %v5546
  %v5548 = vand.u32 %v410, 4294901760
  %5549 = vmatpush.msra.mxu0 %v5548
  %v5550 = vand.u32 %v405, 4294901760
  %5551 = vmatpush.msra.mxu0 %v5550
  %v5552 = vand.u32 %v400, 4294901760
  %5553 = vmatpush.msra.mxu0 %v5552
  %v5554 = vand.u32 %v395, 4294901760
  %5555 = vmatpush.msra.mxu0 %v5554
  %v5556 = vand.u32 %v390, 4294901760
  %5557 = vmatpush.msra.mxu0 %v5556
  %v5558 = vand.u32 %v385, 4294901760
  %5559 = vmatpush.msra.mxu0 %v5558
  %v5560 = vand.u32 %v380, 4294901760
  %5561 = vmatpush.msra.mxu0 %v5560
  %v5562 = vand.u32 %v375, 4294901760
  %5563 = vmatpush.msra.mxu0 %v5562
  %v5564 = vand.u32 %v370, 4294901760
  %5565 = vmatpush.msra.mxu0 %v5564
  %v5566 = vand.u32 %v365, 4294901760
  %5567 = vmatpush.msra.mxu0 %v5566
  %v5568 = vand.u32 %v452, 4294901760
  %5569 = vmatmul.f32.gmra.mxu0 %v5568
  %v5570 = vpop.f32.mrf.mxu0
  %v5571 = vadd.f32 %v5534, %v5570
  %5572 = vdwg.mxu0
  %v5573 = vand.u32 %v121, 4294901760
  %5574 = vmatpush.msra.mxu0 %v5573
  %v5575 = vand.u32 %v116, 4294901760
  %5576 = vmatpush.msra.mxu0 %v5575
  %v5577 = vand.u32 %v111, 4294901760
  %5578 = vmatpush.msra.mxu0 %v5577
  %v5579 = vand.u32 %v106, 4294901760
  %5580 = vmatpush.msra.mxu0 %v5579
  %v5581 = vand.u32 %v101, 4294901760
  %5582 = vmatpush.msra.mxu0 %v5581
  %v5583 = vand.u32 %v96, 4294901760
  %5584 = vmatpush.msra.mxu0 %v5583
  %v5585 = vand.u32 %v91, 4294901760
  %5586 = vmatpush.msra.mxu0 %v5585
  %v5587 = vand.u32 %v86, 4294901760
  %5588 = vmatpush.msra.mxu0 %v5587
  %v5589 = vand.u32 %v81, 4294901760
  %5590 = vmatpush.msra.mxu0 %v5589
  %v5591 = vand.u32 %v76, 4294901760
  %5592 = vmatpush.msra.mxu0 %v5591
  %v5593 = vand.u32 %v71, 4294901760
  %5594 = vmatpush.msra.mxu0 %v5593
  %v5595 = vand.u32 %v66, 4294901760
  %5596 = vmatpush.msra.mxu0 %v5595
  %v5597 = vand.u32 %v61, 4294901760
  %5598 = vmatpush.msra.mxu0 %v5597
  %v5599 = vand.u32 %v56, 4294901760
  %5600 = vmatpush.msra.mxu0 %v5599
  %v5601 = vand.u32 %v51, 4294901760
  %5602 = vmatpush.msra.mxu0 %v5601
  %v5603 = vand.u32 %v46, 4294901760
  %5604 = vmatpush.msra.mxu0 %v5603
  %v5605 = vand.u32 %v448, 4294901760
  %v5606 = vsub.f32 %v448, %v5605
  %v5607 = vand.u32 %v5606, 4294901760
  %v5608 = vsub.f32 %v5606, %v5607
  %v5609 = vand.u32 %v5608, 4294901760
  %5610 = vmatmul.f32.gmra.mxu0 %v5609
  %v5611 = vpop.f32.mrf.mxu0
  %v5612 = vadd.f32 0.0, %v5611
  %5613 = vdwg.mxu0
  %v5614 = vand.u32 %v121, 4294901760
  %v5615 = vsub.f32 %v121, %v5614
  %v5616 = vand.u32 %v5615, 4294901760
  %v5617 = vsub.f32 %v5615, %v5616
  %v5618 = vand.u32 %v5617, 4294901760
  %5619 = vmatpush.msra.mxu0 %v5618
  %v5620 = vand.u32 %v116, 4294901760
  %v5621 = vsub.f32 %v116, %v5620
  %v5622 = vand.u32 %v5621, 4294901760
  %v5623 = vsub.f32 %v5621, %v5622
  %v5624 = vand.u32 %v5623, 4294901760
  %5625 = vmatpush.msra.mxu0 %v5624
  %v5626 = vand.u32 %v111, 4294901760
  %v5627 = vsub.f32 %v111, %v5626
  %v5628 = vand.u32 %v5627, 4294901760
  %v5629 = vsub.f32 %v5627, %v5628
  %v5630 = vand.u32 %v5629, 4294901760
  %5631 = vmatpush.msra.mxu0 %v5630
  %v5632 = vand.u32 %v106, 4294901760
  %v5633 = vsub.f32 %v106, %v5632
  %v5634 = vand.u32 %v5633, 4294901760
  %v5635 = vsub.f32 %v5633, %v5634
  %v5636 = vand.u32 %v5635, 4294901760
  %5637 = vmatpush.msra.mxu0 %v5636
  %v5638 = vand.u32 %v101, 4294901760
  %v5639 = vsub.f32 %v101, %v5638
  %v5640 = vand.u32 %v5639, 4294901760
  %v5641 = vsub.f32 %v5639, %v5640
  %v5642 = vand.u32 %v5641, 4294901760
  %5643 = vmatpush.msra.mxu0 %v5642
  %v5644 = vand.u32 %v96, 4294901760
  %v5645 = vsub.f32 %v96, %v5644
  %v5646 = vand.u32 %v5645, 4294901760
  %v5647 = vsub.f32 %v5645, %v5646
  %v5648 = vand.u32 %v5647, 4294901760
  %5649 = vmatpush.msra.mxu0 %v5648
  %v5650 = vand.u32 %v91, 4294901760
  %v5651 = vsub.f32 %v91, %v5650
  %v5652 = vand.u32 %v5651, 4294901760
  %v5653 = vsub.f32 %v5651, %v5652
  %v5654 = vand.u32 %v5653, 4294901760
  %5655 = vmatpush.msra.mxu0 %v5654
  %v5656 = vand.u32 %v86, 4294901760
  %v5657 = vsub.f32 %v86, %v5656
  %v5658 = vand.u32 %v5657, 4294901760
  %v5659 = vsub.f32 %v5657, %v5658
  %v5660 = vand.u32 %v5659, 4294901760
  %5661 = vmatpush.msra.mxu0 %v5660
  %v5662 = vand.u32 %v81, 4294901760
  %v5663 = vsub.f32 %v81, %v5662
  %v5664 = vand.u32 %v5663, 4294901760
  %v5665 = vsub.f32 %v5663, %v5664
  %v5666 = vand.u32 %v5665, 4294901760
  %5667 = vmatpush.msra.mxu0 %v5666
  %v5668 = vand.u32 %v76, 4294901760
  %v5669 = vsub.f32 %v76, %v5668
  %v5670 = vand.u32 %v5669, 4294901760
  %v5671 = vsub.f32 %v5669, %v5670
  %v5672 = vand.u32 %v5671, 4294901760
  %5673 = vmatpush.msra.mxu0 %v5672
  %v5674 = vand.u32 %v71, 4294901760
  %v5675 = vsub.f32 %v71, %v5674
  %v5676 = vand.u32 %v5675, 4294901760
  %v5677 = vsub.f32 %v5675, %v5676
  %v5678 = vand.u32 %v5677, 4294901760
  %5679 = vmatpush.msra.mxu0 %v5678
  %v5680 = vand.u32 %v66, 4294901760
  %v5681 = vsub.f32 %v66, %v5680
  %v5682 = vand.u32 %v5681, 4294901760
  %v5683 = vsub.f32 %v5681, %v5682
  %v5684 = vand.u32 %v5683, 4294901760
  %5685 = vmatpush.msra.mxu0 %v5684
  %v5686 = vand.u32 %v61, 4294901760
  %v5687 = vsub.f32 %v61, %v5686
  %v5688 = vand.u32 %v5687, 4294901760
  %v5689 = vsub.f32 %v5687, %v5688
  %v5690 = vand.u32 %v5689, 4294901760
  %5691 = vmatpush.msra.mxu0 %v5690
  %v5692 = vand.u32 %v56, 4294901760
  %v5693 = vsub.f32 %v56, %v5692
  %v5694 = vand.u32 %v5693, 4294901760
  %v5695 = vsub.f32 %v5693, %v5694
  %v5696 = vand.u32 %v5695, 4294901760
  %5697 = vmatpush.msra.mxu0 %v5696
  %v5698 = vand.u32 %v51, 4294901760
  %v5699 = vsub.f32 %v51, %v5698
  %v5700 = vand.u32 %v5699, 4294901760
  %v5701 = vsub.f32 %v5699, %v5700
  %v5702 = vand.u32 %v5701, 4294901760
  %5703 = vmatpush.msra.mxu0 %v5702
  %v5704 = vand.u32 %v46, 4294901760
  %v5705 = vsub.f32 %v46, %v5704
  %v5706 = vand.u32 %v5705, 4294901760
  %v5707 = vsub.f32 %v5705, %v5706
  %v5708 = vand.u32 %v5707, 4294901760
  %5709 = vmatpush.msra.mxu0 %v5708
  %v5710 = vand.u32 %v448, 4294901760
  %5711 = vmatmul.f32.gmra.mxu0 %v5710
  %v5712 = vpop.f32.mrf.mxu0
  %v5713 = vadd.f32 %v5612, %v5712
  %5714 = vdwg.mxu0
  %v5715 = vand.u32 %v121, 4294901760
  %v5716 = vsub.f32 %v121, %v5715
  %5717 = vmatpush.msra.mxu0 %v5716
  %v5718 = vand.u32 %v116, 4294901760
  %v5719 = vsub.f32 %v116, %v5718
  %5720 = vmatpush.msra.mxu0 %v5719
  %v5721 = vand.u32 %v111, 4294901760
  %v5722 = vsub.f32 %v111, %v5721
  %5723 = vmatpush.msra.mxu0 %v5722
  %v5724 = vand.u32 %v106, 4294901760
  %v5725 = vsub.f32 %v106, %v5724
  %5726 = vmatpush.msra.mxu0 %v5725
  %v5727 = vand.u32 %v101, 4294901760
  %v5728 = vsub.f32 %v101, %v5727
  %5729 = vmatpush.msra.mxu0 %v5728
  %v5730 = vand.u32 %v96, 4294901760
  %v5731 = vsub.f32 %v96, %v5730
  %5732 = vmatpush.msra.mxu0 %v5731
  %v5733 = vand.u32 %v91, 4294901760
  %v5734 = vsub.f32 %v91, %v5733
  %5735 = vmatpush.msra.mxu0 %v5734
  %v5736 = vand.u32 %v86, 4294901760
  %v5737 = vsub.f32 %v86, %v5736
  %5738 = vmatpush.msra.mxu0 %v5737
  %v5739 = vand.u32 %v81, 4294901760
  %v5740 = vsub.f32 %v81, %v5739
  %5741 = vmatpush.msra.mxu0 %v5740
  %v5742 = vand.u32 %v76, 4294901760
  %v5743 = vsub.f32 %v76, %v5742
  %5744 = vmatpush.msra.mxu0 %v5743
  %v5745 = vand.u32 %v71, 4294901760
  %v5746 = vsub.f32 %v71, %v5745
  %5747 = vmatpush.msra.mxu0 %v5746
  %v5748 = vand.u32 %v66, 4294901760
  %v5749 = vsub.f32 %v66, %v5748
  %5750 = vmatpush.msra.mxu0 %v5749
  %v5751 = vand.u32 %v61, 4294901760
  %v5752 = vsub.f32 %v61, %v5751
  %5753 = vmatpush.msra.mxu0 %v5752
  %v5754 = vand.u32 %v56, 4294901760
  %v5755 = vsub.f32 %v56, %v5754
  %5756 = vmatpush.msra.mxu0 %v5755
  %v5757 = vand.u32 %v51, 4294901760
  %v5758 = vsub.f32 %v51, %v5757
  %5759 = vmatpush.msra.mxu0 %v5758
  %v5760 = vand.u32 %v46, 4294901760
  %v5761 = vsub.f32 %v46, %v5760
  %5762 = vmatpush.msra.mxu0 %v5761
  %v5763 = vand.u32 %v448, 4294901760
  %v5764 = vsub.f32 %v448, %v5763
  %5765 = vmatmul.f32.gmra.mxu0 %v5764
  %v5766 = vpop.f32.mrf.mxu0
  %v5767 = vadd.f32 %v5713, %v5766
  %5768 = vdwg.mxu0
  %v5769 = vand.u32 %v121, 4294901760
  %5770 = vmatpush.msra.mxu0 %v5769
  %v5771 = vand.u32 %v116, 4294901760
  %5772 = vmatpush.msra.mxu0 %v5771
  %v5773 = vand.u32 %v111, 4294901760
  %5774 = vmatpush.msra.mxu0 %v5773
  %v5775 = vand.u32 %v106, 4294901760
  %5776 = vmatpush.msra.mxu0 %v5775
  %v5777 = vand.u32 %v101, 4294901760
  %5778 = vmatpush.msra.mxu0 %v5777
  %v5779 = vand.u32 %v96, 4294901760
  %5780 = vmatpush.msra.mxu0 %v5779
  %v5781 = vand.u32 %v91, 4294901760
  %5782 = vmatpush.msra.mxu0 %v5781
  %v5783 = vand.u32 %v86, 4294901760
  %5784 = vmatpush.msra.mxu0 %v5783
  %v5785 = vand.u32 %v81, 4294901760
  %5786 = vmatpush.msra.mxu0 %v5785
  %v5787 = vand.u32 %v76, 4294901760
  %5788 = vmatpush.msra.mxu0 %v5787
  %v5789 = vand.u32 %v71, 4294901760
  %5790 = vmatpush.msra.mxu0 %v5789
  %v5791 = vand.u32 %v66, 4294901760
  %5792 = vmatpush.msra.mxu0 %v5791
  %v5793 = vand.u32 %v61, 4294901760
  %5794 = vmatpush.msra.mxu0 %v5793
  %v5795 = vand.u32 %v56, 4294901760
  %5796 = vmatpush.msra.mxu0 %v5795
  %v5797 = vand.u32 %v51, 4294901760
  %5798 = vmatpush.msra.mxu0 %v5797
  %v5799 = vand.u32 %v46, 4294901760
  %5800 = vmatpush.msra.mxu0 %v5799
  %v5801 = vand.u32 %v448, 4294901760
  %v5802 = vsub.f32 %v448, %v5801
  %v5803 = vand.u32 %v5802, 4294901760
  %5804 = vmatmul.f32.gmra.mxu0 %v5803
  %v5805 = vpop.f32.mrf.mxu0
  %v5806 = vadd.f32 %v5767, %v5805
  %5807 = vdwg.mxu0
  %v5808 = vand.u32 %v121, 4294901760
  %v5809 = vsub.f32 %v121, %v5808
  %v5810 = vand.u32 %v5809, 4294901760
  %5811 = vmatpush.msra.mxu0 %v5810
  %v5812 = vand.u32 %v116, 4294901760
  %v5813 = vsub.f32 %v116, %v5812
  %v5814 = vand.u32 %v5813, 4294901760
  %5815 = vmatpush.msra.mxu0 %v5814
  %v5816 = vand.u32 %v111, 4294901760
  %v5817 = vsub.f32 %v111, %v5816
  %v5818 = vand.u32 %v5817, 4294901760
  %5819 = vmatpush.msra.mxu0 %v5818
  %v5820 = vand.u32 %v106, 4294901760
  %v5821 = vsub.f32 %v106, %v5820
  %v5822 = vand.u32 %v5821, 4294901760
  %5823 = vmatpush.msra.mxu0 %v5822
  %v5824 = vand.u32 %v101, 4294901760
  %v5825 = vsub.f32 %v101, %v5824
  %v5826 = vand.u32 %v5825, 4294901760
  %5827 = vmatpush.msra.mxu0 %v5826
  %v5828 = vand.u32 %v96, 4294901760
  %v5829 = vsub.f32 %v96, %v5828
  %v5830 = vand.u32 %v5829, 4294901760
  %5831 = vmatpush.msra.mxu0 %v5830
  %v5832 = vand.u32 %v91, 4294901760
  %v5833 = vsub.f32 %v91, %v5832
  %v5834 = vand.u32 %v5833, 4294901760
  %5835 = vmatpush.msra.mxu0 %v5834
  %v5836 = vand.u32 %v86, 4294901760
  %v5837 = vsub.f32 %v86, %v5836
  %v5838 = vand.u32 %v5837, 4294901760
  %5839 = vmatpush.msra.mxu0 %v5838
  %v5840 = vand.u32 %v81, 4294901760
  %v5841 = vsub.f32 %v81, %v5840
  %v5842 = vand.u32 %v5841, 4294901760
  %5843 = vmatpush.msra.mxu0 %v5842
  %v5844 = vand.u32 %v76, 4294901760
  %v5845 = vsub.f32 %v76, %v5844
  %v5846 = vand.u32 %v5845, 4294901760
  %5847 = vmatpush.msra.mxu0 %v5846
  %v5848 = vand.u32 %v71, 4294901760
  %v5849 = vsub.f32 %v71, %v5848
  %v5850 = vand.u32 %v5849, 4294901760
  %5851 = vmatpush.msra.mxu0 %v5850
  %v5852 = vand.u32 %v66, 4294901760
  %v5853 = vsub.f32 %v66, %v5852
  %v5854 = vand.u32 %v5853, 4294901760
  %5855 = vmatpush.msra.mxu0 %v5854
  %v5856 = vand.u32 %v61, 4294901760
  %v5857 = vsub.f32 %v61, %v5856
  %v5858 = vand.u32 %v5857, 4294901760
  %5859 = vmatpush.msra.mxu0 %v5858
  %v5860 = vand.u32 %v56, 4294901760
  %v5861 = vsub.f32 %v56, %v5860
  %v5862 = vand.u32 %v5861, 4294901760
  %5863 = vmatpush.msra.mxu0 %v5862
  %v5864 = vand.u32 %v51, 4294901760
  %v5865 = vsub.f32 %v51, %v5864
  %v5866 = vand.u32 %v5865, 4294901760
  %5867 = vmatpush.msra.mxu0 %v5866
  %v5868 = vand.u32 %v46, 4294901760
  %v5869 = vsub.f32 %v46, %v5868
  %v5870 = vand.u32 %v5869, 4294901760
  %5871 = vmatpush.msra.mxu0 %v5870
  %v5872 = vand.u32 %v448, 4294901760
  %5873 = vmatmul.f32.gmra.mxu0 %v5872
  %v5874 = vpop.f32.mrf.mxu0
  %v5875 = vadd.f32 %v5806, %v5874
  %5876 = vdwg.mxu0
  %v5877 = vand.u32 %v121, 4294901760
  %5878 = vmatpush.msra.mxu0 %v5877
  %v5879 = vand.u32 %v116, 4294901760
  %5880 = vmatpush.msra.mxu0 %v5879
  %v5881 = vand.u32 %v111, 4294901760
  %5882 = vmatpush.msra.mxu0 %v5881
  %v5883 = vand.u32 %v106, 4294901760
  %5884 = vmatpush.msra.mxu0 %v5883
  %v5885 = vand.u32 %v101, 4294901760
  %5886 = vmatpush.msra.mxu0 %v5885
  %v5887 = vand.u32 %v96, 4294901760
  %5888 = vmatpush.msra.mxu0 %v5887
  %v5889 = vand.u32 %v91, 4294901760
  %5890 = vmatpush.msra.mxu0 %v5889
  %v5891 = vand.u32 %v86, 4294901760
  %5892 = vmatpush.msra.mxu0 %v5891
  %v5893 = vand.u32 %v81, 4294901760
  %5894 = vmatpush.msra.mxu0 %v5893
  %v5895 = vand.u32 %v76, 4294901760
  %5896 = vmatpush.msra.mxu0 %v5895
  %v5897 = vand.u32 %v71, 4294901760
  %5898 = vmatpush.msra.mxu0 %v5897
  %v5899 = vand.u32 %v66, 4294901760
  %5900 = vmatpush.msra.mxu0 %v5899
  %v5901 = vand.u32 %v61, 4294901760
  %5902 = vmatpush.msra.mxu0 %v5901
  %v5903 = vand.u32 %v56, 4294901760
  %5904 = vmatpush.msra.mxu0 %v5903
  %v5905 = vand.u32 %v51, 4294901760
  %5906 = vmatpush.msra.mxu0 %v5905
  %v5907 = vand.u32 %v46, 4294901760
  %5908 = vmatpush.msra.mxu0 %v5907
  %v5909 = vand.u32 %v448, 4294901760
  %5910 = vmatmul.f32.gmra.mxu0 %v5909
  %v5911 = vpop.f32.mrf.mxu0
  %v5912 = vadd.f32 %v5875, %v5911
  %5913 = vdwg.mxu0
  %v5914 = vand.u32 %v201, 4294901760
  %5915 = vmatpush.msra.mxu0 %v5914
  %v5916 = vand.u32 %v196, 4294901760
  %5917 = vmatpush.msra.mxu0 %v5916
  %v5918 = vand.u32 %v191, 4294901760
  %5919 = vmatpush.msra.mxu0 %v5918
  %v5920 = vand.u32 %v186, 4294901760
  %5921 = vmatpush.msra.mxu0 %v5920
  %v5922 = vand.u32 %v181, 4294901760
  %5923 = vmatpush.msra.mxu0 %v5922
  %v5924 = vand.u32 %v176, 4294901760
  %5925 = vmatpush.msra.mxu0 %v5924
  %v5926 = vand.u32 %v171, 4294901760
  %5927 = vmatpush.msra.mxu0 %v5926
  %v5928 = vand.u32 %v166, 4294901760
  %5929 = vmatpush.msra.mxu0 %v5928
  %v5930 = vand.u32 %v161, 4294901760
  %5931 = vmatpush.msra.mxu0 %v5930
  %v5932 = vand.u32 %v156, 4294901760
  %5933 = vmatpush.msra.mxu0 %v5932
  %v5934 = vand.u32 %v151, 4294901760
  %5935 = vmatpush.msra.mxu0 %v5934
  %v5936 = vand.u32 %v146, 4294901760
  %5937 = vmatpush.msra.mxu0 %v5936
  %v5938 = vand.u32 %v141, 4294901760
  %5939 = vmatpush.msra.mxu0 %v5938
  %v5940 = vand.u32 %v136, 4294901760
  %5941 = vmatpush.msra.mxu0 %v5940
  %v5942 = vand.u32 %v131, 4294901760
  %5943 = vmatpush.msra.mxu0 %v5942
  %v5944 = vand.u32 %v126, 4294901760
  %5945 = vmatpush.msra.mxu0 %v5944
  %v5946 = vand.u32 %v449, 4294901760
  %v5947 = vsub.f32 %v449, %v5946
  %v5948 = vand.u32 %v5947, 4294901760
  %v5949 = vsub.f32 %v5947, %v5948
  %v5950 = vand.u32 %v5949, 4294901760
  %5951 = vmatmul.f32.gmra.mxu0 %v5950
  %v5952 = vpop.f32.mrf.mxu0
  %v5953 = vadd.f32 %v5912, %v5952
  %5954 = vdwg.mxu0
  %v5955 = vand.u32 %v201, 4294901760
  %v5956 = vsub.f32 %v201, %v5955
  %v5957 = vand.u32 %v5956, 4294901760
  %v5958 = vsub.f32 %v5956, %v5957
  %v5959 = vand.u32 %v5958, 4294901760
  %5960 = vmatpush.msra.mxu0 %v5959
  %v5961 = vand.u32 %v196, 4294901760
  %v5962 = vsub.f32 %v196, %v5961
  %v5963 = vand.u32 %v5962, 4294901760
  %v5964 = vsub.f32 %v5962, %v5963
  %v5965 = vand.u32 %v5964, 4294901760
  %5966 = vmatpush.msra.mxu0 %v5965
  %v5967 = vand.u32 %v191, 4294901760
  %v5968 = vsub.f32 %v191, %v5967
  %v5969 = vand.u32 %v5968, 4294901760
  %v5970 = vsub.f32 %v5968, %v5969
  %v5971 = vand.u32 %v5970, 4294901760
  %5972 = vmatpush.msra.mxu0 %v5971
  %v5973 = vand.u32 %v186, 4294901760
  %v5974 = vsub.f32 %v186, %v5973
  %v5975 = vand.u32 %v5974, 4294901760
  %v5976 = vsub.f32 %v5974, %v5975
  %v5977 = vand.u32 %v5976, 4294901760
  %5978 = vmatpush.msra.mxu0 %v5977
  %v5979 = vand.u32 %v181, 4294901760
  %v5980 = vsub.f32 %v181, %v5979
  %v5981 = vand.u32 %v5980, 4294901760
  %v5982 = vsub.f32 %v5980, %v5981
  %v5983 = vand.u32 %v5982, 4294901760
  %5984 = vmatpush.msra.mxu0 %v5983
  %v5985 = vand.u32 %v176, 4294901760
  %v5986 = vsub.f32 %v176, %v5985
  %v5987 = vand.u32 %v5986, 4294901760
  %v5988 = vsub.f32 %v5986, %v5987
  %v5989 = vand.u32 %v5988, 4294901760
  %5990 = vmatpush.msra.mxu0 %v5989
  %v5991 = vand.u32 %v171, 4294901760
  %v5992 = vsub.f32 %v171, %v5991
  %v5993 = vand.u32 %v5992, 4294901760
  %v5994 = vsub.f32 %v5992, %v5993
  %v5995 = vand.u32 %v5994, 4294901760
  %5996 = vmatpush.msra.mxu0 %v5995
  %v5997 = vand.u32 %v166, 4294901760
  %v5998 = vsub.f32 %v166, %v5997
  %v5999 = vand.u32 %v5998, 4294901760
  %v6000 = vsub.f32 %v5998, %v5999
  %v6001 = vand.u32 %v6000, 4294901760
  %6002 = vmatpush.msra.mxu0 %v6001
  %v6003 = vand.u32 %v161, 4294901760
  %v6004 = vsub.f32 %v161, %v6003
  %v6005 = vand.u32 %v6004, 4294901760
  %v6006 = vsub.f32 %v6004, %v6005
  %v6007 = vand.u32 %v6006, 4294901760
  %6008 = vmatpush.msra.mxu0 %v6007
  %v6009 = vand.u32 %v156, 4294901760
  %v6010 = vsub.f32 %v156, %v6009
  %v6011 = vand.u32 %v6010, 4294901760
  %v6012 = vsub.f32 %v6010, %v6011
  %v6013 = vand.u32 %v6012, 4294901760
  %6014 = vmatpush.msra.mxu0 %v6013
  %v6015 = vand.u32 %v151, 4294901760
  %v6016 = vsub.f32 %v151, %v6015
  %v6017 = vand.u32 %v6016, 4294901760
  %v6018 = vsub.f32 %v6016, %v6017
  %v6019 = vand.u32 %v6018, 4294901760
  %6020 = vmatpush.msra.mxu0 %v6019
  %v6021 = vand.u32 %v146, 4294901760
  %v6022 = vsub.f32 %v146, %v6021
  %v6023 = vand.u32 %v6022, 4294901760
  %v6024 = vsub.f32 %v6022, %v6023
  %v6025 = vand.u32 %v6024, 4294901760
  %6026 = vmatpush.msra.mxu0 %v6025
  %v6027 = vand.u32 %v141, 4294901760
  %v6028 = vsub.f32 %v141, %v6027
  %v6029 = vand.u32 %v6028, 4294901760
  %v6030 = vsub.f32 %v6028, %v6029
  %v6031 = vand.u32 %v6030, 4294901760
  %6032 = vmatpush.msra.mxu0 %v6031
  %v6033 = vand.u32 %v136, 4294901760
  %v6034 = vsub.f32 %v136, %v6033
  %v6035 = vand.u32 %v6034, 4294901760
  %v6036 = vsub.f32 %v6034, %v6035
  %v6037 = vand.u32 %v6036, 4294901760
  %6038 = vmatpush.msra.mxu0 %v6037
  %v6039 = vand.u32 %v131, 4294901760
  %v6040 = vsub.f32 %v131, %v6039
  %v6041 = vand.u32 %v6040, 4294901760
  %v6042 = vsub.f32 %v6040, %v6041
  %v6043 = vand.u32 %v6042, 4294901760
  %6044 = vmatpush.msra.mxu0 %v6043
  %v6045 = vand.u32 %v126, 4294901760
  %v6046 = vsub.f32 %v126, %v6045
  %v6047 = vand.u32 %v6046, 4294901760
  %v6048 = vsub.f32 %v6046, %v6047
  %v6049 = vand.u32 %v6048, 4294901760
  %6050 = vmatpush.msra.mxu0 %v6049
  %v6051 = vand.u32 %v449, 4294901760
  %6052 = vmatmul.f32.gmra.mxu0 %v6051
  %v6053 = vpop.f32.mrf.mxu0
  %v6054 = vadd.f32 %v5953, %v6053
  %6055 = vdwg.mxu0
  %v6056 = vand.u32 %v201, 4294901760
  %v6057 = vsub.f32 %v201, %v6056
  %6058 = vmatpush.msra.mxu0 %v6057
  %v6059 = vand.u32 %v196, 4294901760
  %v6060 = vsub.f32 %v196, %v6059
  %6061 = vmatpush.msra.mxu0 %v6060
  %v6062 = vand.u32 %v191, 4294901760
  %v6063 = vsub.f32 %v191, %v6062
  %6064 = vmatpush.msra.mxu0 %v6063
  %v6065 = vand.u32 %v186, 4294901760
  %v6066 = vsub.f32 %v186, %v6065
  %6067 = vmatpush.msra.mxu0 %v6066
  %v6068 = vand.u32 %v181, 4294901760
  %v6069 = vsub.f32 %v181, %v6068
  %6070 = vmatpush.msra.mxu0 %v6069
  %v6071 = vand.u32 %v176, 4294901760
  %v6072 = vsub.f32 %v176, %v6071
  %6073 = vmatpush.msra.mxu0 %v6072
  %v6074 = vand.u32 %v171, 4294901760
  %v6075 = vsub.f32 %v171, %v6074
  %6076 = vmatpush.msra.mxu0 %v6075
  %v6077 = vand.u32 %v166, 4294901760
  %v6078 = vsub.f32 %v166, %v6077
  %6079 = vmatpush.msra.mxu0 %v6078
  %v6080 = vand.u32 %v161, 4294901760
  %v6081 = vsub.f32 %v161, %v6080
  %6082 = vmatpush.msra.mxu0 %v6081
  %v6083 = vand.u32 %v156, 4294901760
  %v6084 = vsub.f32 %v156, %v6083
  %6085 = vmatpush.msra.mxu0 %v6084
  %v6086 = vand.u32 %v151, 4294901760
  %v6087 = vsub.f32 %v151, %v6086
  %6088 = vmatpush.msra.mxu0 %v6087
  %v6089 = vand.u32 %v146, 4294901760
  %v6090 = vsub.f32 %v146, %v6089
  %6091 = vmatpush.msra.mxu0 %v6090
  %v6092 = vand.u32 %v141, 4294901760
  %v6093 = vsub.f32 %v141, %v6092
  %6094 = vmatpush.msra.mxu0 %v6093
  %v6095 = vand.u32 %v136, 4294901760
  %v6096 = vsub.f32 %v136, %v6095
  %6097 = vmatpush.msra.mxu0 %v6096
  %v6098 = vand.u32 %v131, 4294901760
  %v6099 = vsub.f32 %v131, %v6098
  %6100 = vmatpush.msra.mxu0 %v6099
  %v6101 = vand.u32 %v126, 4294901760
  %v6102 = vsub.f32 %v126, %v6101
  %6103 = vmatpush.msra.mxu0 %v6102
  %v6104 = vand.u32 %v449, 4294901760
  %v6105 = vsub.f32 %v449, %v6104
  %6106 = vmatmul.f32.gmra.mxu0 %v6105
  %v6107 = vpop.f32.mrf.mxu0
  %v6108 = vadd.f32 %v6054, %v6107
  %6109 = vdwg.mxu0
  %v6110 = vand.u32 %v201, 4294901760
  %6111 = vmatpush.msra.mxu0 %v6110
  %v6112 = vand.u32 %v196, 4294901760
  %6113 = vmatpush.msra.mxu0 %v6112
  %v6114 = vand.u32 %v191, 4294901760
  %6115 = vmatpush.msra.mxu0 %v6114
  %v6116 = vand.u32 %v186, 4294901760
  %6117 = vmatpush.msra.mxu0 %v6116
  %v6118 = vand.u32 %v181, 4294901760
  %6119 = vmatpush.msra.mxu0 %v6118
  %v6120 = vand.u32 %v176, 4294901760
  %6121 = vmatpush.msra.mxu0 %v6120
  %v6122 = vand.u32 %v171, 4294901760
  %6123 = vmatpush.msra.mxu0 %v6122
  %v6124 = vand.u32 %v166, 4294901760
  %6125 = vmatpush.msra.mxu0 %v6124
  %v6126 = vand.u32 %v161, 4294901760
  %6127 = vmatpush.msra.mxu0 %v6126
  %v6128 = vand.u32 %v156, 4294901760
  %6129 = vmatpush.msra.mxu0 %v6128
  %v6130 = vand.u32 %v151, 4294901760
  %6131 = vmatpush.msra.mxu0 %v6130
  %v6132 = vand.u32 %v146, 4294901760
  %6133 = vmatpush.msra.mxu0 %v6132
  %v6134 = vand.u32 %v141, 4294901760
  %6135 = vmatpush.msra.mxu0 %v6134
  %v6136 = vand.u32 %v136, 4294901760
  %6137 = vmatpush.msra.mxu0 %v6136
  %v6138 = vand.u32 %v131, 4294901760
  %6139 = vmatpush.msra.mxu0 %v6138
  %v6140 = vand.u32 %v126, 4294901760
  %6141 = vmatpush.msra.mxu0 %v6140
  %v6142 = vand.u32 %v449, 4294901760
  %v6143 = vsub.f32 %v449, %v6142
  %v6144 = vand.u32 %v6143, 4294901760
  %6145 = vmatmul.f32.gmra.mxu0 %v6144
  %v6146 = vpop.f32.mrf.mxu0
  %v6147 = vadd.f32 %v6108, %v6146
  %6148 = vdwg.mxu0
  %v6149 = vand.u32 %v201, 4294901760
  %v6150 = vsub.f32 %v201, %v6149
  %v6151 = vand.u32 %v6150, 4294901760
  %6152 = vmatpush.msra.mxu0 %v6151
  %v6153 = vand.u32 %v196, 4294901760
  %v6154 = vsub.f32 %v196, %v6153
  %v6155 = vand.u32 %v6154, 4294901760
  %6156 = vmatpush.msra.mxu0 %v6155
  %v6157 = vand.u32 %v191, 4294901760
  %v6158 = vsub.f32 %v191, %v6157
  %v6159 = vand.u32 %v6158, 4294901760
  %6160 = vmatpush.msra.mxu0 %v6159
  %v6161 = vand.u32 %v186, 4294901760
  %v6162 = vsub.f32 %v186, %v6161
  %v6163 = vand.u32 %v6162, 4294901760
  %6164 = vmatpush.msra.mxu0 %v6163
  %v6165 = vand.u32 %v181, 4294901760
  %v6166 = vsub.f32 %v181, %v6165
  %v6167 = vand.u32 %v6166, 4294901760
  %6168 = vmatpush.msra.mxu0 %v6167
  %v6169 = vand.u32 %v176, 4294901760
  %v6170 = vsub.f32 %v176, %v6169
  %v6171 = vand.u32 %v6170, 4294901760
  %6172 = vmatpush.msra.mxu0 %v6171
  %v6173 = vand.u32 %v171, 4294901760
  %v6174 = vsub.f32 %v171, %v6173
  %v6175 = vand.u32 %v6174, 4294901760
  %6176 = vmatpush.msra.mxu0 %v6175
  %v6177 = vand.u32 %v166, 4294901760
  %v6178 = vsub.f32 %v166, %v6177
  %v6179 = vand.u32 %v6178, 4294901760
  %6180 = vmatpush.msra.mxu0 %v6179
  %v6181 = vand.u32 %v161, 4294901760
  %v6182 = vsub.f32 %v161, %v6181
  %v6183 = vand.u32 %v6182, 4294901760
  %6184 = vmatpush.msra.mxu0 %v6183
  %v6185 = vand.u32 %v156, 4294901760
  %v6186 = vsub.f32 %v156, %v6185
  %v6187 = vand.u32 %v6186, 4294901760
  %6188 = vmatpush.msra.mxu0 %v6187
  %v6189 = vand.u32 %v151, 4294901760
  %v6190 = vsub.f32 %v151, %v6189
  %v6191 = vand.u32 %v6190, 4294901760
  %6192 = vmatpush.msra.mxu0 %v6191
  %v6193 = vand.u32 %v146, 4294901760
  %v6194 = vsub.f32 %v146, %v6193
  %v6195 = vand.u32 %v6194, 4294901760
  %6196 = vmatpush.msra.mxu0 %v6195
  %v6197 = vand.u32 %v141, 4294901760
  %v6198 = vsub.f32 %v141, %v6197
  %v6199 = vand.u32 %v6198, 4294901760
  %6200 = vmatpush.msra.mxu0 %v6199
  %v6201 = vand.u32 %v136, 4294901760
  %v6202 = vsub.f32 %v136, %v6201
  %v6203 = vand.u32 %v6202, 4294901760
  %6204 = vmatpush.msra.mxu0 %v6203
  %v6205 = vand.u32 %v131, 4294901760
  %v6206 = vsub.f32 %v131, %v6205
  %v6207 = vand.u32 %v6206, 4294901760
  %6208 = vmatpush.msra.mxu0 %v6207
  %v6209 = vand.u32 %v126, 4294901760
  %v6210 = vsub.f32 %v126, %v6209
  %v6211 = vand.u32 %v6210, 4294901760
  %6212 = vmatpush.msra.mxu0 %v6211
  %v6213 = vand.u32 %v449, 4294901760
  %6214 = vmatmul.f32.gmra.mxu0 %v6213
  %v6215 = vpop.f32.mrf.mxu0
  %v6216 = vadd.f32 %v6147, %v6215
  %6217 = vdwg.mxu0
  %v6218 = vand.u32 %v201, 4294901760
  %6219 = vmatpush.msra.mxu0 %v6218
  %v6220 = vand.u32 %v196, 4294901760
  %6221 = vmatpush.msra.mxu0 %v6220
  %v6222 = vand.u32 %v191, 4294901760
  %6223 = vmatpush.msra.mxu0 %v6222
  %v6224 = vand.u32 %v186, 4294901760
  %6225 = vmatpush.msra.mxu0 %v6224
  %v6226 = vand.u32 %v181, 4294901760
  %6227 = vmatpush.msra.mxu0 %v6226
  %v6228 = vand.u32 %v176, 4294901760
  %6229 = vmatpush.msra.mxu0 %v6228
  %v6230 = vand.u32 %v171, 4294901760
  %6231 = vmatpush.msra.mxu0 %v6230
  %v6232 = vand.u32 %v166, 4294901760
  %6233 = vmatpush.msra.mxu0 %v6232
  %v6234 = vand.u32 %v161, 4294901760
  %6235 = vmatpush.msra.mxu0 %v6234
  %v6236 = vand.u32 %v156, 4294901760
  %6237 = vmatpush.msra.mxu0 %v6236
  %v6238 = vand.u32 %v151, 4294901760
  %6239 = vmatpush.msra.mxu0 %v6238
  %v6240 = vand.u32 %v146, 4294901760
  %6241 = vmatpush.msra.mxu0 %v6240
  %v6242 = vand.u32 %v141, 4294901760
  %6243 = vmatpush.msra.mxu0 %v6242
  %v6244 = vand.u32 %v136, 4294901760
  %6245 = vmatpush.msra.mxu0 %v6244
  %v6246 = vand.u32 %v131, 4294901760
  %6247 = vmatpush.msra.mxu0 %v6246
  %v6248 = vand.u32 %v126, 4294901760
  %6249 = vmatpush.msra.mxu0 %v6248
  %v6250 = vand.u32 %v449, 4294901760
  %6251 = vmatmul.f32.gmra.mxu0 %v6250
  %v6252 = vpop.f32.mrf.mxu0
  %v6253 = vadd.f32 %v6216, %v6252
  %6254 = vdwg.mxu0
  %v6255 = vand.u32 %v281, 4294901760
  %6256 = vmatpush.msra.mxu0 %v6255
  %v6257 = vand.u32 %v276, 4294901760
  %6258 = vmatpush.msra.mxu0 %v6257
  %v6259 = vand.u32 %v271, 4294901760
  %6260 = vmatpush.msra.mxu0 %v6259
  %v6261 = vand.u32 %v266, 4294901760
  %6262 = vmatpush.msra.mxu0 %v6261
  %v6263 = vand.u32 %v261, 4294901760
  %6264 = vmatpush.msra.mxu0 %v6263
  %v6265 = vand.u32 %v256, 4294901760
  %6266 = vmatpush.msra.mxu0 %v6265
  %v6267 = vand.u32 %v251, 4294901760
  %6268 = vmatpush.msra.mxu0 %v6267
  %v6269 = vand.u32 %v246, 4294901760
  %6270 = vmatpush.msra.mxu0 %v6269
  %v6271 = vand.u32 %v241, 4294901760
  %6272 = vmatpush.msra.mxu0 %v6271
  %v6273 = vand.u32 %v236, 4294901760
  %6274 = vmatpush.msra.mxu0 %v6273
  %v6275 = vand.u32 %v231, 4294901760
  %6276 = vmatpush.msra.mxu0 %v6275
  %v6277 = vand.u32 %v226, 4294901760
  %6278 = vmatpush.msra.mxu0 %v6277
  %v6279 = vand.u32 %v221, 4294901760
  %6280 = vmatpush.msra.mxu0 %v6279
  %v6281 = vand.u32 %v216, 4294901760
  %6282 = vmatpush.msra.mxu0 %v6281
  %v6283 = vand.u32 %v211, 4294901760
  %6284 = vmatpush.msra.mxu0 %v6283
  %v6285 = vand.u32 %v206, 4294901760
  %6286 = vmatpush.msra.mxu0 %v6285
  %v6287 = vand.u32 %v450, 4294901760
  %v6288 = vsub.f32 %v450, %v6287
  %v6289 = vand.u32 %v6288, 4294901760
  %v6290 = vsub.f32 %v6288, %v6289
  %v6291 = vand.u32 %v6290, 4294901760
  %6292 = vmatmul.f32.gmra.mxu0 %v6291
  %v6293 = vpop.f32.mrf.mxu0
  %v6294 = vadd.f32 %v6253, %v6293
  %6295 = vdwg.mxu0
  %v6296 = vand.u32 %v281, 4294901760
  %v6297 = vsub.f32 %v281, %v6296
  %v6298 = vand.u32 %v6297, 4294901760
  %v6299 = vsub.f32 %v6297, %v6298
  %v6300 = vand.u32 %v6299, 4294901760
  %6301 = vmatpush.msra.mxu0 %v6300
  %v6302 = vand.u32 %v276, 4294901760
  %v6303 = vsub.f32 %v276, %v6302
  %v6304 = vand.u32 %v6303, 4294901760
  %v6305 = vsub.f32 %v6303, %v6304
  %v6306 = vand.u32 %v6305, 4294901760
  %6307 = vmatpush.msra.mxu0 %v6306
  %v6308 = vand.u32 %v271, 4294901760
  %v6309 = vsub.f32 %v271, %v6308
  %v6310 = vand.u32 %v6309, 4294901760
  %v6311 = vsub.f32 %v6309, %v6310
  %v6312 = vand.u32 %v6311, 4294901760
  %6313 = vmatpush.msra.mxu0 %v6312
  %v6314 = vand.u32 %v266, 4294901760
  %v6315 = vsub.f32 %v266, %v6314
  %v6316 = vand.u32 %v6315, 4294901760
  %v6317 = vsub.f32 %v6315, %v6316
  %v6318 = vand.u32 %v6317, 4294901760
  %6319 = vmatpush.msra.mxu0 %v6318
  %v6320 = vand.u32 %v261, 4294901760
  %v6321 = vsub.f32 %v261, %v6320
  %v6322 = vand.u32 %v6321, 4294901760
  %v6323 = vsub.f32 %v6321, %v6322
  %v6324 = vand.u32 %v6323, 4294901760
  %6325 = vmatpush.msra.mxu0 %v6324
  %v6326 = vand.u32 %v256, 4294901760
  %v6327 = vsub.f32 %v256, %v6326
  %v6328 = vand.u32 %v6327, 4294901760
  %v6329 = vsub.f32 %v6327, %v6328
  %v6330 = vand.u32 %v6329, 4294901760
  %6331 = vmatpush.msra.mxu0 %v6330
  %v6332 = vand.u32 %v251, 4294901760
  %v6333 = vsub.f32 %v251, %v6332
  %v6334 = vand.u32 %v6333, 4294901760
  %v6335 = vsub.f32 %v6333, %v6334
  %v6336 = vand.u32 %v6335, 4294901760
  %6337 = vmatpush.msra.mxu0 %v6336
  %v6338 = vand.u32 %v246, 4294901760
  %v6339 = vsub.f32 %v246, %v6338
  %v6340 = vand.u32 %v6339, 4294901760
  %v6341 = vsub.f32 %v6339, %v6340
  %v6342 = vand.u32 %v6341, 4294901760
  %6343 = vmatpush.msra.mxu0 %v6342
  %v6344 = vand.u32 %v241, 4294901760
  %v6345 = vsub.f32 %v241, %v6344
  %v6346 = vand.u32 %v6345, 4294901760
  %v6347 = vsub.f32 %v6345, %v6346
  %v6348 = vand.u32 %v6347, 4294901760
  %6349 = vmatpush.msra.mxu0 %v6348
  %v6350 = vand.u32 %v236, 4294901760
  %v6351 = vsub.f32 %v236, %v6350
  %v6352 = vand.u32 %v6351, 4294901760
  %v6353 = vsub.f32 %v6351, %v6352
  %v6354 = vand.u32 %v6353, 4294901760
  %6355 = vmatpush.msra.mxu0 %v6354
  %v6356 = vand.u32 %v231, 4294901760
  %v6357 = vsub.f32 %v231, %v6356
  %v6358 = vand.u32 %v6357, 4294901760
  %v6359 = vsub.f32 %v6357, %v6358
  %v6360 = vand.u32 %v6359, 4294901760
  %6361 = vmatpush.msra.mxu0 %v6360
  %v6362 = vand.u32 %v226, 4294901760
  %v6363 = vsub.f32 %v226, %v6362
  %v6364 = vand.u32 %v6363, 4294901760
  %v6365 = vsub.f32 %v6363, %v6364
  %v6366 = vand.u32 %v6365, 4294901760
  %6367 = vmatpush.msra.mxu0 %v6366
  %v6368 = vand.u32 %v221, 4294901760
  %v6369 = vsub.f32 %v221, %v6368
  %v6370 = vand.u32 %v6369, 4294901760
  %v6371 = vsub.f32 %v6369, %v6370
  %v6372 = vand.u32 %v6371, 4294901760
  %6373 = vmatpush.msra.mxu0 %v6372
  %v6374 = vand.u32 %v216, 4294901760
  %v6375 = vsub.f32 %v216, %v6374
  %v6376 = vand.u32 %v6375, 4294901760
  %v6377 = vsub.f32 %v6375, %v6376
  %v6378 = vand.u32 %v6377, 4294901760
  %6379 = vmatpush.msra.mxu0 %v6378
  %v6380 = vand.u32 %v211, 4294901760
  %v6381 = vsub.f32 %v211, %v6380
  %v6382 = vand.u32 %v6381, 4294901760
  %v6383 = vsub.f32 %v6381, %v6382
  %v6384 = vand.u32 %v6383, 4294901760
  %6385 = vmatpush.msra.mxu0 %v6384
  %v6386 = vand.u32 %v206, 4294901760
  %v6387 = vsub.f32 %v206, %v6386
  %v6388 = vand.u32 %v6387, 4294901760
  %v6389 = vsub.f32 %v6387, %v6388
  %v6390 = vand.u32 %v6389, 4294901760
  %6391 = vmatpush.msra.mxu0 %v6390
  %v6392 = vand.u32 %v450, 4294901760
  %6393 = vmatmul.f32.gmra.mxu0 %v6392
  %v6394 = vpop.f32.mrf.mxu0
  %v6395 = vadd.f32 %v6294, %v6394
  %6396 = vdwg.mxu0
  %v6397 = vand.u32 %v281, 4294901760
  %v6398 = vsub.f32 %v281, %v6397
  %6399 = vmatpush.msra.mxu0 %v6398
  %v6400 = vand.u32 %v276, 4294901760
  %v6401 = vsub.f32 %v276, %v6400
  %6402 = vmatpush.msra.mxu0 %v6401
  %v6403 = vand.u32 %v271, 4294901760
  %v6404 = vsub.f32 %v271, %v6403
  %6405 = vmatpush.msra.mxu0 %v6404
  %v6406 = vand.u32 %v266, 4294901760
  %v6407 = vsub.f32 %v266, %v6406
  %6408 = vmatpush.msra.mxu0 %v6407
  %v6409 = vand.u32 %v261, 4294901760
  %v6410 = vsub.f32 %v261, %v6409
  %6411 = vmatpush.msra.mxu0 %v6410
  %v6412 = vand.u32 %v256, 4294901760
  %v6413 = vsub.f32 %v256, %v6412
  %6414 = vmatpush.msra.mxu0 %v6413
  %v6415 = vand.u32 %v251, 4294901760
  %v6416 = vsub.f32 %v251, %v6415
  %6417 = vmatpush.msra.mxu0 %v6416
  %v6418 = vand.u32 %v246, 4294901760
  %v6419 = vsub.f32 %v246, %v6418
  %6420 = vmatpush.msra.mxu0 %v6419
  %v6421 = vand.u32 %v241, 4294901760
  %v6422 = vsub.f32 %v241, %v6421
  %6423 = vmatpush.msra.mxu0 %v6422
  %v6424 = vand.u32 %v236, 4294901760
  %v6425 = vsub.f32 %v236, %v6424
  %6426 = vmatpush.msra.mxu0 %v6425
  %v6427 = vand.u32 %v231, 4294901760
  %v6428 = vsub.f32 %v231, %v6427
  %6429 = vmatpush.msra.mxu0 %v6428
  %v6430 = vand.u32 %v226, 4294901760
  %v6431 = vsub.f32 %v226, %v6430
  %6432 = vmatpush.msra.mxu0 %v6431
  %v6433 = vand.u32 %v221, 4294901760
  %v6434 = vsub.f32 %v221, %v6433
  %6435 = vmatpush.msra.mxu0 %v6434
  %v6436 = vand.u32 %v216, 4294901760
  %v6437 = vsub.f32 %v216, %v6436
  %6438 = vmatpush.msra.mxu0 %v6437
  %v6439 = vand.u32 %v211, 4294901760
  %v6440 = vsub.f32 %v211, %v6439
  %6441 = vmatpush.msra.mxu0 %v6440
  %v6442 = vand.u32 %v206, 4294901760
  %v6443 = vsub.f32 %v206, %v6442
  %6444 = vmatpush.msra.mxu0 %v6443
  %v6445 = vand.u32 %v450, 4294901760
  %v6446 = vsub.f32 %v450, %v6445
  %6447 = vmatmul.f32.gmra.mxu0 %v6446
  %v6448 = vpop.f32.mrf.mxu0
  %v6449 = vadd.f32 %v6395, %v6448
  %6450 = vdwg.mxu0
  %v6451 = vand.u32 %v281, 4294901760
  %6452 = vmatpush.msra.mxu0 %v6451
  %v6453 = vand.u32 %v276, 4294901760
  %6454 = vmatpush.msra.mxu0 %v6453
  %v6455 = vand.u32 %v271, 4294901760
  %6456 = vmatpush.msra.mxu0 %v6455
  %v6457 = vand.u32 %v266, 4294901760
  %6458 = vmatpush.msra.mxu0 %v6457
  %v6459 = vand.u32 %v261, 4294901760
  %6460 = vmatpush.msra.mxu0 %v6459
  %v6461 = vand.u32 %v256, 4294901760
  %6462 = vmatpush.msra.mxu0 %v6461
  %v6463 = vand.u32 %v251, 4294901760
  %6464 = vmatpush.msra.mxu0 %v6463
  %v6465 = vand.u32 %v246, 4294901760
  %6466 = vmatpush.msra.mxu0 %v6465
  %v6467 = vand.u32 %v241, 4294901760
  %6468 = vmatpush.msra.mxu0 %v6467
  %v6469 = vand.u32 %v236, 4294901760
  %6470 = vmatpush.msra.mxu0 %v6469
  %v6471 = vand.u32 %v231, 4294901760
  %6472 = vmatpush.msra.mxu0 %v6471
  %v6473 = vand.u32 %v226, 4294901760
  %6474 = vmatpush.msra.mxu0 %v6473
  %v6475 = vand.u32 %v221, 4294901760
  %6476 = vmatpush.msra.mxu0 %v6475
  %v6477 = vand.u32 %v216, 4294901760
  %6478 = vmatpush.msra.mxu0 %v6477
  %v6479 = vand.u32 %v211, 4294901760
  %6480 = vmatpush.msra.mxu0 %v6479
  %v6481 = vand.u32 %v206, 4294901760
  %6482 = vmatpush.msra.mxu0 %v6481
  %v6483 = vand.u32 %v450, 4294901760
  %v6484 = vsub.f32 %v450, %v6483
  %v6485 = vand.u32 %v6484, 4294901760
  %6486 = vmatmul.f32.gmra.mxu0 %v6485
  %v6487 = vpop.f32.mrf.mxu0
  %v6488 = vadd.f32 %v6449, %v6487
  %6489 = vdwg.mxu0
  %v6490 = vand.u32 %v281, 4294901760
  %v6491 = vsub.f32 %v281, %v6490
  %v6492 = vand.u32 %v6491, 4294901760
  %6493 = vmatpush.msra.mxu0 %v6492
  %v6494 = vand.u32 %v276, 4294901760
  %v6495 = vsub.f32 %v276, %v6494
  %v6496 = vand.u32 %v6495, 4294901760
  %6497 = vmatpush.msra.mxu0 %v6496
  %v6498 = vand.u32 %v271, 4294901760
  %v6499 = vsub.f32 %v271, %v6498
  %v6500 = vand.u32 %v6499, 4294901760
  %6501 = vmatpush.msra.mxu0 %v6500
  %v6502 = vand.u32 %v266, 4294901760
  %v6503 = vsub.f32 %v266, %v6502
  %v6504 = vand.u32 %v6503, 4294901760
  %6505 = vmatpush.msra.mxu0 %v6504
  %v6506 = vand.u32 %v261, 4294901760
  %v6507 = vsub.f32 %v261, %v6506
  %v6508 = vand.u32 %v6507, 4294901760
  %6509 = vmatpush.msra.mxu0 %v6508
  %v6510 = vand.u32 %v256, 4294901760
  %v6511 = vsub.f32 %v256, %v6510
  %v6512 = vand.u32 %v6511, 4294901760
  %6513 = vmatpush.msra.mxu0 %v6512
  %v6514 = vand.u32 %v251, 4294901760
  %v6515 = vsub.f32 %v251, %v6514
  %v6516 = vand.u32 %v6515, 4294901760
  %6517 = vmatpush.msra.mxu0 %v6516
  %v6518 = vand.u32 %v246, 4294901760
  %v6519 = vsub.f32 %v246, %v6518
  %v6520 = vand.u32 %v6519, 4294901760
  %6521 = vmatpush.msra.mxu0 %v6520
  %v6522 = vand.u32 %v241, 4294901760
  %v6523 = vsub.f32 %v241, %v6522
  %v6524 = vand.u32 %v6523, 4294901760
  %6525 = vmatpush.msra.mxu0 %v6524
  %v6526 = vand.u32 %v236, 4294901760
  %v6527 = vsub.f32 %v236, %v6526
  %v6528 = vand.u32 %v6527, 4294901760
  %6529 = vmatpush.msra.mxu0 %v6528
  %v6530 = vand.u32 %v231, 4294901760
  %v6531 = vsub.f32 %v231, %v6530
  %v6532 = vand.u32 %v6531, 4294901760
  %6533 = vmatpush.msra.mxu0 %v6532
  %v6534 = vand.u32 %v226, 4294901760
  %v6535 = vsub.f32 %v226, %v6534
  %v6536 = vand.u32 %v6535, 4294901760
  %6537 = vmatpush.msra.mxu0 %v6536
  %v6538 = vand.u32 %v221, 4294901760
  %v6539 = vsub.f32 %v221, %v6538
  %v6540 = vand.u32 %v6539, 4294901760
  %6541 = vmatpush.msra.mxu0 %v6540
  %v6542 = vand.u32 %v216, 4294901760
  %v6543 = vsub.f32 %v216, %v6542
  %v6544 = vand.u32 %v6543, 4294901760
  %6545 = vmatpush.msra.mxu0 %v6544
  %v6546 = vand.u32 %v211, 4294901760
  %v6547 = vsub.f32 %v211, %v6546
  %v6548 = vand.u32 %v6547, 4294901760
  %6549 = vmatpush.msra.mxu0 %v6548
  %v6550 = vand.u32 %v206, 4294901760
  %v6551 = vsub.f32 %v206, %v6550
  %v6552 = vand.u32 %v6551, 4294901760
  %6553 = vmatpush.msra.mxu0 %v6552
  %v6554 = vand.u32 %v450, 4294901760
  %6555 = vmatmul.f32.gmra.mxu0 %v6554
  %v6556 = vpop.f32.mrf.mxu0
  %v6557 = vadd.f32 %v6488, %v6556
  %6558 = vdwg.mxu0
  %v6559 = vand.u32 %v281, 4294901760
  %6560 = vmatpush.msra.mxu0 %v6559
  %v6561 = vand.u32 %v276, 4294901760
  %6562 = vmatpush.msra.mxu0 %v6561
  %v6563 = vand.u32 %v271, 4294901760
  %6564 = vmatpush.msra.mxu0 %v6563
  %v6565 = vand.u32 %v266, 4294901760
  %6566 = vmatpush.msra.mxu0 %v6565
  %v6567 = vand.u32 %v261, 4294901760
  %6568 = vmatpush.msra.mxu0 %v6567
  %v6569 = vand.u32 %v256, 4294901760
  %6570 = vmatpush.msra.mxu0 %v6569
  %v6571 = vand.u32 %v251, 4294901760
  %6572 = vmatpush.msra.mxu0 %v6571
  %v6573 = vand.u32 %v246, 4294901760
  %6574 = vmatpush.msra.mxu0 %v6573
  %v6575 = vand.u32 %v241, 4294901760
  %6576 = vmatpush.msra.mxu0 %v6575
  %v6577 = vand.u32 %v236, 4294901760
  %6578 = vmatpush.msra.mxu0 %v6577
  %v6579 = vand.u32 %v231, 4294901760
  %6580 = vmatpush.msra.mxu0 %v6579
  %v6581 = vand.u32 %v226, 4294901760
  %6582 = vmatpush.msra.mxu0 %v6581
  %v6583 = vand.u32 %v221, 4294901760
  %6584 = vmatpush.msra.mxu0 %v6583
  %v6585 = vand.u32 %v216, 4294901760
  %6586 = vmatpush.msra.mxu0 %v6585
  %v6587 = vand.u32 %v211, 4294901760
  %6588 = vmatpush.msra.mxu0 %v6587
  %v6589 = vand.u32 %v206, 4294901760
  %6590 = vmatpush.msra.mxu0 %v6589
  %v6591 = vand.u32 %v450, 4294901760
  %6592 = vmatmul.f32.gmra.mxu0 %v6591
  %v6593 = vpop.f32.mrf.mxu0
  %v6594 = vadd.f32 %v6557, %v6593
  %6595 = vdwg.mxu0
  %v6596 = vand.u32 %v361, 4294901760
  %6597 = vmatpush.msra.mxu0 %v6596
  %v6598 = vand.u32 %v356, 4294901760
  %6599 = vmatpush.msra.mxu0 %v6598
  %v6600 = vand.u32 %v351, 4294901760
  %6601 = vmatpush.msra.mxu0 %v6600
  %v6602 = vand.u32 %v346, 4294901760
  %6603 = vmatpush.msra.mxu0 %v6602
  %v6604 = vand.u32 %v341, 4294901760
  %6605 = vmatpush.msra.mxu0 %v6604
  %v6606 = vand.u32 %v336, 4294901760
  %6607 = vmatpush.msra.mxu0 %v6606
  %v6608 = vand.u32 %v331, 4294901760
  %6609 = vmatpush.msra.mxu0 %v6608
  %v6610 = vand.u32 %v326, 4294901760
  %6611 = vmatpush.msra.mxu0 %v6610
  %v6612 = vand.u32 %v321, 4294901760
  %6613 = vmatpush.msra.mxu0 %v6612
  %v6614 = vand.u32 %v316, 4294901760
  %6615 = vmatpush.msra.mxu0 %v6614
  %v6616 = vand.u32 %v311, 4294901760
  %6617 = vmatpush.msra.mxu0 %v6616
  %v6618 = vand.u32 %v306, 4294901760
  %6619 = vmatpush.msra.mxu0 %v6618
  %v6620 = vand.u32 %v301, 4294901760
  %6621 = vmatpush.msra.mxu0 %v6620
  %v6622 = vand.u32 %v296, 4294901760
  %6623 = vmatpush.msra.mxu0 %v6622
  %v6624 = vand.u32 %v291, 4294901760
  %6625 = vmatpush.msra.mxu0 %v6624
  %v6626 = vand.u32 %v286, 4294901760
  %6627 = vmatpush.msra.mxu0 %v6626
  %v6628 = vand.u32 %v451, 4294901760
  %v6629 = vsub.f32 %v451, %v6628
  %v6630 = vand.u32 %v6629, 4294901760
  %v6631 = vsub.f32 %v6629, %v6630
  %v6632 = vand.u32 %v6631, 4294901760
  %6633 = vmatmul.f32.gmra.mxu0 %v6632
  %v6634 = vpop.f32.mrf.mxu0
  %v6635 = vadd.f32 %v6594, %v6634
  %6636 = vdwg.mxu0
  %v6637 = vand.u32 %v361, 4294901760
  %v6638 = vsub.f32 %v361, %v6637
  %v6639 = vand.u32 %v6638, 4294901760
  %v6640 = vsub.f32 %v6638, %v6639
  %v6641 = vand.u32 %v6640, 4294901760
  %6642 = vmatpush.msra.mxu0 %v6641
  %v6643 = vand.u32 %v356, 4294901760
  %v6644 = vsub.f32 %v356, %v6643
  %v6645 = vand.u32 %v6644, 4294901760
  %v6646 = vsub.f32 %v6644, %v6645
  %v6647 = vand.u32 %v6646, 4294901760
  %6648 = vmatpush.msra.mxu0 %v6647
  %v6649 = vand.u32 %v351, 4294901760
  %v6650 = vsub.f32 %v351, %v6649
  %v6651 = vand.u32 %v6650, 4294901760
  %v6652 = vsub.f32 %v6650, %v6651
  %v6653 = vand.u32 %v6652, 4294901760
  %6654 = vmatpush.msra.mxu0 %v6653
  %v6655 = vand.u32 %v346, 4294901760
  %v6656 = vsub.f32 %v346, %v6655
  %v6657 = vand.u32 %v6656, 4294901760
  %v6658 = vsub.f32 %v6656, %v6657
  %v6659 = vand.u32 %v6658, 4294901760
  %6660 = vmatpush.msra.mxu0 %v6659
  %v6661 = vand.u32 %v341, 4294901760
  %v6662 = vsub.f32 %v341, %v6661
  %v6663 = vand.u32 %v6662, 4294901760
  %v6664 = vsub.f32 %v6662, %v6663
  %v6665 = vand.u32 %v6664, 4294901760
  %6666 = vmatpush.msra.mxu0 %v6665
  %v6667 = vand.u32 %v336, 4294901760
  %v6668 = vsub.f32 %v336, %v6667
  %v6669 = vand.u32 %v6668, 4294901760
  %v6670 = vsub.f32 %v6668, %v6669
  %v6671 = vand.u32 %v6670, 4294901760
  %6672 = vmatpush.msra.mxu0 %v6671
  %v6673 = vand.u32 %v331, 4294901760
  %v6674 = vsub.f32 %v331, %v6673
  %v6675 = vand.u32 %v6674, 4294901760
  %v6676 = vsub.f32 %v6674, %v6675
  %v6677 = vand.u32 %v6676, 4294901760
  %6678 = vmatpush.msra.mxu0 %v6677
  %v6679 = vand.u32 %v326, 4294901760
  %v6680 = vsub.f32 %v326, %v6679
  %v6681 = vand.u32 %v6680, 4294901760
  %v6682 = vsub.f32 %v6680, %v6681
  %v6683 = vand.u32 %v6682, 4294901760
  %6684 = vmatpush.msra.mxu0 %v6683
  %v6685 = vand.u32 %v321, 4294901760
  %v6686 = vsub.f32 %v321, %v6685
  %v6687 = vand.u32 %v6686, 4294901760
  %v6688 = vsub.f32 %v6686, %v6687
  %v6689 = vand.u32 %v6688, 4294901760
  %6690 = vmatpush.msra.mxu0 %v6689
  %v6691 = vand.u32 %v316, 4294901760
  %v6692 = vsub.f32 %v316, %v6691
  %v6693 = vand.u32 %v6692, 4294901760
  %v6694 = vsub.f32 %v6692, %v6693
  %v6695 = vand.u32 %v6694, 4294901760
  %6696 = vmatpush.msra.mxu0 %v6695
  %v6697 = vand.u32 %v311, 4294901760
  %v6698 = vsub.f32 %v311, %v6697
  %v6699 = vand.u32 %v6698, 4294901760
  %v6700 = vsub.f32 %v6698, %v6699
  %v6701 = vand.u32 %v6700, 4294901760
  %6702 = vmatpush.msra.mxu0 %v6701
  %v6703 = vand.u32 %v306, 4294901760
  %v6704 = vsub.f32 %v306, %v6703
  %v6705 = vand.u32 %v6704, 4294901760
  %v6706 = vsub.f32 %v6704, %v6705
  %v6707 = vand.u32 %v6706, 4294901760
  %6708 = vmatpush.msra.mxu0 %v6707
  %v6709 = vand.u32 %v301, 4294901760
  %v6710 = vsub.f32 %v301, %v6709
  %v6711 = vand.u32 %v6710, 4294901760
  %v6712 = vsub.f32 %v6710, %v6711
  %v6713 = vand.u32 %v6712, 4294901760
  %6714 = vmatpush.msra.mxu0 %v6713
  %v6715 = vand.u32 %v296, 4294901760
  %v6716 = vsub.f32 %v296, %v6715
  %v6717 = vand.u32 %v6716, 4294901760
  %v6718 = vsub.f32 %v6716, %v6717
  %v6719 = vand.u32 %v6718, 4294901760
  %6720 = vmatpush.msra.mxu0 %v6719
  %v6721 = vand.u32 %v291, 4294901760
  %v6722 = vsub.f32 %v291, %v6721
  %v6723 = vand.u32 %v6722, 4294901760
  %v6724 = vsub.f32 %v6722, %v6723
  %v6725 = vand.u32 %v6724, 4294901760
  %6726 = vmatpush.msra.mxu0 %v6725
  %v6727 = vand.u32 %v286, 4294901760
  %v6728 = vsub.f32 %v286, %v6727
  %v6729 = vand.u32 %v6728, 4294901760
  %v6730 = vsub.f32 %v6728, %v6729
  %v6731 = vand.u32 %v6730, 4294901760
  %6732 = vmatpush.msra.mxu0 %v6731
  %v6733 = vand.u32 %v451, 4294901760
  %6734 = vmatmul.f32.gmra.mxu0 %v6733
  %v6735 = vpop.f32.mrf.mxu0
  %v6736 = vadd.f32 %v6635, %v6735
  %6737 = vdwg.mxu0
  %v6738 = vand.u32 %v361, 4294901760
  %v6739 = vsub.f32 %v361, %v6738
  %6740 = vmatpush.msra.mxu0 %v6739
  %v6741 = vand.u32 %v356, 4294901760
  %v6742 = vsub.f32 %v356, %v6741
  %6743 = vmatpush.msra.mxu0 %v6742
  %v6744 = vand.u32 %v351, 4294901760
  %v6745 = vsub.f32 %v351, %v6744
  %6746 = vmatpush.msra.mxu0 %v6745
  %v6747 = vand.u32 %v346, 4294901760
  %v6748 = vsub.f32 %v346, %v6747
  %6749 = vmatpush.msra.mxu0 %v6748
  %v6750 = vand.u32 %v341, 4294901760
  %v6751 = vsub.f32 %v341, %v6750
  %6752 = vmatpush.msra.mxu0 %v6751
  %v6753 = vand.u32 %v336, 4294901760
  %v6754 = vsub.f32 %v336, %v6753
  %6755 = vmatpush.msra.mxu0 %v6754
  %v6756 = vand.u32 %v331, 4294901760
  %v6757 = vsub.f32 %v331, %v6756
  %6758 = vmatpush.msra.mxu0 %v6757
  %v6759 = vand.u32 %v326, 4294901760
  %v6760 = vsub.f32 %v326, %v6759
  %6761 = vmatpush.msra.mxu0 %v6760
  %v6762 = vand.u32 %v321, 4294901760
  %v6763 = vsub.f32 %v321, %v6762
  %6764 = vmatpush.msra.mxu0 %v6763
  %v6765 = vand.u32 %v316, 4294901760
  %v6766 = vsub.f32 %v316, %v6765
  %6767 = vmatpush.msra.mxu0 %v6766
  %v6768 = vand.u32 %v311, 4294901760
  %v6769 = vsub.f32 %v311, %v6768
  %6770 = vmatpush.msra.mxu0 %v6769
  %v6771 = vand.u32 %v306, 4294901760
  %v6772 = vsub.f32 %v306, %v6771
  %6773 = vmatpush.msra.mxu0 %v6772
  %v6774 = vand.u32 %v301, 4294901760
  %v6775 = vsub.f32 %v301, %v6774
  %6776 = vmatpush.msra.mxu0 %v6775
  %v6777 = vand.u32 %v296, 4294901760
  %v6778 = vsub.f32 %v296, %v6777
  %6779 = vmatpush.msra.mxu0 %v6778
  %v6780 = vand.u32 %v291, 4294901760
  %v6781 = vsub.f32 %v291, %v6780
  %6782 = vmatpush.msra.mxu0 %v6781
  %v6783 = vand.u32 %v286, 4294901760
  %v6784 = vsub.f32 %v286, %v6783
  %6785 = vmatpush.msra.mxu0 %v6784
  %v6786 = vand.u32 %v451, 4294901760
  %v6787 = vsub.f32 %v451, %v6786
  %6788 = vmatmul.f32.gmra.mxu0 %v6787
  %v6789 = vpop.f32.mrf.mxu0
  %v6790 = vadd.f32 %v6736, %v6789
  %6791 = vdwg.mxu0
  %v6792 = vand.u32 %v361, 4294901760
  %6793 = vmatpush.msra.mxu0 %v6792
  %v6794 = vand.u32 %v356, 4294901760
  %6795 = vmatpush.msra.mxu0 %v6794
  %v6796 = vand.u32 %v351, 4294901760
  %6797 = vmatpush.msra.mxu0 %v6796
  %v6798 = vand.u32 %v346, 4294901760
  %6799 = vmatpush.msra.mxu0 %v6798
  %v6800 = vand.u32 %v341, 4294901760
  %6801 = vmatpush.msra.mxu0 %v6800
  %v6802 = vand.u32 %v336, 4294901760
  %6803 = vmatpush.msra.mxu0 %v6802
  %v6804 = vand.u32 %v331, 4294901760
  %6805 = vmatpush.msra.mxu0 %v6804
  %v6806 = vand.u32 %v326, 4294901760
  %6807 = vmatpush.msra.mxu0 %v6806
  %v6808 = vand.u32 %v321, 4294901760
  %6809 = vmatpush.msra.mxu0 %v6808
  %v6810 = vand.u32 %v316, 4294901760
  %6811 = vmatpush.msra.mxu0 %v6810
  %v6812 = vand.u32 %v311, 4294901760
  %6813 = vmatpush.msra.mxu0 %v6812
  %v6814 = vand.u32 %v306, 4294901760
  %6815 = vmatpush.msra.mxu0 %v6814
  %v6816 = vand.u32 %v301, 4294901760
  %6817 = vmatpush.msra.mxu0 %v6816
  %v6818 = vand.u32 %v296, 4294901760
  %6819 = vmatpush.msra.mxu0 %v6818
  %v6820 = vand.u32 %v291, 4294901760
  %6821 = vmatpush.msra.mxu0 %v6820
  %v6822 = vand.u32 %v286, 4294901760
  %6823 = vmatpush.msra.mxu0 %v6822
  %v6824 = vand.u32 %v451, 4294901760
  %v6825 = vsub.f32 %v451, %v6824
  %v6826 = vand.u32 %v6825, 4294901760
  %6827 = vmatmul.f32.gmra.mxu0 %v6826
  %v6828 = vpop.f32.mrf.mxu0
  %v6829 = vadd.f32 %v6790, %v6828
  %6830 = vdwg.mxu0
  %v6831 = vand.u32 %v361, 4294901760
  %v6832 = vsub.f32 %v361, %v6831
  %v6833 = vand.u32 %v6832, 4294901760
  %6834 = vmatpush.msra.mxu0 %v6833
  %v6835 = vand.u32 %v356, 4294901760
  %v6836 = vsub.f32 %v356, %v6835
  %v6837 = vand.u32 %v6836, 4294901760
  %6838 = vmatpush.msra.mxu0 %v6837
  %v6839 = vand.u32 %v351, 4294901760
  %v6840 = vsub.f32 %v351, %v6839
  %v6841 = vand.u32 %v6840, 4294901760
  %6842 = vmatpush.msra.mxu0 %v6841
  %v6843 = vand.u32 %v346, 4294901760
  %v6844 = vsub.f32 %v346, %v6843
  %v6845 = vand.u32 %v6844, 4294901760
  %6846 = vmatpush.msra.mxu0 %v6845
  %v6847 = vand.u32 %v341, 4294901760
  %v6848 = vsub.f32 %v341, %v6847
  %v6849 = vand.u32 %v6848, 4294901760
  %6850 = vmatpush.msra.mxu0 %v6849
  %v6851 = vand.u32 %v336, 4294901760
  %v6852 = vsub.f32 %v336, %v6851
  %v6853 = vand.u32 %v6852, 4294901760
  %6854 = vmatpush.msra.mxu0 %v6853
  %v6855 = vand.u32 %v331, 4294901760
  %v6856 = vsub.f32 %v331, %v6855
  %v6857 = vand.u32 %v6856, 4294901760
  %6858 = vmatpush.msra.mxu0 %v6857
  %v6859 = vand.u32 %v326, 4294901760
  %v6860 = vsub.f32 %v326, %v6859
  %v6861 = vand.u32 %v6860, 4294901760
  %6862 = vmatpush.msra.mxu0 %v6861
  %v6863 = vand.u32 %v321, 4294901760
  %v6864 = vsub.f32 %v321, %v6863
  %v6865 = vand.u32 %v6864, 4294901760
  %6866 = vmatpush.msra.mxu0 %v6865
  %v6867 = vand.u32 %v316, 4294901760
  %v6868 = vsub.f32 %v316, %v6867
  %v6869 = vand.u32 %v6868, 4294901760
  %6870 = vmatpush.msra.mxu0 %v6869
  %v6871 = vand.u32 %v311, 4294901760
  %v6872 = vsub.f32 %v311, %v6871
  %v6873 = vand.u32 %v6872, 4294901760
  %6874 = vmatpush.msra.mxu0 %v6873
  %v6875 = vand.u32 %v306, 4294901760
  %v6876 = vsub.f32 %v306, %v6875
  %v6877 = vand.u32 %v6876, 4294901760
  %6878 = vmatpush.msra.mxu0 %v6877
  %v6879 = vand.u32 %v301, 4294901760
  %v6880 = vsub.f32 %v301, %v6879
  %v6881 = vand.u32 %v6880, 4294901760
  %6882 = vmatpush.msra.mxu0 %v6881
  %v6883 = vand.u32 %v296, 4294901760
  %v6884 = vsub.f32 %v296, %v6883
  %v6885 = vand.u32 %v6884, 4294901760
  %6886 = vmatpush.msra.mxu0 %v6885
  %v6887 = vand.u32 %v291, 4294901760
  %v6888 = vsub.f32 %v291, %v6887
  %v6889 = vand.u32 %v6888, 4294901760
  %6890 = vmatpush.msra.mxu0 %v6889
  %v6891 = vand.u32 %v286, 4294901760
  %v6892 = vsub.f32 %v286, %v6891
  %v6893 = vand.u32 %v6892, 4294901760
  %6894 = vmatpush.msra.mxu0 %v6893
  %v6895 = vand.u32 %v451, 4294901760
  %6896 = vmatmul.f32.gmra.mxu0 %v6895
  %v6897 = vpop.f32.mrf.mxu0
  %v6898 = vadd.f32 %v6829, %v6897
  %6899 = vdwg.mxu0
  %v6900 = vand.u32 %v361, 4294901760
  %6901 = vmatpush.msra.mxu0 %v6900
  %v6902 = vand.u32 %v356, 4294901760
  %6903 = vmatpush.msra.mxu0 %v6902
  %v6904 = vand.u32 %v351, 4294901760
  %6905 = vmatpush.msra.mxu0 %v6904
  %v6906 = vand.u32 %v346, 4294901760
  %6907 = vmatpush.msra.mxu0 %v6906
  %v6908 = vand.u32 %v341, 4294901760
  %6909 = vmatpush.msra.mxu0 %v6908
  %v6910 = vand.u32 %v336, 4294901760
  %6911 = vmatpush.msra.mxu0 %v6910
  %v6912 = vand.u32 %v331, 4294901760
  %6913 = vmatpush.msra.mxu0 %v6912
  %v6914 = vand.u32 %v326, 4294901760
  %6915 = vmatpush.msra.mxu0 %v6914
  %v6916 = vand.u32 %v321, 4294901760
  %6917 = vmatpush.msra.mxu0 %v6916
  %v6918 = vand.u32 %v316, 4294901760
  %6919 = vmatpush.msra.mxu0 %v6918
  %v6920 = vand.u32 %v311, 4294901760
  %6921 = vmatpush.msra.mxu0 %v6920
  %v6922 = vand.u32 %v306, 4294901760
  %6923 = vmatpush.msra.mxu0 %v6922
  %v6924 = vand.u32 %v301, 4294901760
  %6925 = vmatpush.msra.mxu0 %v6924
  %v6926 = vand.u32 %v296, 4294901760
  %6927 = vmatpush.msra.mxu0 %v6926
  %v6928 = vand.u32 %v291, 4294901760
  %6929 = vmatpush.msra.mxu0 %v6928
  %v6930 = vand.u32 %v286, 4294901760
  %6931 = vmatpush.msra.mxu0 %v6930
  %v6932 = vand.u32 %v451, 4294901760
  %6933 = vmatmul.f32.gmra.mxu0 %v6932
  %v6934 = vpop.f32.mrf.mxu0
  %v6935 = vadd.f32 %v6898, %v6934
  %6936 = vdwg.mxu0
  %v6937 = vand.u32 %v441, 4294901760
  %6938 = vmatpush.msra.mxu0 %v6937
  %v6939 = vand.u32 %v436, 4294901760
  %6940 = vmatpush.msra.mxu0 %v6939
  %v6941 = vand.u32 %v431, 4294901760
  %6942 = vmatpush.msra.mxu0 %v6941
  %v6943 = vand.u32 %v426, 4294901760
  %6944 = vmatpush.msra.mxu0 %v6943
  %v6945 = vand.u32 %v421, 4294901760
  %6946 = vmatpush.msra.mxu0 %v6945
  %v6947 = vand.u32 %v416, 4294901760
  %6948 = vmatpush.msra.mxu0 %v6947
  %v6949 = vand.u32 %v411, 4294901760
  %6950 = vmatpush.msra.mxu0 %v6949
  %v6951 = vand.u32 %v406, 4294901760
  %6952 = vmatpush.msra.mxu0 %v6951
  %v6953 = vand.u32 %v401, 4294901760
  %6954 = vmatpush.msra.mxu0 %v6953
  %v6955 = vand.u32 %v396, 4294901760
  %6956 = vmatpush.msra.mxu0 %v6955
  %v6957 = vand.u32 %v391, 4294901760
  %6958 = vmatpush.msra.mxu0 %v6957
  %v6959 = vand.u32 %v386, 4294901760
  %6960 = vmatpush.msra.mxu0 %v6959
  %v6961 = vand.u32 %v381, 4294901760
  %6962 = vmatpush.msra.mxu0 %v6961
  %v6963 = vand.u32 %v376, 4294901760
  %6964 = vmatpush.msra.mxu0 %v6963
  %v6965 = vand.u32 %v371, 4294901760
  %6966 = vmatpush.msra.mxu0 %v6965
  %v6967 = vand.u32 %v366, 4294901760
  %6968 = vmatpush.msra.mxu0 %v6967
  %v6969 = vand.u32 %v452, 4294901760
  %v6970 = vsub.f32 %v452, %v6969
  %v6971 = vand.u32 %v6970, 4294901760
  %v6972 = vsub.f32 %v6970, %v6971
  %v6973 = vand.u32 %v6972, 4294901760
  %6974 = vmatmul.f32.gmra.mxu0 %v6973
  %v6975 = vpop.f32.mrf.mxu0
  %v6976 = vadd.f32 %v6935, %v6975
  %6977 = vdwg.mxu0
  %v6978 = vand.u32 %v441, 4294901760
  %v6979 = vsub.f32 %v441, %v6978
  %v6980 = vand.u32 %v6979, 4294901760
  %v6981 = vsub.f32 %v6979, %v6980
  %v6982 = vand.u32 %v6981, 4294901760
  %6983 = vmatpush.msra.mxu0 %v6982
  %v6984 = vand.u32 %v436, 4294901760
  %v6985 = vsub.f32 %v436, %v6984
  %v6986 = vand.u32 %v6985, 4294901760
  %v6987 = vsub.f32 %v6985, %v6986
  %v6988 = vand.u32 %v6987, 4294901760
  %6989 = vmatpush.msra.mxu0 %v6988
  %v6990 = vand.u32 %v431, 4294901760
  %v6991 = vsub.f32 %v431, %v6990
  %v6992 = vand.u32 %v6991, 4294901760
  %v6993 = vsub.f32 %v6991, %v6992
  %v6994 = vand.u32 %v6993, 4294901760
  %6995 = vmatpush.msra.mxu0 %v6994
  %v6996 = vand.u32 %v426, 4294901760
  %v6997 = vsub.f32 %v426, %v6996
  %v6998 = vand.u32 %v6997, 4294901760
  %v6999 = vsub.f32 %v6997, %v6998
  %v7000 = vand.u32 %v6999, 4294901760
  %7001 = vmatpush.msra.mxu0 %v7000
  %v7002 = vand.u32 %v421, 4294901760
  %v7003 = vsub.f32 %v421, %v7002
  %v7004 = vand.u32 %v7003, 4294901760
  %v7005 = vsub.f32 %v7003, %v7004
  %v7006 = vand.u32 %v7005, 4294901760
  %7007 = vmatpush.msra.mxu0 %v7006
  %v7008 = vand.u32 %v416, 4294901760
  %v7009 = vsub.f32 %v416, %v7008
  %v7010 = vand.u32 %v7009, 4294901760
  %v7011 = vsub.f32 %v7009, %v7010
  %v7012 = vand.u32 %v7011, 4294901760
  %7013 = vmatpush.msra.mxu0 %v7012
  %v7014 = vand.u32 %v411, 4294901760
  %v7015 = vsub.f32 %v411, %v7014
  %v7016 = vand.u32 %v7015, 4294901760
  %v7017 = vsub.f32 %v7015, %v7016
  %v7018 = vand.u32 %v7017, 4294901760
  %7019 = vmatpush.msra.mxu0 %v7018
  %v7020 = vand.u32 %v406, 4294901760
  %v7021 = vsub.f32 %v406, %v7020
  %v7022 = vand.u32 %v7021, 4294901760
  %v7023 = vsub.f32 %v7021, %v7022
  %v7024 = vand.u32 %v7023, 4294901760
  %7025 = vmatpush.msra.mxu0 %v7024
  %v7026 = vand.u32 %v401, 4294901760
  %v7027 = vsub.f32 %v401, %v7026
  %v7028 = vand.u32 %v7027, 4294901760
  %v7029 = vsub.f32 %v7027, %v7028
  %v7030 = vand.u32 %v7029, 4294901760
  %7031 = vmatpush.msra.mxu0 %v7030
  %v7032 = vand.u32 %v396, 4294901760
  %v7033 = vsub.f32 %v396, %v7032
  %v7034 = vand.u32 %v7033, 4294901760
  %v7035 = vsub.f32 %v7033, %v7034
  %v7036 = vand.u32 %v7035, 4294901760
  %7037 = vmatpush.msra.mxu0 %v7036
  %v7038 = vand.u32 %v391, 4294901760
  %v7039 = vsub.f32 %v391, %v7038
  %v7040 = vand.u32 %v7039, 4294901760
  %v7041 = vsub.f32 %v7039, %v7040
  %v7042 = vand.u32 %v7041, 4294901760
  %7043 = vmatpush.msra.mxu0 %v7042
  %v7044 = vand.u32 %v386, 4294901760
  %v7045 = vsub.f32 %v386, %v7044
  %v7046 = vand.u32 %v7045, 4294901760
  %v7047 = vsub.f32 %v7045, %v7046
  %v7048 = vand.u32 %v7047, 4294901760
  %7049 = vmatpush.msra.mxu0 %v7048
  %v7050 = vand.u32 %v381, 4294901760
  %v7051 = vsub.f32 %v381, %v7050
  %v7052 = vand.u32 %v7051, 4294901760
  %v7053 = vsub.f32 %v7051, %v7052
  %v7054 = vand.u32 %v7053, 4294901760
  %7055 = vmatpush.msra.mxu0 %v7054
  %v7056 = vand.u32 %v376, 4294901760
  %v7057 = vsub.f32 %v376, %v7056
  %v7058 = vand.u32 %v7057, 4294901760
  %v7059 = vsub.f32 %v7057, %v7058
  %v7060 = vand.u32 %v7059, 4294901760
  %7061 = vmatpush.msra.mxu0 %v7060
  %v7062 = vand.u32 %v371, 4294901760
  %v7063 = vsub.f32 %v371, %v7062
  %v7064 = vand.u32 %v7063, 4294901760
  %v7065 = vsub.f32 %v7063, %v7064
  %v7066 = vand.u32 %v7065, 4294901760
  %7067 = vmatpush.msra.mxu0 %v7066
  %v7068 = vand.u32 %v366, 4294901760
  %v7069 = vsub.f32 %v366, %v7068
  %v7070 = vand.u32 %v7069, 4294901760
  %v7071 = vsub.f32 %v7069, %v7070
  %v7072 = vand.u32 %v7071, 4294901760
  %7073 = vmatpush.msra.mxu0 %v7072
  %v7074 = vand.u32 %v452, 4294901760
  %7075 = vmatmul.f32.gmra.mxu0 %v7074
  %v7076 = vpop.f32.mrf.mxu0
  %v7077 = vadd.f32 %v6976, %v7076
  %7078 = vdwg.mxu0
  %v7079 = vand.u32 %v441, 4294901760
  %v7080 = vsub.f32 %v441, %v7079
  %7081 = vmatpush.msra.mxu0 %v7080
  %v7082 = vand.u32 %v436, 4294901760
  %v7083 = vsub.f32 %v436, %v7082
  %7084 = vmatpush.msra.mxu0 %v7083
  %v7085 = vand.u32 %v431, 4294901760
  %v7086 = vsub.f32 %v431, %v7085
  %7087 = vmatpush.msra.mxu0 %v7086
  %v7088 = vand.u32 %v426, 4294901760
  %v7089 = vsub.f32 %v426, %v7088
  %7090 = vmatpush.msra.mxu0 %v7089
  %v7091 = vand.u32 %v421, 4294901760
  %v7092 = vsub.f32 %v421, %v7091
  %7093 = vmatpush.msra.mxu0 %v7092
  %v7094 = vand.u32 %v416, 4294901760
  %v7095 = vsub.f32 %v416, %v7094
  %7096 = vmatpush.msra.mxu0 %v7095
  %v7097 = vand.u32 %v411, 4294901760
  %v7098 = vsub.f32 %v411, %v7097
  %7099 = vmatpush.msra.mxu0 %v7098
  %v7100 = vand.u32 %v406, 4294901760
  %v7101 = vsub.f32 %v406, %v7100
  %7102 = vmatpush.msra.mxu0 %v7101
  %v7103 = vand.u32 %v401, 4294901760
  %v7104 = vsub.f32 %v401, %v7103
  %7105 = vmatpush.msra.mxu0 %v7104
  %v7106 = vand.u32 %v396, 4294901760
  %v7107 = vsub.f32 %v396, %v7106
  %7108 = vmatpush.msra.mxu0 %v7107
  %v7109 = vand.u32 %v391, 4294901760
  %v7110 = vsub.f32 %v391, %v7109
  %7111 = vmatpush.msra.mxu0 %v7110
  %v7112 = vand.u32 %v386, 4294901760
  %v7113 = vsub.f32 %v386, %v7112
  %7114 = vmatpush.msra.mxu0 %v7113
  %v7115 = vand.u32 %v381, 4294901760
  %v7116 = vsub.f32 %v381, %v7115
  %7117 = vmatpush.msra.mxu0 %v7116
  %v7118 = vand.u32 %v376, 4294901760
  %v7119 = vsub.f32 %v376, %v7118
  %7120 = vmatpush.msra.mxu0 %v7119
  %v7121 = vand.u32 %v371, 4294901760
  %v7122 = vsub.f32 %v371, %v7121
  %7123 = vmatpush.msra.mxu0 %v7122
  %v7124 = vand.u32 %v366, 4294901760
  %v7125 = vsub.f32 %v366, %v7124
  %7126 = vmatpush.msra.mxu0 %v7125
  %v7127 = vand.u32 %v452, 4294901760
  %v7128 = vsub.f32 %v452, %v7127
  %7129 = vmatmul.f32.gmra.mxu0 %v7128
  %v7130 = vpop.f32.mrf.mxu0
  %v7131 = vadd.f32 %v7077, %v7130
  %7132 = vdwg.mxu0
  %v7133 = vand.u32 %v441, 4294901760
  %7134 = vmatpush.msra.mxu0 %v7133
  %v7135 = vand.u32 %v436, 4294901760
  %7136 = vmatpush.msra.mxu0 %v7135
  %v7137 = vand.u32 %v431, 4294901760
  %7138 = vmatpush.msra.mxu0 %v7137
  %v7139 = vand.u32 %v426, 4294901760
  %7140 = vmatpush.msra.mxu0 %v7139
  %v7141 = vand.u32 %v421, 4294901760
  %7142 = vmatpush.msra.mxu0 %v7141
  %v7143 = vand.u32 %v416, 4294901760
  %7144 = vmatpush.msra.mxu0 %v7143
  %v7145 = vand.u32 %v411, 4294901760
  %7146 = vmatpush.msra.mxu0 %v7145
  %v7147 = vand.u32 %v406, 4294901760
  %7148 = vmatpush.msra.mxu0 %v7147
  %v7149 = vand.u32 %v401, 4294901760
  %7150 = vmatpush.msra.mxu0 %v7149
  %v7151 = vand.u32 %v396, 4294901760
  %7152 = vmatpush.msra.mxu0 %v7151
  %v7153 = vand.u32 %v391, 4294901760
  %7154 = vmatpush.msra.mxu0 %v7153
  %v7155 = vand.u32 %v386, 4294901760
  %7156 = vmatpush.msra.mxu0 %v7155
  %v7157 = vand.u32 %v381, 4294901760
  %7158 = vmatpush.msra.mxu0 %v7157
  %v7159 = vand.u32 %v376, 4294901760
  %7160 = vmatpush.msra.mxu0 %v7159
  %v7161 = vand.u32 %v371, 4294901760
  %7162 = vmatpush.msra.mxu0 %v7161
  %v7163 = vand.u32 %v366, 4294901760
  %7164 = vmatpush.msra.mxu0 %v7163
  %v7165 = vand.u32 %v452, 4294901760
  %v7166 = vsub.f32 %v452, %v7165
  %v7167 = vand.u32 %v7166, 4294901760
  %7168 = vmatmul.f32.gmra.mxu0 %v7167
  %v7169 = vpop.f32.mrf.mxu0
  %v7170 = vadd.f32 %v7131, %v7169
  %7171 = vdwg.mxu0
  %v7172 = vand.u32 %v441, 4294901760
  %v7173 = vsub.f32 %v441, %v7172
  %v7174 = vand.u32 %v7173, 4294901760
  %7175 = vmatpush.msra.mxu0 %v7174
  %v7176 = vand.u32 %v436, 4294901760
  %v7177 = vsub.f32 %v436, %v7176
  %v7178 = vand.u32 %v7177, 4294901760
  %7179 = vmatpush.msra.mxu0 %v7178
  %v7180 = vand.u32 %v431, 4294901760
  %v7181 = vsub.f32 %v431, %v7180
  %v7182 = vand.u32 %v7181, 4294901760
  %7183 = vmatpush.msra.mxu0 %v7182
  %v7184 = vand.u32 %v426, 4294901760
  %v7185 = vsub.f32 %v426, %v7184
  %v7186 = vand.u32 %v7185, 4294901760
  %7187 = vmatpush.msra.mxu0 %v7186
  %v7188 = vand.u32 %v421, 4294901760
  %v7189 = vsub.f32 %v421, %v7188
  %v7190 = vand.u32 %v7189, 4294901760
  %7191 = vmatpush.msra.mxu0 %v7190
  %v7192 = vand.u32 %v416, 4294901760
  %v7193 = vsub.f32 %v416, %v7192
  %v7194 = vand.u32 %v7193, 4294901760
  %7195 = vmatpush.msra.mxu0 %v7194
  %v7196 = vand.u32 %v411, 4294901760
  %v7197 = vsub.f32 %v411, %v7196
  %v7198 = vand.u32 %v7197, 4294901760
  %7199 = vmatpush.msra.mxu0 %v7198
  %v7200 = vand.u32 %v406, 4294901760
  %v7201 = vsub.f32 %v406, %v7200
  %v7202 = vand.u32 %v7201, 4294901760
  %7203 = vmatpush.msra.mxu0 %v7202
  %v7204 = vand.u32 %v401, 4294901760
  %v7205 = vsub.f32 %v401, %v7204
  %v7206 = vand.u32 %v7205, 4294901760
  %7207 = vmatpush.msra.mxu0 %v7206
  %v7208 = vand.u32 %v396, 4294901760
  %v7209 = vsub.f32 %v396, %v7208
  %v7210 = vand.u32 %v7209, 4294901760
  %7211 = vmatpush.msra.mxu0 %v7210
  %v7212 = vand.u32 %v391, 4294901760
  %v7213 = vsub.f32 %v391, %v7212
  %v7214 = vand.u32 %v7213, 4294901760
  %7215 = vmatpush.msra.mxu0 %v7214
  %v7216 = vand.u32 %v386, 4294901760
  %v7217 = vsub.f32 %v386, %v7216
  %v7218 = vand.u32 %v7217, 4294901760
  %7219 = vmatpush.msra.mxu0 %v7218
  %v7220 = vand.u32 %v381, 4294901760
  %v7221 = vsub.f32 %v381, %v7220
  %v7222 = vand.u32 %v7221, 4294901760
  %7223 = vmatpush.msra.mxu0 %v7222
  %v7224 = vand.u32 %v376, 4294901760
  %v7225 = vsub.f32 %v376, %v7224
  %v7226 = vand.u32 %v7225, 4294901760
  %7227 = vmatpush.msra.mxu0 %v7226
  %v7228 = vand.u32 %v371, 4294901760
  %v7229 = vsub.f32 %v371, %v7228
  %v7230 = vand.u32 %v7229, 4294901760
  %7231 = vmatpush.msra.mxu0 %v7230
  %v7232 = vand.u32 %v366, 4294901760
  %v7233 = vsub.f32 %v366, %v7232
  %v7234 = vand.u32 %v7233, 4294901760
  %7235 = vmatpush.msra.mxu0 %v7234
  %v7236 = vand.u32 %v452, 4294901760
  %7237 = vmatmul.f32.gmra.mxu0 %v7236
  %v7238 = vpop.f32.mrf.mxu0
  %v7239 = vadd.f32 %v7170, %v7238
  %7240 = vdwg.mxu0
  %v7241 = vand.u32 %v441, 4294901760
  %7242 = vmatpush.msra.mxu0 %v7241
  %v7243 = vand.u32 %v436, 4294901760
  %7244 = vmatpush.msra.mxu0 %v7243
  %v7245 = vand.u32 %v431, 4294901760
  %7246 = vmatpush.msra.mxu0 %v7245
  %v7247 = vand.u32 %v426, 4294901760
  %7248 = vmatpush.msra.mxu0 %v7247
  %v7249 = vand.u32 %v421, 4294901760
  %7250 = vmatpush.msra.mxu0 %v7249
  %v7251 = vand.u32 %v416, 4294901760
  %7252 = vmatpush.msra.mxu0 %v7251
  %v7253 = vand.u32 %v411, 4294901760
  %7254 = vmatpush.msra.mxu0 %v7253
  %v7255 = vand.u32 %v406, 4294901760
  %7256 = vmatpush.msra.mxu0 %v7255
  %v7257 = vand.u32 %v401, 4294901760
  %7258 = vmatpush.msra.mxu0 %v7257
  %v7259 = vand.u32 %v396, 4294901760
  %7260 = vmatpush.msra.mxu0 %v7259
  %v7261 = vand.u32 %v391, 4294901760
  %7262 = vmatpush.msra.mxu0 %v7261
  %v7263 = vand.u32 %v386, 4294901760
  %7264 = vmatpush.msra.mxu0 %v7263
  %v7265 = vand.u32 %v381, 4294901760
  %7266 = vmatpush.msra.mxu0 %v7265
  %v7267 = vand.u32 %v376, 4294901760
  %7268 = vmatpush.msra.mxu0 %v7267
  %v7269 = vand.u32 %v371, 4294901760
  %7270 = vmatpush.msra.mxu0 %v7269
  %v7271 = vand.u32 %v366, 4294901760
  %7272 = vmatpush.msra.mxu0 %v7271
  %v7273 = vand.u32 %v452, 4294901760
  %7274 = vmatmul.f32.gmra.mxu0 %v7273
  %v7275 = vpop.f32.mrf.mxu0
  %v7276 = vadd.f32 %v7239, %v7275
  %7277 = vdwg.mxu0
  %v7278 = vand.u32 %v122, 4294901760
  %7279 = vmatpush.msra.mxu0 %v7278
  %v7280 = vand.u32 %v117, 4294901760
  %7281 = vmatpush.msra.mxu0 %v7280
  %v7282 = vand.u32 %v112, 4294901760
  %7283 = vmatpush.msra.mxu0 %v7282
  %v7284 = vand.u32 %v107, 4294901760
  %7285 = vmatpush.msra.mxu0 %v7284
  %v7286 = vand.u32 %v102, 4294901760
  %7287 = vmatpush.msra.mxu0 %v7286
  %v7288 = vand.u32 %v97, 4294901760
  %7289 = vmatpush.msra.mxu0 %v7288
  %v7290 = vand.u32 %v92, 4294901760
  %7291 = vmatpush.msra.mxu0 %v7290
  %v7292 = vand.u32 %v87, 4294901760
  %7293 = vmatpush.msra.mxu0 %v7292
  %v7294 = vand.u32 %v82, 4294901760
  %7295 = vmatpush.msra.mxu0 %v7294
  %v7296 = vand.u32 %v77, 4294901760
  %7297 = vmatpush.msra.mxu0 %v7296
  %v7298 = vand.u32 %v72, 4294901760
  %7299 = vmatpush.msra.mxu0 %v7298
  %v7300 = vand.u32 %v67, 4294901760
  %7301 = vmatpush.msra.mxu0 %v7300
  %v7302 = vand.u32 %v62, 4294901760
  %7303 = vmatpush.msra.mxu0 %v7302
  %v7304 = vand.u32 %v57, 4294901760
  %7305 = vmatpush.msra.mxu0 %v7304
  %v7306 = vand.u32 %v52, 4294901760
  %7307 = vmatpush.msra.mxu0 %v7306
  %v7308 = vand.u32 %v47, 4294901760
  %7309 = vmatpush.msra.mxu0 %v7308
  %v7310 = vand.u32 %v448, 4294901760
  %v7311 = vsub.f32 %v448, %v7310
  %v7312 = vand.u32 %v7311, 4294901760
  %v7313 = vsub.f32 %v7311, %v7312
  %v7314 = vand.u32 %v7313, 4294901760
  %7315 = vmatmul.f32.gmra.mxu0 %v7314
  %v7316 = vpop.f32.mrf.mxu0
  %v7317 = vadd.f32 0.0, %v7316
  %7318 = vdwg.mxu0
  %v7319 = vand.u32 %v122, 4294901760
  %v7320 = vsub.f32 %v122, %v7319
  %v7321 = vand.u32 %v7320, 4294901760
  %v7322 = vsub.f32 %v7320, %v7321
  %v7323 = vand.u32 %v7322, 4294901760
  %7324 = vmatpush.msra.mxu0 %v7323
  %v7325 = vand.u32 %v117, 4294901760
  %v7326 = vsub.f32 %v117, %v7325
  %v7327 = vand.u32 %v7326, 4294901760
  %v7328 = vsub.f32 %v7326, %v7327
  %v7329 = vand.u32 %v7328, 4294901760
  %7330 = vmatpush.msra.mxu0 %v7329
  %v7331 = vand.u32 %v112, 4294901760
  %v7332 = vsub.f32 %v112, %v7331
  %v7333 = vand.u32 %v7332, 4294901760
  %v7334 = vsub.f32 %v7332, %v7333
  %v7335 = vand.u32 %v7334, 4294901760
  %7336 = vmatpush.msra.mxu0 %v7335
  %v7337 = vand.u32 %v107, 4294901760
  %v7338 = vsub.f32 %v107, %v7337
  %v7339 = vand.u32 %v7338, 4294901760
  %v7340 = vsub.f32 %v7338, %v7339
  %v7341 = vand.u32 %v7340, 4294901760
  %7342 = vmatpush.msra.mxu0 %v7341
  %v7343 = vand.u32 %v102, 4294901760
  %v7344 = vsub.f32 %v102, %v7343
  %v7345 = vand.u32 %v7344, 4294901760
  %v7346 = vsub.f32 %v7344, %v7345
  %v7347 = vand.u32 %v7346, 4294901760
  %7348 = vmatpush.msra.mxu0 %v7347
  %v7349 = vand.u32 %v97, 4294901760
  %v7350 = vsub.f32 %v97, %v7349
  %v7351 = vand.u32 %v7350, 4294901760
  %v7352 = vsub.f32 %v7350, %v7351
  %v7353 = vand.u32 %v7352, 4294901760
  %7354 = vmatpush.msra.mxu0 %v7353
  %v7355 = vand.u32 %v92, 4294901760
  %v7356 = vsub.f32 %v92, %v7355
  %v7357 = vand.u32 %v7356, 4294901760
  %v7358 = vsub.f32 %v7356, %v7357
  %v7359 = vand.u32 %v7358, 4294901760
  %7360 = vmatpush.msra.mxu0 %v7359
  %v7361 = vand.u32 %v87, 4294901760
  %v7362 = vsub.f32 %v87, %v7361
  %v7363 = vand.u32 %v7362, 4294901760
  %v7364 = vsub.f32 %v7362, %v7363
  %v7365 = vand.u32 %v7364, 4294901760
  %7366 = vmatpush.msra.mxu0 %v7365
  %v7367 = vand.u32 %v82, 4294901760
  %v7368 = vsub.f32 %v82, %v7367
  %v7369 = vand.u32 %v7368, 4294901760
  %v7370 = vsub.f32 %v7368, %v7369
  %v7371 = vand.u32 %v7370, 4294901760
  %7372 = vmatpush.msra.mxu0 %v7371
  %v7373 = vand.u32 %v77, 4294901760
  %v7374 = vsub.f32 %v77, %v7373
  %v7375 = vand.u32 %v7374, 4294901760
  %v7376 = vsub.f32 %v7374, %v7375
  %v7377 = vand.u32 %v7376, 4294901760
  %7378 = vmatpush.msra.mxu0 %v7377
  %v7379 = vand.u32 %v72, 4294901760
  %v7380 = vsub.f32 %v72, %v7379
  %v7381 = vand.u32 %v7380, 4294901760
  %v7382 = vsub.f32 %v7380, %v7381
  %v7383 = vand.u32 %v7382, 4294901760
  %7384 = vmatpush.msra.mxu0 %v7383
  %v7385 = vand.u32 %v67, 4294901760
  %v7386 = vsub.f32 %v67, %v7385
  %v7387 = vand.u32 %v7386, 4294901760
  %v7388 = vsub.f32 %v7386, %v7387
  %v7389 = vand.u32 %v7388, 4294901760
  %7390 = vmatpush.msra.mxu0 %v7389
  %v7391 = vand.u32 %v62, 4294901760
  %v7392 = vsub.f32 %v62, %v7391
  %v7393 = vand.u32 %v7392, 4294901760
  %v7394 = vsub.f32 %v7392, %v7393
  %v7395 = vand.u32 %v7394, 4294901760
  %7396 = vmatpush.msra.mxu0 %v7395
  %v7397 = vand.u32 %v57, 4294901760
  %v7398 = vsub.f32 %v57, %v7397
  %v7399 = vand.u32 %v7398, 4294901760
  %v7400 = vsub.f32 %v7398, %v7399
  %v7401 = vand.u32 %v7400, 4294901760
  %7402 = vmatpush.msra.mxu0 %v7401
  %v7403 = vand.u32 %v52, 4294901760
  %v7404 = vsub.f32 %v52, %v7403
  %v7405 = vand.u32 %v7404, 4294901760
  %v7406 = vsub.f32 %v7404, %v7405
  %v7407 = vand.u32 %v7406, 4294901760
  %7408 = vmatpush.msra.mxu0 %v7407
  %v7409 = vand.u32 %v47, 4294901760
  %v7410 = vsub.f32 %v47, %v7409
  %v7411 = vand.u32 %v7410, 4294901760
  %v7412 = vsub.f32 %v7410, %v7411
  %v7413 = vand.u32 %v7412, 4294901760
  %7414 = vmatpush.msra.mxu0 %v7413
  %v7415 = vand.u32 %v448, 4294901760
  %7416 = vmatmul.f32.gmra.mxu0 %v7415
  %v7417 = vpop.f32.mrf.mxu0
  %v7418 = vadd.f32 %v7317, %v7417
  %7419 = vdwg.mxu0
  %v7420 = vand.u32 %v122, 4294901760
  %v7421 = vsub.f32 %v122, %v7420
  %7422 = vmatpush.msra.mxu0 %v7421
  %v7423 = vand.u32 %v117, 4294901760
  %v7424 = vsub.f32 %v117, %v7423
  %7425 = vmatpush.msra.mxu0 %v7424
  %v7426 = vand.u32 %v112, 4294901760
  %v7427 = vsub.f32 %v112, %v7426
  %7428 = vmatpush.msra.mxu0 %v7427
  %v7429 = vand.u32 %v107, 4294901760
  %v7430 = vsub.f32 %v107, %v7429
  %7431 = vmatpush.msra.mxu0 %v7430
  %v7432 = vand.u32 %v102, 4294901760
  %v7433 = vsub.f32 %v102, %v7432
  %7434 = vmatpush.msra.mxu0 %v7433
  %v7435 = vand.u32 %v97, 4294901760
  %v7436 = vsub.f32 %v97, %v7435
  %7437 = vmatpush.msra.mxu0 %v7436
  %v7438 = vand.u32 %v92, 4294901760
  %v7439 = vsub.f32 %v92, %v7438
  %7440 = vmatpush.msra.mxu0 %v7439
  %v7441 = vand.u32 %v87, 4294901760
  %v7442 = vsub.f32 %v87, %v7441
  %7443 = vmatpush.msra.mxu0 %v7442
  %v7444 = vand.u32 %v82, 4294901760
  %v7445 = vsub.f32 %v82, %v7444
  %7446 = vmatpush.msra.mxu0 %v7445
  %v7447 = vand.u32 %v77, 4294901760
  %v7448 = vsub.f32 %v77, %v7447
  %7449 = vmatpush.msra.mxu0 %v7448
  %v7450 = vand.u32 %v72, 4294901760
  %v7451 = vsub.f32 %v72, %v7450
  %7452 = vmatpush.msra.mxu0 %v7451
  %v7453 = vand.u32 %v67, 4294901760
  %v7454 = vsub.f32 %v67, %v7453
  %7455 = vmatpush.msra.mxu0 %v7454
  %v7456 = vand.u32 %v62, 4294901760
  %v7457 = vsub.f32 %v62, %v7456
  %7458 = vmatpush.msra.mxu0 %v7457
  %v7459 = vand.u32 %v57, 4294901760
  %v7460 = vsub.f32 %v57, %v7459
  %7461 = vmatpush.msra.mxu0 %v7460
  %v7462 = vand.u32 %v52, 4294901760
  %v7463 = vsub.f32 %v52, %v7462
  %7464 = vmatpush.msra.mxu0 %v7463
  %v7465 = vand.u32 %v47, 4294901760
  %v7466 = vsub.f32 %v47, %v7465
  %7467 = vmatpush.msra.mxu0 %v7466
  %v7468 = vand.u32 %v448, 4294901760
  %v7469 = vsub.f32 %v448, %v7468
  %7470 = vmatmul.f32.gmra.mxu0 %v7469
  %v7471 = vpop.f32.mrf.mxu0
  %v7472 = vadd.f32 %v7418, %v7471
  %7473 = vdwg.mxu0
  %v7474 = vand.u32 %v122, 4294901760
  %7475 = vmatpush.msra.mxu0 %v7474
  %v7476 = vand.u32 %v117, 4294901760
  %7477 = vmatpush.msra.mxu0 %v7476
  %v7478 = vand.u32 %v112, 4294901760
  %7479 = vmatpush.msra.mxu0 %v7478
  %v7480 = vand.u32 %v107, 4294901760
  %7481 = vmatpush.msra.mxu0 %v7480
  %v7482 = vand.u32 %v102, 4294901760
  %7483 = vmatpush.msra.mxu0 %v7482
  %v7484 = vand.u32 %v97, 4294901760
  %7485 = vmatpush.msra.mxu0 %v7484
  %v7486 = vand.u32 %v92, 4294901760
  %7487 = vmatpush.msra.mxu0 %v7486
  %v7488 = vand.u32 %v87, 4294901760
  %7489 = vmatpush.msra.mxu0 %v7488
  %v7490 = vand.u32 %v82, 4294901760
  %7491 = vmatpush.msra.mxu0 %v7490
  %v7492 = vand.u32 %v77, 4294901760
  %7493 = vmatpush.msra.mxu0 %v7492
  %v7494 = vand.u32 %v72, 4294901760
  %7495 = vmatpush.msra.mxu0 %v7494
  %v7496 = vand.u32 %v67, 4294901760
  %7497 = vmatpush.msra.mxu0 %v7496
  %v7498 = vand.u32 %v62, 4294901760
  %7499 = vmatpush.msra.mxu0 %v7498
  %v7500 = vand.u32 %v57, 4294901760
  %7501 = vmatpush.msra.mxu0 %v7500
  %v7502 = vand.u32 %v52, 4294901760
  %7503 = vmatpush.msra.mxu0 %v7502
  %v7504 = vand.u32 %v47, 4294901760
  %7505 = vmatpush.msra.mxu0 %v7504
  %v7506 = vand.u32 %v448, 4294901760
  %v7507 = vsub.f32 %v448, %v7506
  %v7508 = vand.u32 %v7507, 4294901760
  %7509 = vmatmul.f32.gmra.mxu0 %v7508
  %v7510 = vpop.f32.mrf.mxu0
  %v7511 = vadd.f32 %v7472, %v7510
  %7512 = vdwg.mxu0
  %v7513 = vand.u32 %v122, 4294901760
  %v7514 = vsub.f32 %v122, %v7513
  %v7515 = vand.u32 %v7514, 4294901760
  %7516 = vmatpush.msra.mxu0 %v7515
  %v7517 = vand.u32 %v117, 4294901760
  %v7518 = vsub.f32 %v117, %v7517
  %v7519 = vand.u32 %v7518, 4294901760
  %7520 = vmatpush.msra.mxu0 %v7519
  %v7521 = vand.u32 %v112, 4294901760
  %v7522 = vsub.f32 %v112, %v7521
  %v7523 = vand.u32 %v7522, 4294901760
  %7524 = vmatpush.msra.mxu0 %v7523
  %v7525 = vand.u32 %v107, 4294901760
  %v7526 = vsub.f32 %v107, %v7525
  %v7527 = vand.u32 %v7526, 4294901760
  %7528 = vmatpush.msra.mxu0 %v7527
  %v7529 = vand.u32 %v102, 4294901760
  %v7530 = vsub.f32 %v102, %v7529
  %v7531 = vand.u32 %v7530, 4294901760
  %7532 = vmatpush.msra.mxu0 %v7531
  %v7533 = vand.u32 %v97, 4294901760
  %v7534 = vsub.f32 %v97, %v7533
  %v7535 = vand.u32 %v7534, 4294901760
  %7536 = vmatpush.msra.mxu0 %v7535
  %v7537 = vand.u32 %v92, 4294901760
  %v7538 = vsub.f32 %v92, %v7537
  %v7539 = vand.u32 %v7538, 4294901760
  %7540 = vmatpush.msra.mxu0 %v7539
  %v7541 = vand.u32 %v87, 4294901760
  %v7542 = vsub.f32 %v87, %v7541
  %v7543 = vand.u32 %v7542, 4294901760
  %7544 = vmatpush.msra.mxu0 %v7543
  %v7545 = vand.u32 %v82, 4294901760
  %v7546 = vsub.f32 %v82, %v7545
  %v7547 = vand.u32 %v7546, 4294901760
  %7548 = vmatpush.msra.mxu0 %v7547
  %v7549 = vand.u32 %v77, 4294901760
  %v7550 = vsub.f32 %v77, %v7549
  %v7551 = vand.u32 %v7550, 4294901760
  %7552 = vmatpush.msra.mxu0 %v7551
  %v7553 = vand.u32 %v72, 4294901760
  %v7554 = vsub.f32 %v72, %v7553
  %v7555 = vand.u32 %v7554, 4294901760
  %7556 = vmatpush.msra.mxu0 %v7555
  %v7557 = vand.u32 %v67, 4294901760
  %v7558 = vsub.f32 %v67, %v7557
  %v7559 = vand.u32 %v7558, 4294901760
  %7560 = vmatpush.msra.mxu0 %v7559
  %v7561 = vand.u32 %v62, 4294901760
  %v7562 = vsub.f32 %v62, %v7561
  %v7563 = vand.u32 %v7562, 4294901760
  %7564 = vmatpush.msra.mxu0 %v7563
  %v7565 = vand.u32 %v57, 4294901760
  %v7566 = vsub.f32 %v57, %v7565
  %v7567 = vand.u32 %v7566, 4294901760
  %7568 = vmatpush.msra.mxu0 %v7567
  %v7569 = vand.u32 %v52, 4294901760
  %v7570 = vsub.f32 %v52, %v7569
  %v7571 = vand.u32 %v7570, 4294901760
  %7572 = vmatpush.msra.mxu0 %v7571
  %v7573 = vand.u32 %v47, 4294901760
  %v7574 = vsub.f32 %v47, %v7573
  %v7575 = vand.u32 %v7574, 4294901760
  %7576 = vmatpush.msra.mxu0 %v7575
  %v7577 = vand.u32 %v448, 4294901760
  %7578 = vmatmul.f32.gmra.mxu0 %v7577
  %v7579 = vpop.f32.mrf.mxu0
  %v7580 = vadd.f32 %v7511, %v7579
  %7581 = vdwg.mxu0
  %v7582 = vand.u32 %v122, 4294901760
  %7583 = vmatpush.msra.mxu0 %v7582
  %v7584 = vand.u32 %v117, 4294901760
  %7585 = vmatpush.msra.mxu0 %v7584
  %v7586 = vand.u32 %v112, 4294901760
  %7587 = vmatpush.msra.mxu0 %v7586
  %v7588 = vand.u32 %v107, 4294901760
  %7589 = vmatpush.msra.mxu0 %v7588
  %v7590 = vand.u32 %v102, 4294901760
  %7591 = vmatpush.msra.mxu0 %v7590
  %v7592 = vand.u32 %v97, 4294901760
  %7593 = vmatpush.msra.mxu0 %v7592
  %v7594 = vand.u32 %v92, 4294901760
  %7595 = vmatpush.msra.mxu0 %v7594
  %v7596 = vand.u32 %v87, 4294901760
  %7597 = vmatpush.msra.mxu0 %v7596
  %v7598 = vand.u32 %v82, 4294901760
  %7599 = vmatpush.msra.mxu0 %v7598
  %v7600 = vand.u32 %v77, 4294901760
  %7601 = vmatpush.msra.mxu0 %v7600
  %v7602 = vand.u32 %v72, 4294901760
  %7603 = vmatpush.msra.mxu0 %v7602
  %v7604 = vand.u32 %v67, 4294901760
  %7605 = vmatpush.msra.mxu0 %v7604
  %v7606 = vand.u32 %v62, 4294901760
  %7607 = vmatpush.msra.mxu0 %v7606
  %v7608 = vand.u32 %v57, 4294901760
  %7609 = vmatpush.msra.mxu0 %v7608
  %v7610 = vand.u32 %v52, 4294901760
  %7611 = vmatpush.msra.mxu0 %v7610
  %v7612 = vand.u32 %v47, 4294901760
  %7613 = vmatpush.msra.mxu0 %v7612
  %v7614 = vand.u32 %v448, 4294901760
  %7615 = vmatmul.f32.gmra.mxu0 %v7614
  %v7616 = vpop.f32.mrf.mxu0
  %v7617 = vadd.f32 %v7580, %v7616
  %7618 = vdwg.mxu0
  %v7619 = vand.u32 %v202, 4294901760
  %7620 = vmatpush.msra.mxu0 %v7619
  %v7621 = vand.u32 %v197, 4294901760
  %7622 = vmatpush.msra.mxu0 %v7621
  %v7623 = vand.u32 %v192, 4294901760
  %7624 = vmatpush.msra.mxu0 %v7623
  %v7625 = vand.u32 %v187, 4294901760
  %7626 = vmatpush.msra.mxu0 %v7625
  %v7627 = vand.u32 %v182, 4294901760
  %7628 = vmatpush.msra.mxu0 %v7627
  %v7629 = vand.u32 %v177, 4294901760
  %7630 = vmatpush.msra.mxu0 %v7629
  %v7631 = vand.u32 %v172, 4294901760
  %7632 = vmatpush.msra.mxu0 %v7631
  %v7633 = vand.u32 %v167, 4294901760
  %7634 = vmatpush.msra.mxu0 %v7633
  %v7635 = vand.u32 %v162, 4294901760
  %7636 = vmatpush.msra.mxu0 %v7635
  %v7637 = vand.u32 %v157, 4294901760
  %7638 = vmatpush.msra.mxu0 %v7637
  %v7639 = vand.u32 %v152, 4294901760
  %7640 = vmatpush.msra.mxu0 %v7639
  %v7641 = vand.u32 %v147, 4294901760
  %7642 = vmatpush.msra.mxu0 %v7641
  %v7643 = vand.u32 %v142, 4294901760
  %7644 = vmatpush.msra.mxu0 %v7643
  %v7645 = vand.u32 %v137, 4294901760
  %7646 = vmatpush.msra.mxu0 %v7645
  %v7647 = vand.u32 %v132, 4294901760
  %7648 = vmatpush.msra.mxu0 %v7647
  %v7649 = vand.u32 %v127, 4294901760
  %7650 = vmatpush.msra.mxu0 %v7649
  %v7651 = vand.u32 %v449, 4294901760
  %v7652 = vsub.f32 %v449, %v7651
  %v7653 = vand.u32 %v7652, 4294901760
  %v7654 = vsub.f32 %v7652, %v7653
  %v7655 = vand.u32 %v7654, 4294901760
  %7656 = vmatmul.f32.gmra.mxu0 %v7655
  %v7657 = vpop.f32.mrf.mxu0
  %v7658 = vadd.f32 %v7617, %v7657
  %7659 = vdwg.mxu0
  %v7660 = vand.u32 %v202, 4294901760
  %v7661 = vsub.f32 %v202, %v7660
  %v7662 = vand.u32 %v7661, 4294901760
  %v7663 = vsub.f32 %v7661, %v7662
  %v7664 = vand.u32 %v7663, 4294901760
  %7665 = vmatpush.msra.mxu0 %v7664
  %v7666 = vand.u32 %v197, 4294901760
  %v7667 = vsub.f32 %v197, %v7666
  %v7668 = vand.u32 %v7667, 4294901760
  %v7669 = vsub.f32 %v7667, %v7668
  %v7670 = vand.u32 %v7669, 4294901760
  %7671 = vmatpush.msra.mxu0 %v7670
  %v7672 = vand.u32 %v192, 4294901760
  %v7673 = vsub.f32 %v192, %v7672
  %v7674 = vand.u32 %v7673, 4294901760
  %v7675 = vsub.f32 %v7673, %v7674
  %v7676 = vand.u32 %v7675, 4294901760
  %7677 = vmatpush.msra.mxu0 %v7676
  %v7678 = vand.u32 %v187, 4294901760
  %v7679 = vsub.f32 %v187, %v7678
  %v7680 = vand.u32 %v7679, 4294901760
  %v7681 = vsub.f32 %v7679, %v7680
  %v7682 = vand.u32 %v7681, 4294901760
  %7683 = vmatpush.msra.mxu0 %v7682
  %v7684 = vand.u32 %v182, 4294901760
  %v7685 = vsub.f32 %v182, %v7684
  %v7686 = vand.u32 %v7685, 4294901760
  %v7687 = vsub.f32 %v7685, %v7686
  %v7688 = vand.u32 %v7687, 4294901760
  %7689 = vmatpush.msra.mxu0 %v7688
  %v7690 = vand.u32 %v177, 4294901760
  %v7691 = vsub.f32 %v177, %v7690
  %v7692 = vand.u32 %v7691, 4294901760
  %v7693 = vsub.f32 %v7691, %v7692
  %v7694 = vand.u32 %v7693, 4294901760
  %7695 = vmatpush.msra.mxu0 %v7694
  %v7696 = vand.u32 %v172, 4294901760
  %v7697 = vsub.f32 %v172, %v7696
  %v7698 = vand.u32 %v7697, 4294901760
  %v7699 = vsub.f32 %v7697, %v7698
  %v7700 = vand.u32 %v7699, 4294901760
  %7701 = vmatpush.msra.mxu0 %v7700
  %v7702 = vand.u32 %v167, 4294901760
  %v7703 = vsub.f32 %v167, %v7702
  %v7704 = vand.u32 %v7703, 4294901760
  %v7705 = vsub.f32 %v7703, %v7704
  %v7706 = vand.u32 %v7705, 4294901760
  %7707 = vmatpush.msra.mxu0 %v7706
  %v7708 = vand.u32 %v162, 4294901760
  %v7709 = vsub.f32 %v162, %v7708
  %v7710 = vand.u32 %v7709, 4294901760
  %v7711 = vsub.f32 %v7709, %v7710
  %v7712 = vand.u32 %v7711, 4294901760
  %7713 = vmatpush.msra.mxu0 %v7712
  %v7714 = vand.u32 %v157, 4294901760
  %v7715 = vsub.f32 %v157, %v7714
  %v7716 = vand.u32 %v7715, 4294901760
  %v7717 = vsub.f32 %v7715, %v7716
  %v7718 = vand.u32 %v7717, 4294901760
  %7719 = vmatpush.msra.mxu0 %v7718
  %v7720 = vand.u32 %v152, 4294901760
  %v7721 = vsub.f32 %v152, %v7720
  %v7722 = vand.u32 %v7721, 4294901760
  %v7723 = vsub.f32 %v7721, %v7722
  %v7724 = vand.u32 %v7723, 4294901760
  %7725 = vmatpush.msra.mxu0 %v7724
  %v7726 = vand.u32 %v147, 4294901760
  %v7727 = vsub.f32 %v147, %v7726
  %v7728 = vand.u32 %v7727, 4294901760
  %v7729 = vsub.f32 %v7727, %v7728
  %v7730 = vand.u32 %v7729, 4294901760
  %7731 = vmatpush.msra.mxu0 %v7730
  %v7732 = vand.u32 %v142, 4294901760
  %v7733 = vsub.f32 %v142, %v7732
  %v7734 = vand.u32 %v7733, 4294901760
  %v7735 = vsub.f32 %v7733, %v7734
  %v7736 = vand.u32 %v7735, 4294901760
  %7737 = vmatpush.msra.mxu0 %v7736
  %v7738 = vand.u32 %v137, 4294901760
  %v7739 = vsub.f32 %v137, %v7738
  %v7740 = vand.u32 %v7739, 4294901760
  %v7741 = vsub.f32 %v7739, %v7740
  %v7742 = vand.u32 %v7741, 4294901760
  %7743 = vmatpush.msra.mxu0 %v7742
  %v7744 = vand.u32 %v132, 4294901760
  %v7745 = vsub.f32 %v132, %v7744
  %v7746 = vand.u32 %v7745, 4294901760
  %v7747 = vsub.f32 %v7745, %v7746
  %v7748 = vand.u32 %v7747, 4294901760
  %7749 = vmatpush.msra.mxu0 %v7748
  %v7750 = vand.u32 %v127, 4294901760
  %v7751 = vsub.f32 %v127, %v7750
  %v7752 = vand.u32 %v7751, 4294901760
  %v7753 = vsub.f32 %v7751, %v7752
  %v7754 = vand.u32 %v7753, 4294901760
  %7755 = vmatpush.msra.mxu0 %v7754
  %v7756 = vand.u32 %v449, 4294901760
  %7757 = vmatmul.f32.gmra.mxu0 %v7756
  %v7758 = vpop.f32.mrf.mxu0
  %v7759 = vadd.f32 %v7658, %v7758
  %7760 = vdwg.mxu0
  %v7761 = vand.u32 %v202, 4294901760
  %v7762 = vsub.f32 %v202, %v7761
  %7763 = vmatpush.msra.mxu0 %v7762
  %v7764 = vand.u32 %v197, 4294901760
  %v7765 = vsub.f32 %v197, %v7764
  %7766 = vmatpush.msra.mxu0 %v7765
  %v7767 = vand.u32 %v192, 4294901760
  %v7768 = vsub.f32 %v192, %v7767
  %7769 = vmatpush.msra.mxu0 %v7768
  %v7770 = vand.u32 %v187, 4294901760
  %v7771 = vsub.f32 %v187, %v7770
  %7772 = vmatpush.msra.mxu0 %v7771
  %v7773 = vand.u32 %v182, 4294901760
  %v7774 = vsub.f32 %v182, %v7773
  %7775 = vmatpush.msra.mxu0 %v7774
  %v7776 = vand.u32 %v177, 4294901760
  %v7777 = vsub.f32 %v177, %v7776
  %7778 = vmatpush.msra.mxu0 %v7777
  %v7779 = vand.u32 %v172, 4294901760
  %v7780 = vsub.f32 %v172, %v7779
  %7781 = vmatpush.msra.mxu0 %v7780
  %v7782 = vand.u32 %v167, 4294901760
  %v7783 = vsub.f32 %v167, %v7782
  %7784 = vmatpush.msra.mxu0 %v7783
  %v7785 = vand.u32 %v162, 4294901760
  %v7786 = vsub.f32 %v162, %v7785
  %7787 = vmatpush.msra.mxu0 %v7786
  %v7788 = vand.u32 %v157, 4294901760
  %v7789 = vsub.f32 %v157, %v7788
  %7790 = vmatpush.msra.mxu0 %v7789
  %v7791 = vand.u32 %v152, 4294901760
  %v7792 = vsub.f32 %v152, %v7791
  %7793 = vmatpush.msra.mxu0 %v7792
  %v7794 = vand.u32 %v147, 4294901760
  %v7795 = vsub.f32 %v147, %v7794
  %7796 = vmatpush.msra.mxu0 %v7795
  %v7797 = vand.u32 %v142, 4294901760
  %v7798 = vsub.f32 %v142, %v7797
  %7799 = vmatpush.msra.mxu0 %v7798
  %v7800 = vand.u32 %v137, 4294901760
  %v7801 = vsub.f32 %v137, %v7800
  %7802 = vmatpush.msra.mxu0 %v7801
  %v7803 = vand.u32 %v132, 4294901760
  %v7804 = vsub.f32 %v132, %v7803
  %7805 = vmatpush.msra.mxu0 %v7804
  %v7806 = vand.u32 %v127, 4294901760
  %v7807 = vsub.f32 %v127, %v7806
  %7808 = vmatpush.msra.mxu0 %v7807
  %v7809 = vand.u32 %v449, 4294901760
  %v7810 = vsub.f32 %v449, %v7809
  %7811 = vmatmul.f32.gmra.mxu0 %v7810
  %v7812 = vpop.f32.mrf.mxu0
  %v7813 = vadd.f32 %v7759, %v7812
  %7814 = vdwg.mxu0
  %v7815 = vand.u32 %v202, 4294901760
  %7816 = vmatpush.msra.mxu0 %v7815
  %v7817 = vand.u32 %v197, 4294901760
  %7818 = vmatpush.msra.mxu0 %v7817
  %v7819 = vand.u32 %v192, 4294901760
  %7820 = vmatpush.msra.mxu0 %v7819
  %v7821 = vand.u32 %v187, 4294901760
  %7822 = vmatpush.msra.mxu0 %v7821
  %v7823 = vand.u32 %v182, 4294901760
  %7824 = vmatpush.msra.mxu0 %v7823
  %v7825 = vand.u32 %v177, 4294901760
  %7826 = vmatpush.msra.mxu0 %v7825
  %v7827 = vand.u32 %v172, 4294901760
  %7828 = vmatpush.msra.mxu0 %v7827
  %v7829 = vand.u32 %v167, 4294901760
  %7830 = vmatpush.msra.mxu0 %v7829
  %v7831 = vand.u32 %v162, 4294901760
  %7832 = vmatpush.msra.mxu0 %v7831
  %v7833 = vand.u32 %v157, 4294901760
  %7834 = vmatpush.msra.mxu0 %v7833
  %v7835 = vand.u32 %v152, 4294901760
  %7836 = vmatpush.msra.mxu0 %v7835
  %v7837 = vand.u32 %v147, 4294901760
  %7838 = vmatpush.msra.mxu0 %v7837
  %v7839 = vand.u32 %v142, 4294901760
  %7840 = vmatpush.msra.mxu0 %v7839
  %v7841 = vand.u32 %v137, 4294901760
  %7842 = vmatpush.msra.mxu0 %v7841
  %v7843 = vand.u32 %v132, 4294901760
  %7844 = vmatpush.msra.mxu0 %v7843
  %v7845 = vand.u32 %v127, 4294901760
  %7846 = vmatpush.msra.mxu0 %v7845
  %v7847 = vand.u32 %v449, 4294901760
  %v7848 = vsub.f32 %v449, %v7847
  %v7849 = vand.u32 %v7848, 4294901760
  %7850 = vmatmul.f32.gmra.mxu0 %v7849
  %v7851 = vpop.f32.mrf.mxu0
  %v7852 = vadd.f32 %v7813, %v7851
  %7853 = vdwg.mxu0
  %v7854 = vand.u32 %v202, 4294901760
  %v7855 = vsub.f32 %v202, %v7854
  %v7856 = vand.u32 %v7855, 4294901760
  %7857 = vmatpush.msra.mxu0 %v7856
  %v7858 = vand.u32 %v197, 4294901760
  %v7859 = vsub.f32 %v197, %v7858
  %v7860 = vand.u32 %v7859, 4294901760
  %7861 = vmatpush.msra.mxu0 %v7860
  %v7862 = vand.u32 %v192, 4294901760
  %v7863 = vsub.f32 %v192, %v7862
  %v7864 = vand.u32 %v7863, 4294901760
  %7865 = vmatpush.msra.mxu0 %v7864
  %v7866 = vand.u32 %v187, 4294901760
  %v7867 = vsub.f32 %v187, %v7866
  %v7868 = vand.u32 %v7867, 4294901760
  %7869 = vmatpush.msra.mxu0 %v7868
  %v7870 = vand.u32 %v182, 4294901760
  %v7871 = vsub.f32 %v182, %v7870
  %v7872 = vand.u32 %v7871, 4294901760
  %7873 = vmatpush.msra.mxu0 %v7872
  %v7874 = vand.u32 %v177, 4294901760
  %v7875 = vsub.f32 %v177, %v7874
  %v7876 = vand.u32 %v7875, 4294901760
  %7877 = vmatpush.msra.mxu0 %v7876
  %v7878 = vand.u32 %v172, 4294901760
  %v7879 = vsub.f32 %v172, %v7878
  %v7880 = vand.u32 %v7879, 4294901760
  %7881 = vmatpush.msra.mxu0 %v7880
  %v7882 = vand.u32 %v167, 4294901760
  %v7883 = vsub.f32 %v167, %v7882
  %v7884 = vand.u32 %v7883, 4294901760
  %7885 = vmatpush.msra.mxu0 %v7884
  %v7886 = vand.u32 %v162, 4294901760
  %v7887 = vsub.f32 %v162, %v7886
  %v7888 = vand.u32 %v7887, 4294901760
  %7889 = vmatpush.msra.mxu0 %v7888
  %v7890 = vand.u32 %v157, 4294901760
  %v7891 = vsub.f32 %v157, %v7890
  %v7892 = vand.u32 %v7891, 4294901760
  %7893 = vmatpush.msra.mxu0 %v7892
  %v7894 = vand.u32 %v152, 4294901760
  %v7895 = vsub.f32 %v152, %v7894
  %v7896 = vand.u32 %v7895, 4294901760
  %7897 = vmatpush.msra.mxu0 %v7896
  %v7898 = vand.u32 %v147, 4294901760
  %v7899 = vsub.f32 %v147, %v7898
  %v7900 = vand.u32 %v7899, 4294901760
  %7901 = vmatpush.msra.mxu0 %v7900
  %v7902 = vand.u32 %v142, 4294901760
  %v7903 = vsub.f32 %v142, %v7902
  %v7904 = vand.u32 %v7903, 4294901760
  %7905 = vmatpush.msra.mxu0 %v7904
  %v7906 = vand.u32 %v137, 4294901760
  %v7907 = vsub.f32 %v137, %v7906
  %v7908 = vand.u32 %v7907, 4294901760
  %7909 = vmatpush.msra.mxu0 %v7908
  %v7910 = vand.u32 %v132, 4294901760
  %v7911 = vsub.f32 %v132, %v7910
  %v7912 = vand.u32 %v7911, 4294901760
  %7913 = vmatpush.msra.mxu0 %v7912
  %v7914 = vand.u32 %v127, 4294901760
  %v7915 = vsub.f32 %v127, %v7914
  %v7916 = vand.u32 %v7915, 4294901760
  %7917 = vmatpush.msra.mxu0 %v7916
  %v7918 = vand.u32 %v449, 4294901760
  %7919 = vmatmul.f32.gmra.mxu0 %v7918
  %v7920 = vpop.f32.mrf.mxu0
  %v7921 = vadd.f32 %v7852, %v7920
  %7922 = vdwg.mxu0
  %v7923 = vand.u32 %v202, 4294901760
  %7924 = vmatpush.msra.mxu0 %v7923
  %v7925 = vand.u32 %v197, 4294901760
  %7926 = vmatpush.msra.mxu0 %v7925
  %v7927 = vand.u32 %v192, 4294901760
  %7928 = vmatpush.msra.mxu0 %v7927
  %v7929 = vand.u32 %v187, 4294901760
  %7930 = vmatpush.msra.mxu0 %v7929
  %v7931 = vand.u32 %v182, 4294901760
  %7932 = vmatpush.msra.mxu0 %v7931
  %v7933 = vand.u32 %v177, 4294901760
  %7934 = vmatpush.msra.mxu0 %v7933
  %v7935 = vand.u32 %v172, 4294901760
  %7936 = vmatpush.msra.mxu0 %v7935
  %v7937 = vand.u32 %v167, 4294901760
  %7938 = vmatpush.msra.mxu0 %v7937
  %v7939 = vand.u32 %v162, 4294901760
  %7940 = vmatpush.msra.mxu0 %v7939
  %v7941 = vand.u32 %v157, 4294901760
  %7942 = vmatpush.msra.mxu0 %v7941
  %v7943 = vand.u32 %v152, 4294901760
  %7944 = vmatpush.msra.mxu0 %v7943
  %v7945 = vand.u32 %v147, 4294901760
  %7946 = vmatpush.msra.mxu0 %v7945
  %v7947 = vand.u32 %v142, 4294901760
  %7948 = vmatpush.msra.mxu0 %v7947
  %v7949 = vand.u32 %v137, 4294901760
  %7950 = vmatpush.msra.mxu0 %v7949
  %v7951 = vand.u32 %v132, 4294901760
  %7952 = vmatpush.msra.mxu0 %v7951
  %v7953 = vand.u32 %v127, 4294901760
  %7954 = vmatpush.msra.mxu0 %v7953
  %v7955 = vand.u32 %v449, 4294901760
  %7956 = vmatmul.f32.gmra.mxu0 %v7955
  %v7957 = vpop.f32.mrf.mxu0
  %v7958 = vadd.f32 %v7921, %v7957
  %7959 = vdwg.mxu0
  %v7960 = vand.u32 %v282, 4294901760
  %7961 = vmatpush.msra.mxu0 %v7960
  %v7962 = vand.u32 %v277, 4294901760
  %7963 = vmatpush.msra.mxu0 %v7962
  %v7964 = vand.u32 %v272, 4294901760
  %7965 = vmatpush.msra.mxu0 %v7964
  %v7966 = vand.u32 %v267, 4294901760
  %7967 = vmatpush.msra.mxu0 %v7966
  %v7968 = vand.u32 %v262, 4294901760
  %7969 = vmatpush.msra.mxu0 %v7968
  %v7970 = vand.u32 %v257, 4294901760
  %7971 = vmatpush.msra.mxu0 %v7970
  %v7972 = vand.u32 %v252, 4294901760
  %7973 = vmatpush.msra.mxu0 %v7972
  %v7974 = vand.u32 %v247, 4294901760
  %7975 = vmatpush.msra.mxu0 %v7974
  %v7976 = vand.u32 %v242, 4294901760
  %7977 = vmatpush.msra.mxu0 %v7976
  %v7978 = vand.u32 %v237, 4294901760
  %7979 = vmatpush.msra.mxu0 %v7978
  %v7980 = vand.u32 %v232, 4294901760
  %7981 = vmatpush.msra.mxu0 %v7980
  %v7982 = vand.u32 %v227, 4294901760
  %7983 = vmatpush.msra.mxu0 %v7982
  %v7984 = vand.u32 %v222, 4294901760
  %7985 = vmatpush.msra.mxu0 %v7984
  %v7986 = vand.u32 %v217, 4294901760
  %7987 = vmatpush.msra.mxu0 %v7986
  %v7988 = vand.u32 %v212, 4294901760
  %7989 = vmatpush.msra.mxu0 %v7988
  %v7990 = vand.u32 %v207, 4294901760
  %7991 = vmatpush.msra.mxu0 %v7990
  %v7992 = vand.u32 %v450, 4294901760
  %v7993 = vsub.f32 %v450, %v7992
  %v7994 = vand.u32 %v7993, 4294901760
  %v7995 = vsub.f32 %v7993, %v7994
  %v7996 = vand.u32 %v7995, 4294901760
  %7997 = vmatmul.f32.gmra.mxu0 %v7996
  %v7998 = vpop.f32.mrf.mxu0
  %v7999 = vadd.f32 %v7958, %v7998
  %8000 = vdwg.mxu0
  %v8001 = vand.u32 %v282, 4294901760
  %v8002 = vsub.f32 %v282, %v8001
  %v8003 = vand.u32 %v8002, 4294901760
  %v8004 = vsub.f32 %v8002, %v8003
  %v8005 = vand.u32 %v8004, 4294901760
  %8006 = vmatpush.msra.mxu0 %v8005
  %v8007 = vand.u32 %v277, 4294901760
  %v8008 = vsub.f32 %v277, %v8007
  %v8009 = vand.u32 %v8008, 4294901760
  %v8010 = vsub.f32 %v8008, %v8009
  %v8011 = vand.u32 %v8010, 4294901760
  %8012 = vmatpush.msra.mxu0 %v8011
  %v8013 = vand.u32 %v272, 4294901760
  %v8014 = vsub.f32 %v272, %v8013
  %v8015 = vand.u32 %v8014, 4294901760
  %v8016 = vsub.f32 %v8014, %v8015
  %v8017 = vand.u32 %v8016, 4294901760
  %8018 = vmatpush.msra.mxu0 %v8017
  %v8019 = vand.u32 %v267, 4294901760
  %v8020 = vsub.f32 %v267, %v8019
  %v8021 = vand.u32 %v8020, 4294901760
  %v8022 = vsub.f32 %v8020, %v8021
  %v8023 = vand.u32 %v8022, 4294901760
  %8024 = vmatpush.msra.mxu0 %v8023
  %v8025 = vand.u32 %v262, 4294901760
  %v8026 = vsub.f32 %v262, %v8025
  %v8027 = vand.u32 %v8026, 4294901760
  %v8028 = vsub.f32 %v8026, %v8027
  %v8029 = vand.u32 %v8028, 4294901760
  %8030 = vmatpush.msra.mxu0 %v8029
  %v8031 = vand.u32 %v257, 4294901760
  %v8032 = vsub.f32 %v257, %v8031
  %v8033 = vand.u32 %v8032, 4294901760
  %v8034 = vsub.f32 %v8032, %v8033
  %v8035 = vand.u32 %v8034, 4294901760
  %8036 = vmatpush.msra.mxu0 %v8035
  %v8037 = vand.u32 %v252, 4294901760
  %v8038 = vsub.f32 %v252, %v8037
  %v8039 = vand.u32 %v8038, 4294901760
  %v8040 = vsub.f32 %v8038, %v8039
  %v8041 = vand.u32 %v8040, 4294901760
  %8042 = vmatpush.msra.mxu0 %v8041
  %v8043 = vand.u32 %v247, 4294901760
  %v8044 = vsub.f32 %v247, %v8043
  %v8045 = vand.u32 %v8044, 4294901760
  %v8046 = vsub.f32 %v8044, %v8045
  %v8047 = vand.u32 %v8046, 4294901760
  %8048 = vmatpush.msra.mxu0 %v8047
  %v8049 = vand.u32 %v242, 4294901760
  %v8050 = vsub.f32 %v242, %v8049
  %v8051 = vand.u32 %v8050, 4294901760
  %v8052 = vsub.f32 %v8050, %v8051
  %v8053 = vand.u32 %v8052, 4294901760
  %8054 = vmatpush.msra.mxu0 %v8053
  %v8055 = vand.u32 %v237, 4294901760
  %v8056 = vsub.f32 %v237, %v8055
  %v8057 = vand.u32 %v8056, 4294901760
  %v8058 = vsub.f32 %v8056, %v8057
  %v8059 = vand.u32 %v8058, 4294901760
  %8060 = vmatpush.msra.mxu0 %v8059
  %v8061 = vand.u32 %v232, 4294901760
  %v8062 = vsub.f32 %v232, %v8061
  %v8063 = vand.u32 %v8062, 4294901760
  %v8064 = vsub.f32 %v8062, %v8063
  %v8065 = vand.u32 %v8064, 4294901760
  %8066 = vmatpush.msra.mxu0 %v8065
  %v8067 = vand.u32 %v227, 4294901760
  %v8068 = vsub.f32 %v227, %v8067
  %v8069 = vand.u32 %v8068, 4294901760
  %v8070 = vsub.f32 %v8068, %v8069
  %v8071 = vand.u32 %v8070, 4294901760
  %8072 = vmatpush.msra.mxu0 %v8071
  %v8073 = vand.u32 %v222, 4294901760
  %v8074 = vsub.f32 %v222, %v8073
  %v8075 = vand.u32 %v8074, 4294901760
  %v8076 = vsub.f32 %v8074, %v8075
  %v8077 = vand.u32 %v8076, 4294901760
  %8078 = vmatpush.msra.mxu0 %v8077
  %v8079 = vand.u32 %v217, 4294901760
  %v8080 = vsub.f32 %v217, %v8079
  %v8081 = vand.u32 %v8080, 4294901760
  %v8082 = vsub.f32 %v8080, %v8081
  %v8083 = vand.u32 %v8082, 4294901760
  %8084 = vmatpush.msra.mxu0 %v8083
  %v8085 = vand.u32 %v212, 4294901760
  %v8086 = vsub.f32 %v212, %v8085
  %v8087 = vand.u32 %v8086, 4294901760
  %v8088 = vsub.f32 %v8086, %v8087
  %v8089 = vand.u32 %v8088, 4294901760
  %8090 = vmatpush.msra.mxu0 %v8089
  %v8091 = vand.u32 %v207, 4294901760
  %v8092 = vsub.f32 %v207, %v8091
  %v8093 = vand.u32 %v8092, 4294901760
  %v8094 = vsub.f32 %v8092, %v8093
  %v8095 = vand.u32 %v8094, 4294901760
  %8096 = vmatpush.msra.mxu0 %v8095
  %v8097 = vand.u32 %v450, 4294901760
  %8098 = vmatmul.f32.gmra.mxu0 %v8097
  %v8099 = vpop.f32.mrf.mxu0
  %v8100 = vadd.f32 %v7999, %v8099
  %8101 = vdwg.mxu0
  %v8102 = vand.u32 %v282, 4294901760
  %v8103 = vsub.f32 %v282, %v8102
  %8104 = vmatpush.msra.mxu0 %v8103
  %v8105 = vand.u32 %v277, 4294901760
  %v8106 = vsub.f32 %v277, %v8105
  %8107 = vmatpush.msra.mxu0 %v8106
  %v8108 = vand.u32 %v272, 4294901760
  %v8109 = vsub.f32 %v272, %v8108
  %8110 = vmatpush.msra.mxu0 %v8109
  %v8111 = vand.u32 %v267, 4294901760
  %v8112 = vsub.f32 %v267, %v8111
  %8113 = vmatpush.msra.mxu0 %v8112
  %v8114 = vand.u32 %v262, 4294901760
  %v8115 = vsub.f32 %v262, %v8114
  %8116 = vmatpush.msra.mxu0 %v8115
  %v8117 = vand.u32 %v257, 4294901760
  %v8118 = vsub.f32 %v257, %v8117
  %8119 = vmatpush.msra.mxu0 %v8118
  %v8120 = vand.u32 %v252, 4294901760
  %v8121 = vsub.f32 %v252, %v8120
  %8122 = vmatpush.msra.mxu0 %v8121
  %v8123 = vand.u32 %v247, 4294901760
  %v8124 = vsub.f32 %v247, %v8123
  %8125 = vmatpush.msra.mxu0 %v8124
  %v8126 = vand.u32 %v242, 4294901760
  %v8127 = vsub.f32 %v242, %v8126
  %8128 = vmatpush.msra.mxu0 %v8127
  %v8129 = vand.u32 %v237, 4294901760
  %v8130 = vsub.f32 %v237, %v8129
  %8131 = vmatpush.msra.mxu0 %v8130
  %v8132 = vand.u32 %v232, 4294901760
  %v8133 = vsub.f32 %v232, %v8132
  %8134 = vmatpush.msra.mxu0 %v8133
  %v8135 = vand.u32 %v227, 4294901760
  %v8136 = vsub.f32 %v227, %v8135
  %8137 = vmatpush.msra.mxu0 %v8136
  %v8138 = vand.u32 %v222, 4294901760
  %v8139 = vsub.f32 %v222, %v8138
  %8140 = vmatpush.msra.mxu0 %v8139
  %v8141 = vand.u32 %v217, 4294901760
  %v8142 = vsub.f32 %v217, %v8141
  %8143 = vmatpush.msra.mxu0 %v8142
  %v8144 = vand.u32 %v212, 4294901760
  %v8145 = vsub.f32 %v212, %v8144
  %8146 = vmatpush.msra.mxu0 %v8145
  %v8147 = vand.u32 %v207, 4294901760
  %v8148 = vsub.f32 %v207, %v8147
  %8149 = vmatpush.msra.mxu0 %v8148
  %v8150 = vand.u32 %v450, 4294901760
  %v8151 = vsub.f32 %v450, %v8150
  %8152 = vmatmul.f32.gmra.mxu0 %v8151
  %v8153 = vpop.f32.mrf.mxu0
  %v8154 = vadd.f32 %v8100, %v8153
  %8155 = vdwg.mxu0
  %v8156 = vand.u32 %v282, 4294901760
  %8157 = vmatpush.msra.mxu0 %v8156
  %v8158 = vand.u32 %v277, 4294901760
  %8159 = vmatpush.msra.mxu0 %v8158
  %v8160 = vand.u32 %v272, 4294901760
  %8161 = vmatpush.msra.mxu0 %v8160
  %v8162 = vand.u32 %v267, 4294901760
  %8163 = vmatpush.msra.mxu0 %v8162
  %v8164 = vand.u32 %v262, 4294901760
  %8165 = vmatpush.msra.mxu0 %v8164
  %v8166 = vand.u32 %v257, 4294901760
  %8167 = vmatpush.msra.mxu0 %v8166
  %v8168 = vand.u32 %v252, 4294901760
  %8169 = vmatpush.msra.mxu0 %v8168
  %v8170 = vand.u32 %v247, 4294901760
  %8171 = vmatpush.msra.mxu0 %v8170
  %v8172 = vand.u32 %v242, 4294901760
  %8173 = vmatpush.msra.mxu0 %v8172
  %v8174 = vand.u32 %v237, 4294901760
  %8175 = vmatpush.msra.mxu0 %v8174
  %v8176 = vand.u32 %v232, 4294901760
  %8177 = vmatpush.msra.mxu0 %v8176
  %v8178 = vand.u32 %v227, 4294901760
  %8179 = vmatpush.msra.mxu0 %v8178
  %v8180 = vand.u32 %v222, 4294901760
  %8181 = vmatpush.msra.mxu0 %v8180
  %v8182 = vand.u32 %v217, 4294901760
  %8183 = vmatpush.msra.mxu0 %v8182
  %v8184 = vand.u32 %v212, 4294901760
  %8185 = vmatpush.msra.mxu0 %v8184
  %v8186 = vand.u32 %v207, 4294901760
  %8187 = vmatpush.msra.mxu0 %v8186
  %v8188 = vand.u32 %v450, 4294901760
  %v8189 = vsub.f32 %v450, %v8188
  %v8190 = vand.u32 %v8189, 4294901760
  %8191 = vmatmul.f32.gmra.mxu0 %v8190
  %v8192 = vpop.f32.mrf.mxu0
  %v8193 = vadd.f32 %v8154, %v8192
  %8194 = vdwg.mxu0
  %v8195 = vand.u32 %v282, 4294901760
  %v8196 = vsub.f32 %v282, %v8195
  %v8197 = vand.u32 %v8196, 4294901760
  %8198 = vmatpush.msra.mxu0 %v8197
  %v8199 = vand.u32 %v277, 4294901760
  %v8200 = vsub.f32 %v277, %v8199
  %v8201 = vand.u32 %v8200, 4294901760
  %8202 = vmatpush.msra.mxu0 %v8201
  %v8203 = vand.u32 %v272, 4294901760
  %v8204 = vsub.f32 %v272, %v8203
  %v8205 = vand.u32 %v8204, 4294901760
  %8206 = vmatpush.msra.mxu0 %v8205
  %v8207 = vand.u32 %v267, 4294901760
  %v8208 = vsub.f32 %v267, %v8207
  %v8209 = vand.u32 %v8208, 4294901760
  %8210 = vmatpush.msra.mxu0 %v8209
  %v8211 = vand.u32 %v262, 4294901760
  %v8212 = vsub.f32 %v262, %v8211
  %v8213 = vand.u32 %v8212, 4294901760
  %8214 = vmatpush.msra.mxu0 %v8213
  %v8215 = vand.u32 %v257, 4294901760
  %v8216 = vsub.f32 %v257, %v8215
  %v8217 = vand.u32 %v8216, 4294901760
  %8218 = vmatpush.msra.mxu0 %v8217
  %v8219 = vand.u32 %v252, 4294901760
  %v8220 = vsub.f32 %v252, %v8219
  %v8221 = vand.u32 %v8220, 4294901760
  %8222 = vmatpush.msra.mxu0 %v8221
  %v8223 = vand.u32 %v247, 4294901760
  %v8224 = vsub.f32 %v247, %v8223
  %v8225 = vand.u32 %v8224, 4294901760
  %8226 = vmatpush.msra.mxu0 %v8225
  %v8227 = vand.u32 %v242, 4294901760
  %v8228 = vsub.f32 %v242, %v8227
  %v8229 = vand.u32 %v8228, 4294901760
  %8230 = vmatpush.msra.mxu0 %v8229
  %v8231 = vand.u32 %v237, 4294901760
  %v8232 = vsub.f32 %v237, %v8231
  %v8233 = vand.u32 %v8232, 4294901760
  %8234 = vmatpush.msra.mxu0 %v8233
  %v8235 = vand.u32 %v232, 4294901760
  %v8236 = vsub.f32 %v232, %v8235
  %v8237 = vand.u32 %v8236, 4294901760
  %8238 = vmatpush.msra.mxu0 %v8237
  %v8239 = vand.u32 %v227, 4294901760
  %v8240 = vsub.f32 %v227, %v8239
  %v8241 = vand.u32 %v8240, 4294901760
  %8242 = vmatpush.msra.mxu0 %v8241
  %v8243 = vand.u32 %v222, 4294901760
  %v8244 = vsub.f32 %v222, %v8243
  %v8245 = vand.u32 %v8244, 4294901760
  %8246 = vmatpush.msra.mxu0 %v8245
  %v8247 = vand.u32 %v217, 4294901760
  %v8248 = vsub.f32 %v217, %v8247
  %v8249 = vand.u32 %v8248, 4294901760
  %8250 = vmatpush.msra.mxu0 %v8249
  %v8251 = vand.u32 %v212, 4294901760
  %v8252 = vsub.f32 %v212, %v8251
  %v8253 = vand.u32 %v8252, 4294901760
  %8254 = vmatpush.msra.mxu0 %v8253
  %v8255 = vand.u32 %v207, 4294901760
  %v8256 = vsub.f32 %v207, %v8255
  %v8257 = vand.u32 %v8256, 4294901760
  %8258 = vmatpush.msra.mxu0 %v8257
  %v8259 = vand.u32 %v450, 4294901760
  %8260 = vmatmul.f32.gmra.mxu0 %v8259
  %v8261 = vpop.f32.mrf.mxu0
  %v8262 = vadd.f32 %v8193, %v8261
  %8263 = vdwg.mxu0
  %v8264 = vand.u32 %v282, 4294901760
  %8265 = vmatpush.msra.mxu0 %v8264
  %v8266 = vand.u32 %v277, 4294901760
  %8267 = vmatpush.msra.mxu0 %v8266
  %v8268 = vand.u32 %v272, 4294901760
  %8269 = vmatpush.msra.mxu0 %v8268
  %v8270 = vand.u32 %v267, 4294901760
  %8271 = vmatpush.msra.mxu0 %v8270
  %v8272 = vand.u32 %v262, 4294901760
  %8273 = vmatpush.msra.mxu0 %v8272
  %v8274 = vand.u32 %v257, 4294901760
  %8275 = vmatpush.msra.mxu0 %v8274
  %v8276 = vand.u32 %v252, 4294901760
  %8277 = vmatpush.msra.mxu0 %v8276
  %v8278 = vand.u32 %v247, 4294901760
  %8279 = vmatpush.msra.mxu0 %v8278
  %v8280 = vand.u32 %v242, 4294901760
  %8281 = vmatpush.msra.mxu0 %v8280
  %v8282 = vand.u32 %v237, 4294901760
  %8283 = vmatpush.msra.mxu0 %v8282
  %v8284 = vand.u32 %v232, 4294901760
  %8285 = vmatpush.msra.mxu0 %v8284
  %v8286 = vand.u32 %v227, 4294901760
  %8287 = vmatpush.msra.mxu0 %v8286
  %v8288 = vand.u32 %v222, 4294901760
  %8289 = vmatpush.msra.mxu0 %v8288
  %v8290 = vand.u32 %v217, 4294901760
  %8291 = vmatpush.msra.mxu0 %v8290
  %v8292 = vand.u32 %v212, 4294901760
  %8293 = vmatpush.msra.mxu0 %v8292
  %v8294 = vand.u32 %v207, 4294901760
  %8295 = vmatpush.msra.mxu0 %v8294
  %v8296 = vand.u32 %v450, 4294901760
  %8297 = vmatmul.f32.gmra.mxu0 %v8296
  %v8298 = vpop.f32.mrf.mxu0
  %v8299 = vadd.f32 %v8262, %v8298
  %8300 = vdwg.mxu0
  %v8301 = vand.u32 %v362, 4294901760
  %8302 = vmatpush.msra.mxu0 %v8301
  %v8303 = vand.u32 %v357, 4294901760
  %8304 = vmatpush.msra.mxu0 %v8303
  %v8305 = vand.u32 %v352, 4294901760
  %8306 = vmatpush.msra.mxu0 %v8305
  %v8307 = vand.u32 %v347, 4294901760
  %8308 = vmatpush.msra.mxu0 %v8307
  %v8309 = vand.u32 %v342, 4294901760
  %8310 = vmatpush.msra.mxu0 %v8309
  %v8311 = vand.u32 %v337, 4294901760
  %8312 = vmatpush.msra.mxu0 %v8311
  %v8313 = vand.u32 %v332, 4294901760
  %8314 = vmatpush.msra.mxu0 %v8313
  %v8315 = vand.u32 %v327, 4294901760
  %8316 = vmatpush.msra.mxu0 %v8315
  %v8317 = vand.u32 %v322, 4294901760
  %8318 = vmatpush.msra.mxu0 %v8317
  %v8319 = vand.u32 %v317, 4294901760
  %8320 = vmatpush.msra.mxu0 %v8319
  %v8321 = vand.u32 %v312, 4294901760
  %8322 = vmatpush.msra.mxu0 %v8321
  %v8323 = vand.u32 %v307, 4294901760
  %8324 = vmatpush.msra.mxu0 %v8323
  %v8325 = vand.u32 %v302, 4294901760
  %8326 = vmatpush.msra.mxu0 %v8325
  %v8327 = vand.u32 %v297, 4294901760
  %8328 = vmatpush.msra.mxu0 %v8327
  %v8329 = vand.u32 %v292, 4294901760
  %8330 = vmatpush.msra.mxu0 %v8329
  %v8331 = vand.u32 %v287, 4294901760
  %8332 = vmatpush.msra.mxu0 %v8331
  %v8333 = vand.u32 %v451, 4294901760
  %v8334 = vsub.f32 %v451, %v8333
  %v8335 = vand.u32 %v8334, 4294901760
  %v8336 = vsub.f32 %v8334, %v8335
  %v8337 = vand.u32 %v8336, 4294901760
  %8338 = vmatmul.f32.gmra.mxu0 %v8337
  %v8339 = vpop.f32.mrf.mxu0
  %v8340 = vadd.f32 %v8299, %v8339
  %8341 = vdwg.mxu0
  %v8342 = vand.u32 %v362, 4294901760
  %v8343 = vsub.f32 %v362, %v8342
  %v8344 = vand.u32 %v8343, 4294901760
  %v8345 = vsub.f32 %v8343, %v8344
  %v8346 = vand.u32 %v8345, 4294901760
  %8347 = vmatpush.msra.mxu0 %v8346
  %v8348 = vand.u32 %v357, 4294901760
  %v8349 = vsub.f32 %v357, %v8348
  %v8350 = vand.u32 %v8349, 4294901760
  %v8351 = vsub.f32 %v8349, %v8350
  %v8352 = vand.u32 %v8351, 4294901760
  %8353 = vmatpush.msra.mxu0 %v8352
  %v8354 = vand.u32 %v352, 4294901760
  %v8355 = vsub.f32 %v352, %v8354
  %v8356 = vand.u32 %v8355, 4294901760
  %v8357 = vsub.f32 %v8355, %v8356
  %v8358 = vand.u32 %v8357, 4294901760
  %8359 = vmatpush.msra.mxu0 %v8358
  %v8360 = vand.u32 %v347, 4294901760
  %v8361 = vsub.f32 %v347, %v8360
  %v8362 = vand.u32 %v8361, 4294901760
  %v8363 = vsub.f32 %v8361, %v8362
  %v8364 = vand.u32 %v8363, 4294901760
  %8365 = vmatpush.msra.mxu0 %v8364
  %v8366 = vand.u32 %v342, 4294901760
  %v8367 = vsub.f32 %v342, %v8366
  %v8368 = vand.u32 %v8367, 4294901760
  %v8369 = vsub.f32 %v8367, %v8368
  %v8370 = vand.u32 %v8369, 4294901760
  %8371 = vmatpush.msra.mxu0 %v8370
  %v8372 = vand.u32 %v337, 4294901760
  %v8373 = vsub.f32 %v337, %v8372
  %v8374 = vand.u32 %v8373, 4294901760
  %v8375 = vsub.f32 %v8373, %v8374
  %v8376 = vand.u32 %v8375, 4294901760
  %8377 = vmatpush.msra.mxu0 %v8376
  %v8378 = vand.u32 %v332, 4294901760
  %v8379 = vsub.f32 %v332, %v8378
  %v8380 = vand.u32 %v8379, 4294901760
  %v8381 = vsub.f32 %v8379, %v8380
  %v8382 = vand.u32 %v8381, 4294901760
  %8383 = vmatpush.msra.mxu0 %v8382
  %v8384 = vand.u32 %v327, 4294901760
  %v8385 = vsub.f32 %v327, %v8384
  %v8386 = vand.u32 %v8385, 4294901760
  %v8387 = vsub.f32 %v8385, %v8386
  %v8388 = vand.u32 %v8387, 4294901760
  %8389 = vmatpush.msra.mxu0 %v8388
  %v8390 = vand.u32 %v322, 4294901760
  %v8391 = vsub.f32 %v322, %v8390
  %v8392 = vand.u32 %v8391, 4294901760
  %v8393 = vsub.f32 %v8391, %v8392
  %v8394 = vand.u32 %v8393, 4294901760
  %8395 = vmatpush.msra.mxu0 %v8394
  %v8396 = vand.u32 %v317, 4294901760
  %v8397 = vsub.f32 %v317, %v8396
  %v8398 = vand.u32 %v8397, 4294901760
  %v8399 = vsub.f32 %v8397, %v8398
  %v8400 = vand.u32 %v8399, 4294901760
  %8401 = vmatpush.msra.mxu0 %v8400
  %v8402 = vand.u32 %v312, 4294901760
  %v8403 = vsub.f32 %v312, %v8402
  %v8404 = vand.u32 %v8403, 4294901760
  %v8405 = vsub.f32 %v8403, %v8404
  %v8406 = vand.u32 %v8405, 4294901760
  %8407 = vmatpush.msra.mxu0 %v8406
  %v8408 = vand.u32 %v307, 4294901760
  %v8409 = vsub.f32 %v307, %v8408
  %v8410 = vand.u32 %v8409, 4294901760
  %v8411 = vsub.f32 %v8409, %v8410
  %v8412 = vand.u32 %v8411, 4294901760
  %8413 = vmatpush.msra.mxu0 %v8412
  %v8414 = vand.u32 %v302, 4294901760
  %v8415 = vsub.f32 %v302, %v8414
  %v8416 = vand.u32 %v8415, 4294901760
  %v8417 = vsub.f32 %v8415, %v8416
  %v8418 = vand.u32 %v8417, 4294901760
  %8419 = vmatpush.msra.mxu0 %v8418
  %v8420 = vand.u32 %v297, 4294901760
  %v8421 = vsub.f32 %v297, %v8420
  %v8422 = vand.u32 %v8421, 4294901760
  %v8423 = vsub.f32 %v8421, %v8422
  %v8424 = vand.u32 %v8423, 4294901760
  %8425 = vmatpush.msra.mxu0 %v8424
  %v8426 = vand.u32 %v292, 4294901760
  %v8427 = vsub.f32 %v292, %v8426
  %v8428 = vand.u32 %v8427, 4294901760
  %v8429 = vsub.f32 %v8427, %v8428
  %v8430 = vand.u32 %v8429, 4294901760
  %8431 = vmatpush.msra.mxu0 %v8430
  %v8432 = vand.u32 %v287, 4294901760
  %v8433 = vsub.f32 %v287, %v8432
  %v8434 = vand.u32 %v8433, 4294901760
  %v8435 = vsub.f32 %v8433, %v8434
  %v8436 = vand.u32 %v8435, 4294901760
  %8437 = vmatpush.msra.mxu0 %v8436
  %v8438 = vand.u32 %v451, 4294901760
  %8439 = vmatmul.f32.gmra.mxu0 %v8438
  %v8440 = vpop.f32.mrf.mxu0
  %v8441 = vadd.f32 %v8340, %v8440
  %8442 = vdwg.mxu0
  %v8443 = vand.u32 %v362, 4294901760
  %v8444 = vsub.f32 %v362, %v8443
  %8445 = vmatpush.msra.mxu0 %v8444
  %v8446 = vand.u32 %v357, 4294901760
  %v8447 = vsub.f32 %v357, %v8446
  %8448 = vmatpush.msra.mxu0 %v8447
  %v8449 = vand.u32 %v352, 4294901760
  %v8450 = vsub.f32 %v352, %v8449
  %8451 = vmatpush.msra.mxu0 %v8450
  %v8452 = vand.u32 %v347, 4294901760
  %v8453 = vsub.f32 %v347, %v8452
  %8454 = vmatpush.msra.mxu0 %v8453
  %v8455 = vand.u32 %v342, 4294901760
  %v8456 = vsub.f32 %v342, %v8455
  %8457 = vmatpush.msra.mxu0 %v8456
  %v8458 = vand.u32 %v337, 4294901760
  %v8459 = vsub.f32 %v337, %v8458
  %8460 = vmatpush.msra.mxu0 %v8459
  %v8461 = vand.u32 %v332, 4294901760
  %v8462 = vsub.f32 %v332, %v8461
  %8463 = vmatpush.msra.mxu0 %v8462
  %v8464 = vand.u32 %v327, 4294901760
  %v8465 = vsub.f32 %v327, %v8464
  %8466 = vmatpush.msra.mxu0 %v8465
  %v8467 = vand.u32 %v322, 4294901760
  %v8468 = vsub.f32 %v322, %v8467
  %8469 = vmatpush.msra.mxu0 %v8468
  %v8470 = vand.u32 %v317, 4294901760
  %v8471 = vsub.f32 %v317, %v8470
  %8472 = vmatpush.msra.mxu0 %v8471
  %v8473 = vand.u32 %v312, 4294901760
  %v8474 = vsub.f32 %v312, %v8473
  %8475 = vmatpush.msra.mxu0 %v8474
  %v8476 = vand.u32 %v307, 4294901760
  %v8477 = vsub.f32 %v307, %v8476
  %8478 = vmatpush.msra.mxu0 %v8477
  %v8479 = vand.u32 %v302, 4294901760
  %v8480 = vsub.f32 %v302, %v8479
  %8481 = vmatpush.msra.mxu0 %v8480
  %v8482 = vand.u32 %v297, 4294901760
  %v8483 = vsub.f32 %v297, %v8482
  %8484 = vmatpush.msra.mxu0 %v8483
  %v8485 = vand.u32 %v292, 4294901760
  %v8486 = vsub.f32 %v292, %v8485
  %8487 = vmatpush.msra.mxu0 %v8486
  %v8488 = vand.u32 %v287, 4294901760
  %v8489 = vsub.f32 %v287, %v8488
  %8490 = vmatpush.msra.mxu0 %v8489
  %v8491 = vand.u32 %v451, 4294901760
  %v8492 = vsub.f32 %v451, %v8491
  %8493 = vmatmul.f32.gmra.mxu0 %v8492
  %v8494 = vpop.f32.mrf.mxu0
  %v8495 = vadd.f32 %v8441, %v8494
  %8496 = vdwg.mxu0
  %v8497 = vand.u32 %v362, 4294901760
  %8498 = vmatpush.msra.mxu0 %v8497
  %v8499 = vand.u32 %v357, 4294901760
  %8500 = vmatpush.msra.mxu0 %v8499
  %v8501 = vand.u32 %v352, 4294901760
  %8502 = vmatpush.msra.mxu0 %v8501
  %v8503 = vand.u32 %v347, 4294901760
  %8504 = vmatpush.msra.mxu0 %v8503
  %v8505 = vand.u32 %v342, 4294901760
  %8506 = vmatpush.msra.mxu0 %v8505
  %v8507 = vand.u32 %v337, 4294901760
  %8508 = vmatpush.msra.mxu0 %v8507
  %v8509 = vand.u32 %v332, 4294901760
  %8510 = vmatpush.msra.mxu0 %v8509
  %v8511 = vand.u32 %v327, 4294901760
  %8512 = vmatpush.msra.mxu0 %v8511
  %v8513 = vand.u32 %v322, 4294901760
  %8514 = vmatpush.msra.mxu0 %v8513
  %v8515 = vand.u32 %v317, 4294901760
  %8516 = vmatpush.msra.mxu0 %v8515
  %v8517 = vand.u32 %v312, 4294901760
  %8518 = vmatpush.msra.mxu0 %v8517
  %v8519 = vand.u32 %v307, 4294901760
  %8520 = vmatpush.msra.mxu0 %v8519
  %v8521 = vand.u32 %v302, 4294901760
  %8522 = vmatpush.msra.mxu0 %v8521
  %v8523 = vand.u32 %v297, 4294901760
  %8524 = vmatpush.msra.mxu0 %v8523
  %v8525 = vand.u32 %v292, 4294901760
  %8526 = vmatpush.msra.mxu0 %v8525
  %v8527 = vand.u32 %v287, 4294901760
  %8528 = vmatpush.msra.mxu0 %v8527
  %v8529 = vand.u32 %v451, 4294901760
  %v8530 = vsub.f32 %v451, %v8529
  %v8531 = vand.u32 %v8530, 4294901760
  %8532 = vmatmul.f32.gmra.mxu0 %v8531
  %v8533 = vpop.f32.mrf.mxu0
  %v8534 = vadd.f32 %v8495, %v8533
  %8535 = vdwg.mxu0
  %v8536 = vand.u32 %v362, 4294901760
  %v8537 = vsub.f32 %v362, %v8536
  %v8538 = vand.u32 %v8537, 4294901760
  %8539 = vmatpush.msra.mxu0 %v8538
  %v8540 = vand.u32 %v357, 4294901760
  %v8541 = vsub.f32 %v357, %v8540
  %v8542 = vand.u32 %v8541, 4294901760
  %8543 = vmatpush.msra.mxu0 %v8542
  %v8544 = vand.u32 %v352, 4294901760
  %v8545 = vsub.f32 %v352, %v8544
  %v8546 = vand.u32 %v8545, 4294901760
  %8547 = vmatpush.msra.mxu0 %v8546
  %v8548 = vand.u32 %v347, 4294901760
  %v8549 = vsub.f32 %v347, %v8548
  %v8550 = vand.u32 %v8549, 4294901760
  %8551 = vmatpush.msra.mxu0 %v8550
  %v8552 = vand.u32 %v342, 4294901760
  %v8553 = vsub.f32 %v342, %v8552
  %v8554 = vand.u32 %v8553, 4294901760
  %8555 = vmatpush.msra.mxu0 %v8554
  %v8556 = vand.u32 %v337, 4294901760
  %v8557 = vsub.f32 %v337, %v8556
  %v8558 = vand.u32 %v8557, 4294901760
  %8559 = vmatpush.msra.mxu0 %v8558
  %v8560 = vand.u32 %v332, 4294901760
  %v8561 = vsub.f32 %v332, %v8560
  %v8562 = vand.u32 %v8561, 4294901760
  %8563 = vmatpush.msra.mxu0 %v8562
  %v8564 = vand.u32 %v327, 4294901760
  %v8565 = vsub.f32 %v327, %v8564
  %v8566 = vand.u32 %v8565, 4294901760
  %8567 = vmatpush.msra.mxu0 %v8566
  %v8568 = vand.u32 %v322, 4294901760
  %v8569 = vsub.f32 %v322, %v8568
  %v8570 = vand.u32 %v8569, 4294901760
  %8571 = vmatpush.msra.mxu0 %v8570
  %v8572 = vand.u32 %v317, 4294901760
  %v8573 = vsub.f32 %v317, %v8572
  %v8574 = vand.u32 %v8573, 4294901760
  %8575 = vmatpush.msra.mxu0 %v8574
  %v8576 = vand.u32 %v312, 4294901760
  %v8577 = vsub.f32 %v312, %v8576
  %v8578 = vand.u32 %v8577, 4294901760
  %8579 = vmatpush.msra.mxu0 %v8578
  %v8580 = vand.u32 %v307, 4294901760
  %v8581 = vsub.f32 %v307, %v8580
  %v8582 = vand.u32 %v8581, 4294901760
  %8583 = vmatpush.msra.mxu0 %v8582
  %v8584 = vand.u32 %v302, 4294901760
  %v8585 = vsub.f32 %v302, %v8584
  %v8586 = vand.u32 %v8585, 4294901760
  %8587 = vmatpush.msra.mxu0 %v8586
  %v8588 = vand.u32 %v297, 4294901760
  %v8589 = vsub.f32 %v297, %v8588
  %v8590 = vand.u32 %v8589, 4294901760
  %8591 = vmatpush.msra.mxu0 %v8590
  %v8592 = vand.u32 %v292, 4294901760
  %v8593 = vsub.f32 %v292, %v8592
  %v8594 = vand.u32 %v8593, 4294901760
  %8595 = vmatpush.msra.mxu0 %v8594
  %v8596 = vand.u32 %v287, 4294901760
  %v8597 = vsub.f32 %v287, %v8596
  %v8598 = vand.u32 %v8597, 4294901760
  %8599 = vmatpush.msra.mxu0 %v8598
  %v8600 = vand.u32 %v451, 4294901760
  %8601 = vmatmul.f32.gmra.mxu0 %v8600
  %v8602 = vpop.f32.mrf.mxu0
  %v8603 = vadd.f32 %v8534, %v8602
  %8604 = vdwg.mxu0
  %v8605 = vand.u32 %v362, 4294901760
  %8606 = vmatpush.msra.mxu0 %v8605
  %v8607 = vand.u32 %v357, 4294901760
  %8608 = vmatpush.msra.mxu0 %v8607
  %v8609 = vand.u32 %v352, 4294901760
  %8610 = vmatpush.msra.mxu0 %v8609
  %v8611 = vand.u32 %v347, 4294901760
  %8612 = vmatpush.msra.mxu0 %v8611
  %v8613 = vand.u32 %v342, 4294901760
  %8614 = vmatpush.msra.mxu0 %v8613
  %v8615 = vand.u32 %v337, 4294901760
  %8616 = vmatpush.msra.mxu0 %v8615
  %v8617 = vand.u32 %v332, 4294901760
  %8618 = vmatpush.msra.mxu0 %v8617
  %v8619 = vand.u32 %v327, 4294901760
  %8620 = vmatpush.msra.mxu0 %v8619
  %v8621 = vand.u32 %v322, 4294901760
  %8622 = vmatpush.msra.mxu0 %v8621
  %v8623 = vand.u32 %v317, 4294901760
  %8624 = vmatpush.msra.mxu0 %v8623
  %v8625 = vand.u32 %v312, 4294901760
  %8626 = vmatpush.msra.mxu0 %v8625
  %v8627 = vand.u32 %v307, 4294901760
  %8628 = vmatpush.msra.mxu0 %v8627
  %v8629 = vand.u32 %v302, 4294901760
  %8630 = vmatpush.msra.mxu0 %v8629
  %v8631 = vand.u32 %v297, 4294901760
  %8632 = vmatpush.msra.mxu0 %v8631
  %v8633 = vand.u32 %v292, 4294901760
  %8634 = vmatpush.msra.mxu0 %v8633
  %v8635 = vand.u32 %v287, 4294901760
  %8636 = vmatpush.msra.mxu0 %v8635
  %v8637 = vand.u32 %v451, 4294901760
  %8638 = vmatmul.f32.gmra.mxu0 %v8637
  %v8639 = vpop.f32.mrf.mxu0
  %v8640 = vadd.f32 %v8603, %v8639
  %8641 = vdwg.mxu0
  %v8642 = vand.u32 %v442, 4294901760
  %8643 = vmatpush.msra.mxu0 %v8642
  %v8644 = vand.u32 %v437, 4294901760
  %8645 = vmatpush.msra.mxu0 %v8644
  %v8646 = vand.u32 %v432, 4294901760
  %8647 = vmatpush.msra.mxu0 %v8646
  %v8648 = vand.u32 %v427, 4294901760
  %8649 = vmatpush.msra.mxu0 %v8648
  %v8650 = vand.u32 %v422, 4294901760
  %8651 = vmatpush.msra.mxu0 %v8650
  %v8652 = vand.u32 %v417, 4294901760
  %8653 = vmatpush.msra.mxu0 %v8652
  %v8654 = vand.u32 %v412, 4294901760
  %8655 = vmatpush.msra.mxu0 %v8654
  %v8656 = vand.u32 %v407, 4294901760
  %8657 = vmatpush.msra.mxu0 %v8656
  %v8658 = vand.u32 %v402, 4294901760
  %8659 = vmatpush.msra.mxu0 %v8658
  %v8660 = vand.u32 %v397, 4294901760
  %8661 = vmatpush.msra.mxu0 %v8660
  %v8662 = vand.u32 %v392, 4294901760
  %8663 = vmatpush.msra.mxu0 %v8662
  %v8664 = vand.u32 %v387, 4294901760
  %8665 = vmatpush.msra.mxu0 %v8664
  %v8666 = vand.u32 %v382, 4294901760
  %8667 = vmatpush.msra.mxu0 %v8666
  %v8668 = vand.u32 %v377, 4294901760
  %8669 = vmatpush.msra.mxu0 %v8668
  %v8670 = vand.u32 %v372, 4294901760
  %8671 = vmatpush.msra.mxu0 %v8670
  %v8672 = vand.u32 %v367, 4294901760
  %8673 = vmatpush.msra.mxu0 %v8672
  %v8674 = vand.u32 %v452, 4294901760
  %v8675 = vsub.f32 %v452, %v8674
  %v8676 = vand.u32 %v8675, 4294901760
  %v8677 = vsub.f32 %v8675, %v8676
  %v8678 = vand.u32 %v8677, 4294901760
  %8679 = vmatmul.f32.gmra.mxu0 %v8678
  %v8680 = vpop.f32.mrf.mxu0
  %v8681 = vadd.f32 %v8640, %v8680
  %8682 = vdwg.mxu0
  %v8683 = vand.u32 %v442, 4294901760
  %v8684 = vsub.f32 %v442, %v8683
  %v8685 = vand.u32 %v8684, 4294901760
  %v8686 = vsub.f32 %v8684, %v8685
  %v8687 = vand.u32 %v8686, 4294901760
  %8688 = vmatpush.msra.mxu0 %v8687
  %v8689 = vand.u32 %v437, 4294901760
  %v8690 = vsub.f32 %v437, %v8689
  %v8691 = vand.u32 %v8690, 4294901760
  %v8692 = vsub.f32 %v8690, %v8691
  %v8693 = vand.u32 %v8692, 4294901760
  %8694 = vmatpush.msra.mxu0 %v8693
  %v8695 = vand.u32 %v432, 4294901760
  %v8696 = vsub.f32 %v432, %v8695
  %v8697 = vand.u32 %v8696, 4294901760
  %v8698 = vsub.f32 %v8696, %v8697
  %v8699 = vand.u32 %v8698, 4294901760
  %8700 = vmatpush.msra.mxu0 %v8699
  %v8701 = vand.u32 %v427, 4294901760
  %v8702 = vsub.f32 %v427, %v8701
  %v8703 = vand.u32 %v8702, 4294901760
  %v8704 = vsub.f32 %v8702, %v8703
  %v8705 = vand.u32 %v8704, 4294901760
  %8706 = vmatpush.msra.mxu0 %v8705
  %v8707 = vand.u32 %v422, 4294901760
  %v8708 = vsub.f32 %v422, %v8707
  %v8709 = vand.u32 %v8708, 4294901760
  %v8710 = vsub.f32 %v8708, %v8709
  %v8711 = vand.u32 %v8710, 4294901760
  %8712 = vmatpush.msra.mxu0 %v8711
  %v8713 = vand.u32 %v417, 4294901760
  %v8714 = vsub.f32 %v417, %v8713
  %v8715 = vand.u32 %v8714, 4294901760
  %v8716 = vsub.f32 %v8714, %v8715
  %v8717 = vand.u32 %v8716, 4294901760
  %8718 = vmatpush.msra.mxu0 %v8717
  %v8719 = vand.u32 %v412, 4294901760
  %v8720 = vsub.f32 %v412, %v8719
  %v8721 = vand.u32 %v8720, 4294901760
  %v8722 = vsub.f32 %v8720, %v8721
  %v8723 = vand.u32 %v8722, 4294901760
  %8724 = vmatpush.msra.mxu0 %v8723
  %v8725 = vand.u32 %v407, 4294901760
  %v8726 = vsub.f32 %v407, %v8725
  %v8727 = vand.u32 %v8726, 4294901760
  %v8728 = vsub.f32 %v8726, %v8727
  %v8729 = vand.u32 %v8728, 4294901760
  %8730 = vmatpush.msra.mxu0 %v8729
  %v8731 = vand.u32 %v402, 4294901760
  %v8732 = vsub.f32 %v402, %v8731
  %v8733 = vand.u32 %v8732, 4294901760
  %v8734 = vsub.f32 %v8732, %v8733
  %v8735 = vand.u32 %v8734, 4294901760
  %8736 = vmatpush.msra.mxu0 %v8735
  %v8737 = vand.u32 %v397, 4294901760
  %v8738 = vsub.f32 %v397, %v8737
  %v8739 = vand.u32 %v8738, 4294901760
  %v8740 = vsub.f32 %v8738, %v8739
  %v8741 = vand.u32 %v8740, 4294901760
  %8742 = vmatpush.msra.mxu0 %v8741
  %v8743 = vand.u32 %v392, 4294901760
  %v8744 = vsub.f32 %v392, %v8743
  %v8745 = vand.u32 %v8744, 4294901760
  %v8746 = vsub.f32 %v8744, %v8745
  %v8747 = vand.u32 %v8746, 4294901760
  %8748 = vmatpush.msra.mxu0 %v8747
  %v8749 = vand.u32 %v387, 4294901760
  %v8750 = vsub.f32 %v387, %v8749
  %v8751 = vand.u32 %v8750, 4294901760
  %v8752 = vsub.f32 %v8750, %v8751
  %v8753 = vand.u32 %v8752, 4294901760
  %8754 = vmatpush.msra.mxu0 %v8753
  %v8755 = vand.u32 %v382, 4294901760
  %v8756 = vsub.f32 %v382, %v8755
  %v8757 = vand.u32 %v8756, 4294901760
  %v8758 = vsub.f32 %v8756, %v8757
  %v8759 = vand.u32 %v8758, 4294901760
  %8760 = vmatpush.msra.mxu0 %v8759
  %v8761 = vand.u32 %v377, 4294901760
  %v8762 = vsub.f32 %v377, %v8761
  %v8763 = vand.u32 %v8762, 4294901760
  %v8764 = vsub.f32 %v8762, %v8763
  %v8765 = vand.u32 %v8764, 4294901760
  %8766 = vmatpush.msra.mxu0 %v8765
  %v8767 = vand.u32 %v372, 4294901760
  %v8768 = vsub.f32 %v372, %v8767
  %v8769 = vand.u32 %v8768, 4294901760
  %v8770 = vsub.f32 %v8768, %v8769
  %v8771 = vand.u32 %v8770, 4294901760
  %8772 = vmatpush.msra.mxu0 %v8771
  %v8773 = vand.u32 %v367, 4294901760
  %v8774 = vsub.f32 %v367, %v8773
  %v8775 = vand.u32 %v8774, 4294901760
  %v8776 = vsub.f32 %v8774, %v8775
  %v8777 = vand.u32 %v8776, 4294901760
  %8778 = vmatpush.msra.mxu0 %v8777
  %v8779 = vand.u32 %v452, 4294901760
  %8780 = vmatmul.f32.gmra.mxu0 %v8779
  %v8781 = vpop.f32.mrf.mxu0
  %v8782 = vadd.f32 %v8681, %v8781
  %8783 = vdwg.mxu0
  %v8784 = vand.u32 %v442, 4294901760
  %v8785 = vsub.f32 %v442, %v8784
  %8786 = vmatpush.msra.mxu0 %v8785
  %v8787 = vand.u32 %v437, 4294901760
  %v8788 = vsub.f32 %v437, %v8787
  %8789 = vmatpush.msra.mxu0 %v8788
  %v8790 = vand.u32 %v432, 4294901760
  %v8791 = vsub.f32 %v432, %v8790
  %8792 = vmatpush.msra.mxu0 %v8791
  %v8793 = vand.u32 %v427, 4294901760
  %v8794 = vsub.f32 %v427, %v8793
  %8795 = vmatpush.msra.mxu0 %v8794
  %v8796 = vand.u32 %v422, 4294901760
  %v8797 = vsub.f32 %v422, %v8796
  %8798 = vmatpush.msra.mxu0 %v8797
  %v8799 = vand.u32 %v417, 4294901760
  %v8800 = vsub.f32 %v417, %v8799
  %8801 = vmatpush.msra.mxu0 %v8800
  %v8802 = vand.u32 %v412, 4294901760
  %v8803 = vsub.f32 %v412, %v8802
  %8804 = vmatpush.msra.mxu0 %v8803
  %v8805 = vand.u32 %v407, 4294901760
  %v8806 = vsub.f32 %v407, %v8805
  %8807 = vmatpush.msra.mxu0 %v8806
  %v8808 = vand.u32 %v402, 4294901760
  %v8809 = vsub.f32 %v402, %v8808
  %8810 = vmatpush.msra.mxu0 %v8809
  %v8811 = vand.u32 %v397, 4294901760
  %v8812 = vsub.f32 %v397, %v8811
  %8813 = vmatpush.msra.mxu0 %v8812
  %v8814 = vand.u32 %v392, 4294901760
  %v8815 = vsub.f32 %v392, %v8814
  %8816 = vmatpush.msra.mxu0 %v8815
  %v8817 = vand.u32 %v387, 4294901760
  %v8818 = vsub.f32 %v387, %v8817
  %8819 = vmatpush.msra.mxu0 %v8818
  %v8820 = vand.u32 %v382, 4294901760
  %v8821 = vsub.f32 %v382, %v8820
  %8822 = vmatpush.msra.mxu0 %v8821
  %v8823 = vand.u32 %v377, 4294901760
  %v8824 = vsub.f32 %v377, %v8823
  %8825 = vmatpush.msra.mxu0 %v8824
  %v8826 = vand.u32 %v372, 4294901760
  %v8827 = vsub.f32 %v372, %v8826
  %8828 = vmatpush.msra.mxu0 %v8827
  %v8829 = vand.u32 %v367, 4294901760
  %v8830 = vsub.f32 %v367, %v8829
  %8831 = vmatpush.msra.mxu0 %v8830
  %v8832 = vand.u32 %v452, 4294901760
  %v8833 = vsub.f32 %v452, %v8832
  %8834 = vmatmul.f32.gmra.mxu0 %v8833
  %v8835 = vpop.f32.mrf.mxu0
  %v8836 = vadd.f32 %v8782, %v8835
  %8837 = vdwg.mxu0
  %v8838 = vand.u32 %v442, 4294901760
  %8839 = vmatpush.msra.mxu0 %v8838
  %v8840 = vand.u32 %v437, 4294901760
  %8841 = vmatpush.msra.mxu0 %v8840
  %v8842 = vand.u32 %v432, 4294901760
  %8843 = vmatpush.msra.mxu0 %v8842
  %v8844 = vand.u32 %v427, 4294901760
  %8845 = vmatpush.msra.mxu0 %v8844
  %v8846 = vand.u32 %v422, 4294901760
  %8847 = vmatpush.msra.mxu0 %v8846
  %v8848 = vand.u32 %v417, 4294901760
  %8849 = vmatpush.msra.mxu0 %v8848
  %v8850 = vand.u32 %v412, 4294901760
  %8851 = vmatpush.msra.mxu0 %v8850
  %v8852 = vand.u32 %v407, 4294901760
  %8853 = vmatpush.msra.mxu0 %v8852
  %v8854 = vand.u32 %v402, 4294901760
  %8855 = vmatpush.msra.mxu0 %v8854
  %v8856 = vand.u32 %v397, 4294901760
  %8857 = vmatpush.msra.mxu0 %v8856
  %v8858 = vand.u32 %v392, 4294901760
  %8859 = vmatpush.msra.mxu0 %v8858
  %v8860 = vand.u32 %v387, 4294901760
  %8861 = vmatpush.msra.mxu0 %v8860
  %v8862 = vand.u32 %v382, 4294901760
  %8863 = vmatpush.msra.mxu0 %v8862
  %v8864 = vand.u32 %v377, 4294901760
  %8865 = vmatpush.msra.mxu0 %v8864
  %v8866 = vand.u32 %v372, 4294901760
  %8867 = vmatpush.msra.mxu0 %v8866
  %v8868 = vand.u32 %v367, 4294901760
  %8869 = vmatpush.msra.mxu0 %v8868
  %v8870 = vand.u32 %v452, 4294901760
  %v8871 = vsub.f32 %v452, %v8870
  %v8872 = vand.u32 %v8871, 4294901760
  %8873 = vmatmul.f32.gmra.mxu0 %v8872
  %v8874 = vpop.f32.mrf.mxu0
  %v8875 = vadd.f32 %v8836, %v8874
  %8876 = vdwg.mxu0
  %v8877 = vand.u32 %v442, 4294901760
  %v8878 = vsub.f32 %v442, %v8877
  %v8879 = vand.u32 %v8878, 4294901760
  %8880 = vmatpush.msra.mxu0 %v8879
  %v8881 = vand.u32 %v437, 4294901760
  %v8882 = vsub.f32 %v437, %v8881
  %v8883 = vand.u32 %v8882, 4294901760
  %8884 = vmatpush.msra.mxu0 %v8883
  %v8885 = vand.u32 %v432, 4294901760
  %v8886 = vsub.f32 %v432, %v8885
  %v8887 = vand.u32 %v8886, 4294901760
  %8888 = vmatpush.msra.mxu0 %v8887
  %v8889 = vand.u32 %v427, 4294901760
  %v8890 = vsub.f32 %v427, %v8889
  %v8891 = vand.u32 %v8890, 4294901760
  %8892 = vmatpush.msra.mxu0 %v8891
  %v8893 = vand.u32 %v422, 4294901760
  %v8894 = vsub.f32 %v422, %v8893
  %v8895 = vand.u32 %v8894, 4294901760
  %8896 = vmatpush.msra.mxu0 %v8895
  %v8897 = vand.u32 %v417, 4294901760
  %v8898 = vsub.f32 %v417, %v8897
  %v8899 = vand.u32 %v8898, 4294901760
  %8900 = vmatpush.msra.mxu0 %v8899
  %v8901 = vand.u32 %v412, 4294901760
  %v8902 = vsub.f32 %v412, %v8901
  %v8903 = vand.u32 %v8902, 4294901760
  %8904 = vmatpush.msra.mxu0 %v8903
  %v8905 = vand.u32 %v407, 4294901760
  %v8906 = vsub.f32 %v407, %v8905
  %v8907 = vand.u32 %v8906, 4294901760
  %8908 = vmatpush.msra.mxu0 %v8907
  %v8909 = vand.u32 %v402, 4294901760
  %v8910 = vsub.f32 %v402, %v8909
  %v8911 = vand.u32 %v8910, 4294901760
  %8912 = vmatpush.msra.mxu0 %v8911
  %v8913 = vand.u32 %v397, 4294901760
  %v8914 = vsub.f32 %v397, %v8913
  %v8915 = vand.u32 %v8914, 4294901760
  %8916 = vmatpush.msra.mxu0 %v8915
  %v8917 = vand.u32 %v392, 4294901760
  %v8918 = vsub.f32 %v392, %v8917
  %v8919 = vand.u32 %v8918, 4294901760
  %8920 = vmatpush.msra.mxu0 %v8919
  %v8921 = vand.u32 %v387, 4294901760
  %v8922 = vsub.f32 %v387, %v8921
  %v8923 = vand.u32 %v8922, 4294901760
  %8924 = vmatpush.msra.mxu0 %v8923
  %v8925 = vand.u32 %v382, 4294901760
  %v8926 = vsub.f32 %v382, %v8925
  %v8927 = vand.u32 %v8926, 4294901760
  %8928 = vmatpush.msra.mxu0 %v8927
  %v8929 = vand.u32 %v377, 4294901760
  %v8930 = vsub.f32 %v377, %v8929
  %v8931 = vand.u32 %v8930, 4294901760
  %8932 = vmatpush.msra.mxu0 %v8931
  %v8933 = vand.u32 %v372, 4294901760
  %v8934 = vsub.f32 %v372, %v8933
  %v8935 = vand.u32 %v8934, 4294901760
  %8936 = vmatpush.msra.mxu0 %v8935
  %v8937 = vand.u32 %v367, 4294901760
  %v8938 = vsub.f32 %v367, %v8937
  %v8939 = vand.u32 %v8938, 4294901760
  %8940 = vmatpush.msra.mxu0 %v8939
  %v8941 = vand.u32 %v452, 4294901760
  %8942 = vmatmul.f32.gmra.mxu0 %v8941
  %v8943 = vpop.f32.mrf.mxu0
  %v8944 = vadd.f32 %v8875, %v8943
  %8945 = vdwg.mxu0
  %v8946 = vand.u32 %v442, 4294901760
  %8947 = vmatpush.msra.mxu0 %v8946
  %v8948 = vand.u32 %v437, 4294901760
  %8949 = vmatpush.msra.mxu0 %v8948
  %v8950 = vand.u32 %v432, 4294901760
  %8951 = vmatpush.msra.mxu0 %v8950
  %v8952 = vand.u32 %v427, 4294901760
  %8953 = vmatpush.msra.mxu0 %v8952
  %v8954 = vand.u32 %v422, 4294901760
  %8955 = vmatpush.msra.mxu0 %v8954
  %v8956 = vand.u32 %v417, 4294901760
  %8957 = vmatpush.msra.mxu0 %v8956
  %v8958 = vand.u32 %v412, 4294901760
  %8959 = vmatpush.msra.mxu0 %v8958
  %v8960 = vand.u32 %v407, 4294901760
  %8961 = vmatpush.msra.mxu0 %v8960
  %v8962 = vand.u32 %v402, 4294901760
  %8963 = vmatpush.msra.mxu0 %v8962
  %v8964 = vand.u32 %v397, 4294901760
  %8965 = vmatpush.msra.mxu0 %v8964
  %v8966 = vand.u32 %v392, 4294901760
  %8967 = vmatpush.msra.mxu0 %v8966
  %v8968 = vand.u32 %v387, 4294901760
  %8969 = vmatpush.msra.mxu0 %v8968
  %v8970 = vand.u32 %v382, 4294901760
  %8971 = vmatpush.msra.mxu0 %v8970
  %v8972 = vand.u32 %v377, 4294901760
  %8973 = vmatpush.msra.mxu0 %v8972
  %v8974 = vand.u32 %v372, 4294901760
  %8975 = vmatpush.msra.mxu0 %v8974
  %v8976 = vand.u32 %v367, 4294901760
  %8977 = vmatpush.msra.mxu0 %v8976
  %v8978 = vand.u32 %v452, 4294901760
  %8979 = vmatmul.f32.gmra.mxu0 %v8978
  %v8980 = vpop.f32.mrf.mxu0
  %v8981 = vadd.f32 %v8944, %v8980
  %8982 = vdwg.mxu0
  %v8983 = vrcp.pop %v2161
  %v8984 = vmul.f32 %v2161, %v8983
  %v8985 = vsub.f32 1.0, %v8984
  %v8986 = vmul.f32 %v8983, %v8985
  %v8987 = vadd.f32 %v8983, %v8986
  %vm8988 = vweird.f32 %v2161
  %vm8989 = vweird.f32 %v8983
  %vm8990 = vmor %vm8988, %vm8989
  %v8991 = vsel %vm8990, %v8983, %v8987
  %v8992 = vand.u32 2147483647, %v2161
  %vm8993 = vcmp.eq.f32.partialorder %v8992, 8.507059e+37
  %v8994 = vand.u32 %v2161, 2147483648
  %v8995 = vor.u32 1.1754944e-38, %v8994
  %v8996 = vsel %vm8993, %v8995, %v8991
  %v8997 = vrcp.pop %v3866
  %v8998 = vmul.f32 %v3866, %v8997
  %v8999 = vsub.f32 1.0, %v8998
  %v9000 = vmul.f32 %v8997, %v8999
  %v9001 = vadd.f32 %v8997, %v9000
  %vm9002 = vweird.f32 %v3866
  %vm9003 = vweird.f32 %v8997
  %vm9004 = vmor %vm9002, %vm9003
  %v9005 = vsel %vm9004, %v8997, %v9001
  %v9006 = vand.u32 2147483647, %v3866
  %vm9007 = vcmp.eq.f32.partialorder %v9006, 8.507059e+37
  %v9008 = vand.u32 %v3866, 2147483648
  %v9009 = vor.u32 1.1754944e-38, %v9008
  %v9010 = vsel %vm9007, %v9009, %v9005
  %v9011 = vrcp.pop %v5571
  %v9012 = vmul.f32 %v5571, %v9011
  %v9013 = vsub.f32 1.0, %v9012
  %v9014 = vmul.f32 %v9011, %v9013
  %v9015 = vadd.f32 %v9011, %v9014
  %vm9016 = vweird.f32 %v5571
  %vm9017 = vweird.f32 %v9011
  %vm9018 = vmor %vm9016, %vm9017
  %v9019 = vsel %vm9018, %v9011, %v9015
  %v9020 = vand.u32 2147483647, %v5571
  %vm9021 = vcmp.eq.f32.partialorder %v9020, 8.507059e+37
  %v9022 = vand.u32 %v5571, 2147483648
  %v9023 = vor.u32 1.1754944e-38, %v9022
  %v9024 = vsel %vm9021, %v9023, %v9019
  %v9025 = vrcp.pop %v7276
  %v9026 = vmul.f32 %v7276, %v9025
  %v9027 = vsub.f32 1.0, %v9026
  %v9028 = vmul.f32 %v9025, %v9027
  %v9029 = vadd.f32 %v9025, %v9028
  %vm9030 = vweird.f32 %v7276
  %vm9031 = vweird.f32 %v9025
  %vm9032 = vmor %vm9030, %vm9031
  %v9033 = vsel %vm9032, %v9025, %v9029
  %v9034 = vand.u32 2147483647, %v7276
  %vm9035 = vcmp.eq.f32.partialorder %v9034, 8.507059e+37
  %v9036 = vand.u32 %v7276, 2147483648
  %v9037 = vor.u32 1.1754944e-38, %v9036
  %v9038 = vsel %vm9035, %v9037, %v9033
  %v9039 = vrcp.pop %v8981
  %v9040 = vmul.f32 %v8981, %v9039
  %v9041 = vsub.f32 1.0, %v9040
  %v9042 = vmul.f32 %v9039, %v9041
  %v9043 = vadd.f32 %v9039, %v9042
  %vm9044 = vweird.f32 %v8981
  %vm9045 = vweird.f32 %v9039
  %vm9046 = vmor %vm9044, %vm9045
  %v9047 = vsel %vm9046, %v9039, %v9043
  %v9048 = vand.u32 2147483647, %v8981
  %vm9049 = vcmp.eq.f32.partialorder %v9048, 8.507059e+37
  %v9050 = vand.u32 %v8981, 2147483648
  %v9051 = vor.u32 1.1754944e-38, %v9050
  %v9052 = vsel %vm9049, %v9051, %v9047
  %v9057 = vrot.slane %v9010, 6
  %v9058 = vrot.slane %v9024, 4
  %v9059 = vrot.slane %v9038, 2
  %vm9060 = vcmask 1041408
  %v9061 = vsel %vm9060, %v8996, %v9057
  %vm9062 = vcmask 1045508
  %v9063 = vsel %vm9062, %v9058, %v9059
  %vm9064 = vcmask 1043456
  %v9065 = vsel %vm9064, %v9061, %v9063
  %v9067 = vmul.f32 %v41, %v9065
  %v9068 = vmul.f32 %v42, %v9052
  %9069 = vst [vmem:[%s2] sm:$0xff] %v9067
  %9070 = vst [vmem:[%s2 + $0x8] sm:$0x3] %v9068
  // Predicated region
  $region10: #{conservative_softmax_monotone.1} parent=0 // pred_check
    _
  $region11: #{conservative_softmax_monotone.1} parent=0 // pred_check_branch
    %9072 = sbr.rel (0) target = $region13
  $region12: #{conservative_softmax_monotone.1} parent=0 // pred_region
    _
  $region13: #{conservative_softmax_monotone.1} parent=0 // pred_fallthru
    _
  // Predicated region
  $region14: #{conservative_softmax_monotone.1} parent=0 // pred_check
    _
  $region15: #{conservative_softmax_monotone.1} parent=0 // pred_check_branch
    %9074 = sbr.rel (0) target = $region17
  $region16: #{conservative_softmax_monotone.1} parent=0 // pred_region
    _
  $region17: #{conservative_softmax_monotone.1} parent=0 // pred_fallthru
    _

</llo_original>
